<compile_context>
chip_gen: v7x
topology: tpu7x:2x2x1
jax: 0.10.0
libtpu: 0.0.40
codegen_flags: <defaults>
</compile_context>

<pallas_src>
import math
from functools import partial

import jax
import jax.numpy as jnp
from jax.experimental import pallas as pl
from jax.experimental.pallas import tpu as pltpu


# ---------------------------------------------------------------------------
# Fused Pallas kernel: time-MLP + conv1(+temb) + conv2 + conv3, one image/step
# ---------------------------------------------------------------------------

def _silu(y):
    # y * sigmoid(y) = y * 1/(1+exp(-y)); exp and approx reciprocal both go to
    # the EUP slot, keeping the VALU free.
    return y * pl.reciprocal(1.0 + jnp.exp(-y), approx=True)


def _fused_unet_kernel(
    emb_ref, x_ref,
    wt1_ref, bt1_ref, wt2_ref, bt2_ref,
    w1_ref, b1_ref, w2_ref, b2_ref, w3_ref, b3_ref,
    o_ref,
    xp_ref, hp1_ref, hp2_ref,
    *, H, W,
):
    f32 = jnp.float32
    bf16 = jnp.bfloat16
    hidden = w1_ref.shape[-1]
    cout = w3_ref.shape[-1]

    # ---- time-embedding MLP (too small for its own pallas_call) ----
    e = emb_ref[0]                                                  # (1, E) f32
    h = jnp.dot(e.astype(bf16), wt1_ref[...], preferred_element_type=f32)
    h = _silu(h + bt1_ref[...])
    temb = jnp.dot(h.astype(bf16), wt2_ref[...], preferred_element_type=f32)
    temb = temb + bt2_ref[...]                                      # (1, hidden)

    def conv3x3(src_ref, w_ref, n_out):
        # 3x3 "same" conv as 9 accumulated (H*W, Cin) @ (Cin, Cout) matmuls
        # over shifted windows of the zero-padded, VMEM-resident image.
        acc = jnp.zeros((H * W, n_out), f32)
        tap_idx = 0
        for ky in range(3):
            for kx in range(3):
                tap = src_ref[ky:ky + H, kx:kx + W, :]              # (H, W, Cin)
                tap2d = tap.reshape(H * W, tap.shape[-1]).astype(bf16)
                acc = acc + jnp.dot(tap2d, w_ref[tap_idx],
                                    preferred_element_type=f32)
                tap_idx += 1
        return acc

    # ---- stage 0: zero-pad the input image into VMEM scratch ----
    xp_ref[...] = jnp.zeros_like(xp_ref)
    xp_ref[1:H + 1, 1:W + 1, :] = x_ref[0]

    # ---- conv1 (Cin -> hidden) + bias + time-embedding add + SiLU ----
    y1 = conv3x3(xp_ref, w1_ref, hidden) + b1_ref[...] + temb       # (H*W, hidden)
    h1 = _silu(y1)
    hp1_ref[...] = jnp.zeros_like(hp1_ref)
    hp1_ref[1:H + 1, 1:W + 1, :] = h1.reshape(H, W, hidden)

    # ---- conv2 (hidden -> hidden) + bias + SiLU ----
    y2 = conv3x3(hp1_ref, w2_ref, hidden) + b2_ref[...]
    h2 = _silu(y2)
    hp2_ref[...] = jnp.zeros_like(hp2_ref)
    hp2_ref[1:H + 1, 1:W + 1, :] = h2.reshape(H, W, hidden)

    # ---- conv3 (hidden -> 128-padded Cout), lane-dense output store ----
    y3 = conv3x3(hp2_ref, w3_ref, cout) + b3_ref[...]               # (H*W, 128)
    o_ref[0] = y3


# ---------------------------------------------------------------------------
# Glue (layout / embeddings / parameters) in plain JAX
# ---------------------------------------------------------------------------

def sinusoidal_embedding(t, dim):
    half = dim // 2
    freqs = jnp.exp(-math.log(10000.0) * jnp.arange(half, dtype=jnp.float32) / (half - 1))
    args = t.astype(jnp.float32)[:, None] * freqs[None, :]
    return jnp.concatenate([jnp.sin(args), jnp.cos(args)], axis=-1)


def init_unet_params(key, cin, hidden, temb_dim):
    ks = jax.random.split(key, 5)

    def nrm(k, shape, scale):
        return scale * jax.random.normal(k, shape, jnp.float32)

    return {
        "wt1": nrm(ks[0], (temb_dim, hidden), 0.2), "bt1": jnp.zeros((hidden,), jnp.float32),
        "wt2": nrm(ks[1], (hidden, hidden), 0.2),   "bt2": jnp.zeros((hidden,), jnp.float32),
        "w1": nrm(ks[2], (3, 3, cin, hidden), 0.2), "b1": jnp.zeros((hidden,), jnp.float32),
        "w2": nrm(ks[3], (3, 3, hidden, hidden), 0.1), "b2": jnp.zeros((hidden,), jnp.float32),
        "w3": nrm(ks[4], (3, 3, hidden, cin), 0.1), "b3": jnp.zeros((cin,), jnp.float32),
    }


def unet_forward(params, x_nchw, t):
    """Synthetic UNet-style noise predictor epsilon(x_t, t). NCHW in/out."""
    B, C, H, W = x_nchw.shape
    hidden = params["w1"].shape[-1]
    temb_dim = params["wt1"].shape[0]
    cout_pad = 128  # lane-dense output slab; real channels sliced in wrapper

    bf16 = jnp.bfloat16
    x = jnp.transpose(x_nchw, (0, 2, 3, 1))                          # NHWC
    emb = sinusoidal_embedding(t, temb_dim).reshape(B, 1, temb_dim)  # (B,1,E)

    # Weights: bf16 operands (f32 accumulate in-kernel), tap-major (9,Cin,Cout).
    wt1 = params["wt1"].astype(bf16)
    wt2 = params["wt2"].astype(bf16)
    w1 = params["w1"].reshape(9, C, hidden).astype(bf16)
    w2 = params["w2"].reshape(9, hidden, hidden).astype(bf16)
    w3 = jnp.pad(params["w3"].reshape(9, hidden, C),
                 ((0, 0), (0, 0), (0, cout_pad - C))).astype(bf16)
    bt1 = params["bt1"].reshape(1, hidden)
    bt2 = params["bt2"].reshape(1, hidden)
    b1 = params["b1"].reshape(1, hidden)
    b2 = params["b2"].reshape(1, hidden)
    b3 = jnp.pad(params["b3"], (0, cout_pad - C)).reshape(1, cout_pad)

    const2 = lambda b: (0, 0)
    const3 = lambda b: (0, 0, 0)

    out_slab = pl.pallas_call(
        partial(_fused_unet_kernel, H=H, W=W),
        out_shape=jax.ShapeDtypeStruct((B, H * W, cout_pad), jnp.float32),
        grid=(B,),
        in_specs=[
            pl.BlockSpec((1, 1, temb_dim), lambda b: (b, 0, 0)),      # emb
            pl.BlockSpec((1, H, W, C), lambda b: (b, 0, 0, 0)),       # x
            pl.BlockSpec((temb_dim, hidden), const2),                 # wt1
            pl.BlockSpec((1, hidden), const2),                        # bt1
            pl.BlockSpec((hidden, hidden), const2),                   # wt2
            pl.BlockSpec((1, hidden), const2),                        # bt2
            pl.BlockSpec((9, C, hidden), const3),                     # w1
            pl.BlockSpec((1, hidden), const2),                        # b1
            pl.BlockSpec((9, hidden, hidden), const3),                # w2
            pl.BlockSpec((1, hidden), const2),                        # b2
            pl.BlockSpec((9, hidden, cout_pad), const3),              # w3 (padded)
            pl.BlockSpec((1, cout_pad), const2),                      # b3 (padded)
        ],
        out_specs=pl.BlockSpec((1, H * W, cout_pad), lambda b: (b, 0, 0)),
        scratch_shapes=[
            pltpu.VMEM((H + 2, W + 2, C), jnp.float32),       # padded input
            pltpu.VMEM((H + 2, W + 2, hidden), jnp.float32),  # padded h1
            pltpu.VMEM((H + 2, W + 2, hidden), jnp.float32),  # padded h2
        ],
        compiler_params=pltpu.CompilerParams(
            dimension_semantics=("parallel",)),
    )(emb, x, wt1, bt1, wt2, bt2, w1, b1, w2, b2, w3, b3)

    out = out_slab[:, :, :C].reshape(B, H, W, C)
    return jnp.transpose(out, (0, 3, 1, 2))                           # NCHW


# ---------------------------------------------------------------------------
# DDPM wrapper (mirrors the PyTorch module's __init__ / forward semantics)
# ---------------------------------------------------------------------------

def linear_beta_schedule(total_steps=1000, beta_start=1e-4, beta_end=0.02):
    return jnp.linspace(beta_start, beta_end, total_steps, dtype=jnp.float32)


class DenoisingDiffusionModelPallas:
    def __init__(self, unet_params, total_diffusion_steps=1000, var_schedule="linear"):
        self.unet_params = unet_params
        self.total_diffusion_steps = total_diffusion_steps
        self.var_schedule = var_schedule
        if var_schedule == "linear":
            self.betas = linear_beta_schedule(total_diffusion_steps)
        else:
            raise NotImplementedError(f"Variance schedule {var_schedule} is not implemented.")
        self.alpha_bars = jnp.cumprod(1.0 - self.betas)
        self.alpha_bars_sqrt = jnp.sqrt(self.alpha_bars)
        self.one_minus_alpha_bars = 1.0 - self.alpha_bars

    def forward(self, x, t):
        """Predicts noise epsilon(x_t, t); exactly unet(x, t), as in the PyTorch module."""
        return unet_forward(self.unet_params, x, t)

    def _scale_time(self, t):
        return t.astype(jnp.float32) / self.total_diffusion_steps


# ---------------------------------------------------------------------------
# Main
# ---------------------------------------------------------------------------

if __name__ == "__main__":
    B, C, H, W = 2, 4, 16, 16
    HIDDEN, TEMB_DIM = 32, 32

    key = jax.random.PRNGKey(0)
    k_param, k_x, k_t = jax.random.split(key, 3)

    params = init_unet_params(k_param, C, HIDDEN, TEMB_DIM)
    ddpm = DenoisingDiffusionModelPallas(params, total_diffusion_steps=1000)

    x = jax.random.normal(k_x, (B, C, H, W), jnp.float32)
    t_int = jax.random.randint(k_t, (B,), 0, ddpm.total_diffusion_steps)
    # Callers (p_mean_variance / loss) scale t before calling forward; mirror that.
    t = ddpm._scale_time(t_int)

    predicted_noise = jax.jit(ddpm.forward)(x, t)
    predicted_noise = jax.block_until_ready(predicted_noise)

    assert predicted_noise.shape == (B, C, H, W)
    assert predicted_noise.dtype == jnp.float32
    assert bool(jnp.all(jnp.isfinite(predicted_noise)))

    print("KERNEL_OK")
</pallas_src>

<mosaic_0001>
module attributes {stable_mosaic.version = 11 : i64} {
  func.func @_fused_unet_kernel(%arg0: i32, %arg1: memref<1x1x32xf32, #tpu.memory_space<vmem>>, %arg2: memref<1x16x16x4xf32, #tpu.memory_space<vmem>>, %arg3: memref<32x32xbf16, #tpu.memory_space<vmem>>, %arg4: memref<1x32xf32, #tpu.memory_space<vmem>>, %arg5: memref<32x32xbf16, #tpu.memory_space<vmem>>, %arg6: memref<1x32xf32, #tpu.memory_space<vmem>>, %arg7: memref<9x4x32xbf16, #tpu.memory_space<vmem>>, %arg8: memref<1x32xf32, #tpu.memory_space<vmem>>, %arg9: memref<9x32x32xbf16, #tpu.memory_space<vmem>>, %arg10: memref<1x32xf32, #tpu.memory_space<vmem>>, %arg11: memref<9x32x128xbf16, #tpu.memory_space<vmem>>, %arg12: memref<1x128xf32, #tpu.memory_space<vmem>>, %arg13: memref<1x256x128xf32, #tpu.memory_space<vmem>>, %arg14: memref<18x18x4xf32, #tpu.memory_space<vmem>>, %arg15: memref<18x18x32xf32, #tpu.memory_space<vmem>>, %arg16: memref<18x18x32xf32, #tpu.memory_space<vmem>>) attributes {dimension_semantics = [#tpu.dimension_semantics<parallel>], iteration_bounds = array<i64: 2>, scalar_prefetch = 0 : i64, scratch_operands = 3 : i64, tpu.core_type = #tpu.core_type<tc>, window_params = [{transform_indices = @transform_0, window_bounds = array<i64: 1, 1, 32>}, {transform_indices = @transform_1, window_bounds = array<i64: 1, 16, 16, 4>}, {pipeline_mode = #tpu.pipeline_mode<synchronous>, transform_indices = @transform_2, window_bounds = array<i64: 32, 32>}, {pipeline_mode = #tpu.pipeline_mode<synchronous>, transform_indices = @transform_3, window_bounds = array<i64: 1, 32>}, {pipeline_mode = #tpu.pipeline_mode<synchronous>, transform_indices = @transform_4, window_bounds = array<i64: 32, 32>}, {pipeline_mode = #tpu.pipeline_mode<synchronous>, transform_indices = @transform_5, window_bounds = array<i64: 1, 32>}, {pipeline_mode = #tpu.pipeline_mode<synchronous>, transform_indices = @transform_6, window_bounds = array<i64: 9, 4, 32>}, {pipeline_mode = #tpu.pipeline_mode<synchronous>, transform_indices = @transform_7, window_bounds = array<i64: 1, 32>}, {pipeline_mode = #tpu.pipeline_mode<synchronous>, transform_indices = @transform_8, window_bounds = array<i64: 9, 32, 32>}, {pipeline_mode = #tpu.pipeline_mode<synchronous>, transform_indices = @transform_9, window_bounds = array<i64: 1, 32>}, {pipeline_mode = #tpu.pipeline_mode<synchronous>, transform_indices = @transform_10, window_bounds = array<i64: 9, 32, 128>}, {pipeline_mode = #tpu.pipeline_mode<synchronous>, transform_indices = @transform_11, window_bounds = array<i64: 1, 128>}, {transform_indices = @transform_12, window_bounds = array<i64: 1, 256, 128>}]} {
    %c0 = arith.constant 0 : index
    %c0_0 = arith.constant 0 : index
    %c0_1 = arith.constant 0 : index
    %0 = vector.load %arg1[%c0, %c0_0, %c0_1] : memref<1x1x32xf32, #tpu.memory_space<vmem>>, vector<1x1x32xf32>
    %1 = vector.shape_cast %0 : vector<1x1x32xf32> to vector<1x32xf32>
    %2 = arith.truncf %1 : vector<1x32xf32> to vector<1x32xbf16>
    %c0_2 = arith.constant 0 : index
    %c0_3 = arith.constant 0 : index
    %3 = vector.load %arg3[%c0_2, %c0_3] : memref<32x32xbf16, #tpu.memory_space<vmem>>, vector<32x32xbf16>
    %cst = arith.constant dense<0.000000e+00> : vector<1x32xf32>
    %4 = tpu.matmul %2, %3, %cst {dimension_numbers = #tpu.dot_dimension_numbers<[1], [0], [0], [1], [0, 0, 1, 1], [], []>} : vector<1x32xbf16>, vector<32x32xbf16>, vector<1x32xf32> -> vector<1x32xf32>
    %c0_4 = arith.constant 0 : index
    %c0_5 = arith.constant 0 : index
    %5 = vector.load %arg4[%c0_4, %c0_5] : memref<1x32xf32, #tpu.memory_space<vmem>>, vector<1x32xf32>
    %6 = arith.addf %4, %5 : vector<1x32xf32>
    %cst_6 = arith.constant 0.000000e+00 : f32
    %7 = vector.broadcast %cst_6 : f32 to vector<1x32xf32>
    %8 = arith.subf %7, %6 : vector<1x32xf32>
    %9 = math.exp %8 : vector<1x32xf32>
    %cst_7 = arith.constant 1.000000e+00 : f32
    %10 = vector.broadcast %cst_7 : f32 to vector<1x32xf32>
    %11 = arith.addf %10, %9 : vector<1x32xf32>
    %12 = tpu.reciprocal %11 {approx = true} : vector<1x32xf32> -> vector<1x32xf32>
    %13 = arith.mulf %6, %12 : vector<1x32xf32>
    %14 = arith.truncf %13 : vector<1x32xf32> to vector<1x32xbf16>
    %c0_8 = arith.constant 0 : index
    %c0_9 = arith.constant 0 : index
    %15 = vector.load %arg5[%c0_8, %c0_9] : memref<32x32xbf16, #tpu.memory_space<vmem>>, vector<32x32xbf16>
    %cst_10 = arith.constant dense<0.000000e+00> : vector<1x32xf32>
    %16 = tpu.matmul %14, %15, %cst_10 {dimension_numbers = #tpu.dot_dimension_numbers<[1], [0], [0], [1], [0, 0, 1, 1], [], []>} : vector<1x32xbf16>, vector<32x32xbf16>, vector<1x32xf32> -> vector<1x32xf32>
    %c0_11 = arith.constant 0 : index
    %c0_12 = arith.constant 0 : index
    %17 = vector.load %arg6[%c0_11, %c0_12] : memref<1x32xf32, #tpu.memory_space<vmem>>, vector<1x32xf32>
    %18 = arith.addf %16, %17 : vector<1x32xf32>
    %cst_13 = arith.constant 0.000000e+00 : f32
    %19 = vector.broadcast %cst_13 : f32 to vector<18x18x4xf32>
    %c0_14 = arith.constant 0 : index
    %c0_15 = arith.constant 0 : index
    %c0_16 = arith.constant 0 : index
    %20 = vector.load %arg14[%c0_14, %c0_15, %c0_16] : memref<18x18x4xf32, #tpu.memory_space<vmem>>, vector<18x18x4xf32>
    tpu.vector_store %arg14[%c0_14, %c0_15, %c0_16], %19 {strides = array<i32>} : memref<18x18x4xf32, #tpu.memory_space<vmem>>, vector<18x18x4xf32>,
    %c0_17 = arith.constant 0 : index
    %c0_18 = arith.constant 0 : index
    %c0_19 = arith.constant 0 : index
    %c0_20 = arith.constant 0 : index
    %21 = vector.load %arg2[%c0_17, %c0_18, %c0_19, %c0_20] : memref<1x16x16x4xf32, #tpu.memory_space<vmem>>, vector<1x16x16x4xf32>
    %22 = vector.shape_cast %21 : vector<1x16x16x4xf32> to vector<16x16x4xf32>
    %c1 = arith.constant 1 : index
    %c1_21 = arith.constant 1 : index
    %c0_22 = arith.constant 0 : index
    %23 = vector.load %arg14[%c1, %c1_21, %c0_22] : memref<18x18x4xf32, #tpu.memory_space<vmem>>, vector<16x16x4xf32>
    tpu.vector_store %arg14[%c1, %c1_21, %c0_22], %22 {strides = array<i32>} : memref<18x18x4xf32, #tpu.memory_space<vmem>>, vector<16x16x4xf32>,
    %cst_23 = arith.constant 0.000000e+00 : f32
    %24 = vector.broadcast %cst_23 : f32 to vector<256x32xf32>
    %c0_24 = arith.constant 0 : index
    %c0_25 = arith.constant 0 : index
    %c0_26 = arith.constant 0 : index
    %25 = vector.load %arg14[%c0_24, %c0_25, %c0_26] : memref<18x18x4xf32, #tpu.memory_space<vmem>>, vector<16x16x4xf32>
    %26 = vector.shape_cast %25 : vector<16x16x4xf32> to vector<256x4xf32>
    %27 = arith.truncf %26 : vector<256x4xf32> to vector<256x4xbf16>
    %c0_27 = arith.constant 0 : index
    %c0_28 = arith.constant 0 : index
    %c0_29 = arith.constant 0 : index
    %28 = vector.load %arg7[%c0_27, %c0_28, %c0_29] : memref<9x4x32xbf16, #tpu.memory_space<vmem>>, vector<1x4x32xbf16>
    %29 = vector.shape_cast %28 : vector<1x4x32xbf16> to vector<4x32xbf16>
    %cst_30 = arith.constant dense<0.000000e+00> : vector<256x32xf32>
    %30 = tpu.matmul %27, %29, %cst_30 {dimension_numbers = #tpu.dot_dimension_numbers<[1], [0], [0], [1], [0, 0, 1, 1], [], []>} : vector<256x4xbf16>, vector<4x32xbf16>, vector<256x32xf32> -> vector<256x32xf32>
    %31 = arith.addf %24, %30 : vector<256x32xf32>
    %c0_31 = arith.constant 0 : index
    %c1_32 = arith.constant 1 : index
    %c0_33 = arith.constant 0 : index
    %32 = vector.load %arg14[%c0_31, %c1_32, %c0_33] : memref<18x18x4xf32, #tpu.memory_space<vmem>>, vector<16x16x4xf32>
    %33 = vector.shape_cast %32 : vector<16x16x4xf32> to vector<256x4xf32>
    %34 = arith.truncf %33 : vector<256x4xf32> to vector<256x4xbf16>
    %c1_34 = arith.constant 1 : index
    %c0_35 = arith.constant 0 : index
    %c0_36 = arith.constant 0 : index
    %35 = vector.load %arg7[%c1_34, %c0_35, %c0_36] : memref<9x4x32xbf16, #tpu.memory_space<vmem>>, vector<1x4x32xbf16>
    %36 = vector.shape_cast %35 : vector<1x4x32xbf16> to vector<4x32xbf16>
    %cst_37 = arith.constant dense<0.000000e+00> : vector<256x32xf32>
    %37 = tpu.matmul %34, %36, %cst_37 {dimension_numbers = #tpu.dot_dimension_numbers<[1], [0], [0], [1], [0, 0, 1, 1], [], []>} : vector<256x4xbf16>, vector<4x32xbf16>, vector<256x32xf32> -> vector<256x32xf32>
    %38 = arith.addf %31, %37 : vector<256x32xf32>
    %c0_38 = arith.constant 0 : index
    %c2 = arith.constant 2 : index
    %c0_39 = arith.constant 0 : index
    %39 = vector.load %arg14[%c0_38, %c2, %c0_39] : memref<18x18x4xf32, #tpu.memory_space<vmem>>, vector<16x16x4xf32>
    %40 = vector.shape_cast %39 : vector<16x16x4xf32> to vector<256x4xf32>
    %41 = arith.truncf %40 : vector<256x4xf32> to vector<256x4xbf16>
    %c2_40 = arith.constant 2 : index
    %c0_41 = arith.constant 0 : index
    %c0_42 = arith.constant 0 : index
    %42 = vector.load %arg7[%c2_40, %c0_41, %c0_42] : memref<9x4x32xbf16, #tpu.memory_space<vmem>>, vector<1x4x32xbf16>
    %43 = vector.shape_cast %42 : vector<1x4x32xbf16> to vector<4x32xbf16>
    %cst_43 = arith.constant dense<0.000000e+00> : vector<256x32xf32>
    %44 = tpu.matmul %41, %43, %cst_43 {dimension_numbers = #tpu.dot_dimension_numbers<[1], [0], [0], [1], [0, 0, 1, 1], [], []>} : vector<256x4xbf16>, vector<4x32xbf16>, vector<256x32xf32> -> vector<256x32xf32>
    %45 = arith.addf %38, %44 : vector<256x32xf32>
    %c1_44 = arith.constant 1 : index
    %c0_45 = arith.constant 0 : index
    %c0_46 = arith.constant 0 : index
    %46 = vector.load %arg14[%c1_44, %c0_45, %c0_46] : memref<18x18x4xf32, #tpu.memory_space<vmem>>, vector<16x16x4xf32>
    %47 = vector.shape_cast %46 : vector<16x16x4xf32> to vector<256x4xf32>
    %48 = arith.truncf %47 : vector<256x4xf32> to vector<256x4xbf16>
    %c3 = arith.constant 3 : index
    %c0_47 = arith.constant 0 : index
    %c0_48 = arith.constant 0 : index
    %49 = vector.load %arg7[%c3, %c0_47, %c0_48] : memref<9x4x32xbf16, #tpu.memory_space<vmem>>, vector<1x4x32xbf16>
    %50 = vector.shape_cast %49 : vector<1x4x32xbf16> to vector<4x32xbf16>
    %cst_49 = arith.constant dense<0.000000e+00> : vector<256x32xf32>
    %51 = tpu.matmul %48, %50, %cst_49 {dimension_numbers = #tpu.dot_dimension_numbers<[1], [0], [0], [1], [0, 0, 1, 1], [], []>} : vector<256x4xbf16>, vector<4x32xbf16>, vector<256x32xf32> -> vector<256x32xf32>
    %52 = arith.addf %45, %51 : vector<256x32xf32>
    %c1_50 = arith.constant 1 : index
    %c1_51 = arith.constant 1 : index
    %c0_52 = arith.constant 0 : index
    %53 = vector.load %arg14[%c1_50, %c1_51, %c0_52] : memref<18x18x4xf32, #tpu.memory_space<vmem>>, vector<16x16x4xf32>
    %54 = vector.shape_cast %53 : vector<16x16x4xf32> to vector<256x4xf32>
    %55 = arith.truncf %54 : vector<256x4xf32> to vector<256x4xbf16>
    %c4 = arith.constant 4 : index
    %c0_53 = arith.constant 0 : index
    %c0_54 = arith.constant 0 : index
    %56 = vector.load %arg7[%c4, %c0_53, %c0_54] : memref<9x4x32xbf16, #tpu.memory_space<vmem>>, vector<1x4x32xbf16>
    %57 = vector.shape_cast %56 : vector<1x4x32xbf16> to vector<4x32xbf16>
    %cst_55 = arith.constant dense<0.000000e+00> : vector<256x32xf32>
    %58 = tpu.matmul %55, %57, %cst_55 {dimension_numbers = #tpu.dot_dimension_numbers<[1], [0], [0], [1], [0, 0, 1, 1], [], []>} : vector<256x4xbf16>, vector<4x32xbf16>, vector<256x32xf32> -> vector<256x32xf32>
    %59 = arith.addf %52, %58 : vector<256x32xf32>
    %c1_56 = arith.constant 1 : index
    %c2_57 = arith.constant 2 : index
    %c0_58 = arith.constant 0 : index
    %60 = vector.load %arg14[%c1_56, %c2_57, %c0_58] : memref<18x18x4xf32, #tpu.memory_space<vmem>>, vector<16x16x4xf32>
    %61 = vector.shape_cast %60 : vector<16x16x4xf32> to vector<256x4xf32>
    %62 = arith.truncf %61 : vector<256x4xf32> to vector<256x4xbf16>
    %c5 = arith.constant 5 : index
    %c0_59 = arith.constant 0 : index
    %c0_60 = arith.constant 0 : index
    %63 = vector.load %arg7[%c5, %c0_59, %c0_60] : memref<9x4x32xbf16, #tpu.memory_space<vmem>>, vector<1x4x32xbf16>
    %64 = vector.shape_cast %63 : vector<1x4x32xbf16> to vector<4x32xbf16>
    %cst_61 = arith.constant dense<0.000000e+00> : vector<256x32xf32>
    %65 = tpu.matmul %62, %64, %cst_61 {dimension_numbers = #tpu.dot_dimension_numbers<[1], [0], [0], [1], [0, 0, 1, 1], [], []>} : vector<256x4xbf16>, vector<4x32xbf16>, vector<256x32xf32> -> vector<256x32xf32>
    %66 = arith.addf %59, %65 : vector<256x32xf32>
    %c2_62 = arith.constant 2 : index
    %c0_63 = arith.constant 0 : index
    %c0_64 = arith.constant 0 : index
    %67 = vector.load %arg14[%c2_62, %c0_63, %c0_64] : memref<18x18x4xf32, #tpu.memory_space<vmem>>, vector<16x16x4xf32>
    %68 = vector.shape_cast %67 : vector<16x16x4xf32> to vector<256x4xf32>
    %69 = arith.truncf %68 : vector<256x4xf32> to vector<256x4xbf16>
    %c6 = arith.constant 6 : index
    %c0_65 = arith.constant 0 : index
    %c0_66 = arith.constant 0 : index
    %70 = vector.load %arg7[%c6, %c0_65, %c0_66] : memref<9x4x32xbf16, #tpu.memory_space<vmem>>, vector<1x4x32xbf16>
    %71 = vector.shape_cast %70 : vector<1x4x32xbf16> to vector<4x32xbf16>
    %cst_67 = arith.constant dense<0.000000e+00> : vector<256x32xf32>
    %72 = tpu.matmul %69, %71, %cst_67 {dimension_numbers = #tpu.dot_dimension_numbers<[1], [0], [0], [1], [0, 0, 1, 1], [], []>} : vector<256x4xbf16>, vector<4x32xbf16>, vector<256x32xf32> -> vector<256x32xf32>
    %73 = arith.addf %66, %72 : vector<256x32xf32>
    %c2_68 = arith.constant 2 : index
    %c1_69 = arith.constant 1 : index
    %c0_70 = arith.constant 0 : index
    %74 = vector.load %arg14[%c2_68, %c1_69, %c0_70] : memref<18x18x4xf32, #tpu.memory_space<vmem>>, vector<16x16x4xf32>
    %75 = vector.shape_cast %74 : vector<16x16x4xf32> to vector<256x4xf32>
    %76 = arith.truncf %75 : vector<256x4xf32> to vector<256x4xbf16>
    %c7 = arith.constant 7 : index
    %c0_71 = arith.constant 0 : index
    %c0_72 = arith.constant 0 : index
    %77 = vector.load %arg7[%c7, %c0_71, %c0_72] : memref<9x4x32xbf16, #tpu.memory_space<vmem>>, vector<1x4x32xbf16>
    %78 = vector.shape_cast %77 : vector<1x4x32xbf16> to vector<4x32xbf16>
    %cst_73 = arith.constant dense<0.000000e+00> : vector<256x32xf32>
    %79 = tpu.matmul %76, %78, %cst_73 {dimension_numbers = #tpu.dot_dimension_numbers<[1], [0], [0], [1], [0, 0, 1, 1], [], []>} : vector<256x4xbf16>, vector<4x32xbf16>, vector<256x32xf32> -> vector<256x32xf32>
    %80 = arith.addf %73, %79 : vector<256x32xf32>
    %c2_74 = arith.constant 2 : index
    %c2_75 = arith.constant 2 : index
    %c0_76 = arith.constant 0 : index
    %81 = vector.load %arg14[%c2_74, %c2_75, %c0_76] : memref<18x18x4xf32, #tpu.memory_space<vmem>>, vector<16x16x4xf32>
    %82 = vector.shape_cast %81 : vector<16x16x4xf32> to vector<256x4xf32>
    %83 = arith.truncf %82 : vector<256x4xf32> to vector<256x4xbf16>
    %c8 = arith.constant 8 : index
    %c0_77 = arith.constant 0 : index
    %c0_78 = arith.constant 0 : index
    %84 = vector.load %arg7[%c8, %c0_77, %c0_78] : memref<9x4x32xbf16, #tpu.memory_space<vmem>>, vector<1x4x32xbf16>
    %85 = vector.shape_cast %84 : vector<1x4x32xbf16> to vector<4x32xbf16>
    %cst_79 = arith.constant dense<0.000000e+00> : vector<256x32xf32>
    %86 = tpu.matmul %83, %85, %cst_79 {dimension_numbers = #tpu.dot_dimension_numbers<[1], [0], [0], [1], [0, 0, 1, 1], [], []>} : vector<256x4xbf16>, vector<4x32xbf16>, vector<256x32xf32> -> vector<256x32xf32>
    %87 = arith.addf %80, %86 : vector<256x32xf32>
    %c0_80 = arith.constant 0 : index
    %c0_81 = arith.constant 0 : index
    %88 = vector.load %arg8[%c0_80, %c0_81] : memref<1x32xf32, #tpu.memory_space<vmem>>, vector<1x32xf32>
    %89 = vector.broadcast %88 : vector<1x32xf32> to vector<256x32xf32>
    %90 = arith.addf %87, %89 : vector<256x32xf32>
    %91 = vector.broadcast %18 : vector<1x32xf32> to vector<256x32xf32>
    %92 = arith.addf %90, %91 : vector<256x32xf32>
    %cst_82 = arith.constant 0.000000e+00 : f32
    %93 = vector.broadcast %cst_82 : f32 to vector<256x32xf32>
    %94 = arith.subf %93, %92 : vector<256x32xf32>
    %95 = math.exp %94 : vector<256x32xf32>
    %cst_83 = arith.constant 1.000000e+00 : f32
    %96 = vector.broadcast %cst_83 : f32 to vector<256x32xf32>
    %97 = arith.addf %96, %95 : vector<256x32xf32>
    %98 = tpu.reciprocal %97 {approx = true} : vector<256x32xf32> -> vector<256x32xf32>
    %99 = arith.mulf %92, %98 : vector<256x32xf32>
    %cst_84 = arith.constant 0.000000e+00 : f32
    %100 = vector.broadcast %cst_84 : f32 to vector<18x18x32xf32>
    %c0_85 = arith.constant 0 : index
    %c0_86 = arith.constant 0 : index
    %c0_87 = arith.constant 0 : index
    %101 = vector.load %arg15[%c0_85, %c0_86, %c0_87] : memref<18x18x32xf32, #tpu.memory_space<vmem>>, vector<18x18x32xf32>
    tpu.vector_store %arg15[%c0_85, %c0_86, %c0_87], %100 {strides = array<i32>} : memref<18x18x32xf32, #tpu.memory_space<vmem>>, vector<18x18x32xf32>,
    %102 = vector.shape_cast %99 : vector<256x32xf32> to vector<16x16x32xf32>
    %c1_88 = arith.constant 1 : index
    %c1_89 = arith.constant 1 : index
    %c0_90 = arith.constant 0 : index
    %103 = vector.load %arg15[%c1_88, %c1_89, %c0_90] : memref<18x18x32xf32, #tpu.memory_space<vmem>>, vector<16x16x32xf32>
    tpu.vector_store %arg15[%c1_88, %c1_89, %c0_90], %102 {strides = array<i32>} : memref<18x18x32xf32, #tpu.memory_space<vmem>>, vector<16x16x32xf32>,
    %cst_91 = arith.constant 0.000000e+00 : f32
    %104 = vector.broadcast %cst_91 : f32 to vector<256x32xf32>
    %c0_92 = arith.constant 0 : index
    %c0_93 = arith.constant 0 : index
    %c0_94 = arith.constant 0 : index
    %105 = vector.load %arg15[%c0_92, %c0_93, %c0_94] : memref<18x18x32xf32, #tpu.memory_space<vmem>>, vector<16x16x32xf32>
    %106 = vector.shape_cast %105 : vector<16x16x32xf32> to vector<256x32xf32>
    %107 = arith.truncf %106 : vector<256x32xf32> to vector<256x32xbf16>
    %c0_95 = arith.constant 0 : index
    %c0_96 = arith.constant 0 : index
    %c0_97 = arith.constant 0 : index
    %108 = vector.load %arg9[%c0_95, %c0_96, %c0_97] : memref<9x32x32xbf16, #tpu.memory_space<vmem>>, vector<1x32x32xbf16>
    %109 = vector.shape_cast %108 : vector<1x32x32xbf16> to vector<32x32xbf16>
    %cst_98 = arith.constant dense<0.000000e+00> : vector<256x32xf32>
    %110 = tpu.matmul %107, %109, %cst_98 {dimension_numbers = #tpu.dot_dimension_numbers<[1], [0], [0], [1], [0, 0, 1, 1], [], []>} : vector<256x32xbf16>, vector<32x32xbf16>, vector<256x32xf32> -> vector<256x32xf32>
    %111 = arith.addf %104, %110 : vector<256x32xf32>
    %c0_99 = arith.constant 0 : index
    %c1_100 = arith.constant 1 : index
    %c0_101 = arith.constant 0 : index
    %112 = vector.load %arg15[%c0_99, %c1_100, %c0_101] : memref<18x18x32xf32, #tpu.memory_space<vmem>>, vector<16x16x32xf32>
    %113 = vector.shape_cast %112 : vector<16x16x32xf32> to vector<256x32xf32>
    %114 = arith.truncf %113 : vector<256x32xf32> to vector<256x32xbf16>
    %c1_102 = arith.constant 1 : index
    %c0_103 = arith.constant 0 : index
    %c0_104 = arith.constant 0 : index
    %115 = vector.load %arg9[%c1_102, %c0_103, %c0_104] : memref<9x32x32xbf16, #tpu.memory_space<vmem>>, vector<1x32x32xbf16>
    %116 = vector.shape_cast %115 : vector<1x32x32xbf16> to vector<32x32xbf16>
    %cst_105 = arith.constant dense<0.000000e+00> : vector<256x32xf32>
    %117 = tpu.matmul %114, %116, %cst_105 {dimension_numbers = #tpu.dot_dimension_numbers<[1], [0], [0], [1], [0, 0, 1, 1], [], []>} : vector<256x32xbf16>, vector<32x32xbf16>, vector<256x32xf32> -> vector<256x32xf32>
    %118 = arith.addf %111, %117 : vector<256x32xf32>
    %c0_106 = arith.constant 0 : index
    %c2_107 = arith.constant 2 : index
    %c0_108 = arith.constant 0 : index
    %119 = vector.load %arg15[%c0_106, %c2_107, %c0_108] : memref<18x18x32xf32, #tpu.memory_space<vmem>>, vector<16x16x32xf32>
    %120 = vector.shape_cast %119 : vector<16x16x32xf32> to vector<256x32xf32>
    %121 = arith.truncf %120 : vector<256x32xf32> to vector<256x32xbf16>
    %c2_109 = arith.constant 2 : index
    %c0_110 = arith.constant 0 : index
    %c0_111 = arith.constant 0 : index
    %122 = vector.load %arg9[%c2_109, %c0_110, %c0_111] : memref<9x32x32xbf16, #tpu.memory_space<vmem>>, vector<1x32x32xbf16>
    %123 = vector.shape_cast %122 : vector<1x32x32xbf16> to vector<32x32xbf16>
    %cst_112 = arith.constant dense<0.000000e+00> : vector<256x32xf32>
    %124 = tpu.matmul %121, %123, %cst_112 {dimension_numbers = #tpu.dot_dimension_numbers<[1], [0], [0], [1], [0, 0, 1, 1], [], []>} : vector<256x32xbf16>, vector<32x32xbf16>, vector<256x32xf32> -> vector<256x32xf32>
    %125 = arith.addf %118, %124 : vector<256x32xf32>
    %c1_113 = arith.constant 1 : index
    %c0_114 = arith.constant 0 : index
    %c0_115 = arith.constant 0 : index
    %126 = vector.load %arg15[%c1_113, %c0_114, %c0_115] : memref<18x18x32xf32, #tpu.memory_space<vmem>>, vector<16x16x32xf32>
    %127 = vector.shape_cast %126 : vector<16x16x32xf32> to vector<256x32xf32>
    %128 = arith.truncf %127 : vector<256x32xf32> to vector<256x32xbf16>
    %c3_116 = arith.constant 3 : index
    %c0_117 = arith.constant 0 : index
    %c0_118 = arith.constant 0 : index
    %129 = vector.load %arg9[%c3_116, %c0_117, %c0_118] : memref<9x32x32xbf16, #tpu.memory_space<vmem>>, vector<1x32x32xbf16>
    %130 = vector.shape_cast %129 : vector<1x32x32xbf16> to vector<32x32xbf16>
    %cst_119 = arith.constant dense<0.000000e+00> : vector<256x32xf32>
    %131 = tpu.matmul %128, %130, %cst_119 {dimension_numbers = #tpu.dot_dimension_numbers<[1], [0], [0], [1], [0, 0, 1, 1], [], []>} : vector<256x32xbf16>, vector<32x32xbf16>, vector<256x32xf32> -> vector<256x32xf32>
    %132 = arith.addf %125, %131 : vector<256x32xf32>
    %c1_120 = arith.constant 1 : index
    %c1_121 = arith.constant 1 : index
    %c0_122 = arith.constant 0 : index
    %133 = vector.load %arg15[%c1_120, %c1_121, %c0_122] : memref<18x18x32xf32, #tpu.memory_space<vmem>>, vector<16x16x32xf32>
    %134 = vector.shape_cast %133 : vector<16x16x32xf32> to vector<256x32xf32>
    %135 = arith.truncf %134 : vector<256x32xf32> to vector<256x32xbf16>
    %c4_123 = arith.constant 4 : index
    %c0_124 = arith.constant 0 : index
    %c0_125 = arith.constant 0 : index
    %136 = vector.load %arg9[%c4_123, %c0_124, %c0_125] : memref<9x32x32xbf16, #tpu.memory_space<vmem>>, vector<1x32x32xbf16>
    %137 = vector.shape_cast %136 : vector<1x32x32xbf16> to vector<32x32xbf16>
    %cst_126 = arith.constant dense<0.000000e+00> : vector<256x32xf32>
    %138 = tpu.matmul %135, %137, %cst_126 {dimension_numbers = #tpu.dot_dimension_numbers<[1], [0], [0], [1], [0, 0, 1, 1], [], []>} : vector<256x32xbf16>, vector<32x32xbf16>, vector<256x32xf32> -> vector<256x32xf32>
    %139 = arith.addf %132, %138 : vector<256x32xf32>
    %c1_127 = arith.constant 1 : index
    %c2_128 = arith.constant 2 : index
    %c0_129 = arith.constant 0 : index
    %140 = vector.load %arg15[%c1_127, %c2_128, %c0_129] : memref<18x18x32xf32, #tpu.memory_space<vmem>>, vector<16x16x32xf32>
    %141 = vector.shape_cast %140 : vector<16x16x32xf32> to vector<256x32xf32>
    %142 = arith.truncf %141 : vector<256x32xf32> to vector<256x32xbf16>
    %c5_130 = arith.constant 5 : index
    %c0_131 = arith.constant 0 : index
    %c0_132 = arith.constant 0 : index
    %143 = vector.load %arg9[%c5_130, %c0_131, %c0_132] : memref<9x32x32xbf16, #tpu.memory_space<vmem>>, vector<1x32x32xbf16>
    %144 = vector.shape_cast %143 : vector<1x32x32xbf16> to vector<32x32xbf16>
    %cst_133 = arith.constant dense<0.000000e+00> : vector<256x32xf32>
    %145 = tpu.matmul %142, %144, %cst_133 {dimension_numbers = #tpu.dot_dimension_numbers<[1], [0], [0], [1], [0, 0, 1, 1], [], []>} : vector<256x32xbf16>, vector<32x32xbf16>, vector<256x32xf32> -> vector<256x32xf32>
    %146 = arith.addf %139, %145 : vector<256x32xf32>
    %c2_134 = arith.constant 2 : index
    %c0_135 = arith.constant 0 : index
    %c0_136 = arith.constant 0 : index
    %147 = vector.load %arg15[%c2_134, %c0_135, %c0_136] : memref<18x18x32xf32, #tpu.memory_space<vmem>>, vector<16x16x32xf32>
    %148 = vector.shape_cast %147 : vector<16x16x32xf32> to vector<256x32xf32>
    %149 = arith.truncf %148 : vector<256x32xf32> to vector<256x32xbf16>
    %c6_137 = arith.constant 6 : index
    %c0_138 = arith.constant 0 : index
    %c0_139 = arith.constant 0 : index
    %150 = vector.load %arg9[%c6_137, %c0_138, %c0_139] : memref<9x32x32xbf16, #tpu.memory_space<vmem>>, vector<1x32x32xbf16>
    %151 = vector.shape_cast %150 : vector<1x32x32xbf16> to vector<32x32xbf16>
    %cst_140 = arith.constant dense<0.000000e+00> : vector<256x32xf32>
    %152 = tpu.matmul %149, %151, %cst_140 {dimension_numbers = #tpu.dot_dimension_numbers<[1], [0], [0], [1], [0, 0, 1, 1], [], []>} : vector<256x32xbf16>, vector<32x32xbf16>, vector<256x32xf32> -> vector<256x32xf32>
    %153 = arith.addf %146, %152 : vector<256x32xf32>
    %c2_141 = arith.constant 2 : index
    %c1_142 = arith.constant 1 : index
    %c0_143 = arith.constant 0 : index
    %154 = vector.load %arg15[%c2_141, %c1_142, %c0_143] : memref<18x18x32xf32, #tpu.memory_space<vmem>>, vector<16x16x32xf32>
    %155 = vector.shape_cast %154 : vector<16x16x32xf32> to vector<256x32xf32>
    %156 = arith.truncf %155 : vector<256x32xf32> to vector<256x32xbf16>
    %c7_144 = arith.constant 7 : index
    %c0_145 = arith.constant 0 : index
    %c0_146 = arith.constant 0 : index
    %157 = vector.load %arg9[%c7_144, %c0_145, %c0_146] : memref<9x32x32xbf16, #tpu.memory_space<vmem>>, vector<1x32x32xbf16>
    %158 = vector.shape_cast %157 : vector<1x32x32xbf16> to vector<32x32xbf16>
    %cst_147 = arith.constant dense<0.000000e+00> : vector<256x32xf32>
    %159 = tpu.matmul %156, %158, %cst_147 {dimension_numbers = #tpu.dot_dimension_numbers<[1], [0], [0], [1], [0, 0, 1, 1], [], []>} : vector<256x32xbf16>, vector<32x32xbf16>, vector<256x32xf32> -> vector<256x32xf32>
    %160 = arith.addf %153, %159 : vector<256x32xf32>
    %c2_148 = arith.constant 2 : index
    %c2_149 = arith.constant 2 : index
    %c0_150 = arith.constant 0 : index
    %161 = vector.load %arg15[%c2_148, %c2_149, %c0_150] : memref<18x18x32xf32, #tpu.memory_space<vmem>>, vector<16x16x32xf32>
    %162 = vector.shape_cast %161 : vector<16x16x32xf32> to vector<256x32xf32>
    %163 = arith.truncf %162 : vector<256x32xf32> to vector<256x32xbf16>
    %c8_151 = arith.constant 8 : index
    %c0_152 = arith.constant 0 : index
    %c0_153 = arith.constant 0 : index
    %164 = vector.load %arg9[%c8_151, %c0_152, %c0_153] : memref<9x32x32xbf16, #tpu.memory_space<vmem>>, vector<1x32x32xbf16>
    %165 = vector.shape_cast %164 : vector<1x32x32xbf16> to vector<32x32xbf16>
    %cst_154 = arith.constant dense<0.000000e+00> : vector<256x32xf32>
    %166 = tpu.matmul %163, %165, %cst_154 {dimension_numbers = #tpu.dot_dimension_numbers<[1], [0], [0], [1], [0, 0, 1, 1], [], []>} : vector<256x32xbf16>, vector<32x32xbf16>, vector<256x32xf32> -> vector<256x32xf32>
    %167 = arith.addf %160, %166 : vector<256x32xf32>
    %c0_155 = arith.constant 0 : index
    %c0_156 = arith.constant 0 : index
    %168 = vector.load %arg10[%c0_155, %c0_156] : memref<1x32xf32, #tpu.memory_space<vmem>>, vector<1x32xf32>
    %169 = vector.broadcast %168 : vector<1x32xf32> to vector<256x32xf32>
    %170 = arith.addf %167, %169 : vector<256x32xf32>
    %cst_157 = arith.constant 0.000000e+00 : f32
    %171 = vector.broadcast %cst_157 : f32 to vector<256x32xf32>
    %172 = arith.subf %171, %170 : vector<256x32xf32>
    %173 = math.exp %172 : vector<256x32xf32>
    %cst_158 = arith.constant 1.000000e+00 : f32
    %174 = vector.broadcast %cst_158 : f32 to vector<256x32xf32>
    %175 = arith.addf %174, %173 : vector<256x32xf32>
    %176 = tpu.reciprocal %175 {approx = true} : vector<256x32xf32> -> vector<256x32xf32>
    %177 = arith.mulf %170, %176 : vector<256x32xf32>
    %cst_159 = arith.constant 0.000000e+00 : f32
    %178 = vector.broadcast %cst_159 : f32 to vector<18x18x32xf32>
    %c0_160 = arith.constant 0 : index
    %c0_161 = arith.constant 0 : index
    %c0_162 = arith.constant 0 : index
    %179 = vector.load %arg16[%c0_160, %c0_161, %c0_162] : memref<18x18x32xf32, #tpu.memory_space<vmem>>, vector<18x18x32xf32>
    tpu.vector_store %arg16[%c0_160, %c0_161, %c0_162], %178 {strides = array<i32>} : memref<18x18x32xf32, #tpu.memory_space<vmem>>, vector<18x18x32xf32>,
    %180 = vector.shape_cast %177 : vector<256x32xf32> to vector<16x16x32xf32>
    %c1_163 = arith.constant 1 : index
    %c1_164 = arith.constant 1 : index
    %c0_165 = arith.constant 0 : index
    %181 = vector.load %arg16[%c1_163, %c1_164, %c0_165] : memref<18x18x32xf32, #tpu.memory_space<vmem>>, vector<16x16x32xf32>
    tpu.vector_store %arg16[%c1_163, %c1_164, %c0_165], %180 {strides = array<i32>} : memref<18x18x32xf32, #tpu.memory_space<vmem>>, vector<16x16x32xf32>,
    %cst_166 = arith.constant 0.000000e+00 : f32
    %182 = vector.broadcast %cst_166 : f32 to vector<256x128xf32>
    %c0_167 = arith.constant 0 : index
    %c0_168 = arith.constant 0 : index
    %c0_169 = arith.constant 0 : index
    %183 = vector.load %arg16[%c0_167, %c0_168, %c0_169] : memref<18x18x32xf32, #tpu.memory_space<vmem>>, vector<16x16x32xf32>
    %184 = vector.shape_cast %183 : vector<16x16x32xf32> to vector<256x32xf32>
    %185 = arith.truncf %184 : vector<256x32xf32> to vector<256x32xbf16>
    %c0_170 = arith.constant 0 : index
    %c0_171 = arith.constant 0 : index
    %c0_172 = arith.constant 0 : index
    %186 = vector.load %arg11[%c0_170, %c0_171, %c0_172] : memref<9x32x128xbf16, #tpu.memory_space<vmem>>, vector<1x32x128xbf16>
    %187 = vector.shape_cast %186 : vector<1x32x128xbf16> to vector<32x128xbf16>
    %cst_173 = arith.constant dense<0.000000e+00> : vector<256x128xf32>
    %188 = tpu.matmul %185, %187, %cst_173 {dimension_numbers = #tpu.dot_dimension_numbers<[1], [0], [0], [1], [0, 0, 1, 1], [], []>} : vector<256x32xbf16>, vector<32x128xbf16>, vector<256x128xf32> -> vector<256x128xf32>
    %189 = arith.addf %182, %188 : vector<256x128xf32>
    %c0_174 = arith.constant 0 : index
    %c1_175 = arith.constant 1 : index
    %c0_176 = arith.constant 0 : index
    %190 = vector.load %arg16[%c0_174, %c1_175, %c0_176] : memref<18x18x32xf32, #tpu.memory_space<vmem>>, vector<16x16x32xf32>
    %191 = vector.shape_cast %190 : vector<16x16x32xf32> to vector<256x32xf32>
    %192 = arith.truncf %191 : vector<256x32xf32> to vector<256x32xbf16>
    %c1_177 = arith.constant 1 : index
    %c0_178 = arith.constant 0 : index
    %c0_179 = arith.constant 0 : index
    %193 = vector.load %arg11[%c1_177, %c0_178, %c0_179] : memref<9x32x128xbf16, #tpu.memory_space<vmem>>, vector<1x32x128xbf16>
    %194 = vector.shape_cast %193 : vector<1x32x128xbf16> to vector<32x128xbf16>
    %cst_180 = arith.constant dense<0.000000e+00> : vector<256x128xf32>
    %195 = tpu.matmul %192, %194, %cst_180 {dimension_numbers = #tpu.dot_dimension_numbers<[1], [0], [0], [1], [0, 0, 1, 1], [], []>} : vector<256x32xbf16>, vector<32x128xbf16>, vector<256x128xf32> -> vector<256x128xf32>
    %196 = arith.addf %189, %195 : vector<256x128xf32>
    %c0_181 = arith.constant 0 : index
    %c2_182 = arith.constant 2 : index
    %c0_183 = arith.constant 0 : index
    %197 = vector.load %arg16[%c0_181, %c2_182, %c0_183] : memref<18x18x32xf32, #tpu.memory_space<vmem>>, vector<16x16x32xf32>
    %198 = vector.shape_cast %197 : vector<16x16x32xf32> to vector<256x32xf32>
    %199 = arith.truncf %198 : vector<256x32xf32> to vector<256x32xbf16>
    %c2_184 = arith.constant 2 : index
    %c0_185 = arith.constant 0 : index
    %c0_186 = arith.constant 0 : index
    %200 = vector.load %arg11[%c2_184, %c0_185, %c0_186] : memref<9x32x128xbf16, #tpu.memory_space<vmem>>, vector<1x32x128xbf16>
    %201 = vector.shape_cast %200 : vector<1x32x128xbf16> to vector<32x128xbf16>
    %cst_187 = arith.constant dense<0.000000e+00> : vector<256x128xf32>
    %202 = tpu.matmul %199, %201, %cst_187 {dimension_numbers = #tpu.dot_dimension_numbers<[1], [0], [0], [1], [0, 0, 1, 1], [], []>} : vector<256x32xbf16>, vector<32x128xbf16>, vector<256x128xf32> -> vector<256x128xf32>
    %203 = arith.addf %196, %202 : vector<256x128xf32>
    %c1_188 = arith.constant 1 : index
    %c0_189 = arith.constant 0 : index
    %c0_190 = arith.constant 0 : index
    %204 = vector.load %arg16[%c1_188, %c0_189, %c0_190] : memref<18x18x32xf32, #tpu.memory_space<vmem>>, vector<16x16x32xf32>
    %205 = vector.shape_cast %204 : vector<16x16x32xf32> to vector<256x32xf32>
    %206 = arith.truncf %205 : vector<256x32xf32> to vector<256x32xbf16>
    %c3_191 = arith.constant 3 : index
    %c0_192 = arith.constant 0 : index
    %c0_193 = arith.constant 0 : index
    %207 = vector.load %arg11[%c3_191, %c0_192, %c0_193] : memref<9x32x128xbf16, #tpu.memory_space<vmem>>, vector<1x32x128xbf16>
    %208 = vector.shape_cast %207 : vector<1x32x128xbf16> to vector<32x128xbf16>
    %cst_194 = arith.constant dense<0.000000e+00> : vector<256x128xf32>
    %209 = tpu.matmul %206, %208, %cst_194 {dimension_numbers = #tpu.dot_dimension_numbers<[1], [0], [0], [1], [0, 0, 1, 1], [], []>} : vector<256x32xbf16>, vector<32x128xbf16>, vector<256x128xf32> -> vector<256x128xf32>
    %210 = arith.addf %203, %209 : vector<256x128xf32>
    %c1_195 = arith.constant 1 : index
    %c1_196 = arith.constant 1 : index
    %c0_197 = arith.constant 0 : index
    %211 = vector.load %arg16[%c1_195, %c1_196, %c0_197] : memref<18x18x32xf32, #tpu.memory_space<vmem>>, vector<16x16x32xf32>
    %212 = vector.shape_cast %211 : vector<16x16x32xf32> to vector<256x32xf32>
    %213 = arith.truncf %212 : vector<256x32xf32> to vector<256x32xbf16>
    %c4_198 = arith.constant 4 : index
    %c0_199 = arith.constant 0 : index
    %c0_200 = arith.constant 0 : index
    %214 = vector.load %arg11[%c4_198, %c0_199, %c0_200] : memref<9x32x128xbf16, #tpu.memory_space<vmem>>, vector<1x32x128xbf16>
    %215 = vector.shape_cast %214 : vector<1x32x128xbf16> to vector<32x128xbf16>
    %cst_201 = arith.constant dense<0.000000e+00> : vector<256x128xf32>
    %216 = tpu.matmul %213, %215, %cst_201 {dimension_numbers = #tpu.dot_dimension_numbers<[1], [0], [0], [1], [0, 0, 1, 1], [], []>} : vector<256x32xbf16>, vector<32x128xbf16>, vector<256x128xf32> -> vector<256x128xf32>
    %217 = arith.addf %210, %216 : vector<256x128xf32>
    %c1_202 = arith.constant 1 : index
    %c2_203 = arith.constant 2 : index
    %c0_204 = arith.constant 0 : index
    %218 = vector.load %arg16[%c1_202, %c2_203, %c0_204] : memref<18x18x32xf32, #tpu.memory_space<vmem>>, vector<16x16x32xf32>
    %219 = vector.shape_cast %218 : vector<16x16x32xf32> to vector<256x32xf32>
    %220 = arith.truncf %219 : vector<256x32xf32> to vector<256x32xbf16>
    %c5_205 = arith.constant 5 : index
    %c0_206 = arith.constant 0 : index
    %c0_207 = arith.constant 0 : index
    %221 = vector.load %arg11[%c5_205, %c0_206, %c0_207] : memref<9x32x128xbf16, #tpu.memory_space<vmem>>, vector<1x32x128xbf16>
    %222 = vector.shape_cast %221 : vector<1x32x128xbf16> to vector<32x128xbf16>
    %cst_208 = arith.constant dense<0.000000e+00> : vector<256x128xf32>
    %223 = tpu.matmul %220, %222, %cst_208 {dimension_numbers = #tpu.dot_dimension_numbers<[1], [0], [0], [1], [0, 0, 1, 1], [], []>} : vector<256x32xbf16>, vector<32x128xbf16>, vector<256x128xf32> -> vector<256x128xf32>
    %224 = arith.addf %217, %223 : vector<256x128xf32>
    %c2_209 = arith.constant 2 : index
    %c0_210 = arith.constant 0 : index
    %c0_211 = arith.constant 0 : index
    %225 = vector.load %arg16[%c2_209, %c0_210, %c0_211] : memref<18x18x32xf32, #tpu.memory_space<vmem>>, vector<16x16x32xf32>
    %226 = vector.shape_cast %225 : vector<16x16x32xf32> to vector<256x32xf32>
    %227 = arith.truncf %226 : vector<256x32xf32> to vector<256x32xbf16>
    %c6_212 = arith.constant 6 : index
    %c0_213 = arith.constant 0 : index
    %c0_214 = arith.constant 0 : index
    %228 = vector.load %arg11[%c6_212, %c0_213, %c0_214] : memref<9x32x128xbf16, #tpu.memory_space<vmem>>, vector<1x32x128xbf16>
    %229 = vector.shape_cast %228 : vector<1x32x128xbf16> to vector<32x128xbf16>
    %cst_215 = arith.constant dense<0.000000e+00> : vector<256x128xf32>
    %230 = tpu.matmul %227, %229, %cst_215 {dimension_numbers = #tpu.dot_dimension_numbers<[1], [0], [0], [1], [0, 0, 1, 1], [], []>} : vector<256x32xbf16>, vector<32x128xbf16>, vector<256x128xf32> -> vector<256x128xf32>
    %231 = arith.addf %224, %230 : vector<256x128xf32>
    %c2_216 = arith.constant 2 : index
    %c1_217 = arith.constant 1 : index
    %c0_218 = arith.constant 0 : index
    %232 = vector.load %arg16[%c2_216, %c1_217, %c0_218] : memref<18x18x32xf32, #tpu.memory_space<vmem>>, vector<16x16x32xf32>
    %233 = vector.shape_cast %232 : vector<16x16x32xf32> to vector<256x32xf32>
    %234 = arith.truncf %233 : vector<256x32xf32> to vector<256x32xbf16>
    %c7_219 = arith.constant 7 : index
    %c0_220 = arith.constant 0 : index
    %c0_221 = arith.constant 0 : index
    %235 = vector.load %arg11[%c7_219, %c0_220, %c0_221] : memref<9x32x128xbf16, #tpu.memory_space<vmem>>, vector<1x32x128xbf16>
    %236 = vector.shape_cast %235 : vector<1x32x128xbf16> to vector<32x128xbf16>
    %cst_222 = arith.constant dense<0.000000e+00> : vector<256x128xf32>
    %237 = tpu.matmul %234, %236, %cst_222 {dimension_numbers = #tpu.dot_dimension_numbers<[1], [0], [0], [1], [0, 0, 1, 1], [], []>} : vector<256x32xbf16>, vector<32x128xbf16>, vector<256x128xf32> -> vector<256x128xf32>
    %238 = arith.addf %231, %237 : vector<256x128xf32>
    %c2_223 = arith.constant 2 : index
    %c2_224 = arith.constant 2 : index
    %c0_225 = arith.constant 0 : index
    %239 = vector.load %arg16[%c2_223, %c2_224, %c0_225] : memref<18x18x32xf32, #tpu.memory_space<vmem>>, vector<16x16x32xf32>
    %240 = vector.shape_cast %239 : vector<16x16x32xf32> to vector<256x32xf32>
    %241 = arith.truncf %240 : vector<256x32xf32> to vector<256x32xbf16>
    %c8_226 = arith.constant 8 : index
    %c0_227 = arith.constant 0 : index
    %c0_228 = arith.constant 0 : index
    %242 = vector.load %arg11[%c8_226, %c0_227, %c0_228] : memref<9x32x128xbf16, #tpu.memory_space<vmem>>, vector<1x32x128xbf16>
    %243 = vector.shape_cast %242 : vector<1x32x128xbf16> to vector<32x128xbf16>
    %cst_229 = arith.constant dense<0.000000e+00> : vector<256x128xf32>
    %244 = tpu.matmul %241, %243, %cst_229 {dimension_numbers = #tpu.dot_dimension_numbers<[1], [0], [0], [1], [0, 0, 1, 1], [], []>} : vector<256x32xbf16>, vector<32x128xbf16>, vector<256x128xf32> -> vector<256x128xf32>
    %245 = arith.addf %238, %244 : vector<256x128xf32>
    %c0_230 = arith.constant 0 : index
    %c0_231 = arith.constant 0 : index
    %246 = vector.load %arg12[%c0_230, %c0_231] : memref<1x128xf32, #tpu.memory_space<vmem>>, vector<1x128xf32>
    %247 = vector.broadcast %246 : vector<1x128xf32> to vector<256x128xf32>
    %248 = arith.addf %245, %247 : vector<256x128xf32>
    %c0_232 = arith.constant 0 : index
    %c0_233 = arith.constant 0 : index
    %c0_234 = arith.constant 0 : index
    %249 = vector.load %arg13[%c0_232, %c0_233, %c0_234] : memref<1x256x128xf32, #tpu.memory_space<vmem>>, vector<1x256x128xf32>
    %250 = vector.shape_cast %249 : vector<1x256x128xf32> to vector<256x128xf32>
    %251 = vector.shape_cast %248 : vector<256x128xf32> to vector<1x256x128xf32>
    tpu.vector_store %arg13[%c0_232, %c0_233, %c0_234], %251 {strides = array<i32>} : memref<1x256x128xf32, #tpu.memory_space<vmem>>, vector<1x256x128xf32>,
    return
  }
  func.func @transform_0(%arg0: i32) -> (i32, i32, i32) {
    %c0_i32 = arith.constant 0 : i32
    %c0_i32_0 = arith.constant 0 : i32
    %c0_i32_1 = arith.constant 0 : i32
    return %arg0, %c0_i32, %c0_i32_0 : i32, i32, i32
  }
  func.func @transform_1(%arg0: i32) -> (i32, i32, i32, i32) {
    %c0_i32 = arith.constant 0 : i32
    %c0_i32_0 = arith.constant 0 : i32
    %c0_i32_1 = arith.constant 0 : i32
    %c0_i32_2 = arith.constant 0 : i32
    return %arg0, %c0_i32, %c0_i32_0, %c0_i32_1 : i32, i32, i32, i32
  }
  func.func @transform_2(%arg0: i32) -> (i32, i32) {
    %c0_i32 = arith.constant 0 : i32
    %c0_i32_0 = arith.constant 0 : i32
    %c0_i32_1 = arith.constant 0 : i32
    return %c0_i32, %c0_i32_0 : i32, i32
  }
  func.func @transform_3(%arg0: i32) -> (i32, i32) {
    %c0_i32 = arith.constant 0 : i32
    %c0_i32_0 = arith.constant 0 : i32
    %c0_i32_1 = arith.constant 0 : i32
    return %c0_i32, %c0_i32_0 : i32, i32
  }
  func.func @transform_4(%arg0: i32) -> (i32, i32) {
    %c0_i32 = arith.constant 0 : i32
    %c0_i32_0 = arith.constant 0 : i32
    %c0_i32_1 = arith.constant 0 : i32
    return %c0_i32, %c0_i32_0 : i32, i32
  }
  func.func @transform_5(%arg0: i32) -> (i32, i32) {
    %c0_i32 = arith.constant 0 : i32
    %c0_i32_0 = arith.constant 0 : i32
    %c0_i32_1 = arith.constant 0 : i32
    return %c0_i32, %c0_i32_0 : i32, i32
  }
  func.func @transform_6(%arg0: i32) -> (i32, i32, i32) {
    %c0_i32 = arith.constant 0 : i32
    %c0_i32_0 = arith.constant 0 : i32
    %c0_i32_1 = arith.constant 0 : i32
    %c0_i32_2 = arith.constant 0 : i32
    return %c0_i32, %c0_i32_0, %c0_i32_1 : i32, i32, i32
  }
  func.func @transform_7(%arg0: i32) -> (i32, i32) {
    %c0_i32 = arith.constant 0 : i32
    %c0_i32_0 = arith.constant 0 : i32
    %c0_i32_1 = arith.constant 0 : i32
    return %c0_i32, %c0_i32_0 : i32, i32
  }
  func.func @transform_8(%arg0: i32) -> (i32, i32, i32) {
    %c0_i32 = arith.constant 0 : i32
    %c0_i32_0 = arith.constant 0 : i32
    %c0_i32_1 = arith.constant 0 : i32
    %c0_i32_2 = arith.constant 0 : i32
    return %c0_i32, %c0_i32_0, %c0_i32_1 : i32, i32, i32
  }
  func.func @transform_9(%arg0: i32) -> (i32, i32) {
    %c0_i32 = arith.constant 0 : i32
    %c0_i32_0 = arith.constant 0 : i32
    %c0_i32_1 = arith.constant 0 : i32
    return %c0_i32, %c0_i32_0 : i32, i32
  }
  func.func @transform_10(%arg0: i32) -> (i32, i32, i32) {
    %c0_i32 = arith.constant 0 : i32
    %c0_i32_0 = arith.constant 0 : i32
    %c0_i32_1 = arith.constant 0 : i32
    %c0_i32_2 = arith.constant 0 : i32
    return %c0_i32, %c0_i32_0, %c0_i32_1 : i32, i32, i32
  }
  func.func @transform_11(%arg0: i32) -> (i32, i32) {
    %c0_i32 = arith.constant 0 : i32
    %c0_i32_0 = arith.constant 0 : i32
    %c0_i32_1 = arith.constant 0 : i32
    return %c0_i32, %c0_i32_0 : i32, i32
  }
  func.func @transform_12(%arg0: i32) -> (i32, i32, i32) {
    %c0_i32 = arith.constant 0 : i32
    %c0_i32_0 = arith.constant 0 : i32
    %c0_i32_1 = arith.constant 0 : i32
    return %arg0, %c0_i32, %c0_i32_0 : i32, i32, i32
  }
}

</mosaic_0001>

<llo_original>
// kernel: forward.1
$region0: #{forward.1}
  #allocation0 [shape = 'u32[]', space=smem, size = 0x4, offset = 0x4, fixed_abs, tag = 'smem constant byte address 0x4 - core index']
  #allocation1 [shape = 'u32[144,128]{1,0:T(1,128)}', space=vmem, size = 0x12000, scoped, tag = 'internal scratch']
  #allocation2 [shape = 'f32[18,18,4]{2,1,0:T(8,128)}', space=vmem, size = 0x36000, scoped, tag = 'scratch operand']
  #allocation3 [shape = 'f32[18,18,32]{2,1,0:T(8,128)}', space=vmem, size = 0x36000, scoped, tag = 'scratch operand']
  #allocation4 [shape = 'f32[18,18,32]{2,1,0:T(8,128)}', space=vmem, size = 0x36000, scoped, tag = 'scratch operand']
  %s0 = inlined_call_operand.vmem [shape: f32[2,1,32], index: 0, kind: input, shape index: {}]
  %s1 = inlined_call_operand.vmem [shape: f32[2,16,16,4], index: 1, kind: input, shape index: {}]
  %s2 = inlined_call_operand.vmem [shape: bf16[32,32], index: 2, kind: input, shape index: {}]
  %s3 = inlined_call_operand.vmem [shape: f32[1,32], index: 3, kind: input, shape index: {}, may-alias: {3,5,7,9}]
  %s4 = inlined_call_operand.vmem [shape: bf16[32,32], index: 4, kind: input, shape index: {}]
  %s5 = inlined_call_operand.vmem [shape: f32[1,32], index: 5, kind: input, shape index: {}, may-alias: {3,5,7,9}]
  %s6 = inlined_call_operand.vmem [shape: bf16[9,4,32], index: 6, kind: input, shape index: {}]
  %s7 = inlined_call_operand.vmem [shape: f32[1,32], index: 7, kind: input, shape index: {}, may-alias: {3,5,7,9}]
  %s8 = inlined_call_operand.vmem [shape: bf16[9,32,32], index: 8, kind: input, shape index: {}]
  %s9 = inlined_call_operand.vmem [shape: f32[1,32], index: 9, kind: input, shape index: {}, may-alias: {3,5,7,9}]
  %s10 = inlined_call_operand.vmem [shape: bf16[9,32,128], index: 10, kind: input, shape index: {}]
  %s11 = inlined_call_operand.vmem [shape: f32[1,128], index: 11, kind: input, shape index: {}]
  %s12 = inlined_call_operand.vmem [shape: f32[2,256,128], index: 12, kind: output, shape index: {}]
  %s13 = sld [smem:[#allocation0]]
  $region81: #{forward.1} parent=0
    _
  %s15 = ssub.s32 1, %s13
  %s16 = scalar_select 0, %s15, %s13
  loop: start=0, step=1, limit=4
  $region2: #{forward.1} parent=0 // loop_pre_header
    _
  $region3: #{forward.1} parent=0 // loop_header
    %s18 = sphi 0, %s22
    %p19 = scmp.ge.s32.totalorder %s18, 4
    %s28 = sphi 0, %s30
    %s31 = sphi 0, %s28
    %s32 = sphi 0, %s31
    %s48 = sphi 0, %s32
    %s54 = sphi 0, %s56
    %s57 = sphi 0, %s54
    %s58 = sphi 0, %s57
    %s74 = sphi 0, %s58
    %s78 = sphi 0, %s78
    %s80 = sphi 0, %s78
    %s81 = sphi 0, %s80
    %s95 = sphi 0, %s81
    %s99 = sphi 0, %s99
    %s101 = sphi 0, %s99
    %s102 = sphi 0, %s101
    %s116 = sphi 0, %s102
    %s120 = sphi 0, %s120
    %s122 = sphi 0, %s120
    %s123 = sphi 0, %s122
    %s137 = sphi 0, %s123
    %s141 = sphi 0, %s141
    %s143 = sphi 0, %s141
    %s144 = sphi 0, %s143
    %s158 = sphi 0, %s144
    %s162 = sphi 0, %s162
    %s164 = sphi 0, %s162
    %s165 = sphi 0, %s164
    %s179 = sphi 0, %s165
    %s183 = sphi 0, %s183
    %s185 = sphi 0, %s183
    %s186 = sphi 0, %s185
    %s200 = sphi 0, %s186
    %s204 = sphi 0, %s204
    %s206 = sphi 0, %s204
    %s207 = sphi 0, %s206
    %s221 = sphi 0, %s207
    %s225 = sphi 0, %s225
    %s227 = sphi 0, %s225
    %s228 = sphi 0, %s227
    %s242 = sphi 0, %s228
    %s246 = sphi 0, %s246
    %s248 = sphi 0, %s246
    %s249 = sphi 0, %s248
    %s263 = sphi 0, %s249
    %s267 = sphi 0, %s267
    %s269 = sphi 0, %s267
    %s270 = sphi 0, %s269
    %s284 = sphi 0, %s270
    %s290 = sphi 0, %s292
    %s293 = sphi 0, %s290
    %s294 = sphi 0, %s293
    %s310 = sphi 0, %s294
  $region4: #{forward.1} parent=0 // loop_header_branch
    %21 = sbr.rel (%p19) target = $region8
  $region5: #{forward.1} parent=0 // loop_body
    %s23 = ssub.s32 %s18, 1
    %s24 = ssub.s32 %s18, 2
    %s25 = sadd.s32 %s18, 1
    %s26 = ssub.s32 %s18, %s25
    %p27 = scmp.eq.s32.totalorder %s26, 0
    %s29 = sadd.s32 %s28, 1
    %s30 = scalar_select %p27, %s28, %s29
    %p33 = pneg %p27
    %p34 = scmp.eq.s32.totalorder %s18, 1
    %p35 = por %p33, %p34
    %p36 = scmp.ne.s32.totalorder %s28, %s31
    %p37 = scmp.eq.s32.totalorder %s18, 0
    %p38 = por %p36, %p37
    %p39 = scmp.ne.s32.totalorder %s28, %s31
    %p40 = scmp.eq.s32.totalorder %s23, 1
    %p41 = por %p39, %p40
    %p42 = scmp.ne.s32.totalorder %s31, %s32
    %p43 = scmp.eq.s32.totalorder %s23, 0
    %p44 = por %p42, %p43
    %p45 = scmp.ne.s32.totalorder %s31, %s32
    %p46 = scmp.eq.s32.totalorder %s24, 1
    %p47 = por %p45, %p46
    %p49 = scmp.ne.s32.totalorder %s32, %s48
    %p50 = scmp.eq.s32.totalorder %s24, 0
    %p51 = por %p49, %p50
    %s52 = ssub.s32 %s18, %s25
    %p53 = scmp.eq.s32.totalorder %s52, 0
    %s55 = sadd.s32 %s54, 1
    %s56 = scalar_select %p53, %s54, %s55
    %p59 = pneg %p53
    %p60 = scmp.eq.s32.totalorder %s18, 1
    %p61 = por %p59, %p60
    %p62 = scmp.ne.s32.totalorder %s54, %s57
    %p63 = scmp.eq.s32.totalorder %s18, 0
    %p64 = por %p62, %p63
    %p65 = scmp.ne.s32.totalorder %s54, %s57
    %p66 = scmp.eq.s32.totalorder %s23, 1
    %p67 = por %p65, %p66
    %p68 = scmp.ne.s32.totalorder %s57, %s58
    %p69 = scmp.eq.s32.totalorder %s23, 0
    %p70 = por %p68, %p69
    %p71 = scmp.ne.s32.totalorder %s57, %s58
    %p72 = scmp.eq.s32.totalorder %s24, 1
    %p73 = por %p71, %p72
    %p75 = scmp.ne.s32.totalorder %s58, %s74
    %p76 = scmp.eq.s32.totalorder %s24, 0
    %p77 = por %p75, %p76
    %s79 = sadd.s32 %s78, 1
    %p82 = scmp.eq.s32.totalorder %s18, 1
    %p83 = scmp.ne.s32.totalorder %s78, %s80
    %p84 = scmp.eq.s32.totalorder %s18, 0
    %p85 = por %p83, %p84
    %p86 = scmp.ne.s32.totalorder %s78, %s80
    %p87 = scmp.eq.s32.totalorder %s23, 1
    %p88 = por %p86, %p87
    %p89 = scmp.ne.s32.totalorder %s80, %s81
    %p90 = scmp.eq.s32.totalorder %s23, 0
    %p91 = por %p89, %p90
    %p92 = scmp.ne.s32.totalorder %s80, %s81
    %p93 = scmp.eq.s32.totalorder %s24, 1
    %p94 = por %p92, %p93
    %p96 = scmp.ne.s32.totalorder %s81, %s95
    %p97 = scmp.eq.s32.totalorder %s24, 0
    %p98 = por %p96, %p97
    %s100 = sadd.s32 %s99, 1
    %p103 = scmp.eq.s32.totalorder %s18, 1
    %p104 = scmp.ne.s32.totalorder %s99, %s101
    %p105 = scmp.eq.s32.totalorder %s18, 0
    %p106 = por %p104, %p105
    %p107 = scmp.ne.s32.totalorder %s99, %s101
    %p108 = scmp.eq.s32.totalorder %s23, 1
    %p109 = por %p107, %p108
    %p110 = scmp.ne.s32.totalorder %s101, %s102
    %p111 = scmp.eq.s32.totalorder %s23, 0
    %p112 = por %p110, %p111
    %p113 = scmp.ne.s32.totalorder %s101, %s102
    %p114 = scmp.eq.s32.totalorder %s24, 1
    %p115 = por %p113, %p114
    %p117 = scmp.ne.s32.totalorder %s102, %s116
    %p118 = scmp.eq.s32.totalorder %s24, 0
    %p119 = por %p117, %p118
    %s121 = sadd.s32 %s120, 1
    %p124 = scmp.eq.s32.totalorder %s18, 1
    %p125 = scmp.ne.s32.totalorder %s120, %s122
    %p126 = scmp.eq.s32.totalorder %s18, 0
    %p127 = por %p125, %p126
    %p128 = scmp.ne.s32.totalorder %s120, %s122
    %p129 = scmp.eq.s32.totalorder %s23, 1
    %p130 = por %p128, %p129
    %p131 = scmp.ne.s32.totalorder %s122, %s123
    %p132 = scmp.eq.s32.totalorder %s23, 0
    %p133 = por %p131, %p132
    %p134 = scmp.ne.s32.totalorder %s122, %s123
    %p135 = scmp.eq.s32.totalorder %s24, 1
    %p136 = por %p134, %p135
    %p138 = scmp.ne.s32.totalorder %s123, %s137
    %p139 = scmp.eq.s32.totalorder %s24, 0
    %p140 = por %p138, %p139
    %s142 = sadd.s32 %s141, 1
    %p145 = scmp.eq.s32.totalorder %s18, 1
    %p146 = scmp.ne.s32.totalorder %s141, %s143
    %p147 = scmp.eq.s32.totalorder %s18, 0
    %p148 = por %p146, %p147
    %p149 = scmp.ne.s32.totalorder %s141, %s143
    %p150 = scmp.eq.s32.totalorder %s23, 1
    %p151 = por %p149, %p150
    %p152 = scmp.ne.s32.totalorder %s143, %s144
    %p153 = scmp.eq.s32.totalorder %s23, 0
    %p154 = por %p152, %p153
    %p155 = scmp.ne.s32.totalorder %s143, %s144
    %p156 = scmp.eq.s32.totalorder %s24, 1
    %p157 = por %p155, %p156
    %p159 = scmp.ne.s32.totalorder %s144, %s158
    %p160 = scmp.eq.s32.totalorder %s24, 0
    %p161 = por %p159, %p160
    %s163 = sadd.s32 %s162, 1
    %p166 = scmp.eq.s32.totalorder %s18, 1
    %p167 = scmp.ne.s32.totalorder %s162, %s164
    %p168 = scmp.eq.s32.totalorder %s18, 0
    %p169 = por %p167, %p168
    %p170 = scmp.ne.s32.totalorder %s162, %s164
    %p171 = scmp.eq.s32.totalorder %s23, 1
    %p172 = por %p170, %p171
    %p173 = scmp.ne.s32.totalorder %s164, %s165
    %p174 = scmp.eq.s32.totalorder %s23, 0
    %p175 = por %p173, %p174
    %p176 = scmp.ne.s32.totalorder %s164, %s165
    %p177 = scmp.eq.s32.totalorder %s24, 1
    %p178 = por %p176, %p177
    %p180 = scmp.ne.s32.totalorder %s165, %s179
    %p181 = scmp.eq.s32.totalorder %s24, 0
    %p182 = por %p180, %p181
    %s184 = sadd.s32 %s183, 1
    %p187 = scmp.eq.s32.totalorder %s18, 1
    %p188 = scmp.ne.s32.totalorder %s183, %s185
    %p189 = scmp.eq.s32.totalorder %s18, 0
    %p190 = por %p188, %p189
    %p191 = scmp.ne.s32.totalorder %s183, %s185
    %p192 = scmp.eq.s32.totalorder %s23, 1
    %p193 = por %p191, %p192
    %p194 = scmp.ne.s32.totalorder %s185, %s186
    %p195 = scmp.eq.s32.totalorder %s23, 0
    %p196 = por %p194, %p195
    %p197 = scmp.ne.s32.totalorder %s185, %s186
    %p198 = scmp.eq.s32.totalorder %s24, 1
    %p199 = por %p197, %p198
    %p201 = scmp.ne.s32.totalorder %s186, %s200
    %p202 = scmp.eq.s32.totalorder %s24, 0
    %p203 = por %p201, %p202
    %s205 = sadd.s32 %s204, 1
    %p208 = scmp.eq.s32.totalorder %s18, 1
    %p209 = scmp.ne.s32.totalorder %s204, %s206
    %p210 = scmp.eq.s32.totalorder %s18, 0
    %p211 = por %p209, %p210
    %p212 = scmp.ne.s32.totalorder %s204, %s206
    %p213 = scmp.eq.s32.totalorder %s23, 1
    %p214 = por %p212, %p213
    %p215 = scmp.ne.s32.totalorder %s206, %s207
    %p216 = scmp.eq.s32.totalorder %s23, 0
    %p217 = por %p215, %p216
    %p218 = scmp.ne.s32.totalorder %s206, %s207
    %p219 = scmp.eq.s32.totalorder %s24, 1
    %p220 = por %p218, %p219
    %p222 = scmp.ne.s32.totalorder %s207, %s221
    %p223 = scmp.eq.s32.totalorder %s24, 0
    %p224 = por %p222, %p223
    %s226 = sadd.s32 %s225, 1
    %p229 = scmp.eq.s32.totalorder %s18, 1
    %p230 = scmp.ne.s32.totalorder %s225, %s227
    %p231 = scmp.eq.s32.totalorder %s18, 0
    %p232 = por %p230, %p231
    %p233 = scmp.ne.s32.totalorder %s225, %s227
    %p234 = scmp.eq.s32.totalorder %s23, 1
    %p235 = por %p233, %p234
    %p236 = scmp.ne.s32.totalorder %s227, %s228
    %p237 = scmp.eq.s32.totalorder %s23, 0
    %p238 = por %p236, %p237
    %p239 = scmp.ne.s32.totalorder %s227, %s228
    %p240 = scmp.eq.s32.totalorder %s24, 1
    %p241 = por %p239, %p240
    %p243 = scmp.ne.s32.totalorder %s228, %s242
    %p244 = scmp.eq.s32.totalorder %s24, 0
    %p245 = por %p243, %p244
    %s247 = sadd.s32 %s246, 1
    %p250 = scmp.eq.s32.totalorder %s18, 1
    %p251 = scmp.ne.s32.totalorder %s246, %s248
    %p252 = scmp.eq.s32.totalorder %s18, 0
    %p253 = por %p251, %p252
    %p254 = scmp.ne.s32.totalorder %s246, %s248
    %p255 = scmp.eq.s32.totalorder %s23, 1
    %p256 = por %p254, %p255
    %p257 = scmp.ne.s32.totalorder %s248, %s249
    %p258 = scmp.eq.s32.totalorder %s23, 0
    %p259 = por %p257, %p258
    %p260 = scmp.ne.s32.totalorder %s248, %s249
    %p261 = scmp.eq.s32.totalorder %s24, 1
    %p262 = por %p260, %p261
    %p264 = scmp.ne.s32.totalorder %s249, %s263
    %p265 = scmp.eq.s32.totalorder %s24, 0
    %p266 = por %p264, %p265
    %s268 = sadd.s32 %s267, 1
    %p271 = scmp.eq.s32.totalorder %s18, 1
    %p272 = scmp.ne.s32.totalorder %s267, %s269
    %p273 = scmp.eq.s32.totalorder %s18, 0
    %p274 = por %p272, %p273
    %p275 = scmp.ne.s32.totalorder %s267, %s269
    %p276 = scmp.eq.s32.totalorder %s23, 1
    %p277 = por %p275, %p276
    %p278 = scmp.ne.s32.totalorder %s269, %s270
    %p279 = scmp.eq.s32.totalorder %s23, 0
    %p280 = por %p278, %p279
    %p281 = scmp.ne.s32.totalorder %s269, %s270
    %p282 = scmp.eq.s32.totalorder %s24, 1
    %p283 = por %p281, %p282
    %p285 = scmp.ne.s32.totalorder %s270, %s284
    %p286 = scmp.eq.s32.totalorder %s24, 0
    %p287 = por %p285, %p286
    %s288 = ssub.s32 %s18, %s25
    %p289 = scmp.eq.s32.totalorder %s288, 0
    %s291 = sadd.s32 %s290, 1
    %s292 = scalar_select %p289, %s290, %s291
    %p295 = pneg %p289
    %p296 = scmp.eq.s32.totalorder %s18, 1
    %p297 = por %p295, %p296
    %p298 = scmp.ne.s32.totalorder %s290, %s293
    %p299 = scmp.eq.s32.totalorder %s18, 0
    %p300 = por %p298, %p299
    %p301 = scmp.ne.s32.totalorder %s290, %s293
    %p302 = scmp.eq.s32.totalorder %s23, 1
    %p303 = por %p301, %p302
    %p304 = scmp.ne.s32.totalorder %s293, %s294
    %p305 = scmp.eq.s32.totalorder %s23, 0
    %p306 = por %p304, %p305
    %p307 = scmp.ne.s32.totalorder %s293, %s294
    %p308 = scmp.eq.s32.totalorder %s24, 1
    %p309 = por %p307, %p308
    %p311 = scmp.ne.s32.totalorder %s294, %s310
    %p312 = scmp.eq.s32.totalorder %s24, 0
    %p313 = por %p311, %p312
    %p314 = scmp.le.s32.totalorder 1, %s18
    %p315 = scmp.lt.s32.totalorder %s18, 3
    %p316 = pnand %p314, %p315
    %p317 = pneg %p316
    // Predicated region
    $region9: #{forward.1} parent=5 // pred_check
      _
    $region10: #{forward.1} parent=5 // pred_check_branch
      %319 = sbr.rel (%p316) target = $region12
    $region11: #{forward.1} parent=5 // pred_region
      %s320 = ssub.s32 %s18, 1
      // Predicated region
      $region13: #{forward.1} parent=11 // pred_check
        %p321 = pneg %p91
      $region14: #{forward.1} parent=11 // pred_check_branch
        %323 = sbr.rel (%p321) target = $region16
      $region15: #{forward.1} parent=11 // pred_region
        _
      $region16: #{forward.1} parent=11 // pred_fallthru
        _
      // Predicated region
      $region17: #{forward.1} parent=11 // pred_check
        %p324 = pneg %p112
      $region18: #{forward.1} parent=11 // pred_check_branch
        %326 = sbr.rel (%p324) target = $region20
      $region19: #{forward.1} parent=11 // pred_region
        _
      $region20: #{forward.1} parent=11 // pred_fallthru
        _
      // Predicated region
      $region21: #{forward.1} parent=11 // pred_check
        %p327 = pneg %p133
      $region22: #{forward.1} parent=11 // pred_check_branch
        %329 = sbr.rel (%p327) target = $region24
      $region23: #{forward.1} parent=11 // pred_region
        _
      $region24: #{forward.1} parent=11 // pred_fallthru
        _
      // Predicated region
      $region25: #{forward.1} parent=11 // pred_check
        %p330 = pneg %p154
      $region26: #{forward.1} parent=11 // pred_check_branch
        %332 = sbr.rel (%p330) target = $region28
      $region27: #{forward.1} parent=11 // pred_region
        _
      $region28: #{forward.1} parent=11 // pred_fallthru
        _
      // Predicated region
      $region29: #{forward.1} parent=11 // pred_check
        %p333 = pneg %p175
      $region30: #{forward.1} parent=11 // pred_check_branch
        %335 = sbr.rel (%p333) target = $region32
      $region31: #{forward.1} parent=11 // pred_region
        _
      $region32: #{forward.1} parent=11 // pred_fallthru
        _
      // Predicated region
      $region33: #{forward.1} parent=11 // pred_check
        %p336 = pneg %p196
      $region34: #{forward.1} parent=11 // pred_check_branch
        %338 = sbr.rel (%p336) target = $region36
      $region35: #{forward.1} parent=11 // pred_region
        _
      $region36: #{forward.1} parent=11 // pred_fallthru
        _
      // Predicated region
      $region37: #{forward.1} parent=11 // pred_check
        %p339 = pneg %p217
      $region38: #{forward.1} parent=11 // pred_check_branch
        %341 = sbr.rel (%p339) target = $region40
      $region39: #{forward.1} parent=11 // pred_region
        _
      $region40: #{forward.1} parent=11 // pred_fallthru
        _
      // Predicated region
      $region41: #{forward.1} parent=11 // pred_check
        %p342 = pneg %p238
      $region42: #{forward.1} parent=11 // pred_check_branch
        %344 = sbr.rel (%p342) target = $region44
      $region43: #{forward.1} parent=11 // pred_region
        _
      $region44: #{forward.1} parent=11 // pred_fallthru
        _
      // Predicated region
      $region45: #{forward.1} parent=11 // pred_check
        %p345 = pneg %p259
      $region46: #{forward.1} parent=11 // pred_check_branch
        %347 = sbr.rel (%p345) target = $region48
      $region47: #{forward.1} parent=11 // pred_region
        _
      $region48: #{forward.1} parent=11 // pred_fallthru
        _
      // Predicated region
      $region49: #{forward.1} parent=11 // pred_check
        %p348 = pneg %p280
      $region50: #{forward.1} parent=11 // pred_check_branch
        %350 = sbr.rel (%p348) target = $region52
      $region51: #{forward.1} parent=11 // pred_region
        _
      $region52: #{forward.1} parent=11 // pred_fallthru
        _
    $region12: #{forward.1} parent=5 // pred_fallthru
      _
    %p351 = scmp.lt.s32.totalorder %s18, 2
    // Predicated region
    $region53: #{forward.1} parent=5 // pred_check
      %p352 = pneg %p351
    $region54: #{forward.1} parent=5 // pred_check_branch
      %354 = sbr.rel (%p352) target = $region56
    $region55: #{forward.1} parent=5 // pred_region
      // Predicated region
      $region57: #{forward.1} parent=55 // pred_check
        %p355 = pneg %p38
      $region58: #{forward.1} parent=55 // pred_check_branch
        %357 = sbr.rel (%p355) target = $region60
      $region59: #{forward.1} parent=55 // pred_region
        %p358 = scmp.lt.s32.totalorder %s18, 1
        %s359 = scalar_select %p358, %s18, 1
        %s360 = scalar_lea.vmem %s0, %s359
      $region60: #{forward.1} parent=55 // pred_fallthru
        _
      // Predicated region
      $region61: #{forward.1} parent=55 // pred_check
        %p361 = pneg %p64
      $region62: #{forward.1} parent=55 // pred_check_branch
        %363 = sbr.rel (%p361) target = $region64
      $region63: #{forward.1} parent=55 // pred_region
        %p364 = scmp.lt.s32.totalorder %s18, 1
        %s365 = scalar_select %p364, %s18, 1
        %s366 = smul.addr %s365, 32
        %s367 = smul.addr %s366, 8
        %s368 = scalar_lea.vmem %s1, %s367
      $region64: #{forward.1} parent=55 // pred_fallthru
        _
    $region56: #{forward.1} parent=5 // pred_fallthru
      _
    %p369 = scmp.le.s32.totalorder 1, %s18
    %p370 = scmp.lt.s32.totalorder %s18, 3
    %p371 = pnand %p369, %p370
    %p372 = pneg %p371
    // Predicated region
    $region65: #{forward.1} parent=5 // pred_check
      _
    $region66: #{forward.1} parent=5 // pred_check_branch
      %374 = sbr.rel (%p371) target = $region68
    $region67: #{forward.1} parent=5 // pred_region
      %s375 = ssub.s32 %s18, 1
      %p376 = scmp.lt.s32.totalorder %s23, 1
      %s377 = scalar_select %p376, %s23, 1
      %s378 = scalar_lea.vmem %s0, %s377
      %p379 = pneg %p44
      %p380 = pneg %p41
      %p381 = scmp.lt.s32.totalorder %s23, 1
      %s382 = scalar_select %p381, %s23, 1
      %s383 = smul.addr %s382, 32
      %s384 = smul.addr %s383, 8
      %s385 = scalar_lea.vmem %s1, %s384
      %p386 = pneg %p70
      %p387 = pneg %p67
      %p388 = pneg %p91
      %p389 = pneg %p88
      %p390 = pneg %p112
      %p391 = pneg %p109
      %p392 = pneg %p133
      %p393 = pneg %p130
      %p394 = pneg %p154
      %p395 = pneg %p151
      %p396 = pneg %p175
      %p397 = pneg %p172
      %p398 = pneg %p196
      %p399 = pneg %p193
      %p400 = pneg %p217
      %p401 = pneg %p214
      %p402 = pneg %p238
      %p403 = pneg %p235
      %p404 = pneg %p259
      %p405 = pneg %p256
      %p406 = pneg %p280
      %p407 = pneg %p277
      %p408 = pneg %p306
      %p409 = pneg %p303
      %p410 = scmp.lt.s32.totalorder %s23, 1
      %s411 = scalar_select %p410, %s23, 1
      %s412 = smul.addr %s411, 32
      %s413 = smul.addr %s412, 8
      %s414 = scalar_lea.vmem %s12, %s413
      %p415 = scmp.lt.s32.totalorder %s23, 1
      %s416 = scalar_select %p415, %s23, 1
      %s417 = scalar_lea.vmem %s0, %s416
      %p418 = scmp.lt.s32.totalorder %s23, 1
      %s419 = scalar_select %p418, %s23, 1
      %s420 = smul.addr %s419, 32
      %s421 = smul.addr %s420, 8
      %s422 = scalar_lea.vmem %s1, %s421
      %p423 = scmp.lt.s32.totalorder %s23, 1
      %s424 = scalar_select %p423, %s23, 1
      %s425 = smul.addr %s424, 32
      %s426 = smul.addr %s425, 8
      %s427 = scalar_lea.vmem %s12, %s426
      %v429 = vld [vmem:[%s417] sm:$0x1]
      %v430 = vpack.c.bf16 %v429, %v429
      %v431 = vld [vmem:[%s2] sm:$0xf]
      %v432 = vld [vmem:[%s2 + $0x4] sm:$0xf]
      %v433 = vld [vmem:[%s2 + $0x8] sm:$0xf]
      %v434 = vld [vmem:[%s2 + $0xc] sm:$0xf]
      %v435 = vld [vmem:[%s3] sm:$0x1]
      %v440 = vunpack.c.l.b16 %v431
      %v441 = vunpack.c.l.b16 %v432
      %v442 = vunpack.c.l.b16 %v433
      %v443 = vunpack.c.l.b16 %v434
      %v444 = vpack.c.b16 %v441, %v440
      %v445 = vpack.c.b16 %v443, %v442
      %vm448 = vcmask 261120
      %v450 = vsel %vm448, %v430, 0
      %452 = vmatprep.subr.bf16.mxu0 0
      %453 = vmatpush1.bf16.msra.mxu0 %v444
      %454 = vmatprep.subr.bf16.mxu0 0
      %455 = vmatpush1.bf16.msra.mxu0 %v445
      %456 = vmatprep.subr.bf16.mxu0 0
      %457 = vmatpush1.bf16.msra.mxu0 0
      %458 = vmatprep.subr.bf16.mxu0 0
      %459 = vmatpush1.bf16.msra.mxu0 0
      %460 = vmatprep.subr.bf16.mxu0 0
      %461 = vmatpush1.bf16.msra.mxu0 0
      %462 = vmatprep.subr.bf16.mxu0 0
      %463 = vmatpush1.bf16.msra.mxu0 0
      %464 = vmatprep.subr.bf16.mxu0 0
      %465 = vmatpush1.bf16.msra.mxu0 0
      %466 = vmatprep.subr.bf16.mxu0 0
      %467 = vmatpush1.bf16.msra.mxu0 0
      %468 = vmatprep.subr.bf16.mxu0 0
      %469 = vmatpush1.bf16.msra.mxu0 0
      %470 = vmatprep.subr.bf16.mxu0 0
      %471 = vmatpush1.bf16.msra.mxu0 0
      %472 = vmatprep.subr.bf16.mxu0 0
      %473 = vmatpush1.bf16.msra.mxu0 0
      %474 = vmatprep.subr.bf16.mxu0 0
      %475 = vmatpush1.bf16.msra.mxu0 0
      %476 = vmatprep.subr.bf16.mxu0 0
      %477 = vmatpush1.bf16.msra.mxu0 0
      %478 = vmatprep.subr.bf16.mxu0 0
      %479 = vmatpush1.bf16.msra.mxu0 0
      %480 = vmatprep.subr.bf16.mxu0 0
      %481 = vmatpush1.bf16.msra.mxu0 0
      %482 = vmatprep.subr.bf16.mxu0 0
      %483 = vmatpush1.bf16.msra.mxu0 0
      %484 = vmatprep.mubr.bf16.mxu0 0
      %485 = vmatmul.mubr.bf16.gmra.mrb[0].mxu0 %v450
      %v486 = vpop.f32.mrb[0].mxu0
      %v487 = vadd.f32 %v435, %v486
      %v488 = vpop.f32.mrb[0].mxu0
      %v489 = vpop.f32.mrb[0].mxu0
      %v490 = vpop.f32.mrb[0].mxu0
      %491 = vdwg.mxu0
      %v492 = vsub.f32 0.0, %v487
      %v493 = vmul.f32 %v492, 1.442695
      %v494 = vpow.pop %v493
      %v495 = vadd.f32 %v494, 1.0
      %v496 = vrcp.pop %v495
      %v497 = vmul.f32 %v487, %v496
      %v498 = vpack.c.bf16 %v497, %v497
      %v499 = vld [vmem:[%s4] sm:$0xf]
      %v500 = vld [vmem:[%s4 + $0x4] sm:$0xf]
      %v501 = vld [vmem:[%s4 + $0x8] sm:$0xf]
      %v502 = vld [vmem:[%s4 + $0xc] sm:$0xf]
      %v503 = vld [vmem:[%s5] sm:$0x1]
      %v508 = vunpack.c.l.b16 %v499
      %v509 = vunpack.c.l.b16 %v500
      %v510 = vunpack.c.l.b16 %v501
      %v511 = vunpack.c.l.b16 %v502
      %v512 = vpack.c.b16 %v509, %v508
      %v513 = vpack.c.b16 %v511, %v510
      %v517 = vsel %vm448, %v498, 0
      %519 = vmatprep.subr.bf16.mxu0 0
      %520 = vmatpush1.bf16.msra.mxu0 %v512
      %521 = vmatprep.subr.bf16.mxu0 0
      %522 = vmatpush1.bf16.msra.mxu0 %v513
      %523 = vmatprep.subr.bf16.mxu0 0
      %524 = vmatpush1.bf16.msra.mxu0 0
      %525 = vmatprep.subr.bf16.mxu0 0
      %526 = vmatpush1.bf16.msra.mxu0 0
      %527 = vmatprep.subr.bf16.mxu0 0
      %528 = vmatpush1.bf16.msra.mxu0 0
      %529 = vmatprep.subr.bf16.mxu0 0
      %530 = vmatpush1.bf16.msra.mxu0 0
      %531 = vmatprep.subr.bf16.mxu0 0
      %532 = vmatpush1.bf16.msra.mxu0 0
      %533 = vmatprep.subr.bf16.mxu0 0
      %534 = vmatpush1.bf16.msra.mxu0 0
      %535 = vmatprep.subr.bf16.mxu0 0
      %536 = vmatpush1.bf16.msra.mxu0 0
      %537 = vmatprep.subr.bf16.mxu0 0
      %538 = vmatpush1.bf16.msra.mxu0 0
      %539 = vmatprep.subr.bf16.mxu0 0
      %540 = vmatpush1.bf16.msra.mxu0 0
      %541 = vmatprep.subr.bf16.mxu0 0
      %542 = vmatpush1.bf16.msra.mxu0 0
      %543 = vmatprep.subr.bf16.mxu0 0
      %544 = vmatpush1.bf16.msra.mxu0 0
      %545 = vmatprep.subr.bf16.mxu0 0
      %546 = vmatpush1.bf16.msra.mxu0 0
      %547 = vmatprep.subr.bf16.mxu0 0
      %548 = vmatpush1.bf16.msra.mxu0 0
      %549 = vmatprep.subr.bf16.mxu0 0
      %550 = vmatpush1.bf16.msra.mxu0 0
      %551 = vmatprep.mubr.bf16.mxu0 0
      %552 = vmatmul.mubr.bf16.gmra.mrb[0].mxu0 %v517
      %v553 = vpop.f32.mrb[0].mxu0
      %v554 = vadd.f32 %v503, %v553
      %v555 = vpop.f32.mrb[0].mxu0
      %v556 = vpop.f32.mrb[0].mxu0
      %v557 = vpop.f32.mrb[0].mxu0
      %558 = vdwg.mxu0
      %vm559 = vcmask 31744
      %560 = vst.msk [vmem:[#allocation2] sm:$0xff] %vm559, 0.0
      %561 = vst.msk [vmem:[#allocation2 + $0x8] sm:$0xff] %vm559, 0.0
      %vm562 = vcmask 25600
      %563 = vst.msk [vmem:[#allocation2 + $0x10] sm:$0x3] %vm562, 0.0
      %564 = vst.msk [vmem:[#allocation2 + $0x18] sm:$0xff] %vm559, 0.0
      %565 = vst.msk [vmem:[#allocation2 + $0x20] sm:$0xff] %vm559, 0.0
      %566 = vst.msk [vmem:[#allocation2 + $0x28] sm:$0x3] %vm562, 0.0
      %567 = vst.msk [vmem:[#allocation2 + $0x30] sm:$0xff] %vm559, 0.0
      %568 = vst.msk [vmem:[#allocation2 + $0x38] sm:$0xff] %vm559, 0.0
      %569 = vst.msk [vmem:[#allocation2 + $0x40] sm:$0x3] %vm562, 0.0
      %570 = vst.msk [vmem:[#allocation2 + $0x48] sm:$0xff] %vm559, 0.0
      %571 = vst.msk [vmem:[#allocation2 + $0x50] sm:$0xff] %vm559, 0.0
      %572 = vst.msk [vmem:[#allocation2 + $0x58] sm:$0x3] %vm562, 0.0
      %573 = vst.msk [vmem:[#allocation2 + $0x60] sm:$0xff] %vm559, 0.0
      %574 = vst.msk [vmem:[#allocation2 + $0x68] sm:$0xff] %vm559, 0.0
      %575 = vst.msk [vmem:[#allocation2 + $0x70] sm:$0x3] %vm562, 0.0
      %576 = vst.msk [vmem:[#allocation2 + $0x78] sm:$0xff] %vm559, 0.0
      %577 = vst.msk [vmem:[#allocation2 + $0x80] sm:$0xff] %vm559, 0.0
      %578 = vst.msk [vmem:[#allocation2 + $0x88] sm:$0x3] %vm562, 0.0
      %579 = vst.msk [vmem:[#allocation2 + $0x90] sm:$0xff] %vm559, 0.0
      %580 = vst.msk [vmem:[#allocation2 + $0x98] sm:$0xff] %vm559, 0.0
      %581 = vst.msk [vmem:[#allocation2 + $0xa0] sm:$0x3] %vm562, 0.0
      %582 = vst.msk [vmem:[#allocation2 + $0xa8] sm:$0xff] %vm559, 0.0
      %583 = vst.msk [vmem:[#allocation2 + $0xb0] sm:$0xff] %vm559, 0.0
      %584 = vst.msk [vmem:[#allocation2 + $0xb8] sm:$0x3] %vm562, 0.0
      %585 = vst.msk [vmem:[#allocation2 + $0xc0] sm:$0xff] %vm559, 0.0
      %586 = vst.msk [vmem:[#allocation2 + $0xc8] sm:$0xff] %vm559, 0.0
      %587 = vst.msk [vmem:[#allocation2 + $0xd0] sm:$0x3] %vm562, 0.0
      %588 = vst.msk [vmem:[#allocation2 + $0xd8] sm:$0xff] %vm559, 0.0
      %589 = vst.msk [vmem:[#allocation2 + $0xe0] sm:$0xff] %vm559, 0.0
      %590 = vst.msk [vmem:[#allocation2 + $0xe8] sm:$0x3] %vm562, 0.0
      %591 = vst.msk [vmem:[#allocation2 + $0xf0] sm:$0xff] %vm559, 0.0
      %592 = vst.msk [vmem:[#allocation2 + $0xf8] sm:$0xff] %vm559, 0.0
      %593 = vst.msk [vmem:[#allocation2 + $0x100] sm:$0x3] %vm562, 0.0
      %594 = vst.msk [vmem:[#allocation2 + $0x108] sm:$0xff] %vm559, 0.0
      %595 = vst.msk [vmem:[#allocation2 + $0x110] sm:$0xff] %vm559, 0.0
      %596 = vst.msk [vmem:[#allocation2 + $0x118] sm:$0x3] %vm562, 0.0
      %597 = vst.msk [vmem:[#allocation2 + $0x120] sm:$0xff] %vm559, 0.0
      %598 = vst.msk [vmem:[#allocation2 + $0x128] sm:$0xff] %vm559, 0.0
      %599 = vst.msk [vmem:[#allocation2 + $0x130] sm:$0x3] %vm562, 0.0
      %600 = vst.msk [vmem:[#allocation2 + $0x138] sm:$0xff] %vm559, 0.0
      %601 = vst.msk [vmem:[#allocation2 + $0x140] sm:$0xff] %vm559, 0.0
      %602 = vst.msk [vmem:[#allocation2 + $0x148] sm:$0x3] %vm562, 0.0
      %603 = vst.msk [vmem:[#allocation2 + $0x150] sm:$0xff] %vm559, 0.0
      %604 = vst.msk [vmem:[#allocation2 + $0x158] sm:$0xff] %vm559, 0.0
      %605 = vst.msk [vmem:[#allocation2 + $0x160] sm:$0x3] %vm562, 0.0
      %606 = vst.msk [vmem:[#allocation2 + $0x168] sm:$0xff] %vm559, 0.0
      %607 = vst.msk [vmem:[#allocation2 + $0x170] sm:$0xff] %vm559, 0.0
      %608 = vst.msk [vmem:[#allocation2 + $0x178] sm:$0x3] %vm562, 0.0
      %609 = vst.msk [vmem:[#allocation2 + $0x180] sm:$0xff] %vm559, 0.0
      %610 = vst.msk [vmem:[#allocation2 + $0x188] sm:$0xff] %vm559, 0.0
      %611 = vst.msk [vmem:[#allocation2 + $0x190] sm:$0x3] %vm562, 0.0
      %612 = vst.msk [vmem:[#allocation2 + $0x198] sm:$0xff] %vm559, 0.0
      %613 = vst.msk [vmem:[#allocation2 + $0x1a0] sm:$0xff] %vm559, 0.0
      %614 = vst.msk [vmem:[#allocation2 + $0x1a8] sm:$0x3] %vm562, 0.0
      %v615 = vld [vmem:[%s422] sm:$0xff]
      %v616 = vld [vmem:[%s422 + $0x8] sm:$0xff]
      %v617 = vld [vmem:[%s422 + $0x10] sm:$0xff]
      %v618 = vld [vmem:[%s422 + $0x18] sm:$0xff]
      %v619 = vld [vmem:[%s422 + $0x20] sm:$0xff]
      %v620 = vld [vmem:[%s422 + $0x28] sm:$0xff]
      %v621 = vld [vmem:[%s422 + $0x30] sm:$0xff]
      %v622 = vld [vmem:[%s422 + $0x38] sm:$0xff]
      %v623 = vld [vmem:[%s422 + $0x40] sm:$0xff]
      %v624 = vld [vmem:[%s422 + $0x48] sm:$0xff]
      %v625 = vld [vmem:[%s422 + $0x50] sm:$0xff]
      %v626 = vld [vmem:[%s422 + $0x58] sm:$0xff]
      %v627 = vld [vmem:[%s422 + $0x60] sm:$0xff]
      %v628 = vld [vmem:[%s422 + $0x68] sm:$0xff]
      %v629 = vld [vmem:[%s422 + $0x70] sm:$0xff]
      %v630 = vld [vmem:[%s422 + $0x78] sm:$0xff]
      %v631 = vld [vmem:[%s422 + $0x80] sm:$0xff]
      %v632 = vld [vmem:[%s422 + $0x88] sm:$0xff]
      %v633 = vld [vmem:[%s422 + $0x90] sm:$0xff]
      %v634 = vld [vmem:[%s422 + $0x98] sm:$0xff]
      %v635 = vld [vmem:[%s422 + $0xa0] sm:$0xff]
      %v636 = vld [vmem:[%s422 + $0xa8] sm:$0xff]
      %v637 = vld [vmem:[%s422 + $0xb0] sm:$0xff]
      %v638 = vld [vmem:[%s422 + $0xb8] sm:$0xff]
      %v639 = vld [vmem:[%s422 + $0xc0] sm:$0xff]
      %v640 = vld [vmem:[%s422 + $0xc8] sm:$0xff]
      %v641 = vld [vmem:[%s422 + $0xd0] sm:$0xff]
      %v642 = vld [vmem:[%s422 + $0xd8] sm:$0xff]
      %v643 = vld [vmem:[%s422 + $0xe0] sm:$0xff]
      %v644 = vld [vmem:[%s422 + $0xe8] sm:$0xff]
      %v645 = vld [vmem:[%s422 + $0xf0] sm:$0xff]
      %v646 = vld [vmem:[%s422 + $0xf8] sm:$0xff]
      %s647 = scalar_lea.vmem [#allocation2], 24
      %648 = vst.msk [vmem:[%s647 + $0x1] sm:$0xff] %vm559, %v615
      %649 = vst.msk [vmem:[%s647 + $0x9] sm:$0xff] %vm559, %v616
      %650 = vst.msk [vmem:[%s647 + $0x19] sm:$0xff] %vm559, %v617
      %651 = vst.msk [vmem:[%s647 + $0x21] sm:$0xff] %vm559, %v618
      %652 = vst.msk [vmem:[%s647 + $0x31] sm:$0xff] %vm559, %v619
      %653 = vst.msk [vmem:[%s647 + $0x39] sm:$0xff] %vm559, %v620
      %654 = vst.msk [vmem:[%s647 + $0x49] sm:$0xff] %vm559, %v621
      %655 = vst.msk [vmem:[%s647 + $0x51] sm:$0xff] %vm559, %v622
      %656 = vst.msk [vmem:[%s647 + $0x61] sm:$0xff] %vm559, %v623
      %657 = vst.msk [vmem:[%s647 + $0x69] sm:$0xff] %vm559, %v624
      %658 = vst.msk [vmem:[%s647 + $0x79] sm:$0xff] %vm559, %v625
      %659 = vst.msk [vmem:[%s647 + $0x81] sm:$0xff] %vm559, %v626
      %660 = vst.msk [vmem:[%s647 + $0x91] sm:$0xff] %vm559, %v627
      %661 = vst.msk [vmem:[%s647 + $0x99] sm:$0xff] %vm559, %v628
      %662 = vst.msk [vmem:[%s647 + $0xa9] sm:$0xff] %vm559, %v629
      %663 = vst.msk [vmem:[%s647 + $0xb1] sm:$0xff] %vm559, %v630
      %664 = vst.msk [vmem:[%s647 + $0xc1] sm:$0xff] %vm559, %v631
      %665 = vst.msk [vmem:[%s647 + $0xc9] sm:$0xff] %vm559, %v632
      %666 = vst.msk [vmem:[%s647 + $0xd9] sm:$0xff] %vm559, %v633
      %667 = vst.msk [vmem:[%s647 + $0xe1] sm:$0xff] %vm559, %v634
      %668 = vst.msk [vmem:[%s647 + $0xf1] sm:$0xff] %vm559, %v635
      %669 = vst.msk [vmem:[%s647 + $0xf9] sm:$0xff] %vm559, %v636
      %670 = vst.msk [vmem:[%s647 + $0x109] sm:$0xff] %vm559, %v637
      %671 = vst.msk [vmem:[%s647 + $0x111] sm:$0xff] %vm559, %v638
      %672 = vst.msk [vmem:[%s647 + $0x121] sm:$0xff] %vm559, %v639
      %673 = vst.msk [vmem:[%s647 + $0x129] sm:$0xff] %vm559, %v640
      %674 = vst.msk [vmem:[%s647 + $0x139] sm:$0xff] %vm559, %v641
      %675 = vst.msk [vmem:[%s647 + $0x141] sm:$0xff] %vm559, %v642
      %676 = vst.msk [vmem:[%s647 + $0x151] sm:$0xff] %vm559, %v643
      %677 = vst.msk [vmem:[%s647 + $0x159] sm:$0xff] %vm559, %v644
      %678 = vst.msk [vmem:[%s647 + $0x169] sm:$0xff] %vm559, %v645
      %679 = vst.msk [vmem:[%s647 + $0x171] sm:$0xff] %vm559, %v646
      %v680 = vld [vmem:[#allocation2] sm:$0xff]
      %v681 = vld [vmem:[#allocation2 + $0x8] sm:$0xff]
      %v682 = vld [vmem:[#allocation2 + $0x18] sm:$0xff]
      %v683 = vld [vmem:[#allocation2 + $0x20] sm:$0xff]
      %v684 = vld [vmem:[#allocation2 + $0x30] sm:$0xff]
      %v685 = vld [vmem:[#allocation2 + $0x38] sm:$0xff]
      %v686 = vld [vmem:[#allocation2 + $0x48] sm:$0xff]
      %v687 = vld [vmem:[#allocation2 + $0x50] sm:$0xff]
      %v688 = vld [vmem:[#allocation2 + $0x60] sm:$0xff]
      %v689 = vld [vmem:[#allocation2 + $0x68] sm:$0xff]
      %v690 = vld [vmem:[#allocation2 + $0x78] sm:$0xff]
      %v691 = vld [vmem:[#allocation2 + $0x80] sm:$0xff]
      %v692 = vld [vmem:[#allocation2 + $0x90] sm:$0xff]
      %v693 = vld [vmem:[#allocation2 + $0x98] sm:$0xff]
      %v694 = vld [vmem:[#allocation2 + $0xa8] sm:$0xff]
      %v695 = vld [vmem:[#allocation2 + $0xb0] sm:$0xff]
      %v696 = vld [vmem:[#allocation2 + $0xc0] sm:$0xff]
      %v697 = vld [vmem:[#allocation2 + $0xc8] sm:$0xff]
      %v698 = vld [vmem:[#allocation2 + $0xd8] sm:$0xff]
      %v699 = vld [vmem:[#allocation2 + $0xe0] sm:$0xff]
      %v700 = vld [vmem:[#allocation2 + $0xf0] sm:$0xff]
      %v701 = vld [vmem:[#allocation2 + $0xf8] sm:$0xff]
      %v702 = vld [vmem:[#allocation2 + $0x108] sm:$0xff]
      %v703 = vld [vmem:[#allocation2 + $0x110] sm:$0xff]
      %v704 = vld [vmem:[#allocation2 + $0x120] sm:$0xff]
      %v705 = vld [vmem:[#allocation2 + $0x128] sm:$0xff]
      %v706 = vld [vmem:[#allocation2 + $0x138] sm:$0xff]
      %v707 = vld [vmem:[#allocation2 + $0x140] sm:$0xff]
      %v708 = vld [vmem:[#allocation2 + $0x150] sm:$0xff]
      %v709 = vld [vmem:[#allocation2 + $0x158] sm:$0xff]
      %v710 = vld [vmem:[#allocation2 + $0x168] sm:$0xff]
      %v711 = vld [vmem:[#allocation2 + $0x170] sm:$0xff]
      %v712 = vpack.c.bf16 %v681, %v680
      %v713 = vpack.c.bf16 %v683, %v682
      %v714 = vpack.c.bf16 %v685, %v684
      %v715 = vpack.c.bf16 %v687, %v686
      %v716 = vpack.c.bf16 %v689, %v688
      %v717 = vpack.c.bf16 %v691, %v690
      %v718 = vpack.c.bf16 %v693, %v692
      %v719 = vpack.c.bf16 %v695, %v694
      %v720 = vpack.c.bf16 %v697, %v696
      %v721 = vpack.c.bf16 %v699, %v698
      %v722 = vpack.c.bf16 %v701, %v700
      %v723 = vpack.c.bf16 %v703, %v702
      %v724 = vpack.c.bf16 %v705, %v704
      %v725 = vpack.c.bf16 %v707, %v706
      %v726 = vpack.c.bf16 %v709, %v708
      %v727 = vpack.c.bf16 %v711, %v710
      %v728 = vld [vmem:[%s6] sm:$0x3]
      %v729 = vld [vmem:[#allocation2 + $0x1] sm:$0xff]
      %v730 = vld [vmem:[#allocation2 + $0x9] sm:$0xff]
      %v731 = vld [vmem:[#allocation2 + $0x19] sm:$0xff]
      %v732 = vld [vmem:[#allocation2 + $0x21] sm:$0xff]
      %v733 = vld [vmem:[#allocation2 + $0x31] sm:$0xff]
      %v734 = vld [vmem:[#allocation2 + $0x39] sm:$0xff]
      %v735 = vld [vmem:[#allocation2 + $0x49] sm:$0xff]
      %v736 = vld [vmem:[#allocation2 + $0x51] sm:$0xff]
      %v737 = vld [vmem:[#allocation2 + $0x61] sm:$0xff]
      %v738 = vld [vmem:[#allocation2 + $0x69] sm:$0xff]
      %v739 = vld [vmem:[#allocation2 + $0x79] sm:$0xff]
      %v740 = vld [vmem:[#allocation2 + $0x81] sm:$0xff]
      %v741 = vld [vmem:[#allocation2 + $0x91] sm:$0xff]
      %v742 = vld [vmem:[#allocation2 + $0x99] sm:$0xff]
      %v743 = vld [vmem:[#allocation2 + $0xa9] sm:$0xff]
      %v744 = vld [vmem:[#allocation2 + $0xb1] sm:$0xff]
      %v745 = vld [vmem:[#allocation2 + $0xc1] sm:$0xff]
      %v746 = vld [vmem:[#allocation2 + $0xc9] sm:$0xff]
      %v747 = vld [vmem:[#allocation2 + $0xd9] sm:$0xff]
      %v748 = vld [vmem:[#allocation2 + $0xe1] sm:$0xff]
      %v749 = vld [vmem:[#allocation2 + $0xf1] sm:$0xff]
      %v750 = vld [vmem:[#allocation2 + $0xf9] sm:$0xff]
      %v751 = vld [vmem:[#allocation2 + $0x109] sm:$0xff]
      %v752 = vld [vmem:[#allocation2 + $0x111] sm:$0xff]
      %v753 = vld [vmem:[#allocation2 + $0x121] sm:$0xff]
      %v754 = vld [vmem:[#allocation2 + $0x129] sm:$0xff]
      %v755 = vld [vmem:[#allocation2 + $0x139] sm:$0xff]
      %v756 = vld [vmem:[#allocation2 + $0x141] sm:$0xff]
      %v757 = vld [vmem:[#allocation2 + $0x151] sm:$0xff]
      %v758 = vld [vmem:[#allocation2 + $0x159] sm:$0xff]
      %v759 = vld [vmem:[#allocation2 + $0x169] sm:$0xff]
      %v760 = vld [vmem:[#allocation2 + $0x171] sm:$0xff]
      %v761 = vpack.c.bf16 %v730, %v729
      %v762 = vpack.c.bf16 %v732, %v731
      %v763 = vpack.c.bf16 %v734, %v733
      %v764 = vpack.c.bf16 %v736, %v735
      %v765 = vpack.c.bf16 %v738, %v737
      %v766 = vpack.c.bf16 %v740, %v739
      %v767 = vpack.c.bf16 %v742, %v741
      %v768 = vpack.c.bf16 %v744, %v743
      %v769 = vpack.c.bf16 %v746, %v745
      %v770 = vpack.c.bf16 %v748, %v747
      %v771 = vpack.c.bf16 %v750, %v749
      %v772 = vpack.c.bf16 %v752, %v751
      %v773 = vpack.c.bf16 %v754, %v753
      %v774 = vpack.c.bf16 %v756, %v755
      %v775 = vpack.c.bf16 %v758, %v757
      %v776 = vpack.c.bf16 %v760, %v759
      %s777 = scalar_lea.vmem %s6, 2
      %v778 = vld [vmem:[%s777] sm:$0x3]
      %v780 = vsel %vm559, %v761, 0
      %v783 = vsel %vm559, %v762, 0
      %v786 = vsel %vm559, %v763, 0
      %v789 = vsel %vm559, %v764, 0
      %v792 = vsel %vm559, %v765, 0
      %v795 = vsel %vm559, %v766, 0
      %v798 = vsel %vm559, %v767, 0
      %v801 = vsel %vm559, %v768, 0
      %v804 = vsel %vm559, %v769, 0
      %v807 = vsel %vm559, %v770, 0
      %v810 = vsel %vm559, %v771, 0
      %v813 = vsel %vm559, %v772, 0
      %v816 = vsel %vm559, %v773, 0
      %v819 = vsel %vm559, %v774, 0
      %v822 = vsel %vm559, %v775, 0
      %v825 = vsel %vm559, %v776, 0
      %vm827 = vcmask 1041408
      %v829 = vsel %vm827, %v778, 0
      %831 = vmatprep.subr.bf16.mxu0 0
      %832 = vmatpush1.bf16.msra.mxu0 %v829
      %833 = vmatprep.subr.bf16.mxu0 0
      %834 = vmatpush1.bf16.msra.mxu0 0
      %835 = vmatprep.subr.bf16.mxu0 0
      %836 = vmatpush1.bf16.msra.mxu0 0
      %837 = vmatprep.subr.bf16.mxu0 0
      %838 = vmatpush1.bf16.msra.mxu0 0
      %839 = vmatprep.subr.bf16.mxu0 0
      %840 = vmatpush1.bf16.msra.mxu0 0
      %841 = vmatprep.subr.bf16.mxu0 0
      %842 = vmatpush1.bf16.msra.mxu0 0
      %843 = vmatprep.subr.bf16.mxu0 0
      %844 = vmatpush1.bf16.msra.mxu0 0
      %845 = vmatprep.subr.bf16.mxu0 0
      %846 = vmatpush1.bf16.msra.mxu0 0
      %847 = vmatprep.subr.bf16.mxu0 0
      %848 = vmatpush1.bf16.msra.mxu0 0
      %849 = vmatprep.subr.bf16.mxu0 0
      %850 = vmatpush1.bf16.msra.mxu0 0
      %851 = vmatprep.subr.bf16.mxu0 0
      %852 = vmatpush1.bf16.msra.mxu0 0
      %853 = vmatprep.subr.bf16.mxu0 0
      %854 = vmatpush1.bf16.msra.mxu0 0
      %855 = vmatprep.subr.bf16.mxu0 0
      %856 = vmatpush1.bf16.msra.mxu0 0
      %857 = vmatprep.subr.bf16.mxu0 0
      %858 = vmatpush1.bf16.msra.mxu0 0
      %859 = vmatprep.subr.bf16.mxu0 0
      %860 = vmatpush1.bf16.msra.mxu0 0
      %861 = vmatprep.subr.bf16.mxu0 0
      %862 = vmatpush1.bf16.msra.mxu0 0
      %863 = vmatprep.mubr.bf16.mxu0 0
      %864 = vmatmul.mubr.bf16.gmra.mrb[0].mxu0 %v780
      %v865 = vpop.f32.mrb[0].mxu0
      %v866 = vadd.f32 0.0, %v865
      %v867 = vpop.f32.mrb[0].mxu0
      %v868 = vpop.f32.mrb[0].mxu0
      %v869 = vadd.f32 0.0, %v868
      %v870 = vpop.f32.mrb[0].mxu0
      %871 = vmatprep.mubr.bf16.mxu0 0
      %872 = vmatmul.mubr.bf16.gmra.mrb[0].mxu0 %v783
      %v873 = vpop.f32.mrb[0].mxu0
      %v874 = vadd.f32 0.0, %v873
      %v875 = vpop.f32.mrb[0].mxu0
      %v876 = vpop.f32.mrb[0].mxu0
      %v877 = vadd.f32 0.0, %v876
      %v878 = vpop.f32.mrb[0].mxu0
      %879 = vmatprep.mubr.bf16.mxu0 0
      %880 = vmatmul.mubr.bf16.gmra.mrb[0].mxu0 %v786
      %v881 = vpop.f32.mrb[0].mxu0
      %v882 = vadd.f32 0.0, %v881
      %v883 = vpop.f32.mrb[0].mxu0
      %v884 = vpop.f32.mrb[0].mxu0
      %v885 = vadd.f32 0.0, %v884
      %v886 = vpop.f32.mrb[0].mxu0
      %887 = vmatprep.mubr.bf16.mxu0 0
      %888 = vmatmul.mubr.bf16.gmra.mrb[0].mxu0 %v789
      %v889 = vpop.f32.mrb[0].mxu0
      %v890 = vadd.f32 0.0, %v889
      %v891 = vpop.f32.mrb[0].mxu0
      %v892 = vpop.f32.mrb[0].mxu0
      %v893 = vadd.f32 0.0, %v892
      %v894 = vpop.f32.mrb[0].mxu0
      %895 = vmatprep.mubr.bf16.mxu0 0
      %896 = vmatmul.mubr.bf16.gmra.mrb[0].mxu0 %v792
      %v897 = vpop.f32.mrb[0].mxu0
      %v898 = vadd.f32 0.0, %v897
      %v899 = vpop.f32.mrb[0].mxu0
      %v900 = vpop.f32.mrb[0].mxu0
      %v901 = vadd.f32 0.0, %v900
      %v902 = vpop.f32.mrb[0].mxu0
      %903 = vmatprep.mubr.bf16.mxu0 0
      %904 = vmatmul.mubr.bf16.gmra.mrb[0].mxu0 %v795
      %v905 = vpop.f32.mrb[0].mxu0
      %v906 = vadd.f32 0.0, %v905
      %v907 = vpop.f32.mrb[0].mxu0
      %v908 = vpop.f32.mrb[0].mxu0
      %v909 = vadd.f32 0.0, %v908
      %v910 = vpop.f32.mrb[0].mxu0
      %911 = vmatprep.mubr.bf16.mxu0 0
      %912 = vmatmul.mubr.bf16.gmra.mrb[0].mxu0 %v798
      %v913 = vpop.f32.mrb[0].mxu0
      %v914 = vadd.f32 0.0, %v913
      %v915 = vpop.f32.mrb[0].mxu0
      %v916 = vpop.f32.mrb[0].mxu0
      %v917 = vadd.f32 0.0, %v916
      %v918 = vpop.f32.mrb[0].mxu0
      %919 = vmatprep.mubr.bf16.mxu0 0
      %920 = vmatmul.mubr.bf16.gmra.mrb[0].mxu0 %v801
      %v921 = vpop.f32.mrb[0].mxu0
      %v922 = vadd.f32 0.0, %v921
      %v923 = vpop.f32.mrb[0].mxu0
      %v924 = vpop.f32.mrb[0].mxu0
      %v925 = vadd.f32 0.0, %v924
      %v926 = vpop.f32.mrb[0].mxu0
      %927 = vmatprep.mubr.bf16.mxu0 0
      %928 = vmatmul.mubr.bf16.gmra.mrb[0].mxu0 %v804
      %v929 = vpop.f32.mrb[0].mxu0
      %v930 = vadd.f32 0.0, %v929
      %v931 = vpop.f32.mrb[0].mxu0
      %v932 = vpop.f32.mrb[0].mxu0
      %v933 = vadd.f32 0.0, %v932
      %v934 = vpop.f32.mrb[0].mxu0
      %935 = vmatprep.mubr.bf16.mxu0 0
      %936 = vmatmul.mubr.bf16.gmra.mrb[0].mxu0 %v807
      %v937 = vpop.f32.mrb[0].mxu0
      %v938 = vadd.f32 0.0, %v937
      %v939 = vpop.f32.mrb[0].mxu0
      %v940 = vpop.f32.mrb[0].mxu0
      %v941 = vadd.f32 0.0, %v940
      %v942 = vpop.f32.mrb[0].mxu0
      %943 = vmatprep.mubr.bf16.mxu0 0
      %944 = vmatmul.mubr.bf16.gmra.mrb[0].mxu0 %v810
      %v945 = vpop.f32.mrb[0].mxu0
      %v946 = vadd.f32 0.0, %v945
      %v947 = vpop.f32.mrb[0].mxu0
      %v948 = vpop.f32.mrb[0].mxu0
      %v949 = vadd.f32 0.0, %v948
      %v950 = vpop.f32.mrb[0].mxu0
      %951 = vmatprep.mubr.bf16.mxu0 0
      %952 = vmatmul.mubr.bf16.gmra.mrb[0].mxu0 %v813
      %v953 = vpop.f32.mrb[0].mxu0
      %v954 = vadd.f32 0.0, %v953
      %v955 = vpop.f32.mrb[0].mxu0
      %v956 = vpop.f32.mrb[0].mxu0
      %v957 = vadd.f32 0.0, %v956
      %v958 = vpop.f32.mrb[0].mxu0
      %959 = vmatprep.mubr.bf16.mxu0 0
      %960 = vmatmul.mubr.bf16.gmra.mrb[0].mxu0 %v816
      %v961 = vpop.f32.mrb[0].mxu0
      %v962 = vadd.f32 0.0, %v961
      %v963 = vpop.f32.mrb[0].mxu0
      %v964 = vpop.f32.mrb[0].mxu0
      %v965 = vadd.f32 0.0, %v964
      %v966 = vpop.f32.mrb[0].mxu0
      %967 = vmatprep.mubr.bf16.mxu0 0
      %968 = vmatmul.mubr.bf16.gmra.mrb[0].mxu0 %v819
      %v969 = vpop.f32.mrb[0].mxu0
      %v970 = vadd.f32 0.0, %v969
      %v971 = vpop.f32.mrb[0].mxu0
      %v972 = vpop.f32.mrb[0].mxu0
      %v973 = vadd.f32 0.0, %v972
      %v974 = vpop.f32.mrb[0].mxu0
      %975 = vmatprep.mubr.bf16.mxu0 0
      %976 = vmatmul.mubr.bf16.gmra.mrb[0].mxu0 %v822
      %v977 = vpop.f32.mrb[0].mxu0
      %v978 = vadd.f32 0.0, %v977
      %v979 = vpop.f32.mrb[0].mxu0
      %v980 = vpop.f32.mrb[0].mxu0
      %v981 = vadd.f32 0.0, %v980
      %v982 = vpop.f32.mrb[0].mxu0
      %983 = vmatprep.mubr.bf16.mxu0 0
      %984 = vmatmul.mubr.bf16.gmra.mrb[0].mxu0 %v825
      %v985 = vpop.f32.mrb[0].mxu0
      %v986 = vadd.f32 0.0, %v985
      %v987 = vpop.f32.mrb[0].mxu0
      %v988 = vpop.f32.mrb[0].mxu0
      %v989 = vadd.f32 0.0, %v988
      %v990 = vpop.f32.mrb[0].mxu0
      %991 = vdwg.mxu0
      %v993 = vsel %vm559, %v712, 0
      %v996 = vsel %vm559, %v713, 0
      %v999 = vsel %vm559, %v714, 0
      %v1002 = vsel %vm559, %v715, 0
      %v1005 = vsel %vm559, %v716, 0
      %v1008 = vsel %vm559, %v717, 0
      %v1011 = vsel %vm559, %v718, 0
      %v1014 = vsel %vm559, %v719, 0
      %v1017 = vsel %vm559, %v720, 0
      %v1020 = vsel %vm559, %v721, 0
      %v1023 = vsel %vm559, %v722, 0
      %v1026 = vsel %vm559, %v723, 0
      %v1029 = vsel %vm559, %v724, 0
      %v1032 = vsel %vm559, %v725, 0
      %v1035 = vsel %vm559, %v726, 0
      %v1038 = vsel %vm559, %v727, 0
      %v1041 = vsel %vm827, %v728, 0
      %1043 = vmatprep.subr.bf16.mxu0 0
      %1044 = vmatpush1.bf16.msra.mxu0 %v1041
      %1045 = vmatprep.subr.bf16.mxu0 0
      %1046 = vmatpush1.bf16.msra.mxu0 0
      %1047 = vmatprep.subr.bf16.mxu0 0
      %1048 = vmatpush1.bf16.msra.mxu0 0
      %1049 = vmatprep.subr.bf16.mxu0 0
      %1050 = vmatpush1.bf16.msra.mxu0 0
      %1051 = vmatprep.subr.bf16.mxu0 0
      %1052 = vmatpush1.bf16.msra.mxu0 0
      %1053 = vmatprep.subr.bf16.mxu0 0
      %1054 = vmatpush1.bf16.msra.mxu0 0
      %1055 = vmatprep.subr.bf16.mxu0 0
      %1056 = vmatpush1.bf16.msra.mxu0 0
      %1057 = vmatprep.subr.bf16.mxu0 0
      %1058 = vmatpush1.bf16.msra.mxu0 0
      %1059 = vmatprep.subr.bf16.mxu0 0
      %1060 = vmatpush1.bf16.msra.mxu0 0
      %1061 = vmatprep.subr.bf16.mxu0 0
      %1062 = vmatpush1.bf16.msra.mxu0 0
      %1063 = vmatprep.subr.bf16.mxu0 0
      %1064 = vmatpush1.bf16.msra.mxu0 0
      %1065 = vmatprep.subr.bf16.mxu0 0
      %1066 = vmatpush1.bf16.msra.mxu0 0
      %1067 = vmatprep.subr.bf16.mxu0 0
      %1068 = vmatpush1.bf16.msra.mxu0 0
      %1069 = vmatprep.subr.bf16.mxu0 0
      %1070 = vmatpush1.bf16.msra.mxu0 0
      %1071 = vmatprep.subr.bf16.mxu0 0
      %1072 = vmatpush1.bf16.msra.mxu0 0
      %1073 = vmatprep.subr.bf16.mxu0 0
      %1074 = vmatpush1.bf16.msra.mxu0 0
      %1075 = vmatprep.mubr.bf16.mxu0 0
      %1076 = vmatmul.mubr.bf16.gmra.mrb[0].mxu0 %v993
      %v1077 = vpop.f32.mrb[0].mxu0
      %v1078 = vadd.f32 %v866, %v1077
      %v1079 = vpop.f32.mrb[0].mxu0
      %v1080 = vpop.f32.mrb[0].mxu0
      %v1081 = vadd.f32 %v869, %v1080
      %v1082 = vpop.f32.mrb[0].mxu0
      %1083 = vmatprep.mubr.bf16.mxu0 0
      %1084 = vmatmul.mubr.bf16.gmra.mrb[0].mxu0 %v996
      %v1085 = vpop.f32.mrb[0].mxu0
      %v1086 = vadd.f32 %v874, %v1085
      %v1087 = vpop.f32.mrb[0].mxu0
      %v1088 = vpop.f32.mrb[0].mxu0
      %v1089 = vadd.f32 %v877, %v1088
      %v1090 = vpop.f32.mrb[0].mxu0
      %1091 = vmatprep.mubr.bf16.mxu0 0
      %1092 = vmatmul.mubr.bf16.gmra.mrb[0].mxu0 %v999
      %v1093 = vpop.f32.mrb[0].mxu0
      %v1094 = vadd.f32 %v882, %v1093
      %v1095 = vpop.f32.mrb[0].mxu0
      %v1096 = vpop.f32.mrb[0].mxu0
      %v1097 = vadd.f32 %v885, %v1096
      %v1098 = vpop.f32.mrb[0].mxu0
      %1099 = vmatprep.mubr.bf16.mxu0 0
      %1100 = vmatmul.mubr.bf16.gmra.mrb[0].mxu0 %v1002
      %v1101 = vpop.f32.mrb[0].mxu0
      %v1102 = vadd.f32 %v890, %v1101
      %v1103 = vpop.f32.mrb[0].mxu0
      %v1104 = vpop.f32.mrb[0].mxu0
      %v1105 = vadd.f32 %v893, %v1104
      %v1106 = vpop.f32.mrb[0].mxu0
      %1107 = vmatprep.mubr.bf16.mxu0 0
      %1108 = vmatmul.mubr.bf16.gmra.mrb[0].mxu0 %v1005
      %v1109 = vpop.f32.mrb[0].mxu0
      %v1110 = vadd.f32 %v898, %v1109
      %v1111 = vpop.f32.mrb[0].mxu0
      %v1112 = vpop.f32.mrb[0].mxu0
      %v1113 = vadd.f32 %v901, %v1112
      %v1114 = vpop.f32.mrb[0].mxu0
      %1115 = vmatprep.mubr.bf16.mxu0 0
      %1116 = vmatmul.mubr.bf16.gmra.mrb[0].mxu0 %v1008
      %v1117 = vpop.f32.mrb[0].mxu0
      %v1118 = vadd.f32 %v906, %v1117
      %v1119 = vpop.f32.mrb[0].mxu0
      %v1120 = vpop.f32.mrb[0].mxu0
      %v1121 = vadd.f32 %v909, %v1120
      %v1122 = vpop.f32.mrb[0].mxu0
      %1123 = vmatprep.mubr.bf16.mxu0 0
      %1124 = vmatmul.mubr.bf16.gmra.mrb[0].mxu0 %v1011
      %v1125 = vpop.f32.mrb[0].mxu0
      %v1126 = vadd.f32 %v914, %v1125
      %v1127 = vpop.f32.mrb[0].mxu0
      %v1128 = vpop.f32.mrb[0].mxu0
      %v1129 = vadd.f32 %v917, %v1128
      %v1130 = vpop.f32.mrb[0].mxu0
      %1131 = vmatprep.mubr.bf16.mxu0 0
      %1132 = vmatmul.mubr.bf16.gmra.mrb[0].mxu0 %v1014
      %v1133 = vpop.f32.mrb[0].mxu0
      %v1134 = vadd.f32 %v922, %v1133
      %v1135 = vpop.f32.mrb[0].mxu0
      %v1136 = vpop.f32.mrb[0].mxu0
      %v1137 = vadd.f32 %v925, %v1136
      %v1138 = vpop.f32.mrb[0].mxu0
      %1139 = vmatprep.mubr.bf16.mxu0 0
      %1140 = vmatmul.mubr.bf16.gmra.mrb[0].mxu0 %v1017
      %v1141 = vpop.f32.mrb[0].mxu0
      %v1142 = vadd.f32 %v930, %v1141
      %v1143 = vpop.f32.mrb[0].mxu0
      %v1144 = vpop.f32.mrb[0].mxu0
      %v1145 = vadd.f32 %v933, %v1144
      %v1146 = vpop.f32.mrb[0].mxu0
      %1147 = vmatprep.mubr.bf16.mxu0 0
      %1148 = vmatmul.mubr.bf16.gmra.mrb[0].mxu0 %v1020
      %v1149 = vpop.f32.mrb[0].mxu0
      %v1150 = vadd.f32 %v938, %v1149
      %v1151 = vpop.f32.mrb[0].mxu0
      %v1152 = vpop.f32.mrb[0].mxu0
      %v1153 = vadd.f32 %v941, %v1152
      %v1154 = vpop.f32.mrb[0].mxu0
      %1155 = vmatprep.mubr.bf16.mxu0 0
      %1156 = vmatmul.mubr.bf16.gmra.mrb[0].mxu0 %v1023
      %v1157 = vpop.f32.mrb[0].mxu0
      %v1158 = vadd.f32 %v946, %v1157
      %v1159 = vpop.f32.mrb[0].mxu0
      %v1160 = vpop.f32.mrb[0].mxu0
      %v1161 = vadd.f32 %v949, %v1160
      %v1162 = vpop.f32.mrb[0].mxu0
      %1163 = vmatprep.mubr.bf16.mxu0 0
      %1164 = vmatmul.mubr.bf16.gmra.mrb[0].mxu0 %v1026
      %v1165 = vpop.f32.mrb[0].mxu0
      %v1166 = vadd.f32 %v954, %v1165
      %v1167 = vpop.f32.mrb[0].mxu0
      %v1168 = vpop.f32.mrb[0].mxu0
      %v1169 = vadd.f32 %v957, %v1168
      %v1170 = vpop.f32.mrb[0].mxu0
      %1171 = vmatprep.mubr.bf16.mxu0 0
      %1172 = vmatmul.mubr.bf16.gmra.mrb[0].mxu0 %v1029
      %v1173 = vpop.f32.mrb[0].mxu0
      %v1174 = vadd.f32 %v962, %v1173
      %v1175 = vpop.f32.mrb[0].mxu0
      %v1176 = vpop.f32.mrb[0].mxu0
      %v1177 = vadd.f32 %v965, %v1176
      %v1178 = vpop.f32.mrb[0].mxu0
      %1179 = vmatprep.mubr.bf16.mxu0 0
      %1180 = vmatmul.mubr.bf16.gmra.mrb[0].mxu0 %v1032
      %v1181 = vpop.f32.mrb[0].mxu0
      %v1182 = vadd.f32 %v970, %v1181
      %v1183 = vpop.f32.mrb[0].mxu0
      %v1184 = vpop.f32.mrb[0].mxu0
      %v1185 = vadd.f32 %v973, %v1184
      %v1186 = vpop.f32.mrb[0].mxu0
      %1187 = vmatprep.mubr.bf16.mxu0 0
      %1188 = vmatmul.mubr.bf16.gmra.mrb[0].mxu0 %v1035
      %v1189 = vpop.f32.mrb[0].mxu0
      %v1190 = vadd.f32 %v978, %v1189
      %v1191 = vpop.f32.mrb[0].mxu0
      %v1192 = vpop.f32.mrb[0].mxu0
      %v1193 = vadd.f32 %v981, %v1192
      %v1194 = vpop.f32.mrb[0].mxu0
      %1195 = vmatprep.mubr.bf16.mxu0 0
      %1196 = vmatmul.mubr.bf16.gmra.mrb[0].mxu0 %v1038
      %v1197 = vpop.f32.mrb[0].mxu0
      %v1198 = vadd.f32 %v986, %v1197
      %v1199 = vpop.f32.mrb[0].mxu0
      %v1200 = vpop.f32.mrb[0].mxu0
      %v1201 = vadd.f32 %v989, %v1200
      %v1202 = vpop.f32.mrb[0].mxu0
      %1203 = vdwg.mxu0
      %v1204 = vld [vmem:[#allocation2 + $0x2] sm:$0xff]
      %v1205 = vld [vmem:[#allocation2 + $0xa] sm:$0xff]
      %v1206 = vld [vmem:[#allocation2 + $0x1a] sm:$0xff]
      %v1207 = vld [vmem:[#allocation2 + $0x22] sm:$0xff]
      %v1208 = vld [vmem:[#allocation2 + $0x32] sm:$0xff]
      %v1209 = vld [vmem:[#allocation2 + $0x3a] sm:$0xff]
      %v1210 = vld [vmem:[#allocation2 + $0x4a] sm:$0xff]
      %v1211 = vld [vmem:[#allocation2 + $0x52] sm:$0xff]
      %v1212 = vld [vmem:[#allocation2 + $0x62] sm:$0xff]
      %v1213 = vld [vmem:[#allocation2 + $0x6a] sm:$0xff]
      %v1214 = vld [vmem:[#allocation2 + $0x7a] sm:$0xff]
      %v1215 = vld [vmem:[#allocation2 + $0x82] sm:$0xff]
      %v1216 = vld [vmem:[#allocation2 + $0x92] sm:$0xff]
      %v1217 = vld [vmem:[#allocation2 + $0x9a] sm:$0xff]
      %v1218 = vld [vmem:[#allocation2 + $0xaa] sm:$0xff]
      %v1219 = vld [vmem:[#allocation2 + $0xb2] sm:$0xff]
      %v1220 = vld [vmem:[#allocation2 + $0xc2] sm:$0xff]
      %v1221 = vld [vmem:[#allocation2 + $0xca] sm:$0xff]
      %v1222 = vld [vmem:[#allocation2 + $0xda] sm:$0xff]
      %v1223 = vld [vmem:[#allocation2 + $0xe2] sm:$0xff]
      %v1224 = vld [vmem:[#allocation2 + $0xf2] sm:$0xff]
      %v1225 = vld [vmem:[#allocation2 + $0xfa] sm:$0xff]
      %v1226 = vld [vmem:[#allocation2 + $0x10a] sm:$0xff]
      %v1227 = vld [vmem:[#allocation2 + $0x112] sm:$0xff]
      %v1228 = vld [vmem:[#allocation2 + $0x122] sm:$0xff]
      %v1229 = vld [vmem:[#allocation2 + $0x12a] sm:$0xff]
      %v1230 = vld [vmem:[#allocation2 + $0x13a] sm:$0xff]
      %v1231 = vld [vmem:[#allocation2 + $0x142] sm:$0xff]
      %v1232 = vld [vmem:[#allocation2 + $0x152] sm:$0xff]
      %v1233 = vld [vmem:[#allocation2 + $0x15a] sm:$0xff]
      %v1234 = vld [vmem:[#allocation2 + $0x16a] sm:$0xff]
      %v1235 = vld [vmem:[#allocation2 + $0x172] sm:$0xff]
      %v1236 = vpack.c.bf16 %v1205, %v1204
      %v1237 = vpack.c.bf16 %v1207, %v1206
      %v1238 = vpack.c.bf16 %v1209, %v1208
      %v1239 = vpack.c.bf16 %v1211, %v1210
      %v1240 = vpack.c.bf16 %v1213, %v1212
      %v1241 = vpack.c.bf16 %v1215, %v1214
      %v1242 = vpack.c.bf16 %v1217, %v1216
      %v1243 = vpack.c.bf16 %v1219, %v1218
      %v1244 = vpack.c.bf16 %v1221, %v1220
      %v1245 = vpack.c.bf16 %v1223, %v1222
      %v1246 = vpack.c.bf16 %v1225, %v1224
      %v1247 = vpack.c.bf16 %v1227, %v1226
      %v1248 = vpack.c.bf16 %v1229, %v1228
      %v1249 = vpack.c.bf16 %v1231, %v1230
      %v1250 = vpack.c.bf16 %v1233, %v1232
      %v1251 = vpack.c.bf16 %v1235, %v1234
      %s1252 = scalar_lea.vmem %s6, 4
      %v1253 = vld [vmem:[%s1252] sm:$0x3]
      %v1255 = vsel %vm559, %v1236, 0
      %v1258 = vsel %vm559, %v1237, 0
      %v1261 = vsel %vm559, %v1238, 0
      %v1264 = vsel %vm559, %v1239, 0
      %v1267 = vsel %vm559, %v1240, 0
      %v1270 = vsel %vm559, %v1241, 0
      %v1273 = vsel %vm559, %v1242, 0
      %v1276 = vsel %vm559, %v1243, 0
      %v1279 = vsel %vm559, %v1244, 0
      %v1282 = vsel %vm559, %v1245, 0
      %v1285 = vsel %vm559, %v1246, 0
      %v1288 = vsel %vm559, %v1247, 0
      %v1291 = vsel %vm559, %v1248, 0
      %v1294 = vsel %vm559, %v1249, 0
      %v1297 = vsel %vm559, %v1250, 0
      %v1300 = vsel %vm559, %v1251, 0
      %v1303 = vsel %vm827, %v1253, 0
      %1305 = vmatprep.subr.bf16.mxu0 0
      %1306 = vmatpush1.bf16.msra.mxu0 %v1303
      %1307 = vmatprep.subr.bf16.mxu0 0
      %1308 = vmatpush1.bf16.msra.mxu0 0
      %1309 = vmatprep.subr.bf16.mxu0 0
      %1310 = vmatpush1.bf16.msra.mxu0 0
      %1311 = vmatprep.subr.bf16.mxu0 0
      %1312 = vmatpush1.bf16.msra.mxu0 0
      %1313 = vmatprep.subr.bf16.mxu0 0
      %1314 = vmatpush1.bf16.msra.mxu0 0
      %1315 = vmatprep.subr.bf16.mxu0 0
      %1316 = vmatpush1.bf16.msra.mxu0 0
      %1317 = vmatprep.subr.bf16.mxu0 0
      %1318 = vmatpush1.bf16.msra.mxu0 0
      %1319 = vmatprep.subr.bf16.mxu0 0
      %1320 = vmatpush1.bf16.msra.mxu0 0
      %1321 = vmatprep.subr.bf16.mxu0 0
      %1322 = vmatpush1.bf16.msra.mxu0 0
      %1323 = vmatprep.subr.bf16.mxu0 0
      %1324 = vmatpush1.bf16.msra.mxu0 0
      %1325 = vmatprep.subr.bf16.mxu0 0
      %1326 = vmatpush1.bf16.msra.mxu0 0
      %1327 = vmatprep.subr.bf16.mxu0 0
      %1328 = vmatpush1.bf16.msra.mxu0 0
      %1329 = vmatprep.subr.bf16.mxu0 0
      %1330 = vmatpush1.bf16.msra.mxu0 0
      %1331 = vmatprep.subr.bf16.mxu0 0
      %1332 = vmatpush1.bf16.msra.mxu0 0
      %1333 = vmatprep.subr.bf16.mxu0 0
      %1334 = vmatpush1.bf16.msra.mxu0 0
      %1335 = vmatprep.subr.bf16.mxu0 0
      %1336 = vmatpush1.bf16.msra.mxu0 0
      %1337 = vmatprep.mubr.bf16.mxu0 0
      %1338 = vmatmul.mubr.bf16.gmra.mrb[0].mxu0 %v1255
      %v1339 = vpop.f32.mrb[0].mxu0
      %v1340 = vadd.f32 0.0, %v1339
      %v1341 = vpop.f32.mrb[0].mxu0
      %v1342 = vpop.f32.mrb[0].mxu0
      %v1343 = vadd.f32 0.0, %v1342
      %v1344 = vpop.f32.mrb[0].mxu0
      %1345 = vmatprep.mubr.bf16.mxu0 0
      %1346 = vmatmul.mubr.bf16.gmra.mrb[0].mxu0 %v1258
      %v1347 = vpop.f32.mrb[0].mxu0
      %v1348 = vadd.f32 0.0, %v1347
      %v1349 = vpop.f32.mrb[0].mxu0
      %v1350 = vpop.f32.mrb[0].mxu0
      %v1351 = vadd.f32 0.0, %v1350
      %v1352 = vpop.f32.mrb[0].mxu0
      %1353 = vmatprep.mubr.bf16.mxu0 0
      %1354 = vmatmul.mubr.bf16.gmra.mrb[0].mxu0 %v1261
      %v1355 = vpop.f32.mrb[0].mxu0
      %v1356 = vadd.f32 0.0, %v1355
      %v1357 = vpop.f32.mrb[0].mxu0
      %v1358 = vpop.f32.mrb[0].mxu0
      %v1359 = vadd.f32 0.0, %v1358
      %v1360 = vpop.f32.mrb[0].mxu0
      %1361 = vmatprep.mubr.bf16.mxu0 0
      %1362 = vmatmul.mubr.bf16.gmra.mrb[0].mxu0 %v1264
      %v1363 = vpop.f32.mrb[0].mxu0
      %v1364 = vadd.f32 0.0, %v1363
      %v1365 = vpop.f32.mrb[0].mxu0
      %v1366 = vpop.f32.mrb[0].mxu0
      %v1367 = vadd.f32 0.0, %v1366
      %v1368 = vpop.f32.mrb[0].mxu0
      %1369 = vmatprep.mubr.bf16.mxu0 0
      %1370 = vmatmul.mubr.bf16.gmra.mrb[0].mxu0 %v1267
      %v1371 = vpop.f32.mrb[0].mxu0
      %v1372 = vadd.f32 0.0, %v1371
      %v1373 = vpop.f32.mrb[0].mxu0
      %v1374 = vpop.f32.mrb[0].mxu0
      %v1375 = vadd.f32 0.0, %v1374
      %v1376 = vpop.f32.mrb[0].mxu0
      %1377 = vmatprep.mubr.bf16.mxu0 0
      %1378 = vmatmul.mubr.bf16.gmra.mrb[0].mxu0 %v1270
      %v1379 = vpop.f32.mrb[0].mxu0
      %v1380 = vadd.f32 0.0, %v1379
      %v1381 = vpop.f32.mrb[0].mxu0
      %v1382 = vpop.f32.mrb[0].mxu0
      %v1383 = vadd.f32 0.0, %v1382
      %v1384 = vpop.f32.mrb[0].mxu0
      %1385 = vmatprep.mubr.bf16.mxu0 0
      %1386 = vmatmul.mubr.bf16.gmra.mrb[0].mxu0 %v1273
      %v1387 = vpop.f32.mrb[0].mxu0
      %v1388 = vadd.f32 0.0, %v1387
      %v1389 = vpop.f32.mrb[0].mxu0
      %v1390 = vpop.f32.mrb[0].mxu0
      %v1391 = vadd.f32 0.0, %v1390
      %v1392 = vpop.f32.mrb[0].mxu0
      %1393 = vmatprep.mubr.bf16.mxu0 0
      %1394 = vmatmul.mubr.bf16.gmra.mrb[0].mxu0 %v1276
      %v1395 = vpop.f32.mrb[0].mxu0
      %v1396 = vadd.f32 0.0, %v1395
      %v1397 = vpop.f32.mrb[0].mxu0
      %v1398 = vpop.f32.mrb[0].mxu0
      %v1399 = vadd.f32 0.0, %v1398
      %v1400 = vpop.f32.mrb[0].mxu0
      %1401 = vmatprep.mubr.bf16.mxu0 0
      %1402 = vmatmul.mubr.bf16.gmra.mrb[0].mxu0 %v1279
      %v1403 = vpop.f32.mrb[0].mxu0
      %v1404 = vadd.f32 0.0, %v1403
      %v1405 = vpop.f32.mrb[0].mxu0
      %v1406 = vpop.f32.mrb[0].mxu0
      %v1407 = vadd.f32 0.0, %v1406
      %v1408 = vpop.f32.mrb[0].mxu0
      %1409 = vmatprep.mubr.bf16.mxu0 0
      %1410 = vmatmul.mubr.bf16.gmra.mrb[0].mxu0 %v1282
      %v1411 = vpop.f32.mrb[0].mxu0
      %v1412 = vadd.f32 0.0, %v1411
      %v1413 = vpop.f32.mrb[0].mxu0
      %v1414 = vpop.f32.mrb[0].mxu0
      %v1415 = vadd.f32 0.0, %v1414
      %v1416 = vpop.f32.mrb[0].mxu0
      %1417 = vmatprep.mubr.bf16.mxu0 0
      %1418 = vmatmul.mubr.bf16.gmra.mrb[0].mxu0 %v1285
      %v1419 = vpop.f32.mrb[0].mxu0
      %v1420 = vadd.f32 0.0, %v1419
      %v1421 = vpop.f32.mrb[0].mxu0
      %v1422 = vpop.f32.mrb[0].mxu0
      %v1423 = vadd.f32 0.0, %v1422
      %v1424 = vpop.f32.mrb[0].mxu0
      %1425 = vmatprep.mubr.bf16.mxu0 0
      %1426 = vmatmul.mubr.bf16.gmra.mrb[0].mxu0 %v1288
      %v1427 = vpop.f32.mrb[0].mxu0
      %v1428 = vadd.f32 0.0, %v1427
      %v1429 = vpop.f32.mrb[0].mxu0
      %v1430 = vpop.f32.mrb[0].mxu0
      %v1431 = vadd.f32 0.0, %v1430
      %v1432 = vpop.f32.mrb[0].mxu0
      %1433 = vmatprep.mubr.bf16.mxu0 0
      %1434 = vmatmul.mubr.bf16.gmra.mrb[0].mxu0 %v1291
      %v1435 = vpop.f32.mrb[0].mxu0
      %v1436 = vadd.f32 0.0, %v1435
      %v1437 = vpop.f32.mrb[0].mxu0
      %v1438 = vpop.f32.mrb[0].mxu0
      %v1439 = vadd.f32 0.0, %v1438
      %v1440 = vpop.f32.mrb[0].mxu0
      %1441 = vmatprep.mubr.bf16.mxu0 0
      %1442 = vmatmul.mubr.bf16.gmra.mrb[0].mxu0 %v1294
      %v1443 = vpop.f32.mrb[0].mxu0
      %v1444 = vadd.f32 0.0, %v1443
      %v1445 = vpop.f32.mrb[0].mxu0
      %v1446 = vpop.f32.mrb[0].mxu0
      %v1447 = vadd.f32 0.0, %v1446
      %v1448 = vpop.f32.mrb[0].mxu0
      %1449 = vmatprep.mubr.bf16.mxu0 0
      %1450 = vmatmul.mubr.bf16.gmra.mrb[0].mxu0 %v1297
      %v1451 = vpop.f32.mrb[0].mxu0
      %v1452 = vadd.f32 0.0, %v1451
      %v1453 = vpop.f32.mrb[0].mxu0
      %v1454 = vpop.f32.mrb[0].mxu0
      %v1455 = vadd.f32 0.0, %v1454
      %v1456 = vpop.f32.mrb[0].mxu0
      %1457 = vmatprep.mubr.bf16.mxu0 0
      %1458 = vmatmul.mubr.bf16.gmra.mrb[0].mxu0 %v1300
      %v1459 = vpop.f32.mrb[0].mxu0
      %v1460 = vadd.f32 0.0, %v1459
      %v1461 = vpop.f32.mrb[0].mxu0
      %v1462 = vpop.f32.mrb[0].mxu0
      %v1463 = vadd.f32 0.0, %v1462
      %v1464 = vpop.f32.mrb[0].mxu0
      %1465 = vdwg.mxu0
      %v1466 = vadd.f32 %v1078, %v1340
      %v1467 = vadd.f32 %v1081, %v1343
      %v1468 = vadd.f32 %v1086, %v1348
      %v1469 = vadd.f32 %v1089, %v1351
      %v1470 = vadd.f32 %v1094, %v1356
      %v1471 = vadd.f32 %v1097, %v1359
      %v1472 = vadd.f32 %v1102, %v1364
      %v1473 = vadd.f32 %v1105, %v1367
      %v1474 = vadd.f32 %v1110, %v1372
      %v1475 = vadd.f32 %v1113, %v1375
      %v1476 = vadd.f32 %v1118, %v1380
      %v1477 = vadd.f32 %v1121, %v1383
      %v1478 = vadd.f32 %v1126, %v1388
      %v1479 = vadd.f32 %v1129, %v1391
      %v1480 = vadd.f32 %v1134, %v1396
      %v1481 = vadd.f32 %v1137, %v1399
      %v1482 = vadd.f32 %v1142, %v1404
      %v1483 = vadd.f32 %v1145, %v1407
      %v1484 = vadd.f32 %v1150, %v1412
      %v1485 = vadd.f32 %v1153, %v1415
      %v1486 = vadd.f32 %v1158, %v1420
      %v1487 = vadd.f32 %v1161, %v1423
      %v1488 = vadd.f32 %v1166, %v1428
      %v1489 = vadd.f32 %v1169, %v1431
      %v1490 = vadd.f32 %v1174, %v1436
      %v1491 = vadd.f32 %v1177, %v1439
      %v1492 = vadd.f32 %v1182, %v1444
      %v1493 = vadd.f32 %v1185, %v1447
      %v1494 = vadd.f32 %v1190, %v1452
      %v1495 = vadd.f32 %v1193, %v1455
      %v1496 = vadd.f32 %v1198, %v1460
      %v1497 = vadd.f32 %v1201, %v1463
      %v1498 = vld [vmem:[%s647] sm:$0xff]
      %v1499 = vld [vmem:[%s647 + $0x8] sm:$0xff]
      %v1500 = vld [vmem:[%s647 + $0x18] sm:$0xff]
      %v1501 = vld [vmem:[%s647 + $0x20] sm:$0xff]
      %v1502 = vld [vmem:[%s647 + $0x30] sm:$0xff]
      %v1503 = vld [vmem:[%s647 + $0x38] sm:$0xff]
      %v1504 = vld [vmem:[%s647 + $0x48] sm:$0xff]
      %v1505 = vld [vmem:[%s647 + $0x50] sm:$0xff]
      %v1506 = vld [vmem:[%s647 + $0x60] sm:$0xff]
      %v1507 = vld [vmem:[%s647 + $0x68] sm:$0xff]
      %v1508 = vld [vmem:[%s647 + $0x78] sm:$0xff]
      %v1509 = vld [vmem:[%s647 + $0x80] sm:$0xff]
      %v1510 = vld [vmem:[%s647 + $0x90] sm:$0xff]
      %v1511 = vld [vmem:[%s647 + $0x98] sm:$0xff]
      %v1512 = vld [vmem:[%s647 + $0xa8] sm:$0xff]
      %v1513 = vld [vmem:[%s647 + $0xb0] sm:$0xff]
      %v1514 = vld [vmem:[%s647 + $0xc0] sm:$0xff]
      %v1515 = vld [vmem:[%s647 + $0xc8] sm:$0xff]
      %v1516 = vld [vmem:[%s647 + $0xd8] sm:$0xff]
      %v1517 = vld [vmem:[%s647 + $0xe0] sm:$0xff]
      %v1518 = vld [vmem:[%s647 + $0xf0] sm:$0xff]
      %v1519 = vld [vmem:[%s647 + $0xf8] sm:$0xff]
      %v1520 = vld [vmem:[%s647 + $0x108] sm:$0xff]
      %v1521 = vld [vmem:[%s647 + $0x110] sm:$0xff]
      %v1522 = vld [vmem:[%s647 + $0x120] sm:$0xff]
      %v1523 = vld [vmem:[%s647 + $0x128] sm:$0xff]
      %v1524 = vld [vmem:[%s647 + $0x138] sm:$0xff]
      %v1525 = vld [vmem:[%s647 + $0x140] sm:$0xff]
      %v1526 = vld [vmem:[%s647 + $0x150] sm:$0xff]
      %v1527 = vld [vmem:[%s647 + $0x158] sm:$0xff]
      %v1528 = vld [vmem:[%s647 + $0x168] sm:$0xff]
      %v1529 = vld [vmem:[%s647 + $0x170] sm:$0xff]
      %v1530 = vpack.c.bf16 %v1499, %v1498
      %v1531 = vpack.c.bf16 %v1501, %v1500
      %v1532 = vpack.c.bf16 %v1503, %v1502
      %v1533 = vpack.c.bf16 %v1505, %v1504
      %v1534 = vpack.c.bf16 %v1507, %v1506
      %v1535 = vpack.c.bf16 %v1509, %v1508
      %v1536 = vpack.c.bf16 %v1511, %v1510
      %v1537 = vpack.c.bf16 %v1513, %v1512
      %v1538 = vpack.c.bf16 %v1515, %v1514
      %v1539 = vpack.c.bf16 %v1517, %v1516
      %v1540 = vpack.c.bf16 %v1519, %v1518
      %v1541 = vpack.c.bf16 %v1521, %v1520
      %v1542 = vpack.c.bf16 %v1523, %v1522
      %v1543 = vpack.c.bf16 %v1525, %v1524
      %v1544 = vpack.c.bf16 %v1527, %v1526
      %v1545 = vpack.c.bf16 %v1529, %v1528
      %s1546 = scalar_lea.vmem %s6, 6
      %v1547 = vld [vmem:[%s1546] sm:$0x3]
      %v1549 = vsel %vm559, %v1530, 0
      %v1552 = vsel %vm559, %v1531, 0
      %v1555 = vsel %vm559, %v1532, 0
      %v1558 = vsel %vm559, %v1533, 0
      %v1561 = vsel %vm559, %v1534, 0
      %v1564 = vsel %vm559, %v1535, 0
      %v1567 = vsel %vm559, %v1536, 0
      %v1570 = vsel %vm559, %v1537, 0
      %v1573 = vsel %vm559, %v1538, 0
      %v1576 = vsel %vm559, %v1539, 0
      %v1579 = vsel %vm559, %v1540, 0
      %v1582 = vsel %vm559, %v1541, 0
      %v1585 = vsel %vm559, %v1542, 0
      %v1588 = vsel %vm559, %v1543, 0
      %v1591 = vsel %vm559, %v1544, 0
      %v1594 = vsel %vm559, %v1545, 0
      %v1597 = vsel %vm827, %v1547, 0
      %1599 = vmatprep.subr.bf16.mxu0 0
      %1600 = vmatpush1.bf16.msra.mxu0 %v1597
      %1601 = vmatprep.subr.bf16.mxu0 0
      %1602 = vmatpush1.bf16.msra.mxu0 0
      %1603 = vmatprep.subr.bf16.mxu0 0
      %1604 = vmatpush1.bf16.msra.mxu0 0
      %1605 = vmatprep.subr.bf16.mxu0 0
      %1606 = vmatpush1.bf16.msra.mxu0 0
      %1607 = vmatprep.subr.bf16.mxu0 0
      %1608 = vmatpush1.bf16.msra.mxu0 0
      %1609 = vmatprep.subr.bf16.mxu0 0
      %1610 = vmatpush1.bf16.msra.mxu0 0
      %1611 = vmatprep.subr.bf16.mxu0 0
      %1612 = vmatpush1.bf16.msra.mxu0 0
      %1613 = vmatprep.subr.bf16.mxu0 0
      %1614 = vmatpush1.bf16.msra.mxu0 0
      %1615 = vmatprep.subr.bf16.mxu0 0
      %1616 = vmatpush1.bf16.msra.mxu0 0
      %1617 = vmatprep.subr.bf16.mxu0 0
      %1618 = vmatpush1.bf16.msra.mxu0 0
      %1619 = vmatprep.subr.bf16.mxu0 0
      %1620 = vmatpush1.bf16.msra.mxu0 0
      %1621 = vmatprep.subr.bf16.mxu0 0
      %1622 = vmatpush1.bf16.msra.mxu0 0
      %1623 = vmatprep.subr.bf16.mxu0 0
      %1624 = vmatpush1.bf16.msra.mxu0 0
      %1625 = vmatprep.subr.bf16.mxu0 0
      %1626 = vmatpush1.bf16.msra.mxu0 0
      %1627 = vmatprep.subr.bf16.mxu0 0
      %1628 = vmatpush1.bf16.msra.mxu0 0
      %1629 = vmatprep.subr.bf16.mxu0 0
      %1630 = vmatpush1.bf16.msra.mxu0 0
      %1631 = vmatprep.mubr.bf16.mxu0 0
      %1632 = vmatmul.mubr.bf16.gmra.mrb[0].mxu0 %v1549
      %v1633 = vpop.f32.mrb[0].mxu0
      %v1634 = vadd.f32 0.0, %v1633
      %v1635 = vpop.f32.mrb[0].mxu0
      %v1636 = vpop.f32.mrb[0].mxu0
      %v1637 = vadd.f32 0.0, %v1636
      %v1638 = vpop.f32.mrb[0].mxu0
      %1639 = vmatprep.mubr.bf16.mxu0 0
      %1640 = vmatmul.mubr.bf16.gmra.mrb[0].mxu0 %v1552
      %v1641 = vpop.f32.mrb[0].mxu0
      %v1642 = vadd.f32 0.0, %v1641
      %v1643 = vpop.f32.mrb[0].mxu0
      %v1644 = vpop.f32.mrb[0].mxu0
      %v1645 = vadd.f32 0.0, %v1644
      %v1646 = vpop.f32.mrb[0].mxu0
      %1647 = vmatprep.mubr.bf16.mxu0 0
      %1648 = vmatmul.mubr.bf16.gmra.mrb[0].mxu0 %v1555
      %v1649 = vpop.f32.mrb[0].mxu0
      %v1650 = vadd.f32 0.0, %v1649
      %v1651 = vpop.f32.mrb[0].mxu0
      %v1652 = vpop.f32.mrb[0].mxu0
      %v1653 = vadd.f32 0.0, %v1652
      %v1654 = vpop.f32.mrb[0].mxu0
      %1655 = vmatprep.mubr.bf16.mxu0 0
      %1656 = vmatmul.mubr.bf16.gmra.mrb[0].mxu0 %v1558
      %v1657 = vpop.f32.mrb[0].mxu0
      %v1658 = vadd.f32 0.0, %v1657
      %v1659 = vpop.f32.mrb[0].mxu0
      %v1660 = vpop.f32.mrb[0].mxu0
      %v1661 = vadd.f32 0.0, %v1660
      %v1662 = vpop.f32.mrb[0].mxu0
      %1663 = vmatprep.mubr.bf16.mxu0 0
      %1664 = vmatmul.mubr.bf16.gmra.mrb[0].mxu0 %v1561
      %v1665 = vpop.f32.mrb[0].mxu0
      %v1666 = vadd.f32 0.0, %v1665
      %v1667 = vpop.f32.mrb[0].mxu0
      %v1668 = vpop.f32.mrb[0].mxu0
      %v1669 = vadd.f32 0.0, %v1668
      %v1670 = vpop.f32.mrb[0].mxu0
      %1671 = vmatprep.mubr.bf16.mxu0 0
      %1672 = vmatmul.mubr.bf16.gmra.mrb[0].mxu0 %v1564
      %v1673 = vpop.f32.mrb[0].mxu0
      %v1674 = vadd.f32 0.0, %v1673
      %v1675 = vpop.f32.mrb[0].mxu0
      %v1676 = vpop.f32.mrb[0].mxu0
      %v1677 = vadd.f32 0.0, %v1676
      %v1678 = vpop.f32.mrb[0].mxu0
      %1679 = vmatprep.mubr.bf16.mxu0 0
      %1680 = vmatmul.mubr.bf16.gmra.mrb[0].mxu0 %v1567
      %v1681 = vpop.f32.mrb[0].mxu0
      %v1682 = vadd.f32 0.0, %v1681
      %v1683 = vpop.f32.mrb[0].mxu0
      %v1684 = vpop.f32.mrb[0].mxu0
      %v1685 = vadd.f32 0.0, %v1684
      %v1686 = vpop.f32.mrb[0].mxu0
      %1687 = vmatprep.mubr.bf16.mxu0 0
      %1688 = vmatmul.mubr.bf16.gmra.mrb[0].mxu0 %v1570
      %v1689 = vpop.f32.mrb[0].mxu0
      %v1690 = vadd.f32 0.0, %v1689
      %v1691 = vpop.f32.mrb[0].mxu0
      %v1692 = vpop.f32.mrb[0].mxu0
      %v1693 = vadd.f32 0.0, %v1692
      %v1694 = vpop.f32.mrb[0].mxu0
      %1695 = vmatprep.mubr.bf16.mxu0 0
      %1696 = vmatmul.mubr.bf16.gmra.mrb[0].mxu0 %v1573
      %v1697 = vpop.f32.mrb[0].mxu0
      %v1698 = vadd.f32 0.0, %v1697
      %v1699 = vpop.f32.mrb[0].mxu0
      %v1700 = vpop.f32.mrb[0].mxu0
      %v1701 = vadd.f32 0.0, %v1700
      %v1702 = vpop.f32.mrb[0].mxu0
      %1703 = vmatprep.mubr.bf16.mxu0 0
      %1704 = vmatmul.mubr.bf16.gmra.mrb[0].mxu0 %v1576
      %v1705 = vpop.f32.mrb[0].mxu0
      %v1706 = vadd.f32 0.0, %v1705
      %v1707 = vpop.f32.mrb[0].mxu0
      %v1708 = vpop.f32.mrb[0].mxu0
      %v1709 = vadd.f32 0.0, %v1708
      %v1710 = vpop.f32.mrb[0].mxu0
      %1711 = vmatprep.mubr.bf16.mxu0 0
      %1712 = vmatmul.mubr.bf16.gmra.mrb[0].mxu0 %v1579
      %v1713 = vpop.f32.mrb[0].mxu0
      %v1714 = vadd.f32 0.0, %v1713
      %v1715 = vpop.f32.mrb[0].mxu0
      %v1716 = vpop.f32.mrb[0].mxu0
      %v1717 = vadd.f32 0.0, %v1716
      %v1718 = vpop.f32.mrb[0].mxu0
      %1719 = vmatprep.mubr.bf16.mxu0 0
      %1720 = vmatmul.mubr.bf16.gmra.mrb[0].mxu0 %v1582
      %v1721 = vpop.f32.mrb[0].mxu0
      %v1722 = vadd.f32 0.0, %v1721
      %v1723 = vpop.f32.mrb[0].mxu0
      %v1724 = vpop.f32.mrb[0].mxu0
      %v1725 = vadd.f32 0.0, %v1724
      %v1726 = vpop.f32.mrb[0].mxu0
      %1727 = vmatprep.mubr.bf16.mxu0 0
      %1728 = vmatmul.mubr.bf16.gmra.mrb[0].mxu0 %v1585
      %v1729 = vpop.f32.mrb[0].mxu0
      %v1730 = vadd.f32 0.0, %v1729
      %v1731 = vpop.f32.mrb[0].mxu0
      %v1732 = vpop.f32.mrb[0].mxu0
      %v1733 = vadd.f32 0.0, %v1732
      %v1734 = vpop.f32.mrb[0].mxu0
      %1735 = vmatprep.mubr.bf16.mxu0 0
      %1736 = vmatmul.mubr.bf16.gmra.mrb[0].mxu0 %v1588
      %v1737 = vpop.f32.mrb[0].mxu0
      %v1738 = vadd.f32 0.0, %v1737
      %v1739 = vpop.f32.mrb[0].mxu0
      %v1740 = vpop.f32.mrb[0].mxu0
      %v1741 = vadd.f32 0.0, %v1740
      %v1742 = vpop.f32.mrb[0].mxu0
      %1743 = vmatprep.mubr.bf16.mxu0 0
      %1744 = vmatmul.mubr.bf16.gmra.mrb[0].mxu0 %v1591
      %v1745 = vpop.f32.mrb[0].mxu0
      %v1746 = vadd.f32 0.0, %v1745
      %v1747 = vpop.f32.mrb[0].mxu0
      %v1748 = vpop.f32.mrb[0].mxu0
      %v1749 = vadd.f32 0.0, %v1748
      %v1750 = vpop.f32.mrb[0].mxu0
      %1751 = vmatprep.mubr.bf16.mxu0 0
      %1752 = vmatmul.mubr.bf16.gmra.mrb[0].mxu0 %v1594
      %v1753 = vpop.f32.mrb[0].mxu0
      %v1754 = vadd.f32 0.0, %v1753
      %v1755 = vpop.f32.mrb[0].mxu0
      %v1756 = vpop.f32.mrb[0].mxu0
      %v1757 = vadd.f32 0.0, %v1756
      %v1758 = vpop.f32.mrb[0].mxu0
      %1759 = vdwg.mxu0
      %v1760 = vadd.f32 %v1466, %v1634
      %v1761 = vadd.f32 %v1467, %v1637
      %v1762 = vadd.f32 %v1468, %v1642
      %v1763 = vadd.f32 %v1469, %v1645
      %v1764 = vadd.f32 %v1470, %v1650
      %v1765 = vadd.f32 %v1471, %v1653
      %v1766 = vadd.f32 %v1472, %v1658
      %v1767 = vadd.f32 %v1473, %v1661
      %v1768 = vadd.f32 %v1474, %v1666
      %v1769 = vadd.f32 %v1475, %v1669
      %v1770 = vadd.f32 %v1476, %v1674
      %v1771 = vadd.f32 %v1477, %v1677
      %v1772 = vadd.f32 %v1478, %v1682
      %v1773 = vadd.f32 %v1479, %v1685
      %v1774 = vadd.f32 %v1480, %v1690
      %v1775 = vadd.f32 %v1481, %v1693
      %v1776 = vadd.f32 %v1482, %v1698
      %v1777 = vadd.f32 %v1483, %v1701
      %v1778 = vadd.f32 %v1484, %v1706
      %v1779 = vadd.f32 %v1485, %v1709
      %v1780 = vadd.f32 %v1486, %v1714
      %v1781 = vadd.f32 %v1487, %v1717
      %v1782 = vadd.f32 %v1488, %v1722
      %v1783 = vadd.f32 %v1489, %v1725
      %v1784 = vadd.f32 %v1490, %v1730
      %v1785 = vadd.f32 %v1491, %v1733
      %v1786 = vadd.f32 %v1492, %v1738
      %v1787 = vadd.f32 %v1493, %v1741
      %v1788 = vadd.f32 %v1494, %v1746
      %v1789 = vadd.f32 %v1495, %v1749
      %v1790 = vadd.f32 %v1496, %v1754
      %v1791 = vadd.f32 %v1497, %v1757
      %v1792 = vld [vmem:[%s647 + $0x1] sm:$0xff]
      %v1793 = vld [vmem:[%s647 + $0x9] sm:$0xff]
      %v1794 = vld [vmem:[%s647 + $0x19] sm:$0xff]
      %v1795 = vld [vmem:[%s647 + $0x21] sm:$0xff]
      %v1796 = vld [vmem:[%s647 + $0x31] sm:$0xff]
      %v1797 = vld [vmem:[%s647 + $0x39] sm:$0xff]
      %v1798 = vld [vmem:[%s647 + $0x49] sm:$0xff]
      %v1799 = vld [vmem:[%s647 + $0x51] sm:$0xff]
      %v1800 = vld [vmem:[%s647 + $0x61] sm:$0xff]
      %v1801 = vld [vmem:[%s647 + $0x69] sm:$0xff]
      %v1802 = vld [vmem:[%s647 + $0x79] sm:$0xff]
      %v1803 = vld [vmem:[%s647 + $0x81] sm:$0xff]
      %v1804 = vld [vmem:[%s647 + $0x91] sm:$0xff]
      %v1805 = vld [vmem:[%s647 + $0x99] sm:$0xff]
      %v1806 = vld [vmem:[%s647 + $0xa9] sm:$0xff]
      %v1807 = vld [vmem:[%s647 + $0xb1] sm:$0xff]
      %v1808 = vld [vmem:[%s647 + $0xc1] sm:$0xff]
      %v1809 = vld [vmem:[%s647 + $0xc9] sm:$0xff]
      %v1810 = vld [vmem:[%s647 + $0xd9] sm:$0xff]
      %v1811 = vld [vmem:[%s647 + $0xe1] sm:$0xff]
      %v1812 = vld [vmem:[%s647 + $0xf1] sm:$0xff]
      %v1813 = vld [vmem:[%s647 + $0xf9] sm:$0xff]
      %v1814 = vld [vmem:[%s647 + $0x109] sm:$0xff]
      %v1815 = vld [vmem:[%s647 + $0x111] sm:$0xff]
      %v1816 = vld [vmem:[%s647 + $0x121] sm:$0xff]
      %v1817 = vld [vmem:[%s647 + $0x129] sm:$0xff]
      %v1818 = vld [vmem:[%s647 + $0x139] sm:$0xff]
      %v1819 = vld [vmem:[%s647 + $0x141] sm:$0xff]
      %v1820 = vld [vmem:[%s647 + $0x151] sm:$0xff]
      %v1821 = vld [vmem:[%s647 + $0x159] sm:$0xff]
      %v1822 = vld [vmem:[%s647 + $0x169] sm:$0xff]
      %v1823 = vld [vmem:[%s647 + $0x171] sm:$0xff]
      %v1824 = vpack.c.bf16 %v1793, %v1792
      %v1825 = vpack.c.bf16 %v1795, %v1794
      %v1826 = vpack.c.bf16 %v1797, %v1796
      %v1827 = vpack.c.bf16 %v1799, %v1798
      %v1828 = vpack.c.bf16 %v1801, %v1800
      %v1829 = vpack.c.bf16 %v1803, %v1802
      %v1830 = vpack.c.bf16 %v1805, %v1804
      %v1831 = vpack.c.bf16 %v1807, %v1806
      %v1832 = vpack.c.bf16 %v1809, %v1808
      %v1833 = vpack.c.bf16 %v1811, %v1810
      %v1834 = vpack.c.bf16 %v1813, %v1812
      %v1835 = vpack.c.bf16 %v1815, %v1814
      %v1836 = vpack.c.bf16 %v1817, %v1816
      %v1837 = vpack.c.bf16 %v1819, %v1818
      %v1838 = vpack.c.bf16 %v1821, %v1820
      %v1839 = vpack.c.bf16 %v1823, %v1822
      %s1840 = scalar_lea.vmem %s6, 8
      %v1841 = vld [vmem:[%s1840] sm:$0x3]
      %v1843 = vsel %vm559, %v1824, 0
      %v1846 = vsel %vm559, %v1825, 0
      %v1849 = vsel %vm559, %v1826, 0
      %v1852 = vsel %vm559, %v1827, 0
      %v1855 = vsel %vm559, %v1828, 0
      %v1858 = vsel %vm559, %v1829, 0
      %v1861 = vsel %vm559, %v1830, 0
      %v1864 = vsel %vm559, %v1831, 0
      %v1867 = vsel %vm559, %v1832, 0
      %v1870 = vsel %vm559, %v1833, 0
      %v1873 = vsel %vm559, %v1834, 0
      %v1876 = vsel %vm559, %v1835, 0
      %v1879 = vsel %vm559, %v1836, 0
      %v1882 = vsel %vm559, %v1837, 0
      %v1885 = vsel %vm559, %v1838, 0
      %v1888 = vsel %vm559, %v1839, 0
      %v1891 = vsel %vm827, %v1841, 0
      %1893 = vmatprep.subr.bf16.mxu0 0
      %1894 = vmatpush1.bf16.msra.mxu0 %v1891
      %1895 = vmatprep.subr.bf16.mxu0 0
      %1896 = vmatpush1.bf16.msra.mxu0 0
      %1897 = vmatprep.subr.bf16.mxu0 0
      %1898 = vmatpush1.bf16.msra.mxu0 0
      %1899 = vmatprep.subr.bf16.mxu0 0
      %1900 = vmatpush1.bf16.msra.mxu0 0
      %1901 = vmatprep.subr.bf16.mxu0 0
      %1902 = vmatpush1.bf16.msra.mxu0 0
      %1903 = vmatprep.subr.bf16.mxu0 0
      %1904 = vmatpush1.bf16.msra.mxu0 0
      %1905 = vmatprep.subr.bf16.mxu0 0
      %1906 = vmatpush1.bf16.msra.mxu0 0
      %1907 = vmatprep.subr.bf16.mxu0 0
      %1908 = vmatpush1.bf16.msra.mxu0 0
      %1909 = vmatprep.subr.bf16.mxu0 0
      %1910 = vmatpush1.bf16.msra.mxu0 0
      %1911 = vmatprep.subr.bf16.mxu0 0
      %1912 = vmatpush1.bf16.msra.mxu0 0
      %1913 = vmatprep.subr.bf16.mxu0 0
      %1914 = vmatpush1.bf16.msra.mxu0 0
      %1915 = vmatprep.subr.bf16.mxu0 0
      %1916 = vmatpush1.bf16.msra.mxu0 0
      %1917 = vmatprep.subr.bf16.mxu0 0
      %1918 = vmatpush1.bf16.msra.mxu0 0
      %1919 = vmatprep.subr.bf16.mxu0 0
      %1920 = vmatpush1.bf16.msra.mxu0 0
      %1921 = vmatprep.subr.bf16.mxu0 0
      %1922 = vmatpush1.bf16.msra.mxu0 0
      %1923 = vmatprep.subr.bf16.mxu0 0
      %1924 = vmatpush1.bf16.msra.mxu0 0
      %1925 = vmatprep.mubr.bf16.mxu0 0
      %1926 = vmatmul.mubr.bf16.gmra.mrb[0].mxu0 %v1843
      %v1927 = vpop.f32.mrb[0].mxu0
      %v1928 = vadd.f32 0.0, %v1927
      %v1929 = vpop.f32.mrb[0].mxu0
      %v1930 = vpop.f32.mrb[0].mxu0
      %v1931 = vadd.f32 0.0, %v1930
      %v1932 = vpop.f32.mrb[0].mxu0
      %1933 = vmatprep.mubr.bf16.mxu0 0
      %1934 = vmatmul.mubr.bf16.gmra.mrb[0].mxu0 %v1846
      %v1935 = vpop.f32.mrb[0].mxu0
      %v1936 = vadd.f32 0.0, %v1935
      %v1937 = vpop.f32.mrb[0].mxu0
      %v1938 = vpop.f32.mrb[0].mxu0
      %v1939 = vadd.f32 0.0, %v1938
      %v1940 = vpop.f32.mrb[0].mxu0
      %1941 = vmatprep.mubr.bf16.mxu0 0
      %1942 = vmatmul.mubr.bf16.gmra.mrb[0].mxu0 %v1849
      %v1943 = vpop.f32.mrb[0].mxu0
      %v1944 = vadd.f32 0.0, %v1943
      %v1945 = vpop.f32.mrb[0].mxu0
      %v1946 = vpop.f32.mrb[0].mxu0
      %v1947 = vadd.f32 0.0, %v1946
      %v1948 = vpop.f32.mrb[0].mxu0
      %1949 = vmatprep.mubr.bf16.mxu0 0
      %1950 = vmatmul.mubr.bf16.gmra.mrb[0].mxu0 %v1852
      %v1951 = vpop.f32.mrb[0].mxu0
      %v1952 = vadd.f32 0.0, %v1951
      %v1953 = vpop.f32.mrb[0].mxu0
      %v1954 = vpop.f32.mrb[0].mxu0
      %v1955 = vadd.f32 0.0, %v1954
      %v1956 = vpop.f32.mrb[0].mxu0
      %1957 = vmatprep.mubr.bf16.mxu0 0
      %1958 = vmatmul.mubr.bf16.gmra.mrb[0].mxu0 %v1855
      %v1959 = vpop.f32.mrb[0].mxu0
      %v1960 = vadd.f32 0.0, %v1959
      %v1961 = vpop.f32.mrb[0].mxu0
      %v1962 = vpop.f32.mrb[0].mxu0
      %v1963 = vadd.f32 0.0, %v1962
      %v1964 = vpop.f32.mrb[0].mxu0
      %1965 = vmatprep.mubr.bf16.mxu0 0
      %1966 = vmatmul.mubr.bf16.gmra.mrb[0].mxu0 %v1858
      %v1967 = vpop.f32.mrb[0].mxu0
      %v1968 = vadd.f32 0.0, %v1967
      %v1969 = vpop.f32.mrb[0].mxu0
      %v1970 = vpop.f32.mrb[0].mxu0
      %v1971 = vadd.f32 0.0, %v1970
      %v1972 = vpop.f32.mrb[0].mxu0
      %1973 = vmatprep.mubr.bf16.mxu0 0
      %1974 = vmatmul.mubr.bf16.gmra.mrb[0].mxu0 %v1861
      %v1975 = vpop.f32.mrb[0].mxu0
      %v1976 = vadd.f32 0.0, %v1975
      %v1977 = vpop.f32.mrb[0].mxu0
      %v1978 = vpop.f32.mrb[0].mxu0
      %v1979 = vadd.f32 0.0, %v1978
      %v1980 = vpop.f32.mrb[0].mxu0
      %1981 = vmatprep.mubr.bf16.mxu0 0
      %1982 = vmatmul.mubr.bf16.gmra.mrb[0].mxu0 %v1864
      %v1983 = vpop.f32.mrb[0].mxu0
      %v1984 = vadd.f32 0.0, %v1983
      %v1985 = vpop.f32.mrb[0].mxu0
      %v1986 = vpop.f32.mrb[0].mxu0
      %v1987 = vadd.f32 0.0, %v1986
      %v1988 = vpop.f32.mrb[0].mxu0
      %1989 = vmatprep.mubr.bf16.mxu0 0
      %1990 = vmatmul.mubr.bf16.gmra.mrb[0].mxu0 %v1867
      %v1991 = vpop.f32.mrb[0].mxu0
      %v1992 = vadd.f32 0.0, %v1991
      %v1993 = vpop.f32.mrb[0].mxu0
      %v1994 = vpop.f32.mrb[0].mxu0
      %v1995 = vadd.f32 0.0, %v1994
      %v1996 = vpop.f32.mrb[0].mxu0
      %1997 = vmatprep.mubr.bf16.mxu0 0
      %1998 = vmatmul.mubr.bf16.gmra.mrb[0].mxu0 %v1870
      %v1999 = vpop.f32.mrb[0].mxu0
      %v2000 = vadd.f32 0.0, %v1999
      %v2001 = vpop.f32.mrb[0].mxu0
      %v2002 = vpop.f32.mrb[0].mxu0
      %v2003 = vadd.f32 0.0, %v2002
      %v2004 = vpop.f32.mrb[0].mxu0
      %2005 = vmatprep.mubr.bf16.mxu0 0
      %2006 = vmatmul.mubr.bf16.gmra.mrb[0].mxu0 %v1873
      %v2007 = vpop.f32.mrb[0].mxu0
      %v2008 = vadd.f32 0.0, %v2007
      %v2009 = vpop.f32.mrb[0].mxu0
      %v2010 = vpop.f32.mrb[0].mxu0
      %v2011 = vadd.f32 0.0, %v2010
      %v2012 = vpop.f32.mrb[0].mxu0
      %2013 = vmatprep.mubr.bf16.mxu0 0
      %2014 = vmatmul.mubr.bf16.gmra.mrb[0].mxu0 %v1876
      %v2015 = vpop.f32.mrb[0].mxu0
      %v2016 = vadd.f32 0.0, %v2015
      %v2017 = vpop.f32.mrb[0].mxu0
      %v2018 = vpop.f32.mrb[0].mxu0
      %v2019 = vadd.f32 0.0, %v2018
      %v2020 = vpop.f32.mrb[0].mxu0
      %2021 = vmatprep.mubr.bf16.mxu0 0
      %2022 = vmatmul.mubr.bf16.gmra.mrb[0].mxu0 %v1879
      %v2023 = vpop.f32.mrb[0].mxu0
      %v2024 = vadd.f32 0.0, %v2023
      %v2025 = vpop.f32.mrb[0].mxu0
      %v2026 = vpop.f32.mrb[0].mxu0
      %v2027 = vadd.f32 0.0, %v2026
      %v2028 = vpop.f32.mrb[0].mxu0
      %2029 = vmatprep.mubr.bf16.mxu0 0
      %2030 = vmatmul.mubr.bf16.gmra.mrb[0].mxu0 %v1882
      %v2031 = vpop.f32.mrb[0].mxu0
      %v2032 = vadd.f32 0.0, %v2031
      %v2033 = vpop.f32.mrb[0].mxu0
      %v2034 = vpop.f32.mrb[0].mxu0
      %v2035 = vadd.f32 0.0, %v2034
      %v2036 = vpop.f32.mrb[0].mxu0
      %2037 = vmatprep.mubr.bf16.mxu0 0
      %2038 = vmatmul.mubr.bf16.gmra.mrb[0].mxu0 %v1885
      %v2039 = vpop.f32.mrb[0].mxu0
      %v2040 = vadd.f32 0.0, %v2039
      %v2041 = vpop.f32.mrb[0].mxu0
      %v2042 = vpop.f32.mrb[0].mxu0
      %v2043 = vadd.f32 0.0, %v2042
      %v2044 = vpop.f32.mrb[0].mxu0
      %2045 = vmatprep.mubr.bf16.mxu0 0
      %2046 = vmatmul.mubr.bf16.gmra.mrb[0].mxu0 %v1888
      %v2047 = vpop.f32.mrb[0].mxu0
      %v2048 = vadd.f32 0.0, %v2047
      %v2049 = vpop.f32.mrb[0].mxu0
      %v2050 = vpop.f32.mrb[0].mxu0
      %v2051 = vadd.f32 0.0, %v2050
      %v2052 = vpop.f32.mrb[0].mxu0
      %2053 = vdwg.mxu0
      %v2054 = vadd.f32 %v1760, %v1928
      %v2055 = vadd.f32 %v1761, %v1931
      %v2056 = vadd.f32 %v1762, %v1936
      %v2057 = vadd.f32 %v1763, %v1939
      %v2058 = vadd.f32 %v1764, %v1944
      %v2059 = vadd.f32 %v1765, %v1947
      %v2060 = vadd.f32 %v1766, %v1952
      %v2061 = vadd.f32 %v1767, %v1955
      %v2062 = vadd.f32 %v1768, %v1960
      %v2063 = vadd.f32 %v1769, %v1963
      %v2064 = vadd.f32 %v1770, %v1968
      %v2065 = vadd.f32 %v1771, %v1971
      %v2066 = vadd.f32 %v1772, %v1976
      %v2067 = vadd.f32 %v1773, %v1979
      %v2068 = vadd.f32 %v1774, %v1984
      %v2069 = vadd.f32 %v1775, %v1987
      %v2070 = vadd.f32 %v1776, %v1992
      %v2071 = vadd.f32 %v1777, %v1995
      %v2072 = vadd.f32 %v1778, %v2000
      %v2073 = vadd.f32 %v1779, %v2003
      %v2074 = vadd.f32 %v1780, %v2008
      %v2075 = vadd.f32 %v1781, %v2011
      %v2076 = vadd.f32 %v1782, %v2016
      %v2077 = vadd.f32 %v1783, %v2019
      %v2078 = vadd.f32 %v1784, %v2024
      %v2079 = vadd.f32 %v1785, %v2027
      %v2080 = vadd.f32 %v1786, %v2032
      %v2081 = vadd.f32 %v1787, %v2035
      %v2082 = vadd.f32 %v1788, %v2040
      %v2083 = vadd.f32 %v1789, %v2043
      %v2084 = vadd.f32 %v1790, %v2048
      %v2085 = vadd.f32 %v1791, %v2051
      %v2086 = vld [vmem:[%s647 + $0x2] sm:$0xff]
      %v2087 = vld [vmem:[%s647 + $0xa] sm:$0xff]
      %v2088 = vld [vmem:[%s647 + $0x1a] sm:$0xff]
      %v2089 = vld [vmem:[%s647 + $0x22] sm:$0xff]
      %v2090 = vld [vmem:[%s647 + $0x32] sm:$0xff]
      %v2091 = vld [vmem:[%s647 + $0x3a] sm:$0xff]
      %v2092 = vld [vmem:[%s647 + $0x4a] sm:$0xff]
      %v2093 = vld [vmem:[%s647 + $0x52] sm:$0xff]
      %v2094 = vld [vmem:[%s647 + $0x62] sm:$0xff]
      %v2095 = vld [vmem:[%s647 + $0x6a] sm:$0xff]
      %v2096 = vld [vmem:[%s647 + $0x7a] sm:$0xff]
      %v2097 = vld [vmem:[%s647 + $0x82] sm:$0xff]
      %v2098 = vld [vmem:[%s647 + $0x92] sm:$0xff]
      %v2099 = vld [vmem:[%s647 + $0x9a] sm:$0xff]
      %v2100 = vld [vmem:[%s647 + $0xaa] sm:$0xff]
      %v2101 = vld [vmem:[%s647 + $0xb2] sm:$0xff]
      %v2102 = vld [vmem:[%s647 + $0xc2] sm:$0xff]
      %v2103 = vld [vmem:[%s647 + $0xca] sm:$0xff]
      %v2104 = vld [vmem:[%s647 + $0xda] sm:$0xff]
      %v2105 = vld [vmem:[%s647 + $0xe2] sm:$0xff]
      %v2106 = vld [vmem:[%s647 + $0xf2] sm:$0xff]
      %v2107 = vld [vmem:[%s647 + $0xfa] sm:$0xff]
      %v2108 = vld [vmem:[%s647 + $0x10a] sm:$0xff]
      %v2109 = vld [vmem:[%s647 + $0x112] sm:$0xff]
      %v2110 = vld [vmem:[%s647 + $0x122] sm:$0xff]
      %v2111 = vld [vmem:[%s647 + $0x12a] sm:$0xff]
      %v2112 = vld [vmem:[%s647 + $0x13a] sm:$0xff]
      %v2113 = vld [vmem:[%s647 + $0x142] sm:$0xff]
      %v2114 = vld [vmem:[%s647 + $0x152] sm:$0xff]
      %v2115 = vld [vmem:[%s647 + $0x15a] sm:$0xff]
      %v2116 = vld [vmem:[%s647 + $0x16a] sm:$0xff]
      %v2117 = vld [vmem:[%s647 + $0x172] sm:$0xff]
      %v2118 = vpack.c.bf16 %v2087, %v2086
      %v2119 = vpack.c.bf16 %v2089, %v2088
      %v2120 = vpack.c.bf16 %v2091, %v2090
      %v2121 = vpack.c.bf16 %v2093, %v2092
      %v2122 = vpack.c.bf16 %v2095, %v2094
      %v2123 = vpack.c.bf16 %v2097, %v2096
      %v2124 = vpack.c.bf16 %v2099, %v2098
      %v2125 = vpack.c.bf16 %v2101, %v2100
      %v2126 = vpack.c.bf16 %v2103, %v2102
      %v2127 = vpack.c.bf16 %v2105, %v2104
      %v2128 = vpack.c.bf16 %v2107, %v2106
      %v2129 = vpack.c.bf16 %v2109, %v2108
      %v2130 = vpack.c.bf16 %v2111, %v2110
      %v2131 = vpack.c.bf16 %v2113, %v2112
      %v2132 = vpack.c.bf16 %v2115, %v2114
      %v2133 = vpack.c.bf16 %v2117, %v2116
      %s2134 = scalar_lea.vmem %s6, 10
      %v2135 = vld [vmem:[%s2134] sm:$0x3]
      %v2137 = vsel %vm559, %v2118, 0
      %v2140 = vsel %vm559, %v2119, 0
      %v2143 = vsel %vm559, %v2120, 0
      %v2146 = vsel %vm559, %v2121, 0
      %v2149 = vsel %vm559, %v2122, 0
      %v2152 = vsel %vm559, %v2123, 0
      %v2155 = vsel %vm559, %v2124, 0
      %v2158 = vsel %vm559, %v2125, 0
      %v2161 = vsel %vm559, %v2126, 0
      %v2164 = vsel %vm559, %v2127, 0
      %v2167 = vsel %vm559, %v2128, 0
      %v2170 = vsel %vm559, %v2129, 0
      %v2173 = vsel %vm559, %v2130, 0
      %v2176 = vsel %vm559, %v2131, 0
      %v2179 = vsel %vm559, %v2132, 0
      %v2182 = vsel %vm559, %v2133, 0
      %v2185 = vsel %vm827, %v2135, 0
      %2187 = vmatprep.subr.bf16.mxu0 0
      %2188 = vmatpush1.bf16.msra.mxu0 %v2185
      %2189 = vmatprep.subr.bf16.mxu0 0
      %2190 = vmatpush1.bf16.msra.mxu0 0
      %2191 = vmatprep.subr.bf16.mxu0 0
      %2192 = vmatpush1.bf16.msra.mxu0 0
      %2193 = vmatprep.subr.bf16.mxu0 0
      %2194 = vmatpush1.bf16.msra.mxu0 0
      %2195 = vmatprep.subr.bf16.mxu0 0
      %2196 = vmatpush1.bf16.msra.mxu0 0
      %2197 = vmatprep.subr.bf16.mxu0 0
      %2198 = vmatpush1.bf16.msra.mxu0 0
      %2199 = vmatprep.subr.bf16.mxu0 0
      %2200 = vmatpush1.bf16.msra.mxu0 0
      %2201 = vmatprep.subr.bf16.mxu0 0
      %2202 = vmatpush1.bf16.msra.mxu0 0
      %2203 = vmatprep.subr.bf16.mxu0 0
      %2204 = vmatpush1.bf16.msra.mxu0 0
      %2205 = vmatprep.subr.bf16.mxu0 0
      %2206 = vmatpush1.bf16.msra.mxu0 0
      %2207 = vmatprep.subr.bf16.mxu0 0
      %2208 = vmatpush1.bf16.msra.mxu0 0
      %2209 = vmatprep.subr.bf16.mxu0 0
      %2210 = vmatpush1.bf16.msra.mxu0 0
      %2211 = vmatprep.subr.bf16.mxu0 0
      %2212 = vmatpush1.bf16.msra.mxu0 0
      %2213 = vmatprep.subr.bf16.mxu0 0
      %2214 = vmatpush1.bf16.msra.mxu0 0
      %2215 = vmatprep.subr.bf16.mxu0 0
      %2216 = vmatpush1.bf16.msra.mxu0 0
      %2217 = vmatprep.subr.bf16.mxu0 0
      %2218 = vmatpush1.bf16.msra.mxu0 0
      %2219 = vmatprep.mubr.bf16.mxu0 0
      %2220 = vmatmul.mubr.bf16.gmra.mrb[0].mxu0 %v2137
      %v2221 = vpop.f32.mrb[0].mxu0
      %v2222 = vadd.f32 0.0, %v2221
      %v2223 = vpop.f32.mrb[0].mxu0
      %v2224 = vpop.f32.mrb[0].mxu0
      %v2225 = vadd.f32 0.0, %v2224
      %v2226 = vpop.f32.mrb[0].mxu0
      %2227 = vmatprep.mubr.bf16.mxu0 0
      %2228 = vmatmul.mubr.bf16.gmra.mrb[0].mxu0 %v2140
      %v2229 = vpop.f32.mrb[0].mxu0
      %v2230 = vadd.f32 0.0, %v2229
      %v2231 = vpop.f32.mrb[0].mxu0
      %v2232 = vpop.f32.mrb[0].mxu0
      %v2233 = vadd.f32 0.0, %v2232
      %v2234 = vpop.f32.mrb[0].mxu0
      %2235 = vmatprep.mubr.bf16.mxu0 0
      %2236 = vmatmul.mubr.bf16.gmra.mrb[0].mxu0 %v2143
      %v2237 = vpop.f32.mrb[0].mxu0
      %v2238 = vadd.f32 0.0, %v2237
      %v2239 = vpop.f32.mrb[0].mxu0
      %v2240 = vpop.f32.mrb[0].mxu0
      %v2241 = vadd.f32 0.0, %v2240
      %v2242 = vpop.f32.mrb[0].mxu0
      %2243 = vmatprep.mubr.bf16.mxu0 0
      %2244 = vmatmul.mubr.bf16.gmra.mrb[0].mxu0 %v2146
      %v2245 = vpop.f32.mrb[0].mxu0
      %v2246 = vadd.f32 0.0, %v2245
      %v2247 = vpop.f32.mrb[0].mxu0
      %v2248 = vpop.f32.mrb[0].mxu0
      %v2249 = vadd.f32 0.0, %v2248
      %v2250 = vpop.f32.mrb[0].mxu0
      %2251 = vmatprep.mubr.bf16.mxu0 0
      %2252 = vmatmul.mubr.bf16.gmra.mrb[0].mxu0 %v2149
      %v2253 = vpop.f32.mrb[0].mxu0
      %v2254 = vadd.f32 0.0, %v2253
      %v2255 = vpop.f32.mrb[0].mxu0
      %v2256 = vpop.f32.mrb[0].mxu0
      %v2257 = vadd.f32 0.0, %v2256
      %v2258 = vpop.f32.mrb[0].mxu0
      %2259 = vmatprep.mubr.bf16.mxu0 0
      %2260 = vmatmul.mubr.bf16.gmra.mrb[0].mxu0 %v2152
      %v2261 = vpop.f32.mrb[0].mxu0
      %v2262 = vadd.f32 0.0, %v2261
      %v2263 = vpop.f32.mrb[0].mxu0
      %v2264 = vpop.f32.mrb[0].mxu0
      %v2265 = vadd.f32 0.0, %v2264
      %v2266 = vpop.f32.mrb[0].mxu0
      %2267 = vmatprep.mubr.bf16.mxu0 0
      %2268 = vmatmul.mubr.bf16.gmra.mrb[0].mxu0 %v2155
      %v2269 = vpop.f32.mrb[0].mxu0
      %v2270 = vadd.f32 0.0, %v2269
      %v2271 = vpop.f32.mrb[0].mxu0
      %v2272 = vpop.f32.mrb[0].mxu0
      %v2273 = vadd.f32 0.0, %v2272
      %v2274 = vpop.f32.mrb[0].mxu0
      %2275 = vmatprep.mubr.bf16.mxu0 0
      %2276 = vmatmul.mubr.bf16.gmra.mrb[0].mxu0 %v2158
      %v2277 = vpop.f32.mrb[0].mxu0
      %v2278 = vadd.f32 0.0, %v2277
      %v2279 = vpop.f32.mrb[0].mxu0
      %v2280 = vpop.f32.mrb[0].mxu0
      %v2281 = vadd.f32 0.0, %v2280
      %v2282 = vpop.f32.mrb[0].mxu0
      %2283 = vmatprep.mubr.bf16.mxu0 0
      %2284 = vmatmul.mubr.bf16.gmra.mrb[0].mxu0 %v2161
      %v2285 = vpop.f32.mrb[0].mxu0
      %v2286 = vadd.f32 0.0, %v2285
      %v2287 = vpop.f32.mrb[0].mxu0
      %v2288 = vpop.f32.mrb[0].mxu0
      %v2289 = vadd.f32 0.0, %v2288
      %v2290 = vpop.f32.mrb[0].mxu0
      %2291 = vmatprep.mubr.bf16.mxu0 0
      %2292 = vmatmul.mubr.bf16.gmra.mrb[0].mxu0 %v2164
      %v2293 = vpop.f32.mrb[0].mxu0
      %v2294 = vadd.f32 0.0, %v2293
      %v2295 = vpop.f32.mrb[0].mxu0
      %v2296 = vpop.f32.mrb[0].mxu0
      %v2297 = vadd.f32 0.0, %v2296
      %v2298 = vpop.f32.mrb[0].mxu0
      %2299 = vmatprep.mubr.bf16.mxu0 0
      %2300 = vmatmul.mubr.bf16.gmra.mrb[0].mxu0 %v2167
      %v2301 = vpop.f32.mrb[0].mxu0
      %v2302 = vadd.f32 0.0, %v2301
      %v2303 = vpop.f32.mrb[0].mxu0
      %v2304 = vpop.f32.mrb[0].mxu0
      %v2305 = vadd.f32 0.0, %v2304
      %v2306 = vpop.f32.mrb[0].mxu0
      %2307 = vmatprep.mubr.bf16.mxu0 0
      %2308 = vmatmul.mubr.bf16.gmra.mrb[0].mxu0 %v2170
      %v2309 = vpop.f32.mrb[0].mxu0
      %v2310 = vadd.f32 0.0, %v2309
      %v2311 = vpop.f32.mrb[0].mxu0
      %v2312 = vpop.f32.mrb[0].mxu0
      %v2313 = vadd.f32 0.0, %v2312
      %v2314 = vpop.f32.mrb[0].mxu0
      %2315 = vmatprep.mubr.bf16.mxu0 0
      %2316 = vmatmul.mubr.bf16.gmra.mrb[0].mxu0 %v2173
      %v2317 = vpop.f32.mrb[0].mxu0
      %v2318 = vadd.f32 0.0, %v2317
      %v2319 = vpop.f32.mrb[0].mxu0
      %v2320 = vpop.f32.mrb[0].mxu0
      %v2321 = vadd.f32 0.0, %v2320
      %v2322 = vpop.f32.mrb[0].mxu0
      %2323 = vmatprep.mubr.bf16.mxu0 0
      %2324 = vmatmul.mubr.bf16.gmra.mrb[0].mxu0 %v2176
      %v2325 = vpop.f32.mrb[0].mxu0
      %v2326 = vadd.f32 0.0, %v2325
      %v2327 = vpop.f32.mrb[0].mxu0
      %v2328 = vpop.f32.mrb[0].mxu0
      %v2329 = vadd.f32 0.0, %v2328
      %v2330 = vpop.f32.mrb[0].mxu0
      %2331 = vmatprep.mubr.bf16.mxu0 0
      %2332 = vmatmul.mubr.bf16.gmra.mrb[0].mxu0 %v2179
      %v2333 = vpop.f32.mrb[0].mxu0
      %v2334 = vadd.f32 0.0, %v2333
      %v2335 = vpop.f32.mrb[0].mxu0
      %v2336 = vpop.f32.mrb[0].mxu0
      %v2337 = vadd.f32 0.0, %v2336
      %v2338 = vpop.f32.mrb[0].mxu0
      %2339 = vmatprep.mubr.bf16.mxu0 0
      %2340 = vmatmul.mubr.bf16.gmra.mrb[0].mxu0 %v2182
      %v2341 = vpop.f32.mrb[0].mxu0
      %v2342 = vadd.f32 0.0, %v2341
      %v2343 = vpop.f32.mrb[0].mxu0
      %v2344 = vpop.f32.mrb[0].mxu0
      %v2345 = vadd.f32 0.0, %v2344
      %v2346 = vpop.f32.mrb[0].mxu0
      %2347 = vdwg.mxu0
      %v2348 = vadd.f32 %v2054, %v2222
      %v2349 = vadd.f32 %v2055, %v2225
      %v2350 = vadd.f32 %v2056, %v2230
      %v2351 = vadd.f32 %v2057, %v2233
      %v2352 = vadd.f32 %v2058, %v2238
      %v2353 = vadd.f32 %v2059, %v2241
      %v2354 = vadd.f32 %v2060, %v2246
      %v2355 = vadd.f32 %v2061, %v2249
      %v2356 = vadd.f32 %v2062, %v2254
      %v2357 = vadd.f32 %v2063, %v2257
      %v2358 = vadd.f32 %v2064, %v2262
      %v2359 = vadd.f32 %v2065, %v2265
      %v2360 = vadd.f32 %v2066, %v2270
      %v2361 = vadd.f32 %v2067, %v2273
      %v2362 = vadd.f32 %v2068, %v2278
      %v2363 = vadd.f32 %v2069, %v2281
      %v2364 = vadd.f32 %v2070, %v2286
      %v2365 = vadd.f32 %v2071, %v2289
      %v2366 = vadd.f32 %v2072, %v2294
      %v2367 = vadd.f32 %v2073, %v2297
      %v2368 = vadd.f32 %v2074, %v2302
      %v2369 = vadd.f32 %v2075, %v2305
      %v2370 = vadd.f32 %v2076, %v2310
      %v2371 = vadd.f32 %v2077, %v2313
      %v2372 = vadd.f32 %v2078, %v2318
      %v2373 = vadd.f32 %v2079, %v2321
      %v2374 = vadd.f32 %v2080, %v2326
      %v2375 = vadd.f32 %v2081, %v2329
      %v2376 = vadd.f32 %v2082, %v2334
      %v2377 = vadd.f32 %v2083, %v2337
      %v2378 = vadd.f32 %v2084, %v2342
      %v2379 = vadd.f32 %v2085, %v2345
      %s2380 = scalar_lea.vmem [#allocation2], 48
      %v2381 = vld [vmem:[%s2380] sm:$0xff]
      %v2382 = vld [vmem:[%s2380 + $0x8] sm:$0xff]
      %v2383 = vld [vmem:[%s2380 + $0x18] sm:$0xff]
      %v2384 = vld [vmem:[%s2380 + $0x20] sm:$0xff]
      %v2385 = vld [vmem:[%s2380 + $0x30] sm:$0xff]
      %v2386 = vld [vmem:[%s2380 + $0x38] sm:$0xff]
      %v2387 = vld [vmem:[%s2380 + $0x48] sm:$0xff]
      %v2388 = vld [vmem:[%s2380 + $0x50] sm:$0xff]
      %v2389 = vld [vmem:[%s2380 + $0x60] sm:$0xff]
      %v2390 = vld [vmem:[%s2380 + $0x68] sm:$0xff]
      %v2391 = vld [vmem:[%s2380 + $0x78] sm:$0xff]
      %v2392 = vld [vmem:[%s2380 + $0x80] sm:$0xff]
      %v2393 = vld [vmem:[%s2380 + $0x90] sm:$0xff]
      %v2394 = vld [vmem:[%s2380 + $0x98] sm:$0xff]
      %v2395 = vld [vmem:[%s2380 + $0xa8] sm:$0xff]
      %v2396 = vld [vmem:[%s2380 + $0xb0] sm:$0xff]
      %v2397 = vld [vmem:[%s2380 + $0xc0] sm:$0xff]
      %v2398 = vld [vmem:[%s2380 + $0xc8] sm:$0xff]
      %v2399 = vld [vmem:[%s2380 + $0xd8] sm:$0xff]
      %v2400 = vld [vmem:[%s2380 + $0xe0] sm:$0xff]
      %v2401 = vld [vmem:[%s2380 + $0xf0] sm:$0xff]
      %v2402 = vld [vmem:[%s2380 + $0xf8] sm:$0xff]
      %v2403 = vld [vmem:[%s2380 + $0x108] sm:$0xff]
      %v2404 = vld [vmem:[%s2380 + $0x110] sm:$0xff]
      %v2405 = vld [vmem:[%s2380 + $0x120] sm:$0xff]
      %v2406 = vld [vmem:[%s2380 + $0x128] sm:$0xff]
      %v2407 = vld [vmem:[%s2380 + $0x138] sm:$0xff]
      %v2408 = vld [vmem:[%s2380 + $0x140] sm:$0xff]
      %v2409 = vld [vmem:[%s2380 + $0x150] sm:$0xff]
      %v2410 = vld [vmem:[%s2380 + $0x158] sm:$0xff]
      %v2411 = vld [vmem:[%s2380 + $0x168] sm:$0xff]
      %v2412 = vld [vmem:[%s2380 + $0x170] sm:$0xff]
      %v2413 = vpack.c.bf16 %v2382, %v2381
      %v2414 = vpack.c.bf16 %v2384, %v2383
      %v2415 = vpack.c.bf16 %v2386, %v2385
      %v2416 = vpack.c.bf16 %v2388, %v2387
      %v2417 = vpack.c.bf16 %v2390, %v2389
      %v2418 = vpack.c.bf16 %v2392, %v2391
      %v2419 = vpack.c.bf16 %v2394, %v2393
      %v2420 = vpack.c.bf16 %v2396, %v2395
      %v2421 = vpack.c.bf16 %v2398, %v2397
      %v2422 = vpack.c.bf16 %v2400, %v2399
      %v2423 = vpack.c.bf16 %v2402, %v2401
      %v2424 = vpack.c.bf16 %v2404, %v2403
      %v2425 = vpack.c.bf16 %v2406, %v2405
      %v2426 = vpack.c.bf16 %v2408, %v2407
      %v2427 = vpack.c.bf16 %v2410, %v2409
      %v2428 = vpack.c.bf16 %v2412, %v2411
      %s2429 = scalar_lea.vmem %s6, 12
      %v2430 = vld [vmem:[%s2429] sm:$0x3]
      %v2432 = vsel %vm559, %v2413, 0
      %v2435 = vsel %vm559, %v2414, 0
      %v2438 = vsel %vm559, %v2415, 0
      %v2441 = vsel %vm559, %v2416, 0
      %v2444 = vsel %vm559, %v2417, 0
      %v2447 = vsel %vm559, %v2418, 0
      %v2450 = vsel %vm559, %v2419, 0
      %v2453 = vsel %vm559, %v2420, 0
      %v2456 = vsel %vm559, %v2421, 0
      %v2459 = vsel %vm559, %v2422, 0
      %v2462 = vsel %vm559, %v2423, 0
      %v2465 = vsel %vm559, %v2424, 0
      %v2468 = vsel %vm559, %v2425, 0
      %v2471 = vsel %vm559, %v2426, 0
      %v2474 = vsel %vm559, %v2427, 0
      %v2477 = vsel %vm559, %v2428, 0
      %v2480 = vsel %vm827, %v2430, 0
      %2482 = vmatprep.subr.bf16.mxu0 0
      %2483 = vmatpush1.bf16.msra.mxu0 %v2480
      %2484 = vmatprep.subr.bf16.mxu0 0
      %2485 = vmatpush1.bf16.msra.mxu0 0
      %2486 = vmatprep.subr.bf16.mxu0 0
      %2487 = vmatpush1.bf16.msra.mxu0 0
      %2488 = vmatprep.subr.bf16.mxu0 0
      %2489 = vmatpush1.bf16.msra.mxu0 0
      %2490 = vmatprep.subr.bf16.mxu0 0
      %2491 = vmatpush1.bf16.msra.mxu0 0
      %2492 = vmatprep.subr.bf16.mxu0 0
      %2493 = vmatpush1.bf16.msra.mxu0 0
      %2494 = vmatprep.subr.bf16.mxu0 0
      %2495 = vmatpush1.bf16.msra.mxu0 0
      %2496 = vmatprep.subr.bf16.mxu0 0
      %2497 = vmatpush1.bf16.msra.mxu0 0
      %2498 = vmatprep.subr.bf16.mxu0 0
      %2499 = vmatpush1.bf16.msra.mxu0 0
      %2500 = vmatprep.subr.bf16.mxu0 0
      %2501 = vmatpush1.bf16.msra.mxu0 0
      %2502 = vmatprep.subr.bf16.mxu0 0
      %2503 = vmatpush1.bf16.msra.mxu0 0
      %2504 = vmatprep.subr.bf16.mxu0 0
      %2505 = vmatpush1.bf16.msra.mxu0 0
      %2506 = vmatprep.subr.bf16.mxu0 0
      %2507 = vmatpush1.bf16.msra.mxu0 0
      %2508 = vmatprep.subr.bf16.mxu0 0
      %2509 = vmatpush1.bf16.msra.mxu0 0
      %2510 = vmatprep.subr.bf16.mxu0 0
      %2511 = vmatpush1.bf16.msra.mxu0 0
      %2512 = vmatprep.subr.bf16.mxu0 0
      %2513 = vmatpush1.bf16.msra.mxu0 0
      %2514 = vmatprep.mubr.bf16.mxu0 0
      %2515 = vmatmul.mubr.bf16.gmra.mrb[0].mxu0 %v2432
      %v2516 = vpop.f32.mrb[0].mxu0
      %v2517 = vadd.f32 0.0, %v2516
      %v2518 = vpop.f32.mrb[0].mxu0
      %v2519 = vpop.f32.mrb[0].mxu0
      %v2520 = vadd.f32 0.0, %v2519
      %v2521 = vpop.f32.mrb[0].mxu0
      %2522 = vmatprep.mubr.bf16.mxu0 0
      %2523 = vmatmul.mubr.bf16.gmra.mrb[0].mxu0 %v2435
      %v2524 = vpop.f32.mrb[0].mxu0
      %v2525 = vadd.f32 0.0, %v2524
      %v2526 = vpop.f32.mrb[0].mxu0
      %v2527 = vpop.f32.mrb[0].mxu0
      %v2528 = vadd.f32 0.0, %v2527
      %v2529 = vpop.f32.mrb[0].mxu0
      %2530 = vmatprep.mubr.bf16.mxu0 0
      %2531 = vmatmul.mubr.bf16.gmra.mrb[0].mxu0 %v2438
      %v2532 = vpop.f32.mrb[0].mxu0
      %v2533 = vadd.f32 0.0, %v2532
      %v2534 = vpop.f32.mrb[0].mxu0
      %v2535 = vpop.f32.mrb[0].mxu0
      %v2536 = vadd.f32 0.0, %v2535
      %v2537 = vpop.f32.mrb[0].mxu0
      %2538 = vmatprep.mubr.bf16.mxu0 0
      %2539 = vmatmul.mubr.bf16.gmra.mrb[0].mxu0 %v2441
      %v2540 = vpop.f32.mrb[0].mxu0
      %v2541 = vadd.f32 0.0, %v2540
      %v2542 = vpop.f32.mrb[0].mxu0
      %v2543 = vpop.f32.mrb[0].mxu0
      %v2544 = vadd.f32 0.0, %v2543
      %v2545 = vpop.f32.mrb[0].mxu0
      %2546 = vmatprep.mubr.bf16.mxu0 0
      %2547 = vmatmul.mubr.bf16.gmra.mrb[0].mxu0 %v2444
      %v2548 = vpop.f32.mrb[0].mxu0
      %v2549 = vadd.f32 0.0, %v2548
      %v2550 = vpop.f32.mrb[0].mxu0
      %v2551 = vpop.f32.mrb[0].mxu0
      %v2552 = vadd.f32 0.0, %v2551
      %v2553 = vpop.f32.mrb[0].mxu0
      %2554 = vmatprep.mubr.bf16.mxu0 0
      %2555 = vmatmul.mubr.bf16.gmra.mrb[0].mxu0 %v2447
      %v2556 = vpop.f32.mrb[0].mxu0
      %v2557 = vadd.f32 0.0, %v2556
      %v2558 = vpop.f32.mrb[0].mxu0
      %v2559 = vpop.f32.mrb[0].mxu0
      %v2560 = vadd.f32 0.0, %v2559
      %v2561 = vpop.f32.mrb[0].mxu0
      %2562 = vmatprep.mubr.bf16.mxu0 0
      %2563 = vmatmul.mubr.bf16.gmra.mrb[0].mxu0 %v2450
      %v2564 = vpop.f32.mrb[0].mxu0
      %v2565 = vadd.f32 0.0, %v2564
      %v2566 = vpop.f32.mrb[0].mxu0
      %v2567 = vpop.f32.mrb[0].mxu0
      %v2568 = vadd.f32 0.0, %v2567
      %v2569 = vpop.f32.mrb[0].mxu0
      %2570 = vmatprep.mubr.bf16.mxu0 0
      %2571 = vmatmul.mubr.bf16.gmra.mrb[0].mxu0 %v2453
      %v2572 = vpop.f32.mrb[0].mxu0
      %v2573 = vadd.f32 0.0, %v2572
      %v2574 = vpop.f32.mrb[0].mxu0
      %v2575 = vpop.f32.mrb[0].mxu0
      %v2576 = vadd.f32 0.0, %v2575
      %v2577 = vpop.f32.mrb[0].mxu0
      %2578 = vmatprep.mubr.bf16.mxu0 0
      %2579 = vmatmul.mubr.bf16.gmra.mrb[0].mxu0 %v2456
      %v2580 = vpop.f32.mrb[0].mxu0
      %v2581 = vadd.f32 0.0, %v2580
      %v2582 = vpop.f32.mrb[0].mxu0
      %v2583 = vpop.f32.mrb[0].mxu0
      %v2584 = vadd.f32 0.0, %v2583
      %v2585 = vpop.f32.mrb[0].mxu0
      %2586 = vmatprep.mubr.bf16.mxu0 0
      %2587 = vmatmul.mubr.bf16.gmra.mrb[0].mxu0 %v2459
      %v2588 = vpop.f32.mrb[0].mxu0
      %v2589 = vadd.f32 0.0, %v2588
      %v2590 = vpop.f32.mrb[0].mxu0
      %v2591 = vpop.f32.mrb[0].mxu0
      %v2592 = vadd.f32 0.0, %v2591
      %v2593 = vpop.f32.mrb[0].mxu0
      %2594 = vmatprep.mubr.bf16.mxu0 0
      %2595 = vmatmul.mubr.bf16.gmra.mrb[0].mxu0 %v2462
      %v2596 = vpop.f32.mrb[0].mxu0
      %v2597 = vadd.f32 0.0, %v2596
      %v2598 = vpop.f32.mrb[0].mxu0
      %v2599 = vpop.f32.mrb[0].mxu0
      %v2600 = vadd.f32 0.0, %v2599
      %v2601 = vpop.f32.mrb[0].mxu0
      %2602 = vmatprep.mubr.bf16.mxu0 0
      %2603 = vmatmul.mubr.bf16.gmra.mrb[0].mxu0 %v2465
      %v2604 = vpop.f32.mrb[0].mxu0
      %v2605 = vadd.f32 0.0, %v2604
      %v2606 = vpop.f32.mrb[0].mxu0
      %v2607 = vpop.f32.mrb[0].mxu0
      %v2608 = vadd.f32 0.0, %v2607
      %v2609 = vpop.f32.mrb[0].mxu0
      %2610 = vmatprep.mubr.bf16.mxu0 0
      %2611 = vmatmul.mubr.bf16.gmra.mrb[0].mxu0 %v2468
      %v2612 = vpop.f32.mrb[0].mxu0
      %v2613 = vadd.f32 0.0, %v2612
      %v2614 = vpop.f32.mrb[0].mxu0
      %v2615 = vpop.f32.mrb[0].mxu0
      %v2616 = vadd.f32 0.0, %v2615
      %v2617 = vpop.f32.mrb[0].mxu0
      %2618 = vmatprep.mubr.bf16.mxu0 0
      %2619 = vmatmul.mubr.bf16.gmra.mrb[0].mxu0 %v2471
      %v2620 = vpop.f32.mrb[0].mxu0
      %v2621 = vadd.f32 0.0, %v2620
      %v2622 = vpop.f32.mrb[0].mxu0
      %v2623 = vpop.f32.mrb[0].mxu0
      %v2624 = vadd.f32 0.0, %v2623
      %v2625 = vpop.f32.mrb[0].mxu0
      %2626 = vmatprep.mubr.bf16.mxu0 0
      %2627 = vmatmul.mubr.bf16.gmra.mrb[0].mxu0 %v2474
      %v2628 = vpop.f32.mrb[0].mxu0
      %v2629 = vadd.f32 0.0, %v2628
      %v2630 = vpop.f32.mrb[0].mxu0
      %v2631 = vpop.f32.mrb[0].mxu0
      %v2632 = vadd.f32 0.0, %v2631
      %v2633 = vpop.f32.mrb[0].mxu0
      %2634 = vmatprep.mubr.bf16.mxu0 0
      %2635 = vmatmul.mubr.bf16.gmra.mrb[0].mxu0 %v2477
      %v2636 = vpop.f32.mrb[0].mxu0
      %v2637 = vadd.f32 0.0, %v2636
      %v2638 = vpop.f32.mrb[0].mxu0
      %v2639 = vpop.f32.mrb[0].mxu0
      %v2640 = vadd.f32 0.0, %v2639
      %v2641 = vpop.f32.mrb[0].mxu0
      %2642 = vdwg.mxu0
      %v2643 = vadd.f32 %v2348, %v2517
      %v2644 = vadd.f32 %v2349, %v2520
      %v2645 = vadd.f32 %v2350, %v2525
      %v2646 = vadd.f32 %v2351, %v2528
      %v2647 = vadd.f32 %v2352, %v2533
      %v2648 = vadd.f32 %v2353, %v2536
      %v2649 = vadd.f32 %v2354, %v2541
      %v2650 = vadd.f32 %v2355, %v2544
      %v2651 = vadd.f32 %v2356, %v2549
      %v2652 = vadd.f32 %v2357, %v2552
      %v2653 = vadd.f32 %v2358, %v2557
      %v2654 = vadd.f32 %v2359, %v2560
      %v2655 = vadd.f32 %v2360, %v2565
      %v2656 = vadd.f32 %v2361, %v2568
      %v2657 = vadd.f32 %v2362, %v2573
      %v2658 = vadd.f32 %v2363, %v2576
      %v2659 = vadd.f32 %v2364, %v2581
      %v2660 = vadd.f32 %v2365, %v2584
      %v2661 = vadd.f32 %v2366, %v2589
      %v2662 = vadd.f32 %v2367, %v2592
      %v2663 = vadd.f32 %v2368, %v2597
      %v2664 = vadd.f32 %v2369, %v2600
      %v2665 = vadd.f32 %v2370, %v2605
      %v2666 = vadd.f32 %v2371, %v2608
      %v2667 = vadd.f32 %v2372, %v2613
      %v2668 = vadd.f32 %v2373, %v2616
      %v2669 = vadd.f32 %v2374, %v2621
      %v2670 = vadd.f32 %v2375, %v2624
      %v2671 = vadd.f32 %v2376, %v2629
      %v2672 = vadd.f32 %v2377, %v2632
      %v2673 = vadd.f32 %v2378, %v2637
      %v2674 = vadd.f32 %v2379, %v2640
      %v2675 = vld [vmem:[%s2380 + $0x1] sm:$0xff]
      %v2676 = vld [vmem:[%s2380 + $0x9] sm:$0xff]
      %v2677 = vld [vmem:[%s2380 + $0x19] sm:$0xff]
      %v2678 = vld [vmem:[%s2380 + $0x21] sm:$0xff]
      %v2679 = vld [vmem:[%s2380 + $0x31] sm:$0xff]
      %v2680 = vld [vmem:[%s2380 + $0x39] sm:$0xff]
      %v2681 = vld [vmem:[%s2380 + $0x49] sm:$0xff]
      %v2682 = vld [vmem:[%s2380 + $0x51] sm:$0xff]
      %v2683 = vld [vmem:[%s2380 + $0x61] sm:$0xff]
      %v2684 = vld [vmem:[%s2380 + $0x69] sm:$0xff]
      %v2685 = vld [vmem:[%s2380 + $0x79] sm:$0xff]
      %v2686 = vld [vmem:[%s2380 + $0x81] sm:$0xff]
      %v2687 = vld [vmem:[%s2380 + $0x91] sm:$0xff]
      %v2688 = vld [vmem:[%s2380 + $0x99] sm:$0xff]
      %v2689 = vld [vmem:[%s2380 + $0xa9] sm:$0xff]
      %v2690 = vld [vmem:[%s2380 + $0xb1] sm:$0xff]
      %v2691 = vld [vmem:[%s2380 + $0xc1] sm:$0xff]
      %v2692 = vld [vmem:[%s2380 + $0xc9] sm:$0xff]
      %v2693 = vld [vmem:[%s2380 + $0xd9] sm:$0xff]
      %v2694 = vld [vmem:[%s2380 + $0xe1] sm:$0xff]
      %v2695 = vld [vmem:[%s2380 + $0xf1] sm:$0xff]
      %v2696 = vld [vmem:[%s2380 + $0xf9] sm:$0xff]
      %v2697 = vld [vmem:[%s2380 + $0x109] sm:$0xff]
      %v2698 = vld [vmem:[%s2380 + $0x111] sm:$0xff]
      %v2699 = vld [vmem:[%s2380 + $0x121] sm:$0xff]
      %v2700 = vld [vmem:[%s2380 + $0x129] sm:$0xff]
      %v2701 = vld [vmem:[%s2380 + $0x139] sm:$0xff]
      %v2702 = vld [vmem:[%s2380 + $0x141] sm:$0xff]
      %v2703 = vld [vmem:[%s2380 + $0x151] sm:$0xff]
      %v2704 = vld [vmem:[%s2380 + $0x159] sm:$0xff]
      %v2705 = vld [vmem:[%s2380 + $0x169] sm:$0xff]
      %v2706 = vld [vmem:[%s2380 + $0x171] sm:$0xff]
      %v2707 = vpack.c.bf16 %v2676, %v2675
      %v2708 = vpack.c.bf16 %v2678, %v2677
      %v2709 = vpack.c.bf16 %v2680, %v2679
      %v2710 = vpack.c.bf16 %v2682, %v2681
      %v2711 = vpack.c.bf16 %v2684, %v2683
      %v2712 = vpack.c.bf16 %v2686, %v2685
      %v2713 = vpack.c.bf16 %v2688, %v2687
      %v2714 = vpack.c.bf16 %v2690, %v2689
      %v2715 = vpack.c.bf16 %v2692, %v2691
      %v2716 = vpack.c.bf16 %v2694, %v2693
      %v2717 = vpack.c.bf16 %v2696, %v2695
      %v2718 = vpack.c.bf16 %v2698, %v2697
      %v2719 = vpack.c.bf16 %v2700, %v2699
      %v2720 = vpack.c.bf16 %v2702, %v2701
      %v2721 = vpack.c.bf16 %v2704, %v2703
      %v2722 = vpack.c.bf16 %v2706, %v2705
      %s2723 = scalar_lea.vmem %s6, 14
      %v2724 = vld [vmem:[%s2723] sm:$0x3]
      %v2726 = vsel %vm559, %v2707, 0
      %v2729 = vsel %vm559, %v2708, 0
      %v2732 = vsel %vm559, %v2709, 0
      %v2735 = vsel %vm559, %v2710, 0
      %v2738 = vsel %vm559, %v2711, 0
      %v2741 = vsel %vm559, %v2712, 0
      %v2744 = vsel %vm559, %v2713, 0
      %v2747 = vsel %vm559, %v2714, 0
      %v2750 = vsel %vm559, %v2715, 0
      %v2753 = vsel %vm559, %v2716, 0
      %v2756 = vsel %vm559, %v2717, 0
      %v2759 = vsel %vm559, %v2718, 0
      %v2762 = vsel %vm559, %v2719, 0
      %v2765 = vsel %vm559, %v2720, 0
      %v2768 = vsel %vm559, %v2721, 0
      %v2771 = vsel %vm559, %v2722, 0
      %v2774 = vsel %vm827, %v2724, 0
      %2776 = vmatprep.subr.bf16.mxu0 0
      %2777 = vmatpush1.bf16.msra.mxu0 %v2774
      %2778 = vmatprep.subr.bf16.mxu0 0
      %2779 = vmatpush1.bf16.msra.mxu0 0
      %2780 = vmatprep.subr.bf16.mxu0 0
      %2781 = vmatpush1.bf16.msra.mxu0 0
      %2782 = vmatprep.subr.bf16.mxu0 0
      %2783 = vmatpush1.bf16.msra.mxu0 0
      %2784 = vmatprep.subr.bf16.mxu0 0
      %2785 = vmatpush1.bf16.msra.mxu0 0
      %2786 = vmatprep.subr.bf16.mxu0 0
      %2787 = vmatpush1.bf16.msra.mxu0 0
      %2788 = vmatprep.subr.bf16.mxu0 0
      %2789 = vmatpush1.bf16.msra.mxu0 0
      %2790 = vmatprep.subr.bf16.mxu0 0
      %2791 = vmatpush1.bf16.msra.mxu0 0
      %2792 = vmatprep.subr.bf16.mxu0 0
      %2793 = vmatpush1.bf16.msra.mxu0 0
      %2794 = vmatprep.subr.bf16.mxu0 0
      %2795 = vmatpush1.bf16.msra.mxu0 0
      %2796 = vmatprep.subr.bf16.mxu0 0
      %2797 = vmatpush1.bf16.msra.mxu0 0
      %2798 = vmatprep.subr.bf16.mxu0 0
      %2799 = vmatpush1.bf16.msra.mxu0 0
      %2800 = vmatprep.subr.bf16.mxu0 0
      %2801 = vmatpush1.bf16.msra.mxu0 0
      %2802 = vmatprep.subr.bf16.mxu0 0
      %2803 = vmatpush1.bf16.msra.mxu0 0
      %2804 = vmatprep.subr.bf16.mxu0 0
      %2805 = vmatpush1.bf16.msra.mxu0 0
      %2806 = vmatprep.subr.bf16.mxu0 0
      %2807 = vmatpush1.bf16.msra.mxu0 0
      %2808 = vmatprep.mubr.bf16.mxu0 0
      %2809 = vmatmul.mubr.bf16.gmra.mrb[0].mxu0 %v2726
      %v2810 = vpop.f32.mrb[0].mxu0
      %v2811 = vadd.f32 0.0, %v2810
      %v2812 = vpop.f32.mrb[0].mxu0
      %v2813 = vpop.f32.mrb[0].mxu0
      %v2814 = vadd.f32 0.0, %v2813
      %v2815 = vpop.f32.mrb[0].mxu0
      %2816 = vmatprep.mubr.bf16.mxu0 0
      %2817 = vmatmul.mubr.bf16.gmra.mrb[0].mxu0 %v2729
      %v2818 = vpop.f32.mrb[0].mxu0
      %v2819 = vadd.f32 0.0, %v2818
      %v2820 = vpop.f32.mrb[0].mxu0
      %v2821 = vpop.f32.mrb[0].mxu0
      %v2822 = vadd.f32 0.0, %v2821
      %v2823 = vpop.f32.mrb[0].mxu0
      %2824 = vmatprep.mubr.bf16.mxu0 0
      %2825 = vmatmul.mubr.bf16.gmra.mrb[0].mxu0 %v2732
      %v2826 = vpop.f32.mrb[0].mxu0
      %v2827 = vadd.f32 0.0, %v2826
      %v2828 = vpop.f32.mrb[0].mxu0
      %v2829 = vpop.f32.mrb[0].mxu0
      %v2830 = vadd.f32 0.0, %v2829
      %v2831 = vpop.f32.mrb[0].mxu0
      %2832 = vmatprep.mubr.bf16.mxu0 0
      %2833 = vmatmul.mubr.bf16.gmra.mrb[0].mxu0 %v2735
      %v2834 = vpop.f32.mrb[0].mxu0
      %v2835 = vadd.f32 0.0, %v2834
      %v2836 = vpop.f32.mrb[0].mxu0
      %v2837 = vpop.f32.mrb[0].mxu0
      %v2838 = vadd.f32 0.0, %v2837
      %v2839 = vpop.f32.mrb[0].mxu0
      %2840 = vmatprep.mubr.bf16.mxu0 0
      %2841 = vmatmul.mubr.bf16.gmra.mrb[0].mxu0 %v2738
      %v2842 = vpop.f32.mrb[0].mxu0
      %v2843 = vadd.f32 0.0, %v2842
      %v2844 = vpop.f32.mrb[0].mxu0
      %v2845 = vpop.f32.mrb[0].mxu0
      %v2846 = vadd.f32 0.0, %v2845
      %v2847 = vpop.f32.mrb[0].mxu0
      %2848 = vmatprep.mubr.bf16.mxu0 0
      %2849 = vmatmul.mubr.bf16.gmra.mrb[0].mxu0 %v2741
      %v2850 = vpop.f32.mrb[0].mxu0
      %v2851 = vadd.f32 0.0, %v2850
      %v2852 = vpop.f32.mrb[0].mxu0
      %v2853 = vpop.f32.mrb[0].mxu0
      %v2854 = vadd.f32 0.0, %v2853
      %v2855 = vpop.f32.mrb[0].mxu0
      %2856 = vmatprep.mubr.bf16.mxu0 0
      %2857 = vmatmul.mubr.bf16.gmra.mrb[0].mxu0 %v2744
      %v2858 = vpop.f32.mrb[0].mxu0
      %v2859 = vadd.f32 0.0, %v2858
      %v2860 = vpop.f32.mrb[0].mxu0
      %v2861 = vpop.f32.mrb[0].mxu0
      %v2862 = vadd.f32 0.0, %v2861
      %v2863 = vpop.f32.mrb[0].mxu0
      %2864 = vmatprep.mubr.bf16.mxu0 0
      %2865 = vmatmul.mubr.bf16.gmra.mrb[0].mxu0 %v2747
      %v2866 = vpop.f32.mrb[0].mxu0
      %v2867 = vadd.f32 0.0, %v2866
      %v2868 = vpop.f32.mrb[0].mxu0
      %v2869 = vpop.f32.mrb[0].mxu0
      %v2870 = vadd.f32 0.0, %v2869
      %v2871 = vpop.f32.mrb[0].mxu0
      %2872 = vmatprep.mubr.bf16.mxu0 0
      %2873 = vmatmul.mubr.bf16.gmra.mrb[0].mxu0 %v2750
      %v2874 = vpop.f32.mrb[0].mxu0
      %v2875 = vadd.f32 0.0, %v2874
      %v2876 = vpop.f32.mrb[0].mxu0
      %v2877 = vpop.f32.mrb[0].mxu0
      %v2878 = vadd.f32 0.0, %v2877
      %v2879 = vpop.f32.mrb[0].mxu0
      %2880 = vmatprep.mubr.bf16.mxu0 0
      %2881 = vmatmul.mubr.bf16.gmra.mrb[0].mxu0 %v2753
      %v2882 = vpop.f32.mrb[0].mxu0
      %v2883 = vadd.f32 0.0, %v2882
      %v2884 = vpop.f32.mrb[0].mxu0
      %v2885 = vpop.f32.mrb[0].mxu0
      %v2886 = vadd.f32 0.0, %v2885
      %v2887 = vpop.f32.mrb[0].mxu0
      %2888 = vmatprep.mubr.bf16.mxu0 0
      %2889 = vmatmul.mubr.bf16.gmra.mrb[0].mxu0 %v2756
      %v2890 = vpop.f32.mrb[0].mxu0
      %v2891 = vadd.f32 0.0, %v2890
      %v2892 = vpop.f32.mrb[0].mxu0
      %v2893 = vpop.f32.mrb[0].mxu0
      %v2894 = vadd.f32 0.0, %v2893
      %v2895 = vpop.f32.mrb[0].mxu0
      %2896 = vmatprep.mubr.bf16.mxu0 0
      %2897 = vmatmul.mubr.bf16.gmra.mrb[0].mxu0 %v2759
      %v2898 = vpop.f32.mrb[0].mxu0
      %v2899 = vadd.f32 0.0, %v2898
      %v2900 = vpop.f32.mrb[0].mxu0
      %v2901 = vpop.f32.mrb[0].mxu0
      %v2902 = vadd.f32 0.0, %v2901
      %v2903 = vpop.f32.mrb[0].mxu0
      %2904 = vmatprep.mubr.bf16.mxu0 0
      %2905 = vmatmul.mubr.bf16.gmra.mrb[0].mxu0 %v2762
      %v2906 = vpop.f32.mrb[0].mxu0
      %v2907 = vadd.f32 0.0, %v2906
      %v2908 = vpop.f32.mrb[0].mxu0
      %v2909 = vpop.f32.mrb[0].mxu0
      %v2910 = vadd.f32 0.0, %v2909
      %v2911 = vpop.f32.mrb[0].mxu0
      %2912 = vmatprep.mubr.bf16.mxu0 0
      %2913 = vmatmul.mubr.bf16.gmra.mrb[0].mxu0 %v2765
      %v2914 = vpop.f32.mrb[0].mxu0
      %v2915 = vadd.f32 0.0, %v2914
      %v2916 = vpop.f32.mrb[0].mxu0
      %v2917 = vpop.f32.mrb[0].mxu0
      %v2918 = vadd.f32 0.0, %v2917
      %v2919 = vpop.f32.mrb[0].mxu0
      %2920 = vmatprep.mubr.bf16.mxu0 0
      %2921 = vmatmul.mubr.bf16.gmra.mrb[0].mxu0 %v2768
      %v2922 = vpop.f32.mrb[0].mxu0
      %v2923 = vadd.f32 0.0, %v2922
      %v2924 = vpop.f32.mrb[0].mxu0
      %v2925 = vpop.f32.mrb[0].mxu0
      %v2926 = vadd.f32 0.0, %v2925
      %v2927 = vpop.f32.mrb[0].mxu0
      %2928 = vmatprep.mubr.bf16.mxu0 0
      %2929 = vmatmul.mubr.bf16.gmra.mrb[0].mxu0 %v2771
      %v2930 = vpop.f32.mrb[0].mxu0
      %v2931 = vadd.f32 0.0, %v2930
      %v2932 = vpop.f32.mrb[0].mxu0
      %v2933 = vpop.f32.mrb[0].mxu0
      %v2934 = vadd.f32 0.0, %v2933
      %v2935 = vpop.f32.mrb[0].mxu0
      %2936 = vdwg.mxu0
      %v2937 = vadd.f32 %v2643, %v2811
      %v2938 = vadd.f32 %v2644, %v2814
      %v2939 = vadd.f32 %v2645, %v2819
      %v2940 = vadd.f32 %v2646, %v2822
      %v2941 = vadd.f32 %v2647, %v2827
      %v2942 = vadd.f32 %v2648, %v2830
      %v2943 = vadd.f32 %v2649, %v2835
      %v2944 = vadd.f32 %v2650, %v2838
      %v2945 = vadd.f32 %v2651, %v2843
      %v2946 = vadd.f32 %v2652, %v2846
      %v2947 = vadd.f32 %v2653, %v2851
      %v2948 = vadd.f32 %v2654, %v2854
      %v2949 = vadd.f32 %v2655, %v2859
      %v2950 = vadd.f32 %v2656, %v2862
      %v2951 = vadd.f32 %v2657, %v2867
      %v2952 = vadd.f32 %v2658, %v2870
      %v2953 = vadd.f32 %v2659, %v2875
      %v2954 = vadd.f32 %v2660, %v2878
      %v2955 = vadd.f32 %v2661, %v2883
      %v2956 = vadd.f32 %v2662, %v2886
      %v2957 = vadd.f32 %v2663, %v2891
      %v2958 = vadd.f32 %v2664, %v2894
      %v2959 = vadd.f32 %v2665, %v2899
      %v2960 = vadd.f32 %v2666, %v2902
      %v2961 = vadd.f32 %v2667, %v2907
      %v2962 = vadd.f32 %v2668, %v2910
      %v2963 = vadd.f32 %v2669, %v2915
      %v2964 = vadd.f32 %v2670, %v2918
      %v2965 = vadd.f32 %v2671, %v2923
      %v2966 = vadd.f32 %v2672, %v2926
      %v2967 = vadd.f32 %v2673, %v2931
      %v2968 = vadd.f32 %v2674, %v2934
      %v2969 = vld [vmem:[%s2380 + $0x2] sm:$0xff]
      %v2970 = vld [vmem:[%s2380 + $0xa] sm:$0xff]
      %v2971 = vld [vmem:[%s2380 + $0x1a] sm:$0xff]
      %v2972 = vld [vmem:[%s2380 + $0x22] sm:$0xff]
      %v2973 = vld [vmem:[%s2380 + $0x32] sm:$0xff]
      %v2974 = vld [vmem:[%s2380 + $0x3a] sm:$0xff]
      %v2975 = vld [vmem:[%s2380 + $0x4a] sm:$0xff]
      %v2976 = vld [vmem:[%s2380 + $0x52] sm:$0xff]
      %v2977 = vld [vmem:[%s2380 + $0x62] sm:$0xff]
      %v2978 = vld [vmem:[%s2380 + $0x6a] sm:$0xff]
      %v2979 = vld [vmem:[%s2380 + $0x7a] sm:$0xff]
      %v2980 = vld [vmem:[%s2380 + $0x82] sm:$0xff]
      %v2981 = vld [vmem:[%s2380 + $0x92] sm:$0xff]
      %v2982 = vld [vmem:[%s2380 + $0x9a] sm:$0xff]
      %v2983 = vld [vmem:[%s2380 + $0xaa] sm:$0xff]
      %v2984 = vld [vmem:[%s2380 + $0xb2] sm:$0xff]
      %v2985 = vld [vmem:[%s2380 + $0xc2] sm:$0xff]
      %v2986 = vld [vmem:[%s2380 + $0xca] sm:$0xff]
      %v2987 = vld [vmem:[%s2380 + $0xda] sm:$0xff]
      %v2988 = vld [vmem:[%s2380 + $0xe2] sm:$0xff]
      %v2989 = vld [vmem:[%s2380 + $0xf2] sm:$0xff]
      %v2990 = vld [vmem:[%s2380 + $0xfa] sm:$0xff]
      %v2991 = vld [vmem:[%s2380 + $0x10a] sm:$0xff]
      %v2992 = vld [vmem:[%s2380 + $0x112] sm:$0xff]
      %v2993 = vld [vmem:[%s2380 + $0x122] sm:$0xff]
      %v2994 = vld [vmem:[%s2380 + $0x12a] sm:$0xff]
      %v2995 = vld [vmem:[%s2380 + $0x13a] sm:$0xff]
      %v2996 = vld [vmem:[%s2380 + $0x142] sm:$0xff]
      %v2997 = vld [vmem:[%s2380 + $0x152] sm:$0xff]
      %v2998 = vld [vmem:[%s2380 + $0x15a] sm:$0xff]
      %v2999 = vld [vmem:[%s2380 + $0x16a] sm:$0xff]
      %v3000 = vld [vmem:[%s2380 + $0x172] sm:$0xff]
      %v3001 = vpack.c.bf16 %v2970, %v2969
      %v3002 = vpack.c.bf16 %v2972, %v2971
      %v3003 = vpack.c.bf16 %v2974, %v2973
      %v3004 = vpack.c.bf16 %v2976, %v2975
      %v3005 = vpack.c.bf16 %v2978, %v2977
      %v3006 = vpack.c.bf16 %v2980, %v2979
      %v3007 = vpack.c.bf16 %v2982, %v2981
      %v3008 = vpack.c.bf16 %v2984, %v2983
      %v3009 = vpack.c.bf16 %v2986, %v2985
      %v3010 = vpack.c.bf16 %v2988, %v2987
      %v3011 = vpack.c.bf16 %v2990, %v2989
      %v3012 = vpack.c.bf16 %v2992, %v2991
      %v3013 = vpack.c.bf16 %v2994, %v2993
      %v3014 = vpack.c.bf16 %v2996, %v2995
      %v3015 = vpack.c.bf16 %v2998, %v2997
      %v3016 = vpack.c.bf16 %v3000, %v2999
      %s3017 = scalar_lea.vmem %s6, 16
      %v3018 = vld [vmem:[%s3017] sm:$0x3]
      %v3020 = vsel %vm559, %v3001, 0
      %v3023 = vsel %vm559, %v3002, 0
      %v3026 = vsel %vm559, %v3003, 0
      %v3029 = vsel %vm559, %v3004, 0
      %v3032 = vsel %vm559, %v3005, 0
      %v3035 = vsel %vm559, %v3006, 0
      %v3038 = vsel %vm559, %v3007, 0
      %v3041 = vsel %vm559, %v3008, 0
      %v3044 = vsel %vm559, %v3009, 0
      %v3047 = vsel %vm559, %v3010, 0
      %v3050 = vsel %vm559, %v3011, 0
      %v3053 = vsel %vm559, %v3012, 0
      %v3056 = vsel %vm559, %v3013, 0
      %v3059 = vsel %vm559, %v3014, 0
      %v3062 = vsel %vm559, %v3015, 0
      %v3065 = vsel %vm559, %v3016, 0
      %v3068 = vsel %vm827, %v3018, 0
      %3070 = vmatprep.subr.bf16.mxu0 0
      %3071 = vmatpush1.bf16.msra.mxu0 %v3068
      %3072 = vmatprep.subr.bf16.mxu0 0
      %3073 = vmatpush1.bf16.msra.mxu0 0
      %3074 = vmatprep.subr.bf16.mxu0 0
      %3075 = vmatpush1.bf16.msra.mxu0 0
      %3076 = vmatprep.subr.bf16.mxu0 0
      %3077 = vmatpush1.bf16.msra.mxu0 0
      %3078 = vmatprep.subr.bf16.mxu0 0
      %3079 = vmatpush1.bf16.msra.mxu0 0
      %3080 = vmatprep.subr.bf16.mxu0 0
      %3081 = vmatpush1.bf16.msra.mxu0 0
      %3082 = vmatprep.subr.bf16.mxu0 0
      %3083 = vmatpush1.bf16.msra.mxu0 0
      %3084 = vmatprep.subr.bf16.mxu0 0
      %3085 = vmatpush1.bf16.msra.mxu0 0
      %3086 = vmatprep.subr.bf16.mxu0 0
      %3087 = vmatpush1.bf16.msra.mxu0 0
      %3088 = vmatprep.subr.bf16.mxu0 0
      %3089 = vmatpush1.bf16.msra.mxu0 0
      %3090 = vmatprep.subr.bf16.mxu0 0
      %3091 = vmatpush1.bf16.msra.mxu0 0
      %3092 = vmatprep.subr.bf16.mxu0 0
      %3093 = vmatpush1.bf16.msra.mxu0 0
      %3094 = vmatprep.subr.bf16.mxu0 0
      %3095 = vmatpush1.bf16.msra.mxu0 0
      %3096 = vmatprep.subr.bf16.mxu0 0
      %3097 = vmatpush1.bf16.msra.mxu0 0
      %3098 = vmatprep.subr.bf16.mxu0 0
      %3099 = vmatpush1.bf16.msra.mxu0 0
      %3100 = vmatprep.subr.bf16.mxu0 0
      %3101 = vmatpush1.bf16.msra.mxu0 0
      %3102 = vmatprep.mubr.bf16.mxu0 0
      %3103 = vmatmul.mubr.bf16.gmra.mrb[0].mxu0 %v3020
      %v3104 = vpop.f32.mrb[0].mxu0
      %v3105 = vadd.f32 0.0, %v3104
      %v3106 = vpop.f32.mrb[0].mxu0
      %v3107 = vpop.f32.mrb[0].mxu0
      %v3108 = vadd.f32 0.0, %v3107
      %v3109 = vpop.f32.mrb[0].mxu0
      %3110 = vmatprep.mubr.bf16.mxu0 0
      %3111 = vmatmul.mubr.bf16.gmra.mrb[0].mxu0 %v3023
      %v3112 = vpop.f32.mrb[0].mxu0
      %v3113 = vadd.f32 0.0, %v3112
      %v3114 = vpop.f32.mrb[0].mxu0
      %v3115 = vpop.f32.mrb[0].mxu0
      %v3116 = vadd.f32 0.0, %v3115
      %v3117 = vpop.f32.mrb[0].mxu0
      %3118 = vmatprep.mubr.bf16.mxu0 0
      %3119 = vmatmul.mubr.bf16.gmra.mrb[0].mxu0 %v3026
      %v3120 = vpop.f32.mrb[0].mxu0
      %v3121 = vadd.f32 0.0, %v3120
      %v3122 = vpop.f32.mrb[0].mxu0
      %v3123 = vpop.f32.mrb[0].mxu0
      %v3124 = vadd.f32 0.0, %v3123
      %v3125 = vpop.f32.mrb[0].mxu0
      %3126 = vmatprep.mubr.bf16.mxu0 0
      %3127 = vmatmul.mubr.bf16.gmra.mrb[0].mxu0 %v3029
      %v3128 = vpop.f32.mrb[0].mxu0
      %v3129 = vadd.f32 0.0, %v3128
      %v3130 = vpop.f32.mrb[0].mxu0
      %v3131 = vpop.f32.mrb[0].mxu0
      %v3132 = vadd.f32 0.0, %v3131
      %v3133 = vpop.f32.mrb[0].mxu0
      %3134 = vmatprep.mubr.bf16.mxu0 0
      %3135 = vmatmul.mubr.bf16.gmra.mrb[0].mxu0 %v3032
      %v3136 = vpop.f32.mrb[0].mxu0
      %v3137 = vadd.f32 0.0, %v3136
      %v3138 = vpop.f32.mrb[0].mxu0
      %v3139 = vpop.f32.mrb[0].mxu0
      %v3140 = vadd.f32 0.0, %v3139
      %v3141 = vpop.f32.mrb[0].mxu0
      %3142 = vmatprep.mubr.bf16.mxu0 0
      %3143 = vmatmul.mubr.bf16.gmra.mrb[0].mxu0 %v3035
      %v3144 = vpop.f32.mrb[0].mxu0
      %v3145 = vadd.f32 0.0, %v3144
      %v3146 = vpop.f32.mrb[0].mxu0
      %v3147 = vpop.f32.mrb[0].mxu0
      %v3148 = vadd.f32 0.0, %v3147
      %v3149 = vpop.f32.mrb[0].mxu0
      %3150 = vmatprep.mubr.bf16.mxu0 0
      %3151 = vmatmul.mubr.bf16.gmra.mrb[0].mxu0 %v3038
      %v3152 = vpop.f32.mrb[0].mxu0
      %v3153 = vadd.f32 0.0, %v3152
      %v3154 = vpop.f32.mrb[0].mxu0
      %v3155 = vpop.f32.mrb[0].mxu0
      %v3156 = vadd.f32 0.0, %v3155
      %v3157 = vpop.f32.mrb[0].mxu0
      %3158 = vmatprep.mubr.bf16.mxu0 0
      %3159 = vmatmul.mubr.bf16.gmra.mrb[0].mxu0 %v3041
      %v3160 = vpop.f32.mrb[0].mxu0
      %v3161 = vadd.f32 0.0, %v3160
      %v3162 = vpop.f32.mrb[0].mxu0
      %v3163 = vpop.f32.mrb[0].mxu0
      %v3164 = vadd.f32 0.0, %v3163
      %v3165 = vpop.f32.mrb[0].mxu0
      %3166 = vmatprep.mubr.bf16.mxu0 0
      %3167 = vmatmul.mubr.bf16.gmra.mrb[0].mxu0 %v3044
      %v3168 = vpop.f32.mrb[0].mxu0
      %v3169 = vadd.f32 0.0, %v3168
      %v3170 = vpop.f32.mrb[0].mxu0
      %v3171 = vpop.f32.mrb[0].mxu0
      %v3172 = vadd.f32 0.0, %v3171
      %v3173 = vpop.f32.mrb[0].mxu0
      %3174 = vmatprep.mubr.bf16.mxu0 0
      %3175 = vmatmul.mubr.bf16.gmra.mrb[0].mxu0 %v3047
      %v3176 = vpop.f32.mrb[0].mxu0
      %v3177 = vadd.f32 0.0, %v3176
      %v3178 = vpop.f32.mrb[0].mxu0
      %v3179 = vpop.f32.mrb[0].mxu0
      %v3180 = vadd.f32 0.0, %v3179
      %v3181 = vpop.f32.mrb[0].mxu0
      %3182 = vmatprep.mubr.bf16.mxu0 0
      %3183 = vmatmul.mubr.bf16.gmra.mrb[0].mxu0 %v3050
      %v3184 = vpop.f32.mrb[0].mxu0
      %v3185 = vadd.f32 0.0, %v3184
      %v3186 = vpop.f32.mrb[0].mxu0
      %v3187 = vpop.f32.mrb[0].mxu0
      %v3188 = vadd.f32 0.0, %v3187
      %v3189 = vpop.f32.mrb[0].mxu0
      %3190 = vmatprep.mubr.bf16.mxu0 0
      %3191 = vmatmul.mubr.bf16.gmra.mrb[0].mxu0 %v3053
      %v3192 = vpop.f32.mrb[0].mxu0
      %v3193 = vadd.f32 0.0, %v3192
      %v3194 = vpop.f32.mrb[0].mxu0
      %v3195 = vpop.f32.mrb[0].mxu0
      %v3196 = vadd.f32 0.0, %v3195
      %v3197 = vpop.f32.mrb[0].mxu0
      %3198 = vmatprep.mubr.bf16.mxu0 0
      %3199 = vmatmul.mubr.bf16.gmra.mrb[0].mxu0 %v3056
      %v3200 = vpop.f32.mrb[0].mxu0
      %v3201 = vadd.f32 0.0, %v3200
      %v3202 = vpop.f32.mrb[0].mxu0
      %v3203 = vpop.f32.mrb[0].mxu0
      %v3204 = vadd.f32 0.0, %v3203
      %v3205 = vpop.f32.mrb[0].mxu0
      %3206 = vmatprep.mubr.bf16.mxu0 0
      %3207 = vmatmul.mubr.bf16.gmra.mrb[0].mxu0 %v3059
      %v3208 = vpop.f32.mrb[0].mxu0
      %v3209 = vadd.f32 0.0, %v3208
      %v3210 = vpop.f32.mrb[0].mxu0
      %v3211 = vpop.f32.mrb[0].mxu0
      %v3212 = vadd.f32 0.0, %v3211
      %v3213 = vpop.f32.mrb[0].mxu0
      %3214 = vmatprep.mubr.bf16.mxu0 0
      %3215 = vmatmul.mubr.bf16.gmra.mrb[0].mxu0 %v3062
      %v3216 = vpop.f32.mrb[0].mxu0
      %v3217 = vadd.f32 0.0, %v3216
      %v3218 = vpop.f32.mrb[0].mxu0
      %v3219 = vpop.f32.mrb[0].mxu0
      %v3220 = vadd.f32 0.0, %v3219
      %v3221 = vpop.f32.mrb[0].mxu0
      %3222 = vmatprep.mubr.bf16.mxu0 0
      %3223 = vmatmul.mubr.bf16.gmra.mrb[0].mxu0 %v3065
      %v3224 = vpop.f32.mrb[0].mxu0
      %v3225 = vadd.f32 0.0, %v3224
      %v3226 = vpop.f32.mrb[0].mxu0
      %v3227 = vpop.f32.mrb[0].mxu0
      %v3228 = vadd.f32 0.0, %v3227
      %v3229 = vpop.f32.mrb[0].mxu0
      %3230 = vdwg.mxu0
      %v3231 = vadd.f32 %v2937, %v3105
      %v3232 = vadd.f32 %v2938, %v3108
      %v3233 = vadd.f32 %v2939, %v3113
      %v3234 = vadd.f32 %v2940, %v3116
      %v3235 = vadd.f32 %v2941, %v3121
      %v3236 = vadd.f32 %v2942, %v3124
      %v3237 = vadd.f32 %v2943, %v3129
      %v3238 = vadd.f32 %v2944, %v3132
      %v3239 = vadd.f32 %v2945, %v3137
      %v3240 = vadd.f32 %v2946, %v3140
      %v3241 = vadd.f32 %v2947, %v3145
      %v3242 = vadd.f32 %v2948, %v3148
      %v3243 = vadd.f32 %v2949, %v3153
      %v3244 = vadd.f32 %v2950, %v3156
      %v3245 = vadd.f32 %v2951, %v3161
      %v3246 = vadd.f32 %v2952, %v3164
      %v3247 = vadd.f32 %v2953, %v3169
      %v3248 = vadd.f32 %v2954, %v3172
      %v3249 = vadd.f32 %v2955, %v3177
      %v3250 = vadd.f32 %v2956, %v3180
      %v3251 = vadd.f32 %v2957, %v3185
      %v3252 = vadd.f32 %v2958, %v3188
      %v3253 = vadd.f32 %v2959, %v3193
      %v3254 = vadd.f32 %v2960, %v3196
      %v3255 = vadd.f32 %v2961, %v3201
      %v3256 = vadd.f32 %v2962, %v3204
      %v3257 = vadd.f32 %v2963, %v3209
      %v3258 = vadd.f32 %v2964, %v3212
      %v3259 = vadd.f32 %v2965, %v3217
      %v3260 = vadd.f32 %v2966, %v3220
      %v3261 = vadd.f32 %v2967, %v3225
      %v3262 = vadd.f32 %v2968, %v3228
      %v3263 = vld [vmem:[%s7] sm:$0x1]
      %v3265 = vlaneseq
      %v3266 = vshrl.u32 %v3265, 7
      %v3267 = vsub.s32 0, %v3266
      %v3268 = vrot.slane %v3263, %v3267
      %v3270 = vadd.f32 %v3231, %v3268
      %v3271 = vadd.f32 %v3232, %v3268
      %v3272 = vadd.f32 %v3233, %v3268
      %v3273 = vadd.f32 %v3234, %v3268
      %v3274 = vadd.f32 %v3235, %v3268
      %v3275 = vadd.f32 %v3236, %v3268
      %v3276 = vadd.f32 %v3237, %v3268
      %v3277 = vadd.f32 %v3238, %v3268
      %v3278 = vadd.f32 %v3239, %v3268
      %v3279 = vadd.f32 %v3240, %v3268
      %v3280 = vadd.f32 %v3241, %v3268
      %v3281 = vadd.f32 %v3242, %v3268
      %v3282 = vadd.f32 %v3243, %v3268
      %v3283 = vadd.f32 %v3244, %v3268
      %v3284 = vadd.f32 %v3245, %v3268
      %v3285 = vadd.f32 %v3246, %v3268
      %v3286 = vadd.f32 %v3247, %v3268
      %v3287 = vadd.f32 %v3248, %v3268
      %v3288 = vadd.f32 %v3249, %v3268
      %v3289 = vadd.f32 %v3250, %v3268
      %v3290 = vadd.f32 %v3251, %v3268
      %v3291 = vadd.f32 %v3252, %v3268
      %v3292 = vadd.f32 %v3253, %v3268
      %v3293 = vadd.f32 %v3254, %v3268
      %v3294 = vadd.f32 %v3255, %v3268
      %v3295 = vadd.f32 %v3256, %v3268
      %v3296 = vadd.f32 %v3257, %v3268
      %v3297 = vadd.f32 %v3258, %v3268
      %v3298 = vadd.f32 %v3259, %v3268
      %v3299 = vadd.f32 %v3260, %v3268
      %v3300 = vadd.f32 %v3261, %v3268
      %v3301 = vadd.f32 %v3262, %v3268
      %v3302 = vlaneseq
      %v3303 = vshrl.u32 %v3302, 7
      %v3304 = vsub.s32 0, %v3303
      %v3305 = vrot.slane %v554, %v3304
      %v3306 = vadd.f32 %v3270, %v3305
      %v3307 = vadd.f32 %v3271, %v3305
      %v3308 = vadd.f32 %v3272, %v3305
      %v3309 = vadd.f32 %v3273, %v3305
      %v3310 = vadd.f32 %v3274, %v3305
      %v3311 = vadd.f32 %v3275, %v3305
      %v3312 = vadd.f32 %v3276, %v3305
      %v3313 = vadd.f32 %v3277, %v3305
      %v3314 = vadd.f32 %v3278, %v3305
      %v3315 = vadd.f32 %v3279, %v3305
      %v3316 = vadd.f32 %v3280, %v3305
      %v3317 = vadd.f32 %v3281, %v3305
      %v3318 = vadd.f32 %v3282, %v3305
      %v3319 = vadd.f32 %v3283, %v3305
      %v3320 = vadd.f32 %v3284, %v3305
      %v3321 = vadd.f32 %v3285, %v3305
      %v3322 = vadd.f32 %v3286, %v3305
      %v3323 = vadd.f32 %v3287, %v3305
      %v3324 = vadd.f32 %v3288, %v3305
      %v3325 = vadd.f32 %v3289, %v3305
      %v3326 = vadd.f32 %v3290, %v3305
      %v3327 = vadd.f32 %v3291, %v3305
      %v3328 = vadd.f32 %v3292, %v3305
      %v3329 = vadd.f32 %v3293, %v3305
      %v3330 = vadd.f32 %v3294, %v3305
      %v3331 = vadd.f32 %v3295, %v3305
      %v3332 = vadd.f32 %v3296, %v3305
      %v3333 = vadd.f32 %v3297, %v3305
      %v3334 = vadd.f32 %v3298, %v3305
      %v3335 = vadd.f32 %v3299, %v3305
      %v3336 = vadd.f32 %v3300, %v3305
      %v3337 = vadd.f32 %v3301, %v3305
      %v3338 = vsub.f32 0.0, %v3306
      %v3339 = vsub.f32 0.0, %v3307
      %v3340 = vsub.f32 0.0, %v3308
      %v3341 = vsub.f32 0.0, %v3309
      %v3342 = vsub.f32 0.0, %v3310
      %v3343 = vsub.f32 0.0, %v3311
      %v3344 = vsub.f32 0.0, %v3312
      %v3345 = vsub.f32 0.0, %v3313
      %v3346 = vsub.f32 0.0, %v3314
      %v3347 = vsub.f32 0.0, %v3315
      %v3348 = vsub.f32 0.0, %v3316
      %v3349 = vsub.f32 0.0, %v3317
      %v3350 = vsub.f32 0.0, %v3318
      %v3351 = vsub.f32 0.0, %v3319
      %v3352 = vsub.f32 0.0, %v3320
      %v3353 = vsub.f32 0.0, %v3321
      %v3354 = vsub.f32 0.0, %v3322
      %v3355 = vsub.f32 0.0, %v3323
      %v3356 = vsub.f32 0.0, %v3324
      %v3357 = vsub.f32 0.0, %v3325
      %v3358 = vsub.f32 0.0, %v3326
      %v3359 = vsub.f32 0.0, %v3327
      %v3360 = vsub.f32 0.0, %v3328
      %v3361 = vsub.f32 0.0, %v3329
      %v3362 = vsub.f32 0.0, %v3330
      %v3363 = vsub.f32 0.0, %v3331
      %v3364 = vsub.f32 0.0, %v3332
      %v3365 = vsub.f32 0.0, %v3333
      %v3366 = vsub.f32 0.0, %v3334
      %v3367 = vsub.f32 0.0, %v3335
      %v3368 = vsub.f32 0.0, %v3336
      %v3369 = vsub.f32 0.0, %v3337
      %v3370 = vmul.f32 %v3338, 1.442695
      %v3371 = vpow.pop %v3370
      %v3372 = vmul.f32 %v3339, 1.442695
      %v3373 = vpow.pop %v3372
      %v3374 = vmul.f32 %v3340, 1.442695
      %v3375 = vpow.pop %v3374
      %v3376 = vmul.f32 %v3341, 1.442695
      %v3377 = vpow.pop %v3376
      %v3378 = vmul.f32 %v3342, 1.442695
      %v3379 = vpow.pop %v3378
      %v3380 = vmul.f32 %v3343, 1.442695
      %v3381 = vpow.pop %v3380
      %v3382 = vmul.f32 %v3344, 1.442695
      %v3383 = vpow.pop %v3382
      %v3384 = vmul.f32 %v3345, 1.442695
      %v3385 = vpow.pop %v3384
      %v3386 = vmul.f32 %v3346, 1.442695
      %v3387 = vpow.pop %v3386
      %v3388 = vmul.f32 %v3347, 1.442695
      %v3389 = vpow.pop %v3388
      %v3390 = vmul.f32 %v3348, 1.442695
      %v3391 = vpow.pop %v3390
      %v3392 = vmul.f32 %v3349, 1.442695
      %v3393 = vpow.pop %v3392
      %v3394 = vmul.f32 %v3350, 1.442695
      %v3395 = vpow.pop %v3394
      %v3396 = vmul.f32 %v3351, 1.442695
      %v3397 = vpow.pop %v3396
      %v3398 = vmul.f32 %v3352, 1.442695
      %v3399 = vpow.pop %v3398
      %v3400 = vmul.f32 %v3353, 1.442695
      %v3401 = vpow.pop %v3400
      %v3402 = vmul.f32 %v3354, 1.442695
      %v3403 = vpow.pop %v3402
      %v3404 = vmul.f32 %v3355, 1.442695
      %v3405 = vpow.pop %v3404
      %v3406 = vmul.f32 %v3356, 1.442695
      %v3407 = vpow.pop %v3406
      %v3408 = vmul.f32 %v3357, 1.442695
      %v3409 = vpow.pop %v3408
      %v3410 = vmul.f32 %v3358, 1.442695
      %v3411 = vpow.pop %v3410
      %v3412 = vmul.f32 %v3359, 1.442695
      %v3413 = vpow.pop %v3412
      %v3414 = vmul.f32 %v3360, 1.442695
      %v3415 = vpow.pop %v3414
      %v3416 = vmul.f32 %v3361, 1.442695
      %v3417 = vpow.pop %v3416
      %v3418 = vmul.f32 %v3362, 1.442695
      %v3419 = vpow.pop %v3418
      %v3420 = vmul.f32 %v3363, 1.442695
      %v3421 = vpow.pop %v3420
      %v3422 = vmul.f32 %v3364, 1.442695
      %v3423 = vpow.pop %v3422
      %v3424 = vmul.f32 %v3365, 1.442695
      %v3425 = vpow.pop %v3424
      %v3426 = vmul.f32 %v3366, 1.442695
      %v3427 = vpow.pop %v3426
      %v3428 = vmul.f32 %v3367, 1.442695
      %v3429 = vpow.pop %v3428
      %v3430 = vmul.f32 %v3368, 1.442695
      %v3431 = vpow.pop %v3430
      %v3432 = vmul.f32 %v3369, 1.442695
      %v3433 = vpow.pop %v3432
      %v3434 = vadd.f32 %v3371, 1.0
      %v3435 = vadd.f32 %v3373, 1.0
      %v3436 = vadd.f32 %v3375, 1.0
      %v3437 = vadd.f32 %v3377, 1.0
      %v3438 = vadd.f32 %v3379, 1.0
      %v3439 = vadd.f32 %v3381, 1.0
      %v3440 = vadd.f32 %v3383, 1.0
      %v3441 = vadd.f32 %v3385, 1.0
      %v3442 = vadd.f32 %v3387, 1.0
      %v3443 = vadd.f32 %v3389, 1.0
      %v3444 = vadd.f32 %v3391, 1.0
      %v3445 = vadd.f32 %v3393, 1.0
      %v3446 = vadd.f32 %v3395, 1.0
      %v3447 = vadd.f32 %v3397, 1.0
      %v3448 = vadd.f32 %v3399, 1.0
      %v3449 = vadd.f32 %v3401, 1.0
      %v3450 = vadd.f32 %v3403, 1.0
      %v3451 = vadd.f32 %v3405, 1.0
      %v3452 = vadd.f32 %v3407, 1.0
      %v3453 = vadd.f32 %v3409, 1.0
      %v3454 = vadd.f32 %v3411, 1.0
      %v3455 = vadd.f32 %v3413, 1.0
      %v3456 = vadd.f32 %v3415, 1.0
      %v3457 = vadd.f32 %v3417, 1.0
      %v3458 = vadd.f32 %v3419, 1.0
      %v3459 = vadd.f32 %v3421, 1.0
      %v3460 = vadd.f32 %v3423, 1.0
      %v3461 = vadd.f32 %v3425, 1.0
      %v3462 = vadd.f32 %v3427, 1.0
      %v3463 = vadd.f32 %v3429, 1.0
      %v3464 = vadd.f32 %v3431, 1.0
      %v3465 = vadd.f32 %v3433, 1.0
      %v3466 = vrcp.pop %v3434
      %v3467 = vrcp.pop %v3435
      %v3468 = vrcp.pop %v3436
      %v3469 = vrcp.pop %v3437
      %v3470 = vrcp.pop %v3438
      %v3471 = vrcp.pop %v3439
      %v3472 = vrcp.pop %v3440
      %v3473 = vrcp.pop %v3441
      %v3474 = vrcp.pop %v3442
      %v3475 = vrcp.pop %v3443
      %v3476 = vrcp.pop %v3444
      %v3477 = vrcp.pop %v3445
      %v3478 = vrcp.pop %v3446
      %v3479 = vrcp.pop %v3447
      %v3480 = vrcp.pop %v3448
      %v3481 = vrcp.pop %v3449
      %v3482 = vrcp.pop %v3450
      %v3483 = vrcp.pop %v3451
      %v3484 = vrcp.pop %v3452
      %v3485 = vrcp.pop %v3453
      %v3486 = vrcp.pop %v3454
      %v3487 = vrcp.pop %v3455
      %v3488 = vrcp.pop %v3456
      %v3489 = vrcp.pop %v3457
      %v3490 = vrcp.pop %v3458
      %v3491 = vrcp.pop %v3459
      %v3492 = vrcp.pop %v3460
      %v3493 = vrcp.pop %v3461
      %v3494 = vrcp.pop %v3462
      %v3495 = vrcp.pop %v3463
      %v3496 = vrcp.pop %v3464
      %v3497 = vrcp.pop %v3465
      %v3498 = vmul.f32 %v3306, %v3466
      %v3499 = vmul.f32 %v3307, %v3467
      %v3500 = vmul.f32 %v3308, %v3468
      %v3501 = vmul.f32 %v3309, %v3469
      %v3502 = vmul.f32 %v3310, %v3470
      %v3503 = vmul.f32 %v3311, %v3471
      %v3504 = vmul.f32 %v3312, %v3472
      %v3505 = vmul.f32 %v3313, %v3473
      %v3506 = vmul.f32 %v3314, %v3474
      %v3507 = vmul.f32 %v3315, %v3475
      %v3508 = vmul.f32 %v3316, %v3476
      %v3509 = vmul.f32 %v3317, %v3477
      %v3510 = vmul.f32 %v3318, %v3478
      %v3511 = vmul.f32 %v3319, %v3479
      %v3512 = vmul.f32 %v3320, %v3480
      %v3513 = vmul.f32 %v3321, %v3481
      %v3514 = vmul.f32 %v3322, %v3482
      %v3515 = vmul.f32 %v3323, %v3483
      %v3516 = vmul.f32 %v3324, %v3484
      %v3517 = vmul.f32 %v3325, %v3485
      %v3518 = vmul.f32 %v3326, %v3486
      %v3519 = vmul.f32 %v3327, %v3487
      %v3520 = vmul.f32 %v3328, %v3488
      %v3521 = vmul.f32 %v3329, %v3489
      %v3522 = vmul.f32 %v3330, %v3490
      %v3523 = vmul.f32 %v3331, %v3491
      %v3524 = vmul.f32 %v3332, %v3492
      %v3525 = vmul.f32 %v3333, %v3493
      %v3526 = vmul.f32 %v3334, %v3494
      %v3527 = vmul.f32 %v3335, %v3495
      %v3528 = vmul.f32 %v3336, %v3496
      %v3529 = vmul.f32 %v3337, %v3497
      %3530 = vst.msk [vmem:[#allocation3] sm:$0xff] %vm448, 0.0
      %3531 = vst.msk [vmem:[#allocation3 + $0x8] sm:$0xff] %vm448, 0.0
      %vm3532 = vcmask 254976
      %3533 = vst.msk [vmem:[#allocation3 + $0x10] sm:$0x3] %vm3532, 0.0
      %3534 = vst.msk [vmem:[#allocation3 + $0x18] sm:$0xff] %vm448, 0.0
      %3535 = vst.msk [vmem:[#allocation3 + $0x20] sm:$0xff] %vm448, 0.0
      %3536 = vst.msk [vmem:[#allocation3 + $0x28] sm:$0x3] %vm3532, 0.0
      %3537 = vst.msk [vmem:[#allocation3 + $0x30] sm:$0xff] %vm448, 0.0
      %3538 = vst.msk [vmem:[#allocation3 + $0x38] sm:$0xff] %vm448, 0.0
      %3539 = vst.msk [vmem:[#allocation3 + $0x40] sm:$0x3] %vm3532, 0.0
      %3540 = vst.msk [vmem:[#allocation3 + $0x48] sm:$0xff] %vm448, 0.0
      %3541 = vst.msk [vmem:[#allocation3 + $0x50] sm:$0xff] %vm448, 0.0
      %3542 = vst.msk [vmem:[#allocation3 + $0x58] sm:$0x3] %vm3532, 0.0
      %3543 = vst.msk [vmem:[#allocation3 + $0x60] sm:$0xff] %vm448, 0.0
      %3544 = vst.msk [vmem:[#allocation3 + $0x68] sm:$0xff] %vm448, 0.0
      %3545 = vst.msk [vmem:[#allocation3 + $0x70] sm:$0x3] %vm3532, 0.0
      %3546 = vst.msk [vmem:[#allocation3 + $0x78] sm:$0xff] %vm448, 0.0
      %3547 = vst.msk [vmem:[#allocation3 + $0x80] sm:$0xff] %vm448, 0.0
      %3548 = vst.msk [vmem:[#allocation3 + $0x88] sm:$0x3] %vm3532, 0.0
      %3549 = vst.msk [vmem:[#allocation3 + $0x90] sm:$0xff] %vm448, 0.0
      %3550 = vst.msk [vmem:[#allocation3 + $0x98] sm:$0xff] %vm448, 0.0
      %3551 = vst.msk [vmem:[#allocation3 + $0xa0] sm:$0x3] %vm3532, 0.0
      %3552 = vst.msk [vmem:[#allocation3 + $0xa8] sm:$0xff] %vm448, 0.0
      %3553 = vst.msk [vmem:[#allocation3 + $0xb0] sm:$0xff] %vm448, 0.0
      %3554 = vst.msk [vmem:[#allocation3 + $0xb8] sm:$0x3] %vm3532, 0.0
      %3555 = vst.msk [vmem:[#allocation3 + $0xc0] sm:$0xff] %vm448, 0.0
      %3556 = vst.msk [vmem:[#allocation3 + $0xc8] sm:$0xff] %vm448, 0.0
      %3557 = vst.msk [vmem:[#allocation3 + $0xd0] sm:$0x3] %vm3532, 0.0
      %3558 = vst.msk [vmem:[#allocation3 + $0xd8] sm:$0xff] %vm448, 0.0
      %3559 = vst.msk [vmem:[#allocation3 + $0xe0] sm:$0xff] %vm448, 0.0
      %3560 = vst.msk [vmem:[#allocation3 + $0xe8] sm:$0x3] %vm3532, 0.0
      %3561 = vst.msk [vmem:[#allocation3 + $0xf0] sm:$0xff] %vm448, 0.0
      %3562 = vst.msk [vmem:[#allocation3 + $0xf8] sm:$0xff] %vm448, 0.0
      %3563 = vst.msk [vmem:[#allocation3 + $0x100] sm:$0x3] %vm3532, 0.0
      %3564 = vst.msk [vmem:[#allocation3 + $0x108] sm:$0xff] %vm448, 0.0
      %3565 = vst.msk [vmem:[#allocation3 + $0x110] sm:$0xff] %vm448, 0.0
      %3566 = vst.msk [vmem:[#allocation3 + $0x118] sm:$0x3] %vm3532, 0.0
      %3567 = vst.msk [vmem:[#allocation3 + $0x120] sm:$0xff] %vm448, 0.0
      %3568 = vst.msk [vmem:[#allocation3 + $0x128] sm:$0xff] %vm448, 0.0
      %3569 = vst.msk [vmem:[#allocation3 + $0x130] sm:$0x3] %vm3532, 0.0
      %3570 = vst.msk [vmem:[#allocation3 + $0x138] sm:$0xff] %vm448, 0.0
      %3571 = vst.msk [vmem:[#allocation3 + $0x140] sm:$0xff] %vm448, 0.0
      %3572 = vst.msk [vmem:[#allocation3 + $0x148] sm:$0x3] %vm3532, 0.0
      %3573 = vst.msk [vmem:[#allocation3 + $0x150] sm:$0xff] %vm448, 0.0
      %3574 = vst.msk [vmem:[#allocation3 + $0x158] sm:$0xff] %vm448, 0.0
      %3575 = vst.msk [vmem:[#allocation3 + $0x160] sm:$0x3] %vm3532, 0.0
      %3576 = vst.msk [vmem:[#allocation3 + $0x168] sm:$0xff] %vm448, 0.0
      %3577 = vst.msk [vmem:[#allocation3 + $0x170] sm:$0xff] %vm448, 0.0
      %3578 = vst.msk [vmem:[#allocation3 + $0x178] sm:$0x3] %vm3532, 0.0
      %3579 = vst.msk [vmem:[#allocation3 + $0x180] sm:$0xff] %vm448, 0.0
      %3580 = vst.msk [vmem:[#allocation3 + $0x188] sm:$0xff] %vm448, 0.0
      %3581 = vst.msk [vmem:[#allocation3 + $0x190] sm:$0x3] %vm3532, 0.0
      %3582 = vst.msk [vmem:[#allocation3 + $0x198] sm:$0xff] %vm448, 0.0
      %3583 = vst.msk [vmem:[#allocation3 + $0x1a0] sm:$0xff] %vm448, 0.0
      %3584 = vst.msk [vmem:[#allocation3 + $0x1a8] sm:$0x3] %vm3532, 0.0
      %s3585 = scalar_lea.vmem [#allocation3], 24
      %3586 = vst.msk [vmem:[%s3585 + $0x1] sm:$0xff] %vm448, %v3498
      %3587 = vst.msk [vmem:[%s3585 + $0x9] sm:$0xff] %vm448, %v3499
      %3588 = vst.msk [vmem:[%s3585 + $0x19] sm:$0xff] %vm448, %v3500
      %3589 = vst.msk [vmem:[%s3585 + $0x21] sm:$0xff] %vm448, %v3501
      %3590 = vst.msk [vmem:[%s3585 + $0x31] sm:$0xff] %vm448, %v3502
      %3591 = vst.msk [vmem:[%s3585 + $0x39] sm:$0xff] %vm448, %v3503
      %3592 = vst.msk [vmem:[%s3585 + $0x49] sm:$0xff] %vm448, %v3504
      %3593 = vst.msk [vmem:[%s3585 + $0x51] sm:$0xff] %vm448, %v3505
      %3594 = vst.msk [vmem:[%s3585 + $0x61] sm:$0xff] %vm448, %v3506
      %3595 = vst.msk [vmem:[%s3585 + $0x69] sm:$0xff] %vm448, %v3507
      %3596 = vst.msk [vmem:[%s3585 + $0x79] sm:$0xff] %vm448, %v3508
      %3597 = vst.msk [vmem:[%s3585 + $0x81] sm:$0xff] %vm448, %v3509
      %3598 = vst.msk [vmem:[%s3585 + $0x91] sm:$0xff] %vm448, %v3510
      %3599 = vst.msk [vmem:[%s3585 + $0x99] sm:$0xff] %vm448, %v3511
      %3600 = vst.msk [vmem:[%s3585 + $0xa9] sm:$0xff] %vm448, %v3512
      %3601 = vst.msk [vmem:[%s3585 + $0xb1] sm:$0xff] %vm448, %v3513
      %3602 = vst.msk [vmem:[%s3585 + $0xc1] sm:$0xff] %vm448, %v3514
      %3603 = vst.msk [vmem:[%s3585 + $0xc9] sm:$0xff] %vm448, %v3515
      %3604 = vst.msk [vmem:[%s3585 + $0xd9] sm:$0xff] %vm448, %v3516
      %3605 = vst.msk [vmem:[%s3585 + $0xe1] sm:$0xff] %vm448, %v3517
      %3606 = vst.msk [vmem:[%s3585 + $0xf1] sm:$0xff] %vm448, %v3518
      %3607 = vst.msk [vmem:[%s3585 + $0xf9] sm:$0xff] %vm448, %v3519
      %3608 = vst.msk [vmem:[%s3585 + $0x109] sm:$0xff] %vm448, %v3520
      %3609 = vst.msk [vmem:[%s3585 + $0x111] sm:$0xff] %vm448, %v3521
      %3610 = vst.msk [vmem:[%s3585 + $0x121] sm:$0xff] %vm448, %v3522
      %3611 = vst.msk [vmem:[%s3585 + $0x129] sm:$0xff] %vm448, %v3523
      %3612 = vst.msk [vmem:[%s3585 + $0x139] sm:$0xff] %vm448, %v3524
      %3613 = vst.msk [vmem:[%s3585 + $0x141] sm:$0xff] %vm448, %v3525
      %3614 = vst.msk [vmem:[%s3585 + $0x151] sm:$0xff] %vm448, %v3526
      %3615 = vst.msk [vmem:[%s3585 + $0x159] sm:$0xff] %vm448, %v3527
      %3616 = vst.msk [vmem:[%s3585 + $0x169] sm:$0xff] %vm448, %v3528
      %3617 = vst.msk [vmem:[%s3585 + $0x171] sm:$0xff] %vm448, %v3529
      %v3618 = vld [vmem:[#allocation3] sm:$0xff]
      %v3619 = vld [vmem:[#allocation3 + $0x8] sm:$0xff]
      %v3620 = vld [vmem:[#allocation3 + $0x18] sm:$0xff]
      %v3621 = vld [vmem:[#allocation3 + $0x20] sm:$0xff]
      %v3622 = vld [vmem:[#allocation3 + $0x30] sm:$0xff]
      %v3623 = vld [vmem:[#allocation3 + $0x38] sm:$0xff]
      %v3624 = vld [vmem:[#allocation3 + $0x48] sm:$0xff]
      %v3625 = vld [vmem:[#allocation3 + $0x50] sm:$0xff]
      %v3626 = vld [vmem:[#allocation3 + $0x60] sm:$0xff]
      %v3627 = vld [vmem:[#allocation3 + $0x68] sm:$0xff]
      %v3628 = vld [vmem:[#allocation3 + $0x78] sm:$0xff]
      %v3629 = vld [vmem:[#allocation3 + $0x80] sm:$0xff]
      %v3630 = vld [vmem:[#allocation3 + $0x90] sm:$0xff]
      %v3631 = vld [vmem:[#allocation3 + $0x98] sm:$0xff]
      %v3632 = vld [vmem:[#allocation3 + $0xa8] sm:$0xff]
      %v3633 = vld [vmem:[#allocation3 + $0xb0] sm:$0xff]
      %v3634 = vld [vmem:[#allocation3 + $0xc0] sm:$0xff]
      %v3635 = vld [vmem:[#allocation3 + $0xc8] sm:$0xff]
      %v3636 = vld [vmem:[#allocation3 + $0xd8] sm:$0xff]
      %v3637 = vld [vmem:[#allocation3 + $0xe0] sm:$0xff]
      %v3638 = vld [vmem:[#allocation3 + $0xf0] sm:$0xff]
      %v3639 = vld [vmem:[#allocation3 + $0xf8] sm:$0xff]
      %v3640 = vld [vmem:[#allocation3 + $0x108] sm:$0xff]
      %v3641 = vld [vmem:[#allocation3 + $0x110] sm:$0xff]
      %v3642 = vld [vmem:[#allocation3 + $0x120] sm:$0xff]
      %v3643 = vld [vmem:[#allocation3 + $0x128] sm:$0xff]
      %v3644 = vld [vmem:[#allocation3 + $0x138] sm:$0xff]
      %v3645 = vld [vmem:[#allocation3 + $0x140] sm:$0xff]
      %v3646 = vld [vmem:[#allocation3 + $0x150] sm:$0xff]
      %v3647 = vld [vmem:[#allocation3 + $0x158] sm:$0xff]
      %v3648 = vld [vmem:[#allocation3 + $0x168] sm:$0xff]
      %v3649 = vld [vmem:[#allocation3 + $0x170] sm:$0xff]
      %v3650 = vpack.c.bf16 %v3619, %v3618
      %v3651 = vpack.c.bf16 %v3621, %v3620
      %v3652 = vpack.c.bf16 %v3623, %v3622
      %v3653 = vpack.c.bf16 %v3625, %v3624
      %v3654 = vpack.c.bf16 %v3627, %v3626
      %v3655 = vpack.c.bf16 %v3629, %v3628
      %v3656 = vpack.c.bf16 %v3631, %v3630
      %v3657 = vpack.c.bf16 %v3633, %v3632
      %v3658 = vpack.c.bf16 %v3635, %v3634
      %v3659 = vpack.c.bf16 %v3637, %v3636
      %v3660 = vpack.c.bf16 %v3639, %v3638
      %v3661 = vpack.c.bf16 %v3641, %v3640
      %v3662 = vpack.c.bf16 %v3643, %v3642
      %v3663 = vpack.c.bf16 %v3645, %v3644
      %v3664 = vpack.c.bf16 %v3647, %v3646
      %v3665 = vpack.c.bf16 %v3649, %v3648
      %v3666 = vld [vmem:[%s8] sm:$0xf]
      %v3667 = vld [vmem:[%s8 + $0x4] sm:$0xf]
      %v3668 = vld [vmem:[%s8 + $0x8] sm:$0xf]
      %v3669 = vld [vmem:[%s8 + $0xc] sm:$0xf]
      %v3670 = vld [vmem:[#allocation3 + $0x1] sm:$0xff]
      %v3671 = vld [vmem:[#allocation3 + $0x9] sm:$0xff]
      %v3672 = vld [vmem:[#allocation3 + $0x19] sm:$0xff]
      %v3673 = vld [vmem:[#allocation3 + $0x21] sm:$0xff]
      %v3674 = vld [vmem:[#allocation3 + $0x31] sm:$0xff]
      %v3675 = vld [vmem:[#allocation3 + $0x39] sm:$0xff]
      %v3676 = vld [vmem:[#allocation3 + $0x49] sm:$0xff]
      %v3677 = vld [vmem:[#allocation3 + $0x51] sm:$0xff]
      %v3678 = vld [vmem:[#allocation3 + $0x61] sm:$0xff]
      %v3679 = vld [vmem:[#allocation3 + $0x69] sm:$0xff]
      %v3680 = vld [vmem:[#allocation3 + $0x79] sm:$0xff]
      %v3681 = vld [vmem:[#allocation3 + $0x81] sm:$0xff]
      %v3682 = vld [vmem:[#allocation3 + $0x91] sm:$0xff]
      %v3683 = vld [vmem:[#allocation3 + $0x99] sm:$0xff]
      %v3684 = vld [vmem:[#allocation3 + $0xa9] sm:$0xff]
      %v3685 = vld [vmem:[#allocation3 + $0xb1] sm:$0xff]
      %v3686 = vld [vmem:[#allocation3 + $0xc1] sm:$0xff]
      %v3687 = vld [vmem:[#allocation3 + $0xc9] sm:$0xff]
      %v3688 = vld [vmem:[#allocation3 + $0xd9] sm:$0xff]
      %v3689 = vld [vmem:[#allocation3 + $0xe1] sm:$0xff]
      %v3690 = vld [vmem:[#allocation3 + $0xf1] sm:$0xff]
      %v3691 = vld [vmem:[#allocation3 + $0xf9] sm:$0xff]
      %v3692 = vld [vmem:[#allocation3 + $0x109] sm:$0xff]
      %v3693 = vld [vmem:[#allocation3 + $0x111] sm:$0xff]
      %v3694 = vld [vmem:[#allocation3 + $0x121] sm:$0xff]
      %v3695 = vld [vmem:[#allocation3 + $0x129] sm:$0xff]
      %v3696 = vld [vmem:[#allocation3 + $0x139] sm:$0xff]
      %v3697 = vld [vmem:[#allocation3 + $0x141] sm:$0xff]
      %v3698 = vld [vmem:[#allocation3 + $0x151] sm:$0xff]
      %v3699 = vld [vmem:[#allocation3 + $0x159] sm:$0xff]
      %v3700 = vld [vmem:[#allocation3 + $0x169] sm:$0xff]
      %v3701 = vld [vmem:[#allocation3 + $0x171] sm:$0xff]
      %v3702 = vpack.c.bf16 %v3671, %v3670
      %v3703 = vpack.c.bf16 %v3673, %v3672
      %v3704 = vpack.c.bf16 %v3675, %v3674
      %v3705 = vpack.c.bf16 %v3677, %v3676
      %v3706 = vpack.c.bf16 %v3679, %v3678
      %v3707 = vpack.c.bf16 %v3681, %v3680
      %v3708 = vpack.c.bf16 %v3683, %v3682
      %v3709 = vpack.c.bf16 %v3685, %v3684
      %v3710 = vpack.c.bf16 %v3687, %v3686
      %v3711 = vpack.c.bf16 %v3689, %v3688
      %v3712 = vpack.c.bf16 %v3691, %v3690
      %v3713 = vpack.c.bf16 %v3693, %v3692
      %v3714 = vpack.c.bf16 %v3695, %v3694
      %v3715 = vpack.c.bf16 %v3697, %v3696
      %v3716 = vpack.c.bf16 %v3699, %v3698
      %v3717 = vpack.c.bf16 %v3701, %v3700
      %s3718 = scalar_lea.vmem %s8, 16
      %v3719 = vld [vmem:[%s3718] sm:$0xf]
      %v3720 = vld [vmem:[%s3718 + $0x4] sm:$0xf]
      %v3721 = vld [vmem:[%s3718 + $0x8] sm:$0xf]
      %v3722 = vld [vmem:[%s3718 + $0xc] sm:$0xf]
      %v3727 = vunpack.c.l.b16 %v3719
      %v3728 = vunpack.c.l.b16 %v3720
      %v3729 = vunpack.c.l.b16 %v3721
      %v3730 = vunpack.c.l.b16 %v3722
      %v3731 = vpack.c.b16 %v3728, %v3727
      %v3732 = vpack.c.b16 %v3730, %v3729
      %v3736 = vsel %vm448, %v3702, 0
      %v3739 = vsel %vm448, %v3703, 0
      %v3742 = vsel %vm448, %v3704, 0
      %v3745 = vsel %vm448, %v3705, 0
      %v3748 = vsel %vm448, %v3706, 0
      %v3751 = vsel %vm448, %v3707, 0
      %v3754 = vsel %vm448, %v3708, 0
      %v3757 = vsel %vm448, %v3709, 0
      %v3760 = vsel %vm448, %v3710, 0
      %v3763 = vsel %vm448, %v3711, 0
      %v3766 = vsel %vm448, %v3712, 0
      %v3769 = vsel %vm448, %v3713, 0
      %v3772 = vsel %vm448, %v3714, 0
      %v3775 = vsel %vm448, %v3715, 0
      %v3778 = vsel %vm448, %v3716, 0
      %v3781 = vsel %vm448, %v3717, 0
      %3783 = vmatprep.subr.bf16.mxu0 0
      %3784 = vmatpush1.bf16.msra.mxu0 %v3731
      %3785 = vmatprep.subr.bf16.mxu0 0
      %3786 = vmatpush1.bf16.msra.mxu0 %v3732
      %3787 = vmatprep.subr.bf16.mxu0 0
      %3788 = vmatpush1.bf16.msra.mxu0 0
      %3789 = vmatprep.subr.bf16.mxu0 0
      %3790 = vmatpush1.bf16.msra.mxu0 0
      %3791 = vmatprep.subr.bf16.mxu0 0
      %3792 = vmatpush1.bf16.msra.mxu0 0
      %3793 = vmatprep.subr.bf16.mxu0 0
      %3794 = vmatpush1.bf16.msra.mxu0 0
      %3795 = vmatprep.subr.bf16.mxu0 0
      %3796 = vmatpush1.bf16.msra.mxu0 0
      %3797 = vmatprep.subr.bf16.mxu0 0
      %3798 = vmatpush1.bf16.msra.mxu0 0
      %3799 = vmatprep.subr.bf16.mxu0 0
      %3800 = vmatpush1.bf16.msra.mxu0 0
      %3801 = vmatprep.subr.bf16.mxu0 0
      %3802 = vmatpush1.bf16.msra.mxu0 0
      %3803 = vmatprep.subr.bf16.mxu0 0
      %3804 = vmatpush1.bf16.msra.mxu0 0
      %3805 = vmatprep.subr.bf16.mxu0 0
      %3806 = vmatpush1.bf16.msra.mxu0 0
      %3807 = vmatprep.subr.bf16.mxu0 0
      %3808 = vmatpush1.bf16.msra.mxu0 0
      %3809 = vmatprep.subr.bf16.mxu0 0
      %3810 = vmatpush1.bf16.msra.mxu0 0
      %3811 = vmatprep.subr.bf16.mxu0 0
      %3812 = vmatpush1.bf16.msra.mxu0 0
      %3813 = vmatprep.subr.bf16.mxu0 0
      %3814 = vmatpush1.bf16.msra.mxu0 0
      %3815 = vmatprep.mubr.bf16.mxu0 0
      %3816 = vmatmul.mubr.bf16.gmra.mrb[0].mxu0 %v3736
      %v3817 = vpop.f32.mrb[0].mxu0
      %v3818 = vadd.f32 0.0, %v3817
      %v3819 = vpop.f32.mrb[0].mxu0
      %v3820 = vpop.f32.mrb[0].mxu0
      %v3821 = vadd.f32 0.0, %v3820
      %v3822 = vpop.f32.mrb[0].mxu0
      %3823 = vmatprep.mubr.bf16.mxu0 0
      %3824 = vmatmul.mubr.bf16.gmra.mrb[0].mxu0 %v3739
      %v3825 = vpop.f32.mrb[0].mxu0
      %v3826 = vadd.f32 0.0, %v3825
      %v3827 = vpop.f32.mrb[0].mxu0
      %v3828 = vpop.f32.mrb[0].mxu0
      %v3829 = vadd.f32 0.0, %v3828
      %v3830 = vpop.f32.mrb[0].mxu0
      %3831 = vmatprep.mubr.bf16.mxu0 0
      %3832 = vmatmul.mubr.bf16.gmra.mrb[0].mxu0 %v3742
      %v3833 = vpop.f32.mrb[0].mxu0
      %v3834 = vadd.f32 0.0, %v3833
      %v3835 = vpop.f32.mrb[0].mxu0
      %v3836 = vpop.f32.mrb[0].mxu0
      %v3837 = vadd.f32 0.0, %v3836
      %v3838 = vpop.f32.mrb[0].mxu0
      %3839 = vmatprep.mubr.bf16.mxu0 0
      %3840 = vmatmul.mubr.bf16.gmra.mrb[0].mxu0 %v3745
      %v3841 = vpop.f32.mrb[0].mxu0
      %v3842 = vadd.f32 0.0, %v3841
      %v3843 = vpop.f32.mrb[0].mxu0
      %v3844 = vpop.f32.mrb[0].mxu0
      %v3845 = vadd.f32 0.0, %v3844
      %v3846 = vpop.f32.mrb[0].mxu0
      %3847 = vmatprep.mubr.bf16.mxu0 0
      %3848 = vmatmul.mubr.bf16.gmra.mrb[0].mxu0 %v3748
      %v3849 = vpop.f32.mrb[0].mxu0
      %v3850 = vadd.f32 0.0, %v3849
      %v3851 = vpop.f32.mrb[0].mxu0
      %v3852 = vpop.f32.mrb[0].mxu0
      %v3853 = vadd.f32 0.0, %v3852
      %v3854 = vpop.f32.mrb[0].mxu0
      %3855 = vmatprep.mubr.bf16.mxu0 0
      %3856 = vmatmul.mubr.bf16.gmra.mrb[0].mxu0 %v3751
      %v3857 = vpop.f32.mrb[0].mxu0
      %v3858 = vadd.f32 0.0, %v3857
      %v3859 = vpop.f32.mrb[0].mxu0
      %v3860 = vpop.f32.mrb[0].mxu0
      %v3861 = vadd.f32 0.0, %v3860
      %v3862 = vpop.f32.mrb[0].mxu0
      %3863 = vmatprep.mubr.bf16.mxu0 0
      %3864 = vmatmul.mubr.bf16.gmra.mrb[0].mxu0 %v3754
      %v3865 = vpop.f32.mrb[0].mxu0
      %v3866 = vadd.f32 0.0, %v3865
      %v3867 = vpop.f32.mrb[0].mxu0
      %v3868 = vpop.f32.mrb[0].mxu0
      %v3869 = vadd.f32 0.0, %v3868
      %v3870 = vpop.f32.mrb[0].mxu0
      %3871 = vmatprep.mubr.bf16.mxu0 0
      %3872 = vmatmul.mubr.bf16.gmra.mrb[0].mxu0 %v3757
      %v3873 = vpop.f32.mrb[0].mxu0
      %v3874 = vadd.f32 0.0, %v3873
      %v3875 = vpop.f32.mrb[0].mxu0
      %v3876 = vpop.f32.mrb[0].mxu0
      %v3877 = vadd.f32 0.0, %v3876
      %v3878 = vpop.f32.mrb[0].mxu0
      %3879 = vmatprep.mubr.bf16.mxu0 0
      %3880 = vmatmul.mubr.bf16.gmra.mrb[0].mxu0 %v3760
      %v3881 = vpop.f32.mrb[0].mxu0
      %v3882 = vadd.f32 0.0, %v3881
      %v3883 = vpop.f32.mrb[0].mxu0
      %v3884 = vpop.f32.mrb[0].mxu0
      %v3885 = vadd.f32 0.0, %v3884
      %v3886 = vpop.f32.mrb[0].mxu0
      %3887 = vmatprep.mubr.bf16.mxu0 0
      %3888 = vmatmul.mubr.bf16.gmra.mrb[0].mxu0 %v3763
      %v3889 = vpop.f32.mrb[0].mxu0
      %v3890 = vadd.f32 0.0, %v3889
      %v3891 = vpop.f32.mrb[0].mxu0
      %v3892 = vpop.f32.mrb[0].mxu0
      %v3893 = vadd.f32 0.0, %v3892
      %v3894 = vpop.f32.mrb[0].mxu0
      %3895 = vmatprep.mubr.bf16.mxu0 0
      %3896 = vmatmul.mubr.bf16.gmra.mrb[0].mxu0 %v3766
      %v3897 = vpop.f32.mrb[0].mxu0
      %v3898 = vadd.f32 0.0, %v3897
      %v3899 = vpop.f32.mrb[0].mxu0
      %v3900 = vpop.f32.mrb[0].mxu0
      %v3901 = vadd.f32 0.0, %v3900
      %v3902 = vpop.f32.mrb[0].mxu0
      %3903 = vmatprep.mubr.bf16.mxu0 0
      %3904 = vmatmul.mubr.bf16.gmra.mrb[0].mxu0 %v3769
      %v3905 = vpop.f32.mrb[0].mxu0
      %v3906 = vadd.f32 0.0, %v3905
      %v3907 = vpop.f32.mrb[0].mxu0
      %v3908 = vpop.f32.mrb[0].mxu0
      %v3909 = vadd.f32 0.0, %v3908
      %v3910 = vpop.f32.mrb[0].mxu0
      %3911 = vmatprep.mubr.bf16.mxu0 0
      %3912 = vmatmul.mubr.bf16.gmra.mrb[0].mxu0 %v3772
      %v3913 = vpop.f32.mrb[0].mxu0
      %v3914 = vadd.f32 0.0, %v3913
      %v3915 = vpop.f32.mrb[0].mxu0
      %v3916 = vpop.f32.mrb[0].mxu0
      %v3917 = vadd.f32 0.0, %v3916
      %v3918 = vpop.f32.mrb[0].mxu0
      %3919 = vmatprep.mubr.bf16.mxu0 0
      %3920 = vmatmul.mubr.bf16.gmra.mrb[0].mxu0 %v3775
      %v3921 = vpop.f32.mrb[0].mxu0
      %v3922 = vadd.f32 0.0, %v3921
      %v3923 = vpop.f32.mrb[0].mxu0
      %v3924 = vpop.f32.mrb[0].mxu0
      %v3925 = vadd.f32 0.0, %v3924
      %v3926 = vpop.f32.mrb[0].mxu0
      %3927 = vmatprep.mubr.bf16.mxu0 0
      %3928 = vmatmul.mubr.bf16.gmra.mrb[0].mxu0 %v3778
      %v3929 = vpop.f32.mrb[0].mxu0
      %v3930 = vadd.f32 0.0, %v3929
      %v3931 = vpop.f32.mrb[0].mxu0
      %v3932 = vpop.f32.mrb[0].mxu0
      %v3933 = vadd.f32 0.0, %v3932
      %v3934 = vpop.f32.mrb[0].mxu0
      %3935 = vmatprep.mubr.bf16.mxu0 0
      %3936 = vmatmul.mubr.bf16.gmra.mrb[0].mxu0 %v3781
      %v3937 = vpop.f32.mrb[0].mxu0
      %v3938 = vadd.f32 0.0, %v3937
      %v3939 = vpop.f32.mrb[0].mxu0
      %v3940 = vpop.f32.mrb[0].mxu0
      %v3941 = vadd.f32 0.0, %v3940
      %v3942 = vpop.f32.mrb[0].mxu0
      %3943 = vdwg.mxu0
      %v3948 = vunpack.c.l.b16 %v3666
      %v3949 = vunpack.c.l.b16 %v3667
      %v3950 = vunpack.c.l.b16 %v3668
      %v3951 = vunpack.c.l.b16 %v3669
      %v3952 = vpack.c.b16 %v3949, %v3948
      %v3953 = vpack.c.b16 %v3951, %v3950
      %v3957 = vsel %vm448, %v3650, 0
      %v3960 = vsel %vm448, %v3651, 0
      %v3963 = vsel %vm448, %v3652, 0
      %v3966 = vsel %vm448, %v3653, 0
      %v3969 = vsel %vm448, %v3654, 0
      %v3972 = vsel %vm448, %v3655, 0
      %v3975 = vsel %vm448, %v3656, 0
      %v3978 = vsel %vm448, %v3657, 0
      %v3981 = vsel %vm448, %v3658, 0
      %v3984 = vsel %vm448, %v3659, 0
      %v3987 = vsel %vm448, %v3660, 0
      %v3990 = vsel %vm448, %v3661, 0
      %v3993 = vsel %vm448, %v3662, 0
      %v3996 = vsel %vm448, %v3663, 0
      %v3999 = vsel %vm448, %v3664, 0
      %v4002 = vsel %vm448, %v3665, 0
      %4004 = vmatprep.subr.bf16.mxu0 0
      %4005 = vmatpush1.bf16.msra.mxu0 %v3952
      %4006 = vmatprep.subr.bf16.mxu0 0
      %4007 = vmatpush1.bf16.msra.mxu0 %v3953
      %4008 = vmatprep.subr.bf16.mxu0 0
      %4009 = vmatpush1.bf16.msra.mxu0 0
      %4010 = vmatprep.subr.bf16.mxu0 0
      %4011 = vmatpush1.bf16.msra.mxu0 0
      %4012 = vmatprep.subr.bf16.mxu0 0
      %4013 = vmatpush1.bf16.msra.mxu0 0
      %4014 = vmatprep.subr.bf16.mxu0 0
      %4015 = vmatpush1.bf16.msra.mxu0 0
      %4016 = vmatprep.subr.bf16.mxu0 0
      %4017 = vmatpush1.bf16.msra.mxu0 0
      %4018 = vmatprep.subr.bf16.mxu0 0
      %4019 = vmatpush1.bf16.msra.mxu0 0
      %4020 = vmatprep.subr.bf16.mxu0 0
      %4021 = vmatpush1.bf16.msra.mxu0 0
      %4022 = vmatprep.subr.bf16.mxu0 0
      %4023 = vmatpush1.bf16.msra.mxu0 0
      %4024 = vmatprep.subr.bf16.mxu0 0
      %4025 = vmatpush1.bf16.msra.mxu0 0
      %4026 = vmatprep.subr.bf16.mxu0 0
      %4027 = vmatpush1.bf16.msra.mxu0 0
      %4028 = vmatprep.subr.bf16.mxu0 0
      %4029 = vmatpush1.bf16.msra.mxu0 0
      %4030 = vmatprep.subr.bf16.mxu0 0
      %4031 = vmatpush1.bf16.msra.mxu0 0
      %4032 = vmatprep.subr.bf16.mxu0 0
      %4033 = vmatpush1.bf16.msra.mxu0 0
      %4034 = vmatprep.subr.bf16.mxu0 0
      %4035 = vmatpush1.bf16.msra.mxu0 0
      %4036 = vmatprep.mubr.bf16.mxu0 0
      %4037 = vmatmul.mubr.bf16.gmra.mrb[0].mxu0 %v3957
      %v4038 = vpop.f32.mrb[0].mxu0
      %v4039 = vadd.f32 %v3818, %v4038
      %v4040 = vpop.f32.mrb[0].mxu0
      %v4041 = vpop.f32.mrb[0].mxu0
      %v4042 = vadd.f32 %v3821, %v4041
      %v4043 = vpop.f32.mrb[0].mxu0
      %4044 = vmatprep.mubr.bf16.mxu0 0
      %4045 = vmatmul.mubr.bf16.gmra.mrb[0].mxu0 %v3960
      %v4046 = vpop.f32.mrb[0].mxu0
      %v4047 = vadd.f32 %v3826, %v4046
      %v4048 = vpop.f32.mrb[0].mxu0
      %v4049 = vpop.f32.mrb[0].mxu0
      %v4050 = vadd.f32 %v3829, %v4049
      %v4051 = vpop.f32.mrb[0].mxu0
      %4052 = vmatprep.mubr.bf16.mxu0 0
      %4053 = vmatmul.mubr.bf16.gmra.mrb[0].mxu0 %v3963
      %v4054 = vpop.f32.mrb[0].mxu0
      %v4055 = vadd.f32 %v3834, %v4054
      %v4056 = vpop.f32.mrb[0].mxu0
      %v4057 = vpop.f32.mrb[0].mxu0
      %v4058 = vadd.f32 %v3837, %v4057
      %v4059 = vpop.f32.mrb[0].mxu0
      %4060 = vmatprep.mubr.bf16.mxu0 0
      %4061 = vmatmul.mubr.bf16.gmra.mrb[0].mxu0 %v3966
      %v4062 = vpop.f32.mrb[0].mxu0
      %v4063 = vadd.f32 %v3842, %v4062
      %v4064 = vpop.f32.mrb[0].mxu0
      %v4065 = vpop.f32.mrb[0].mxu0
      %v4066 = vadd.f32 %v3845, %v4065
      %v4067 = vpop.f32.mrb[0].mxu0
      %4068 = vmatprep.mubr.bf16.mxu0 0
      %4069 = vmatmul.mubr.bf16.gmra.mrb[0].mxu0 %v3969
      %v4070 = vpop.f32.mrb[0].mxu0
      %v4071 = vadd.f32 %v3850, %v4070
      %v4072 = vpop.f32.mrb[0].mxu0
      %v4073 = vpop.f32.mrb[0].mxu0
      %v4074 = vadd.f32 %v3853, %v4073
      %v4075 = vpop.f32.mrb[0].mxu0
      %4076 = vmatprep.mubr.bf16.mxu0 0
      %4077 = vmatmul.mubr.bf16.gmra.mrb[0].mxu0 %v3972
      %v4078 = vpop.f32.mrb[0].mxu0
      %v4079 = vadd.f32 %v3858, %v4078
      %v4080 = vpop.f32.mrb[0].mxu0
      %v4081 = vpop.f32.mrb[0].mxu0
      %v4082 = vadd.f32 %v3861, %v4081
      %v4083 = vpop.f32.mrb[0].mxu0
      %4084 = vmatprep.mubr.bf16.mxu0 0
      %4085 = vmatmul.mubr.bf16.gmra.mrb[0].mxu0 %v3975
      %v4086 = vpop.f32.mrb[0].mxu0
      %v4087 = vadd.f32 %v3866, %v4086
      %v4088 = vpop.f32.mrb[0].mxu0
      %v4089 = vpop.f32.mrb[0].mxu0
      %v4090 = vadd.f32 %v3869, %v4089
      %v4091 = vpop.f32.mrb[0].mxu0
      %4092 = vmatprep.mubr.bf16.mxu0 0
      %4093 = vmatmul.mubr.bf16.gmra.mrb[0].mxu0 %v3978
      %v4094 = vpop.f32.mrb[0].mxu0
      %v4095 = vadd.f32 %v3874, %v4094
      %v4096 = vpop.f32.mrb[0].mxu0
      %v4097 = vpop.f32.mrb[0].mxu0
      %v4098 = vadd.f32 %v3877, %v4097
      %v4099 = vpop.f32.mrb[0].mxu0
      %4100 = vmatprep.mubr.bf16.mxu0 0
      %4101 = vmatmul.mubr.bf16.gmra.mrb[0].mxu0 %v3981
      %v4102 = vpop.f32.mrb[0].mxu0
      %v4103 = vadd.f32 %v3882, %v4102
      %v4104 = vpop.f32.mrb[0].mxu0
      %v4105 = vpop.f32.mrb[0].mxu0
      %v4106 = vadd.f32 %v3885, %v4105
      %v4107 = vpop.f32.mrb[0].mxu0
      %4108 = vmatprep.mubr.bf16.mxu0 0
      %4109 = vmatmul.mubr.bf16.gmra.mrb[0].mxu0 %v3984
      %v4110 = vpop.f32.mrb[0].mxu0
      %v4111 = vadd.f32 %v3890, %v4110
      %v4112 = vpop.f32.mrb[0].mxu0
      %v4113 = vpop.f32.mrb[0].mxu0
      %v4114 = vadd.f32 %v3893, %v4113
      %v4115 = vpop.f32.mrb[0].mxu0
      %4116 = vmatprep.mubr.bf16.mxu0 0
      %4117 = vmatmul.mubr.bf16.gmra.mrb[0].mxu0 %v3987
      %v4118 = vpop.f32.mrb[0].mxu0
      %v4119 = vadd.f32 %v3898, %v4118
      %v4120 = vpop.f32.mrb[0].mxu0
      %v4121 = vpop.f32.mrb[0].mxu0
      %v4122 = vadd.f32 %v3901, %v4121
      %v4123 = vpop.f32.mrb[0].mxu0
      %4124 = vmatprep.mubr.bf16.mxu0 0
      %4125 = vmatmul.mubr.bf16.gmra.mrb[0].mxu0 %v3990
      %v4126 = vpop.f32.mrb[0].mxu0
      %v4127 = vadd.f32 %v3906, %v4126
      %v4128 = vpop.f32.mrb[0].mxu0
      %v4129 = vpop.f32.mrb[0].mxu0
      %v4130 = vadd.f32 %v3909, %v4129
      %v4131 = vpop.f32.mrb[0].mxu0
      %4132 = vmatprep.mubr.bf16.mxu0 0
      %4133 = vmatmul.mubr.bf16.gmra.mrb[0].mxu0 %v3993
      %v4134 = vpop.f32.mrb[0].mxu0
      %v4135 = vadd.f32 %v3914, %v4134
      %v4136 = vpop.f32.mrb[0].mxu0
      %v4137 = vpop.f32.mrb[0].mxu0
      %v4138 = vadd.f32 %v3917, %v4137
      %v4139 = vpop.f32.mrb[0].mxu0
      %4140 = vmatprep.mubr.bf16.mxu0 0
      %4141 = vmatmul.mubr.bf16.gmra.mrb[0].mxu0 %v3996
      %v4142 = vpop.f32.mrb[0].mxu0
      %v4143 = vadd.f32 %v3922, %v4142
      %v4144 = vpop.f32.mrb[0].mxu0
      %v4145 = vpop.f32.mrb[0].mxu0
      %v4146 = vadd.f32 %v3925, %v4145
      %v4147 = vpop.f32.mrb[0].mxu0
      %4148 = vmatprep.mubr.bf16.mxu0 0
      %4149 = vmatmul.mubr.bf16.gmra.mrb[0].mxu0 %v3999
      %v4150 = vpop.f32.mrb[0].mxu0
      %v4151 = vadd.f32 %v3930, %v4150
      %v4152 = vpop.f32.mrb[0].mxu0
      %v4153 = vpop.f32.mrb[0].mxu0
      %v4154 = vadd.f32 %v3933, %v4153
      %v4155 = vpop.f32.mrb[0].mxu0
      %4156 = vmatprep.mubr.bf16.mxu0 0
      %4157 = vmatmul.mubr.bf16.gmra.mrb[0].mxu0 %v4002
      %v4158 = vpop.f32.mrb[0].mxu0
      %v4159 = vadd.f32 %v3938, %v4158
      %v4160 = vpop.f32.mrb[0].mxu0
      %v4161 = vpop.f32.mrb[0].mxu0
      %v4162 = vadd.f32 %v3941, %v4161
      %v4163 = vpop.f32.mrb[0].mxu0
      %4164 = vdwg.mxu0
      %v4165 = vld [vmem:[#allocation3 + $0x2] sm:$0xff]
      %v4166 = vld [vmem:[#allocation3 + $0xa] sm:$0xff]
      %v4167 = vld [vmem:[#allocation3 + $0x1a] sm:$0xff]
      %v4168 = vld [vmem:[#allocation3 + $0x22] sm:$0xff]
      %v4169 = vld [vmem:[#allocation3 + $0x32] sm:$0xff]
      %v4170 = vld [vmem:[#allocation3 + $0x3a] sm:$0xff]
      %v4171 = vld [vmem:[#allocation3 + $0x4a] sm:$0xff]
      %v4172 = vld [vmem:[#allocation3 + $0x52] sm:$0xff]
      %v4173 = vld [vmem:[#allocation3 + $0x62] sm:$0xff]
      %v4174 = vld [vmem:[#allocation3 + $0x6a] sm:$0xff]
      %v4175 = vld [vmem:[#allocation3 + $0x7a] sm:$0xff]
      %v4176 = vld [vmem:[#allocation3 + $0x82] sm:$0xff]
      %v4177 = vld [vmem:[#allocation3 + $0x92] sm:$0xff]
      %v4178 = vld [vmem:[#allocation3 + $0x9a] sm:$0xff]
      %v4179 = vld [vmem:[#allocation3 + $0xaa] sm:$0xff]
      %v4180 = vld [vmem:[#allocation3 + $0xb2] sm:$0xff]
      %v4181 = vld [vmem:[#allocation3 + $0xc2] sm:$0xff]
      %v4182 = vld [vmem:[#allocation3 + $0xca] sm:$0xff]
      %v4183 = vld [vmem:[#allocation3 + $0xda] sm:$0xff]
      %v4184 = vld [vmem:[#allocation3 + $0xe2] sm:$0xff]
      %v4185 = vld [vmem:[#allocation3 + $0xf2] sm:$0xff]
      %v4186 = vld [vmem:[#allocation3 + $0xfa] sm:$0xff]
      %v4187 = vld [vmem:[#allocation3 + $0x10a] sm:$0xff]
      %v4188 = vld [vmem:[#allocation3 + $0x112] sm:$0xff]
      %v4189 = vld [vmem:[#allocation3 + $0x122] sm:$0xff]
      %v4190 = vld [vmem:[#allocation3 + $0x12a] sm:$0xff]
      %v4191 = vld [vmem:[#allocation3 + $0x13a] sm:$0xff]
      %v4192 = vld [vmem:[#allocation3 + $0x142] sm:$0xff]
      %v4193 = vld [vmem:[#allocation3 + $0x152] sm:$0xff]
      %v4194 = vld [vmem:[#allocation3 + $0x15a] sm:$0xff]
      %v4195 = vld [vmem:[#allocation3 + $0x16a] sm:$0xff]
      %v4196 = vld [vmem:[#allocation3 + $0x172] sm:$0xff]
      %v4197 = vpack.c.bf16 %v4166, %v4165
      %v4198 = vpack.c.bf16 %v4168, %v4167
      %v4199 = vpack.c.bf16 %v4170, %v4169
      %v4200 = vpack.c.bf16 %v4172, %v4171
      %v4201 = vpack.c.bf16 %v4174, %v4173
      %v4202 = vpack.c.bf16 %v4176, %v4175
      %v4203 = vpack.c.bf16 %v4178, %v4177
      %v4204 = vpack.c.bf16 %v4180, %v4179
      %v4205 = vpack.c.bf16 %v4182, %v4181
      %v4206 = vpack.c.bf16 %v4184, %v4183
      %v4207 = vpack.c.bf16 %v4186, %v4185
      %v4208 = vpack.c.bf16 %v4188, %v4187
      %v4209 = vpack.c.bf16 %v4190, %v4189
      %v4210 = vpack.c.bf16 %v4192, %v4191
      %v4211 = vpack.c.bf16 %v4194, %v4193
      %v4212 = vpack.c.bf16 %v4196, %v4195
      %s4213 = scalar_lea.vmem %s8, 32
      %v4214 = vld [vmem:[%s4213] sm:$0xf]
      %v4215 = vld [vmem:[%s4213 + $0x4] sm:$0xf]
      %v4216 = vld [vmem:[%s4213 + $0x8] sm:$0xf]
      %v4217 = vld [vmem:[%s4213 + $0xc] sm:$0xf]
      %v4222 = vunpack.c.l.b16 %v4214
      %v4223 = vunpack.c.l.b16 %v4215
      %v4224 = vunpack.c.l.b16 %v4216
      %v4225 = vunpack.c.l.b16 %v4217
      %v4226 = vpack.c.b16 %v4223, %v4222
      %v4227 = vpack.c.b16 %v4225, %v4224
      %v4231 = vsel %vm448, %v4197, 0
      %v4234 = vsel %vm448, %v4198, 0
      %v4237 = vsel %vm448, %v4199, 0
      %v4240 = vsel %vm448, %v4200, 0
      %v4243 = vsel %vm448, %v4201, 0
      %v4246 = vsel %vm448, %v4202, 0
      %v4249 = vsel %vm448, %v4203, 0
      %v4252 = vsel %vm448, %v4204, 0
      %v4255 = vsel %vm448, %v4205, 0
      %v4258 = vsel %vm448, %v4206, 0
      %v4261 = vsel %vm448, %v4207, 0
      %v4264 = vsel %vm448, %v4208, 0
      %v4267 = vsel %vm448, %v4209, 0
      %v4270 = vsel %vm448, %v4210, 0
      %v4273 = vsel %vm448, %v4211, 0
      %v4276 = vsel %vm448, %v4212, 0
      %4278 = vmatprep.subr.bf16.mxu0 0
      %4279 = vmatpush1.bf16.msra.mxu0 %v4226
      %4280 = vmatprep.subr.bf16.mxu0 0
      %4281 = vmatpush1.bf16.msra.mxu0 %v4227
      %4282 = vmatprep.subr.bf16.mxu0 0
      %4283 = vmatpush1.bf16.msra.mxu0 0
      %4284 = vmatprep.subr.bf16.mxu0 0
      %4285 = vmatpush1.bf16.msra.mxu0 0
      %4286 = vmatprep.subr.bf16.mxu0 0
      %4287 = vmatpush1.bf16.msra.mxu0 0
      %4288 = vmatprep.subr.bf16.mxu0 0
      %4289 = vmatpush1.bf16.msra.mxu0 0
      %4290 = vmatprep.subr.bf16.mxu0 0
      %4291 = vmatpush1.bf16.msra.mxu0 0
      %4292 = vmatprep.subr.bf16.mxu0 0
      %4293 = vmatpush1.bf16.msra.mxu0 0
      %4294 = vmatprep.subr.bf16.mxu0 0
      %4295 = vmatpush1.bf16.msra.mxu0 0
      %4296 = vmatprep.subr.bf16.mxu0 0
      %4297 = vmatpush1.bf16.msra.mxu0 0
      %4298 = vmatprep.subr.bf16.mxu0 0
      %4299 = vmatpush1.bf16.msra.mxu0 0
      %4300 = vmatprep.subr.bf16.mxu0 0
      %4301 = vmatpush1.bf16.msra.mxu0 0
      %4302 = vmatprep.subr.bf16.mxu0 0
      %4303 = vmatpush1.bf16.msra.mxu0 0
      %4304 = vmatprep.subr.bf16.mxu0 0
      %4305 = vmatpush1.bf16.msra.mxu0 0
      %4306 = vmatprep.subr.bf16.mxu0 0
      %4307 = vmatpush1.bf16.msra.mxu0 0
      %4308 = vmatprep.subr.bf16.mxu0 0
      %4309 = vmatpush1.bf16.msra.mxu0 0
      %4310 = vmatprep.mubr.bf16.mxu0 0
      %4311 = vmatmul.mubr.bf16.gmra.mrb[0].mxu0 %v4231
      %v4312 = vpop.f32.mrb[0].mxu0
      %v4313 = vadd.f32 0.0, %v4312
      %v4314 = vpop.f32.mrb[0].mxu0
      %v4315 = vpop.f32.mrb[0].mxu0
      %v4316 = vadd.f32 0.0, %v4315
      %v4317 = vpop.f32.mrb[0].mxu0
      %4318 = vmatprep.mubr.bf16.mxu0 0
      %4319 = vmatmul.mubr.bf16.gmra.mrb[0].mxu0 %v4234
      %v4320 = vpop.f32.mrb[0].mxu0
      %v4321 = vadd.f32 0.0, %v4320
      %v4322 = vpop.f32.mrb[0].mxu0
      %v4323 = vpop.f32.mrb[0].mxu0
      %v4324 = vadd.f32 0.0, %v4323
      %v4325 = vpop.f32.mrb[0].mxu0
      %4326 = vmatprep.mubr.bf16.mxu0 0
      %4327 = vmatmul.mubr.bf16.gmra.mrb[0].mxu0 %v4237
      %v4328 = vpop.f32.mrb[0].mxu0
      %v4329 = vadd.f32 0.0, %v4328
      %v4330 = vpop.f32.mrb[0].mxu0
      %v4331 = vpop.f32.mrb[0].mxu0
      %v4332 = vadd.f32 0.0, %v4331
      %v4333 = vpop.f32.mrb[0].mxu0
      %4334 = vmatprep.mubr.bf16.mxu0 0
      %4335 = vmatmul.mubr.bf16.gmra.mrb[0].mxu0 %v4240
      %v4336 = vpop.f32.mrb[0].mxu0
      %v4337 = vadd.f32 0.0, %v4336
      %v4338 = vpop.f32.mrb[0].mxu0
      %v4339 = vpop.f32.mrb[0].mxu0
      %v4340 = vadd.f32 0.0, %v4339
      %v4341 = vpop.f32.mrb[0].mxu0
      %4342 = vmatprep.mubr.bf16.mxu0 0
      %4343 = vmatmul.mubr.bf16.gmra.mrb[0].mxu0 %v4243
      %v4344 = vpop.f32.mrb[0].mxu0
      %v4345 = vadd.f32 0.0, %v4344
      %v4346 = vpop.f32.mrb[0].mxu0
      %v4347 = vpop.f32.mrb[0].mxu0
      %v4348 = vadd.f32 0.0, %v4347
      %v4349 = vpop.f32.mrb[0].mxu0
      %4350 = vmatprep.mubr.bf16.mxu0 0
      %4351 = vmatmul.mubr.bf16.gmra.mrb[0].mxu0 %v4246
      %v4352 = vpop.f32.mrb[0].mxu0
      %v4353 = vadd.f32 0.0, %v4352
      %v4354 = vpop.f32.mrb[0].mxu0
      %v4355 = vpop.f32.mrb[0].mxu0
      %v4356 = vadd.f32 0.0, %v4355
      %v4357 = vpop.f32.mrb[0].mxu0
      %4358 = vmatprep.mubr.bf16.mxu0 0
      %4359 = vmatmul.mubr.bf16.gmra.mrb[0].mxu0 %v4249
      %v4360 = vpop.f32.mrb[0].mxu0
      %v4361 = vadd.f32 0.0, %v4360
      %v4362 = vpop.f32.mrb[0].mxu0
      %v4363 = vpop.f32.mrb[0].mxu0
      %v4364 = vadd.f32 0.0, %v4363
      %v4365 = vpop.f32.mrb[0].mxu0
      %4366 = vmatprep.mubr.bf16.mxu0 0
      %4367 = vmatmul.mubr.bf16.gmra.mrb[0].mxu0 %v4252
      %v4368 = vpop.f32.mrb[0].mxu0
      %v4369 = vadd.f32 0.0, %v4368
      %v4370 = vpop.f32.mrb[0].mxu0
      %v4371 = vpop.f32.mrb[0].mxu0
      %v4372 = vadd.f32 0.0, %v4371
      %v4373 = vpop.f32.mrb[0].mxu0
      %4374 = vmatprep.mubr.bf16.mxu0 0
      %4375 = vmatmul.mubr.bf16.gmra.mrb[0].mxu0 %v4255
      %v4376 = vpop.f32.mrb[0].mxu0
      %v4377 = vadd.f32 0.0, %v4376
      %v4378 = vpop.f32.mrb[0].mxu0
      %v4379 = vpop.f32.mrb[0].mxu0
      %v4380 = vadd.f32 0.0, %v4379
      %v4381 = vpop.f32.mrb[0].mxu0
      %4382 = vmatprep.mubr.bf16.mxu0 0
      %4383 = vmatmul.mubr.bf16.gmra.mrb[0].mxu0 %v4258
      %v4384 = vpop.f32.mrb[0].mxu0
      %v4385 = vadd.f32 0.0, %v4384
      %v4386 = vpop.f32.mrb[0].mxu0
      %v4387 = vpop.f32.mrb[0].mxu0
      %v4388 = vadd.f32 0.0, %v4387
      %v4389 = vpop.f32.mrb[0].mxu0
      %4390 = vmatprep.mubr.bf16.mxu0 0
      %4391 = vmatmul.mubr.bf16.gmra.mrb[0].mxu0 %v4261
      %v4392 = vpop.f32.mrb[0].mxu0
      %v4393 = vadd.f32 0.0, %v4392
      %v4394 = vpop.f32.mrb[0].mxu0
      %v4395 = vpop.f32.mrb[0].mxu0
      %v4396 = vadd.f32 0.0, %v4395
      %v4397 = vpop.f32.mrb[0].mxu0
      %4398 = vmatprep.mubr.bf16.mxu0 0
      %4399 = vmatmul.mubr.bf16.gmra.mrb[0].mxu0 %v4264
      %v4400 = vpop.f32.mrb[0].mxu0
      %v4401 = vadd.f32 0.0, %v4400
      %v4402 = vpop.f32.mrb[0].mxu0
      %v4403 = vpop.f32.mrb[0].mxu0
      %v4404 = vadd.f32 0.0, %v4403
      %v4405 = vpop.f32.mrb[0].mxu0
      %4406 = vmatprep.mubr.bf16.mxu0 0
      %4407 = vmatmul.mubr.bf16.gmra.mrb[0].mxu0 %v4267
      %v4408 = vpop.f32.mrb[0].mxu0
      %v4409 = vadd.f32 0.0, %v4408
      %v4410 = vpop.f32.mrb[0].mxu0
      %v4411 = vpop.f32.mrb[0].mxu0
      %v4412 = vadd.f32 0.0, %v4411
      %v4413 = vpop.f32.mrb[0].mxu0
      %4414 = vmatprep.mubr.bf16.mxu0 0
      %4415 = vmatmul.mubr.bf16.gmra.mrb[0].mxu0 %v4270
      %v4416 = vpop.f32.mrb[0].mxu0
      %v4417 = vadd.f32 0.0, %v4416
      %v4418 = vpop.f32.mrb[0].mxu0
      %v4419 = vpop.f32.mrb[0].mxu0
      %v4420 = vadd.f32 0.0, %v4419
      %v4421 = vpop.f32.mrb[0].mxu0
      %4422 = vmatprep.mubr.bf16.mxu0 0
      %4423 = vmatmul.mubr.bf16.gmra.mrb[0].mxu0 %v4273
      %v4424 = vpop.f32.mrb[0].mxu0
      %v4425 = vadd.f32 0.0, %v4424
      %v4426 = vpop.f32.mrb[0].mxu0
      %v4427 = vpop.f32.mrb[0].mxu0
      %v4428 = vadd.f32 0.0, %v4427
      %v4429 = vpop.f32.mrb[0].mxu0
      %4430 = vmatprep.mubr.bf16.mxu0 0
      %4431 = vmatmul.mubr.bf16.gmra.mrb[0].mxu0 %v4276
      %v4432 = vpop.f32.mrb[0].mxu0
      %v4433 = vadd.f32 0.0, %v4432
      %v4434 = vpop.f32.mrb[0].mxu0
      %v4435 = vpop.f32.mrb[0].mxu0
      %v4436 = vadd.f32 0.0, %v4435
      %v4437 = vpop.f32.mrb[0].mxu0
      %4438 = vdwg.mxu0
      %v4439 = vadd.f32 %v4039, %v4313
      %v4440 = vadd.f32 %v4042, %v4316
      %v4441 = vadd.f32 %v4047, %v4321
      %v4442 = vadd.f32 %v4050, %v4324
      %v4443 = vadd.f32 %v4055, %v4329
      %v4444 = vadd.f32 %v4058, %v4332
      %v4445 = vadd.f32 %v4063, %v4337
      %v4446 = vadd.f32 %v4066, %v4340
      %v4447 = vadd.f32 %v4071, %v4345
      %v4448 = vadd.f32 %v4074, %v4348
      %v4449 = vadd.f32 %v4079, %v4353
      %v4450 = vadd.f32 %v4082, %v4356
      %v4451 = vadd.f32 %v4087, %v4361
      %v4452 = vadd.f32 %v4090, %v4364
      %v4453 = vadd.f32 %v4095, %v4369
      %v4454 = vadd.f32 %v4098, %v4372
      %v4455 = vadd.f32 %v4103, %v4377
      %v4456 = vadd.f32 %v4106, %v4380
      %v4457 = vadd.f32 %v4111, %v4385
      %v4458 = vadd.f32 %v4114, %v4388
      %v4459 = vadd.f32 %v4119, %v4393
      %v4460 = vadd.f32 %v4122, %v4396
      %v4461 = vadd.f32 %v4127, %v4401
      %v4462 = vadd.f32 %v4130, %v4404
      %v4463 = vadd.f32 %v4135, %v4409
      %v4464 = vadd.f32 %v4138, %v4412
      %v4465 = vadd.f32 %v4143, %v4417
      %v4466 = vadd.f32 %v4146, %v4420
      %v4467 = vadd.f32 %v4151, %v4425
      %v4468 = vadd.f32 %v4154, %v4428
      %v4469 = vadd.f32 %v4159, %v4433
      %v4470 = vadd.f32 %v4162, %v4436
      %v4471 = vld [vmem:[%s3585] sm:$0xff]
      %v4472 = vld [vmem:[%s3585 + $0x8] sm:$0xff]
      %v4473 = vld [vmem:[%s3585 + $0x18] sm:$0xff]
      %v4474 = vld [vmem:[%s3585 + $0x20] sm:$0xff]
      %v4475 = vld [vmem:[%s3585 + $0x30] sm:$0xff]
      %v4476 = vld [vmem:[%s3585 + $0x38] sm:$0xff]
      %v4477 = vld [vmem:[%s3585 + $0x48] sm:$0xff]
      %v4478 = vld [vmem:[%s3585 + $0x50] sm:$0xff]
      %v4479 = vld [vmem:[%s3585 + $0x60] sm:$0xff]
      %v4480 = vld [vmem:[%s3585 + $0x68] sm:$0xff]
      %v4481 = vld [vmem:[%s3585 + $0x78] sm:$0xff]
      %v4482 = vld [vmem:[%s3585 + $0x80] sm:$0xff]
      %v4483 = vld [vmem:[%s3585 + $0x90] sm:$0xff]
      %v4484 = vld [vmem:[%s3585 + $0x98] sm:$0xff]
      %v4485 = vld [vmem:[%s3585 + $0xa8] sm:$0xff]
      %v4486 = vld [vmem:[%s3585 + $0xb0] sm:$0xff]
      %v4487 = vld [vmem:[%s3585 + $0xc0] sm:$0xff]
      %v4488 = vld [vmem:[%s3585 + $0xc8] sm:$0xff]
      %v4489 = vld [vmem:[%s3585 + $0xd8] sm:$0xff]
      %v4490 = vld [vmem:[%s3585 + $0xe0] sm:$0xff]
      %v4491 = vld [vmem:[%s3585 + $0xf0] sm:$0xff]
      %v4492 = vld [vmem:[%s3585 + $0xf8] sm:$0xff]
      %v4493 = vld [vmem:[%s3585 + $0x108] sm:$0xff]
      %v4494 = vld [vmem:[%s3585 + $0x110] sm:$0xff]
      %v4495 = vld [vmem:[%s3585 + $0x120] sm:$0xff]
      %v4496 = vld [vmem:[%s3585 + $0x128] sm:$0xff]
      %v4497 = vld [vmem:[%s3585 + $0x138] sm:$0xff]
      %v4498 = vld [vmem:[%s3585 + $0x140] sm:$0xff]
      %v4499 = vld [vmem:[%s3585 + $0x150] sm:$0xff]
      %v4500 = vld [vmem:[%s3585 + $0x158] sm:$0xff]
      %v4501 = vld [vmem:[%s3585 + $0x168] sm:$0xff]
      %v4502 = vld [vmem:[%s3585 + $0x170] sm:$0xff]
      %v4503 = vpack.c.bf16 %v4472, %v4471
      %v4504 = vpack.c.bf16 %v4474, %v4473
      %v4505 = vpack.c.bf16 %v4476, %v4475
      %v4506 = vpack.c.bf16 %v4478, %v4477
      %v4507 = vpack.c.bf16 %v4480, %v4479
      %v4508 = vpack.c.bf16 %v4482, %v4481
      %v4509 = vpack.c.bf16 %v4484, %v4483
      %v4510 = vpack.c.bf16 %v4486, %v4485
      %v4511 = vpack.c.bf16 %v4488, %v4487
      %v4512 = vpack.c.bf16 %v4490, %v4489
      %v4513 = vpack.c.bf16 %v4492, %v4491
      %v4514 = vpack.c.bf16 %v4494, %v4493
      %v4515 = vpack.c.bf16 %v4496, %v4495
      %v4516 = vpack.c.bf16 %v4498, %v4497
      %v4517 = vpack.c.bf16 %v4500, %v4499
      %v4518 = vpack.c.bf16 %v4502, %v4501
      %s4519 = scalar_lea.vmem %s8, 48
      %v4520 = vld [vmem:[%s4519] sm:$0xf]
      %v4521 = vld [vmem:[%s4519 + $0x4] sm:$0xf]
      %v4522 = vld [vmem:[%s4519 + $0x8] sm:$0xf]
      %v4523 = vld [vmem:[%s4519 + $0xc] sm:$0xf]
      %v4528 = vunpack.c.l.b16 %v4520
      %v4529 = vunpack.c.l.b16 %v4521
      %v4530 = vunpack.c.l.b16 %v4522
      %v4531 = vunpack.c.l.b16 %v4523
      %v4532 = vpack.c.b16 %v4529, %v4528
      %v4533 = vpack.c.b16 %v4531, %v4530
      %v4537 = vsel %vm448, %v4503, 0
      %v4540 = vsel %vm448, %v4504, 0
      %v4543 = vsel %vm448, %v4505, 0
      %v4546 = vsel %vm448, %v4506, 0
      %v4549 = vsel %vm448, %v4507, 0
      %v4552 = vsel %vm448, %v4508, 0
      %v4555 = vsel %vm448, %v4509, 0
      %v4558 = vsel %vm448, %v4510, 0
      %v4561 = vsel %vm448, %v4511, 0
      %v4564 = vsel %vm448, %v4512, 0
      %v4567 = vsel %vm448, %v4513, 0
      %v4570 = vsel %vm448, %v4514, 0
      %v4573 = vsel %vm448, %v4515, 0
      %v4576 = vsel %vm448, %v4516, 0
      %v4579 = vsel %vm448, %v4517, 0
      %v4582 = vsel %vm448, %v4518, 0
      %4584 = vmatprep.subr.bf16.mxu0 0
      %4585 = vmatpush1.bf16.msra.mxu0 %v4532
      %4586 = vmatprep.subr.bf16.mxu0 0
      %4587 = vmatpush1.bf16.msra.mxu0 %v4533
      %4588 = vmatprep.subr.bf16.mxu0 0
      %4589 = vmatpush1.bf16.msra.mxu0 0
      %4590 = vmatprep.subr.bf16.mxu0 0
      %4591 = vmatpush1.bf16.msra.mxu0 0
      %4592 = vmatprep.subr.bf16.mxu0 0
      %4593 = vmatpush1.bf16.msra.mxu0 0
      %4594 = vmatprep.subr.bf16.mxu0 0
      %4595 = vmatpush1.bf16.msra.mxu0 0
      %4596 = vmatprep.subr.bf16.mxu0 0
      %4597 = vmatpush1.bf16.msra.mxu0 0
      %4598 = vmatprep.subr.bf16.mxu0 0
      %4599 = vmatpush1.bf16.msra.mxu0 0
      %4600 = vmatprep.subr.bf16.mxu0 0
      %4601 = vmatpush1.bf16.msra.mxu0 0
      %4602 = vmatprep.subr.bf16.mxu0 0
      %4603 = vmatpush1.bf16.msra.mxu0 0
      %4604 = vmatprep.subr.bf16.mxu0 0
      %4605 = vmatpush1.bf16.msra.mxu0 0
      %4606 = vmatprep.subr.bf16.mxu0 0
      %4607 = vmatpush1.bf16.msra.mxu0 0
      %4608 = vmatprep.subr.bf16.mxu0 0
      %4609 = vmatpush1.bf16.msra.mxu0 0
      %4610 = vmatprep.subr.bf16.mxu0 0
      %4611 = vmatpush1.bf16.msra.mxu0 0
      %4612 = vmatprep.subr.bf16.mxu0 0
      %4613 = vmatpush1.bf16.msra.mxu0 0
      %4614 = vmatprep.subr.bf16.mxu0 0
      %4615 = vmatpush1.bf16.msra.mxu0 0
      %4616 = vmatprep.mubr.bf16.mxu0 0
      %4617 = vmatmul.mubr.bf16.gmra.mrb[0].mxu0 %v4537
      %v4618 = vpop.f32.mrb[0].mxu0
      %v4619 = vadd.f32 0.0, %v4618
      %v4620 = vpop.f32.mrb[0].mxu0
      %v4621 = vpop.f32.mrb[0].mxu0
      %v4622 = vadd.f32 0.0, %v4621
      %v4623 = vpop.f32.mrb[0].mxu0
      %4624 = vmatprep.mubr.bf16.mxu0 0
      %4625 = vmatmul.mubr.bf16.gmra.mrb[0].mxu0 %v4540
      %v4626 = vpop.f32.mrb[0].mxu0
      %v4627 = vadd.f32 0.0, %v4626
      %v4628 = vpop.f32.mrb[0].mxu0
      %v4629 = vpop.f32.mrb[0].mxu0
      %v4630 = vadd.f32 0.0, %v4629
      %v4631 = vpop.f32.mrb[0].mxu0
      %4632 = vmatprep.mubr.bf16.mxu0 0
      %4633 = vmatmul.mubr.bf16.gmra.mrb[0].mxu0 %v4543
      %v4634 = vpop.f32.mrb[0].mxu0
      %v4635 = vadd.f32 0.0, %v4634
      %v4636 = vpop.f32.mrb[0].mxu0
      %v4637 = vpop.f32.mrb[0].mxu0
      %v4638 = vadd.f32 0.0, %v4637
      %v4639 = vpop.f32.mrb[0].mxu0
      %4640 = vmatprep.mubr.bf16.mxu0 0
      %4641 = vmatmul.mubr.bf16.gmra.mrb[0].mxu0 %v4546
      %v4642 = vpop.f32.mrb[0].mxu0
      %v4643 = vadd.f32 0.0, %v4642
      %v4644 = vpop.f32.mrb[0].mxu0
      %v4645 = vpop.f32.mrb[0].mxu0
      %v4646 = vadd.f32 0.0, %v4645
      %v4647 = vpop.f32.mrb[0].mxu0
      %4648 = vmatprep.mubr.bf16.mxu0 0
      %4649 = vmatmul.mubr.bf16.gmra.mrb[0].mxu0 %v4549
      %v4650 = vpop.f32.mrb[0].mxu0
      %v4651 = vadd.f32 0.0, %v4650
      %v4652 = vpop.f32.mrb[0].mxu0
      %v4653 = vpop.f32.mrb[0].mxu0
      %v4654 = vadd.f32 0.0, %v4653
      %v4655 = vpop.f32.mrb[0].mxu0
      %4656 = vmatprep.mubr.bf16.mxu0 0
      %4657 = vmatmul.mubr.bf16.gmra.mrb[0].mxu0 %v4552
      %v4658 = vpop.f32.mrb[0].mxu0
      %v4659 = vadd.f32 0.0, %v4658
      %v4660 = vpop.f32.mrb[0].mxu0
      %v4661 = vpop.f32.mrb[0].mxu0
      %v4662 = vadd.f32 0.0, %v4661
      %v4663 = vpop.f32.mrb[0].mxu0
      %4664 = vmatprep.mubr.bf16.mxu0 0
      %4665 = vmatmul.mubr.bf16.gmra.mrb[0].mxu0 %v4555
      %v4666 = vpop.f32.mrb[0].mxu0
      %v4667 = vadd.f32 0.0, %v4666
      %v4668 = vpop.f32.mrb[0].mxu0
      %v4669 = vpop.f32.mrb[0].mxu0
      %v4670 = vadd.f32 0.0, %v4669
      %v4671 = vpop.f32.mrb[0].mxu0
      %4672 = vmatprep.mubr.bf16.mxu0 0
      %4673 = vmatmul.mubr.bf16.gmra.mrb[0].mxu0 %v4558
      %v4674 = vpop.f32.mrb[0].mxu0
      %v4675 = vadd.f32 0.0, %v4674
      %v4676 = vpop.f32.mrb[0].mxu0
      %v4677 = vpop.f32.mrb[0].mxu0
      %v4678 = vadd.f32 0.0, %v4677
      %v4679 = vpop.f32.mrb[0].mxu0
      %4680 = vmatprep.mubr.bf16.mxu0 0
      %4681 = vmatmul.mubr.bf16.gmra.mrb[0].mxu0 %v4561
      %v4682 = vpop.f32.mrb[0].mxu0
      %v4683 = vadd.f32 0.0, %v4682
      %v4684 = vpop.f32.mrb[0].mxu0
      %v4685 = vpop.f32.mrb[0].mxu0
      %v4686 = vadd.f32 0.0, %v4685
      %v4687 = vpop.f32.mrb[0].mxu0
      %4688 = vmatprep.mubr.bf16.mxu0 0
      %4689 = vmatmul.mubr.bf16.gmra.mrb[0].mxu0 %v4564
      %v4690 = vpop.f32.mrb[0].mxu0
      %v4691 = vadd.f32 0.0, %v4690
      %v4692 = vpop.f32.mrb[0].mxu0
      %v4693 = vpop.f32.mrb[0].mxu0
      %v4694 = vadd.f32 0.0, %v4693
      %v4695 = vpop.f32.mrb[0].mxu0
      %4696 = vmatprep.mubr.bf16.mxu0 0
      %4697 = vmatmul.mubr.bf16.gmra.mrb[0].mxu0 %v4567
      %v4698 = vpop.f32.mrb[0].mxu0
      %v4699 = vadd.f32 0.0, %v4698
      %v4700 = vpop.f32.mrb[0].mxu0
      %v4701 = vpop.f32.mrb[0].mxu0
      %v4702 = vadd.f32 0.0, %v4701
      %v4703 = vpop.f32.mrb[0].mxu0
      %4704 = vmatprep.mubr.bf16.mxu0 0
      %4705 = vmatmul.mubr.bf16.gmra.mrb[0].mxu0 %v4570
      %v4706 = vpop.f32.mrb[0].mxu0
      %v4707 = vadd.f32 0.0, %v4706
      %v4708 = vpop.f32.mrb[0].mxu0
      %v4709 = vpop.f32.mrb[0].mxu0
      %v4710 = vadd.f32 0.0, %v4709
      %v4711 = vpop.f32.mrb[0].mxu0
      %4712 = vmatprep.mubr.bf16.mxu0 0
      %4713 = vmatmul.mubr.bf16.gmra.mrb[0].mxu0 %v4573
      %v4714 = vpop.f32.mrb[0].mxu0
      %v4715 = vadd.f32 0.0, %v4714
      %v4716 = vpop.f32.mrb[0].mxu0
      %v4717 = vpop.f32.mrb[0].mxu0
      %v4718 = vadd.f32 0.0, %v4717
      %v4719 = vpop.f32.mrb[0].mxu0
      %4720 = vmatprep.mubr.bf16.mxu0 0
      %4721 = vmatmul.mubr.bf16.gmra.mrb[0].mxu0 %v4576
      %v4722 = vpop.f32.mrb[0].mxu0
      %v4723 = vadd.f32 0.0, %v4722
      %v4724 = vpop.f32.mrb[0].mxu0
      %v4725 = vpop.f32.mrb[0].mxu0
      %v4726 = vadd.f32 0.0, %v4725
      %v4727 = vpop.f32.mrb[0].mxu0
      %4728 = vmatprep.mubr.bf16.mxu0 0
      %4729 = vmatmul.mubr.bf16.gmra.mrb[0].mxu0 %v4579
      %v4730 = vpop.f32.mrb[0].mxu0
      %v4731 = vadd.f32 0.0, %v4730
      %v4732 = vpop.f32.mrb[0].mxu0
      %v4733 = vpop.f32.mrb[0].mxu0
      %v4734 = vadd.f32 0.0, %v4733
      %v4735 = vpop.f32.mrb[0].mxu0
      %4736 = vmatprep.mubr.bf16.mxu0 0
      %4737 = vmatmul.mubr.bf16.gmra.mrb[0].mxu0 %v4582
      %v4738 = vpop.f32.mrb[0].mxu0
      %v4739 = vadd.f32 0.0, %v4738
      %v4740 = vpop.f32.mrb[0].mxu0
      %v4741 = vpop.f32.mrb[0].mxu0
      %v4742 = vadd.f32 0.0, %v4741
      %v4743 = vpop.f32.mrb[0].mxu0
      %4744 = vdwg.mxu0
      %v4745 = vadd.f32 %v4439, %v4619
      %v4746 = vadd.f32 %v4440, %v4622
      %v4747 = vadd.f32 %v4441, %v4627
      %v4748 = vadd.f32 %v4442, %v4630
      %v4749 = vadd.f32 %v4443, %v4635
      %v4750 = vadd.f32 %v4444, %v4638
      %v4751 = vadd.f32 %v4445, %v4643
      %v4752 = vadd.f32 %v4446, %v4646
      %v4753 = vadd.f32 %v4447, %v4651
      %v4754 = vadd.f32 %v4448, %v4654
      %v4755 = vadd.f32 %v4449, %v4659
      %v4756 = vadd.f32 %v4450, %v4662
      %v4757 = vadd.f32 %v4451, %v4667
      %v4758 = vadd.f32 %v4452, %v4670
      %v4759 = vadd.f32 %v4453, %v4675
      %v4760 = vadd.f32 %v4454, %v4678
      %v4761 = vadd.f32 %v4455, %v4683
      %v4762 = vadd.f32 %v4456, %v4686
      %v4763 = vadd.f32 %v4457, %v4691
      %v4764 = vadd.f32 %v4458, %v4694
      %v4765 = vadd.f32 %v4459, %v4699
      %v4766 = vadd.f32 %v4460, %v4702
      %v4767 = vadd.f32 %v4461, %v4707
      %v4768 = vadd.f32 %v4462, %v4710
      %v4769 = vadd.f32 %v4463, %v4715
      %v4770 = vadd.f32 %v4464, %v4718
      %v4771 = vadd.f32 %v4465, %v4723
      %v4772 = vadd.f32 %v4466, %v4726
      %v4773 = vadd.f32 %v4467, %v4731
      %v4774 = vadd.f32 %v4468, %v4734
      %v4775 = vadd.f32 %v4469, %v4739
      %v4776 = vadd.f32 %v4470, %v4742
      %v4777 = vld [vmem:[%s3585 + $0x1] sm:$0xff]
      %v4778 = vld [vmem:[%s3585 + $0x9] sm:$0xff]
      %v4779 = vld [vmem:[%s3585 + $0x19] sm:$0xff]
      %v4780 = vld [vmem:[%s3585 + $0x21] sm:$0xff]
      %v4781 = vld [vmem:[%s3585 + $0x31] sm:$0xff]
      %v4782 = vld [vmem:[%s3585 + $0x39] sm:$0xff]
      %v4783 = vld [vmem:[%s3585 + $0x49] sm:$0xff]
      %v4784 = vld [vmem:[%s3585 + $0x51] sm:$0xff]
      %v4785 = vld [vmem:[%s3585 + $0x61] sm:$0xff]
      %v4786 = vld [vmem:[%s3585 + $0x69] sm:$0xff]
      %v4787 = vld [vmem:[%s3585 + $0x79] sm:$0xff]
      %v4788 = vld [vmem:[%s3585 + $0x81] sm:$0xff]
      %v4789 = vld [vmem:[%s3585 + $0x91] sm:$0xff]
      %v4790 = vld [vmem:[%s3585 + $0x99] sm:$0xff]
      %v4791 = vld [vmem:[%s3585 + $0xa9] sm:$0xff]
      %v4792 = vld [vmem:[%s3585 + $0xb1] sm:$0xff]
      %v4793 = vld [vmem:[%s3585 + $0xc1] sm:$0xff]
      %v4794 = vld [vmem:[%s3585 + $0xc9] sm:$0xff]
      %v4795 = vld [vmem:[%s3585 + $0xd9] sm:$0xff]
      %v4796 = vld [vmem:[%s3585 + $0xe1] sm:$0xff]
      %v4797 = vld [vmem:[%s3585 + $0xf1] sm:$0xff]
      %v4798 = vld [vmem:[%s3585 + $0xf9] sm:$0xff]
      %v4799 = vld [vmem:[%s3585 + $0x109] sm:$0xff]
      %v4800 = vld [vmem:[%s3585 + $0x111] sm:$0xff]
      %v4801 = vld [vmem:[%s3585 + $0x121] sm:$0xff]
      %v4802 = vld [vmem:[%s3585 + $0x129] sm:$0xff]
      %v4803 = vld [vmem:[%s3585 + $0x139] sm:$0xff]
      %v4804 = vld [vmem:[%s3585 + $0x141] sm:$0xff]
      %v4805 = vld [vmem:[%s3585 + $0x151] sm:$0xff]
      %v4806 = vld [vmem:[%s3585 + $0x159] sm:$0xff]
      %v4807 = vld [vmem:[%s3585 + $0x169] sm:$0xff]
      %v4808 = vld [vmem:[%s3585 + $0x171] sm:$0xff]
      %v4809 = vpack.c.bf16 %v4778, %v4777
      %v4810 = vpack.c.bf16 %v4780, %v4779
      %v4811 = vpack.c.bf16 %v4782, %v4781
      %v4812 = vpack.c.bf16 %v4784, %v4783
      %v4813 = vpack.c.bf16 %v4786, %v4785
      %v4814 = vpack.c.bf16 %v4788, %v4787
      %v4815 = vpack.c.bf16 %v4790, %v4789
      %v4816 = vpack.c.bf16 %v4792, %v4791
      %v4817 = vpack.c.bf16 %v4794, %v4793
      %v4818 = vpack.c.bf16 %v4796, %v4795
      %v4819 = vpack.c.bf16 %v4798, %v4797
      %v4820 = vpack.c.bf16 %v4800, %v4799
      %v4821 = vpack.c.bf16 %v4802, %v4801
      %v4822 = vpack.c.bf16 %v4804, %v4803
      %v4823 = vpack.c.bf16 %v4806, %v4805
      %v4824 = vpack.c.bf16 %v4808, %v4807
      %s4825 = scalar_lea.vmem %s8, 64
      %v4826 = vld [vmem:[%s4825] sm:$0xf]
      %v4827 = vld [vmem:[%s4825 + $0x4] sm:$0xf]
      %v4828 = vld [vmem:[%s4825 + $0x8] sm:$0xf]
      %v4829 = vld [vmem:[%s4825 + $0xc] sm:$0xf]
      %v4834 = vunpack.c.l.b16 %v4826
      %v4835 = vunpack.c.l.b16 %v4827
      %v4836 = vunpack.c.l.b16 %v4828
      %v4837 = vunpack.c.l.b16 %v4829
      %v4838 = vpack.c.b16 %v4835, %v4834
      %v4839 = vpack.c.b16 %v4837, %v4836
      %v4843 = vsel %vm448, %v4809, 0
      %v4846 = vsel %vm448, %v4810, 0
      %v4849 = vsel %vm448, %v4811, 0
      %v4852 = vsel %vm448, %v4812, 0
      %v4855 = vsel %vm448, %v4813, 0
      %v4858 = vsel %vm448, %v4814, 0
      %v4861 = vsel %vm448, %v4815, 0
      %v4864 = vsel %vm448, %v4816, 0
      %v4867 = vsel %vm448, %v4817, 0
      %v4870 = vsel %vm448, %v4818, 0
      %v4873 = vsel %vm448, %v4819, 0
      %v4876 = vsel %vm448, %v4820, 0
      %v4879 = vsel %vm448, %v4821, 0
      %v4882 = vsel %vm448, %v4822, 0
      %v4885 = vsel %vm448, %v4823, 0
      %v4888 = vsel %vm448, %v4824, 0
      %4890 = vmatprep.subr.bf16.mxu0 0
      %4891 = vmatpush1.bf16.msra.mxu0 %v4838
      %4892 = vmatprep.subr.bf16.mxu0 0
      %4893 = vmatpush1.bf16.msra.mxu0 %v4839
      %4894 = vmatprep.subr.bf16.mxu0 0
      %4895 = vmatpush1.bf16.msra.mxu0 0
      %4896 = vmatprep.subr.bf16.mxu0 0
      %4897 = vmatpush1.bf16.msra.mxu0 0
      %4898 = vmatprep.subr.bf16.mxu0 0
      %4899 = vmatpush1.bf16.msra.mxu0 0
      %4900 = vmatprep.subr.bf16.mxu0 0
      %4901 = vmatpush1.bf16.msra.mxu0 0
      %4902 = vmatprep.subr.bf16.mxu0 0
      %4903 = vmatpush1.bf16.msra.mxu0 0
      %4904 = vmatprep.subr.bf16.mxu0 0
      %4905 = vmatpush1.bf16.msra.mxu0 0
      %4906 = vmatprep.subr.bf16.mxu0 0
      %4907 = vmatpush1.bf16.msra.mxu0 0
      %4908 = vmatprep.subr.bf16.mxu0 0
      %4909 = vmatpush1.bf16.msra.mxu0 0
      %4910 = vmatprep.subr.bf16.mxu0 0
      %4911 = vmatpush1.bf16.msra.mxu0 0
      %4912 = vmatprep.subr.bf16.mxu0 0
      %4913 = vmatpush1.bf16.msra.mxu0 0
      %4914 = vmatprep.subr.bf16.mxu0 0
      %4915 = vmatpush1.bf16.msra.mxu0 0
      %4916 = vmatprep.subr.bf16.mxu0 0
      %4917 = vmatpush1.bf16.msra.mxu0 0
      %4918 = vmatprep.subr.bf16.mxu0 0
      %4919 = vmatpush1.bf16.msra.mxu0 0
      %4920 = vmatprep.subr.bf16.mxu0 0
      %4921 = vmatpush1.bf16.msra.mxu0 0
      %4922 = vmatprep.mubr.bf16.mxu0 0
      %4923 = vmatmul.mubr.bf16.gmra.mrb[0].mxu0 %v4843
      %v4924 = vpop.f32.mrb[0].mxu0
      %v4925 = vadd.f32 0.0, %v4924
      %v4926 = vpop.f32.mrb[0].mxu0
      %v4927 = vpop.f32.mrb[0].mxu0
      %v4928 = vadd.f32 0.0, %v4927
      %v4929 = vpop.f32.mrb[0].mxu0
      %4930 = vmatprep.mubr.bf16.mxu0 0
      %4931 = vmatmul.mubr.bf16.gmra.mrb[0].mxu0 %v4846
      %v4932 = vpop.f32.mrb[0].mxu0
      %v4933 = vadd.f32 0.0, %v4932
      %v4934 = vpop.f32.mrb[0].mxu0
      %v4935 = vpop.f32.mrb[0].mxu0
      %v4936 = vadd.f32 0.0, %v4935
      %v4937 = vpop.f32.mrb[0].mxu0
      %4938 = vmatprep.mubr.bf16.mxu0 0
      %4939 = vmatmul.mubr.bf16.gmra.mrb[0].mxu0 %v4849
      %v4940 = vpop.f32.mrb[0].mxu0
      %v4941 = vadd.f32 0.0, %v4940
      %v4942 = vpop.f32.mrb[0].mxu0
      %v4943 = vpop.f32.mrb[0].mxu0
      %v4944 = vadd.f32 0.0, %v4943
      %v4945 = vpop.f32.mrb[0].mxu0
      %4946 = vmatprep.mubr.bf16.mxu0 0
      %4947 = vmatmul.mubr.bf16.gmra.mrb[0].mxu0 %v4852
      %v4948 = vpop.f32.mrb[0].mxu0
      %v4949 = vadd.f32 0.0, %v4948
      %v4950 = vpop.f32.mrb[0].mxu0
      %v4951 = vpop.f32.mrb[0].mxu0
      %v4952 = vadd.f32 0.0, %v4951
      %v4953 = vpop.f32.mrb[0].mxu0
      %4954 = vmatprep.mubr.bf16.mxu0 0
      %4955 = vmatmul.mubr.bf16.gmra.mrb[0].mxu0 %v4855
      %v4956 = vpop.f32.mrb[0].mxu0
      %v4957 = vadd.f32 0.0, %v4956
      %v4958 = vpop.f32.mrb[0].mxu0
      %v4959 = vpop.f32.mrb[0].mxu0
      %v4960 = vadd.f32 0.0, %v4959
      %v4961 = vpop.f32.mrb[0].mxu0
      %4962 = vmatprep.mubr.bf16.mxu0 0
      %4963 = vmatmul.mubr.bf16.gmra.mrb[0].mxu0 %v4858
      %v4964 = vpop.f32.mrb[0].mxu0
      %v4965 = vadd.f32 0.0, %v4964
      %v4966 = vpop.f32.mrb[0].mxu0
      %v4967 = vpop.f32.mrb[0].mxu0
      %v4968 = vadd.f32 0.0, %v4967
      %v4969 = vpop.f32.mrb[0].mxu0
      %4970 = vmatprep.mubr.bf16.mxu0 0
      %4971 = vmatmul.mubr.bf16.gmra.mrb[0].mxu0 %v4861
      %v4972 = vpop.f32.mrb[0].mxu0
      %v4973 = vadd.f32 0.0, %v4972
      %v4974 = vpop.f32.mrb[0].mxu0
      %v4975 = vpop.f32.mrb[0].mxu0
      %v4976 = vadd.f32 0.0, %v4975
      %v4977 = vpop.f32.mrb[0].mxu0
      %4978 = vmatprep.mubr.bf16.mxu0 0
      %4979 = vmatmul.mubr.bf16.gmra.mrb[0].mxu0 %v4864
      %v4980 = vpop.f32.mrb[0].mxu0
      %v4981 = vadd.f32 0.0, %v4980
      %v4982 = vpop.f32.mrb[0].mxu0
      %v4983 = vpop.f32.mrb[0].mxu0
      %v4984 = vadd.f32 0.0, %v4983
      %v4985 = vpop.f32.mrb[0].mxu0
      %4986 = vmatprep.mubr.bf16.mxu0 0
      %4987 = vmatmul.mubr.bf16.gmra.mrb[0].mxu0 %v4867
      %v4988 = vpop.f32.mrb[0].mxu0
      %v4989 = vadd.f32 0.0, %v4988
      %v4990 = vpop.f32.mrb[0].mxu0
      %v4991 = vpop.f32.mrb[0].mxu0
      %v4992 = vadd.f32 0.0, %v4991
      %v4993 = vpop.f32.mrb[0].mxu0
      %4994 = vmatprep.mubr.bf16.mxu0 0
      %4995 = vmatmul.mubr.bf16.gmra.mrb[0].mxu0 %v4870
      %v4996 = vpop.f32.mrb[0].mxu0
      %v4997 = vadd.f32 0.0, %v4996
      %v4998 = vpop.f32.mrb[0].mxu0
      %v4999 = vpop.f32.mrb[0].mxu0
      %v5000 = vadd.f32 0.0, %v4999
      %v5001 = vpop.f32.mrb[0].mxu0
      %5002 = vmatprep.mubr.bf16.mxu0 0
      %5003 = vmatmul.mubr.bf16.gmra.mrb[0].mxu0 %v4873
      %v5004 = vpop.f32.mrb[0].mxu0
      %v5005 = vadd.f32 0.0, %v5004
      %v5006 = vpop.f32.mrb[0].mxu0
      %v5007 = vpop.f32.mrb[0].mxu0
      %v5008 = vadd.f32 0.0, %v5007
      %v5009 = vpop.f32.mrb[0].mxu0
      %5010 = vmatprep.mubr.bf16.mxu0 0
      %5011 = vmatmul.mubr.bf16.gmra.mrb[0].mxu0 %v4876
      %v5012 = vpop.f32.mrb[0].mxu0
      %v5013 = vadd.f32 0.0, %v5012
      %v5014 = vpop.f32.mrb[0].mxu0
      %v5015 = vpop.f32.mrb[0].mxu0
      %v5016 = vadd.f32 0.0, %v5015
      %v5017 = vpop.f32.mrb[0].mxu0
      %5018 = vmatprep.mubr.bf16.mxu0 0
      %5019 = vmatmul.mubr.bf16.gmra.mrb[0].mxu0 %v4879
      %v5020 = vpop.f32.mrb[0].mxu0
      %v5021 = vadd.f32 0.0, %v5020
      %v5022 = vpop.f32.mrb[0].mxu0
      %v5023 = vpop.f32.mrb[0].mxu0
      %v5024 = vadd.f32 0.0, %v5023
      %v5025 = vpop.f32.mrb[0].mxu0
      %5026 = vmatprep.mubr.bf16.mxu0 0
      %5027 = vmatmul.mubr.bf16.gmra.mrb[0].mxu0 %v4882
      %v5028 = vpop.f32.mrb[0].mxu0
      %v5029 = vadd.f32 0.0, %v5028
      %v5030 = vpop.f32.mrb[0].mxu0
      %v5031 = vpop.f32.mrb[0].mxu0
      %v5032 = vadd.f32 0.0, %v5031
      %v5033 = vpop.f32.mrb[0].mxu0
      %5034 = vmatprep.mubr.bf16.mxu0 0
      %5035 = vmatmul.mubr.bf16.gmra.mrb[0].mxu0 %v4885
      %v5036 = vpop.f32.mrb[0].mxu0
      %v5037 = vadd.f32 0.0, %v5036
      %v5038 = vpop.f32.mrb[0].mxu0
      %v5039 = vpop.f32.mrb[0].mxu0
      %v5040 = vadd.f32 0.0, %v5039
      %v5041 = vpop.f32.mrb[0].mxu0
      %5042 = vmatprep.mubr.bf16.mxu0 0
      %5043 = vmatmul.mubr.bf16.gmra.mrb[0].mxu0 %v4888
      %v5044 = vpop.f32.mrb[0].mxu0
      %v5045 = vadd.f32 0.0, %v5044
      %v5046 = vpop.f32.mrb[0].mxu0
      %v5047 = vpop.f32.mrb[0].mxu0
      %v5048 = vadd.f32 0.0, %v5047
      %v5049 = vpop.f32.mrb[0].mxu0
      %5050 = vdwg.mxu0
      %v5051 = vadd.f32 %v4745, %v4925
      %v5052 = vadd.f32 %v4746, %v4928
      %v5053 = vadd.f32 %v4747, %v4933
      %v5054 = vadd.f32 %v4748, %v4936
      %v5055 = vadd.f32 %v4749, %v4941
      %v5056 = vadd.f32 %v4750, %v4944
      %v5057 = vadd.f32 %v4751, %v4949
      %v5058 = vadd.f32 %v4752, %v4952
      %v5059 = vadd.f32 %v4753, %v4957
      %v5060 = vadd.f32 %v4754, %v4960
      %v5061 = vadd.f32 %v4755, %v4965
      %v5062 = vadd.f32 %v4756, %v4968
      %v5063 = vadd.f32 %v4757, %v4973
      %v5064 = vadd.f32 %v4758, %v4976
      %v5065 = vadd.f32 %v4759, %v4981
      %v5066 = vadd.f32 %v4760, %v4984
      %v5067 = vadd.f32 %v4761, %v4989
      %v5068 = vadd.f32 %v4762, %v4992
      %v5069 = vadd.f32 %v4763, %v4997
      %v5070 = vadd.f32 %v4764, %v5000
      %v5071 = vadd.f32 %v4765, %v5005
      %v5072 = vadd.f32 %v4766, %v5008
      %v5073 = vadd.f32 %v4767, %v5013
      %v5074 = vadd.f32 %v4768, %v5016
      %v5075 = vadd.f32 %v4769, %v5021
      %v5076 = vadd.f32 %v4770, %v5024
      %v5077 = vadd.f32 %v4771, %v5029
      %v5078 = vadd.f32 %v4772, %v5032
      %v5079 = vadd.f32 %v4773, %v5037
      %v5080 = vadd.f32 %v4774, %v5040
      %v5081 = vadd.f32 %v4775, %v5045
      %v5082 = vadd.f32 %v4776, %v5048
      %v5083 = vld [vmem:[%s3585 + $0x2] sm:$0xff]
      %v5084 = vld [vmem:[%s3585 + $0xa] sm:$0xff]
      %v5085 = vld [vmem:[%s3585 + $0x1a] sm:$0xff]
      %v5086 = vld [vmem:[%s3585 + $0x22] sm:$0xff]
      %v5087 = vld [vmem:[%s3585 + $0x32] sm:$0xff]
      %v5088 = vld [vmem:[%s3585 + $0x3a] sm:$0xff]
      %v5089 = vld [vmem:[%s3585 + $0x4a] sm:$0xff]
      %v5090 = vld [vmem:[%s3585 + $0x52] sm:$0xff]
      %v5091 = vld [vmem:[%s3585 + $0x62] sm:$0xff]
      %v5092 = vld [vmem:[%s3585 + $0x6a] sm:$0xff]
      %v5093 = vld [vmem:[%s3585 + $0x7a] sm:$0xff]
      %v5094 = vld [vmem:[%s3585 + $0x82] sm:$0xff]
      %v5095 = vld [vmem:[%s3585 + $0x92] sm:$0xff]
      %v5096 = vld [vmem:[%s3585 + $0x9a] sm:$0xff]
      %v5097 = vld [vmem:[%s3585 + $0xaa] sm:$0xff]
      %v5098 = vld [vmem:[%s3585 + $0xb2] sm:$0xff]
      %v5099 = vld [vmem:[%s3585 + $0xc2] sm:$0xff]
      %v5100 = vld [vmem:[%s3585 + $0xca] sm:$0xff]
      %v5101 = vld [vmem:[%s3585 + $0xda] sm:$0xff]
      %v5102 = vld [vmem:[%s3585 + $0xe2] sm:$0xff]
      %v5103 = vld [vmem:[%s3585 + $0xf2] sm:$0xff]
      %v5104 = vld [vmem:[%s3585 + $0xfa] sm:$0xff]
      %v5105 = vld [vmem:[%s3585 + $0x10a] sm:$0xff]
      %v5106 = vld [vmem:[%s3585 + $0x112] sm:$0xff]
      %v5107 = vld [vmem:[%s3585 + $0x122] sm:$0xff]
      %v5108 = vld [vmem:[%s3585 + $0x12a] sm:$0xff]
      %v5109 = vld [vmem:[%s3585 + $0x13a] sm:$0xff]
      %v5110 = vld [vmem:[%s3585 + $0x142] sm:$0xff]
      %v5111 = vld [vmem:[%s3585 + $0x152] sm:$0xff]
      %v5112 = vld [vmem:[%s3585 + $0x15a] sm:$0xff]
      %v5113 = vld [vmem:[%s3585 + $0x16a] sm:$0xff]
      %v5114 = vld [vmem:[%s3585 + $0x172] sm:$0xff]
      %v5115 = vpack.c.bf16 %v5084, %v5083
      %v5116 = vpack.c.bf16 %v5086, %v5085
      %v5117 = vpack.c.bf16 %v5088, %v5087
      %v5118 = vpack.c.bf16 %v5090, %v5089
      %v5119 = vpack.c.bf16 %v5092, %v5091
      %v5120 = vpack.c.bf16 %v5094, %v5093
      %v5121 = vpack.c.bf16 %v5096, %v5095
      %v5122 = vpack.c.bf16 %v5098, %v5097
      %v5123 = vpack.c.bf16 %v5100, %v5099
      %v5124 = vpack.c.bf16 %v5102, %v5101
      %v5125 = vpack.c.bf16 %v5104, %v5103
      %v5126 = vpack.c.bf16 %v5106, %v5105
      %v5127 = vpack.c.bf16 %v5108, %v5107
      %v5128 = vpack.c.bf16 %v5110, %v5109
      %v5129 = vpack.c.bf16 %v5112, %v5111
      %v5130 = vpack.c.bf16 %v5114, %v5113
      %s5131 = scalar_lea.vmem %s8, 80
      %v5132 = vld [vmem:[%s5131] sm:$0xf]
      %v5133 = vld [vmem:[%s5131 + $0x4] sm:$0xf]
      %v5134 = vld [vmem:[%s5131 + $0x8] sm:$0xf]
      %v5135 = vld [vmem:[%s5131 + $0xc] sm:$0xf]
      %v5140 = vunpack.c.l.b16 %v5132
      %v5141 = vunpack.c.l.b16 %v5133
      %v5142 = vunpack.c.l.b16 %v5134
      %v5143 = vunpack.c.l.b16 %v5135
      %v5144 = vpack.c.b16 %v5141, %v5140
      %v5145 = vpack.c.b16 %v5143, %v5142
      %v5149 = vsel %vm448, %v5115, 0
      %v5152 = vsel %vm448, %v5116, 0
      %v5155 = vsel %vm448, %v5117, 0
      %v5158 = vsel %vm448, %v5118, 0
      %v5161 = vsel %vm448, %v5119, 0
      %v5164 = vsel %vm448, %v5120, 0
      %v5167 = vsel %vm448, %v5121, 0
      %v5170 = vsel %vm448, %v5122, 0
      %v5173 = vsel %vm448, %v5123, 0
      %v5176 = vsel %vm448, %v5124, 0
      %v5179 = vsel %vm448, %v5125, 0
      %v5182 = vsel %vm448, %v5126, 0
      %v5185 = vsel %vm448, %v5127, 0
      %v5188 = vsel %vm448, %v5128, 0
      %v5191 = vsel %vm448, %v5129, 0
      %v5194 = vsel %vm448, %v5130, 0
      %5196 = vmatprep.subr.bf16.mxu0 0
      %5197 = vmatpush1.bf16.msra.mxu0 %v5144
      %5198 = vmatprep.subr.bf16.mxu0 0
      %5199 = vmatpush1.bf16.msra.mxu0 %v5145
      %5200 = vmatprep.subr.bf16.mxu0 0
      %5201 = vmatpush1.bf16.msra.mxu0 0
      %5202 = vmatprep.subr.bf16.mxu0 0
      %5203 = vmatpush1.bf16.msra.mxu0 0
      %5204 = vmatprep.subr.bf16.mxu0 0
      %5205 = vmatpush1.bf16.msra.mxu0 0
      %5206 = vmatprep.subr.bf16.mxu0 0
      %5207 = vmatpush1.bf16.msra.mxu0 0
      %5208 = vmatprep.subr.bf16.mxu0 0
      %5209 = vmatpush1.bf16.msra.mxu0 0
      %5210 = vmatprep.subr.bf16.mxu0 0
      %5211 = vmatpush1.bf16.msra.mxu0 0
      %5212 = vmatprep.subr.bf16.mxu0 0
      %5213 = vmatpush1.bf16.msra.mxu0 0
      %5214 = vmatprep.subr.bf16.mxu0 0
      %5215 = vmatpush1.bf16.msra.mxu0 0
      %5216 = vmatprep.subr.bf16.mxu0 0
      %5217 = vmatpush1.bf16.msra.mxu0 0
      %5218 = vmatprep.subr.bf16.mxu0 0
      %5219 = vmatpush1.bf16.msra.mxu0 0
      %5220 = vmatprep.subr.bf16.mxu0 0
      %5221 = vmatpush1.bf16.msra.mxu0 0
      %5222 = vmatprep.subr.bf16.mxu0 0
      %5223 = vmatpush1.bf16.msra.mxu0 0
      %5224 = vmatprep.subr.bf16.mxu0 0
      %5225 = vmatpush1.bf16.msra.mxu0 0
      %5226 = vmatprep.subr.bf16.mxu0 0
      %5227 = vmatpush1.bf16.msra.mxu0 0
      %5228 = vmatprep.mubr.bf16.mxu0 0
      %5229 = vmatmul.mubr.bf16.gmra.mrb[0].mxu0 %v5149
      %v5230 = vpop.f32.mrb[0].mxu0
      %v5231 = vadd.f32 0.0, %v5230
      %v5232 = vpop.f32.mrb[0].mxu0
      %v5233 = vpop.f32.mrb[0].mxu0
      %v5234 = vadd.f32 0.0, %v5233
      %v5235 = vpop.f32.mrb[0].mxu0
      %5236 = vmatprep.mubr.bf16.mxu0 0
      %5237 = vmatmul.mubr.bf16.gmra.mrb[0].mxu0 %v5152
      %v5238 = vpop.f32.mrb[0].mxu0
      %v5239 = vadd.f32 0.0, %v5238
      %v5240 = vpop.f32.mrb[0].mxu0
      %v5241 = vpop.f32.mrb[0].mxu0
      %v5242 = vadd.f32 0.0, %v5241
      %v5243 = vpop.f32.mrb[0].mxu0
      %5244 = vmatprep.mubr.bf16.mxu0 0
      %5245 = vmatmul.mubr.bf16.gmra.mrb[0].mxu0 %v5155
      %v5246 = vpop.f32.mrb[0].mxu0
      %v5247 = vadd.f32 0.0, %v5246
      %v5248 = vpop.f32.mrb[0].mxu0
      %v5249 = vpop.f32.mrb[0].mxu0
      %v5250 = vadd.f32 0.0, %v5249
      %v5251 = vpop.f32.mrb[0].mxu0
      %5252 = vmatprep.mubr.bf16.mxu0 0
      %5253 = vmatmul.mubr.bf16.gmra.mrb[0].mxu0 %v5158
      %v5254 = vpop.f32.mrb[0].mxu0
      %v5255 = vadd.f32 0.0, %v5254
      %v5256 = vpop.f32.mrb[0].mxu0
      %v5257 = vpop.f32.mrb[0].mxu0
      %v5258 = vadd.f32 0.0, %v5257
      %v5259 = vpop.f32.mrb[0].mxu0
      %5260 = vmatprep.mubr.bf16.mxu0 0
      %5261 = vmatmul.mubr.bf16.gmra.mrb[0].mxu0 %v5161
      %v5262 = vpop.f32.mrb[0].mxu0
      %v5263 = vadd.f32 0.0, %v5262
      %v5264 = vpop.f32.mrb[0].mxu0
      %v5265 = vpop.f32.mrb[0].mxu0
      %v5266 = vadd.f32 0.0, %v5265
      %v5267 = vpop.f32.mrb[0].mxu0
      %5268 = vmatprep.mubr.bf16.mxu0 0
      %5269 = vmatmul.mubr.bf16.gmra.mrb[0].mxu0 %v5164
      %v5270 = vpop.f32.mrb[0].mxu0
      %v5271 = vadd.f32 0.0, %v5270
      %v5272 = vpop.f32.mrb[0].mxu0
      %v5273 = vpop.f32.mrb[0].mxu0
      %v5274 = vadd.f32 0.0, %v5273
      %v5275 = vpop.f32.mrb[0].mxu0
      %5276 = vmatprep.mubr.bf16.mxu0 0
      %5277 = vmatmul.mubr.bf16.gmra.mrb[0].mxu0 %v5167
      %v5278 = vpop.f32.mrb[0].mxu0
      %v5279 = vadd.f32 0.0, %v5278
      %v5280 = vpop.f32.mrb[0].mxu0
      %v5281 = vpop.f32.mrb[0].mxu0
      %v5282 = vadd.f32 0.0, %v5281
      %v5283 = vpop.f32.mrb[0].mxu0
      %5284 = vmatprep.mubr.bf16.mxu0 0
      %5285 = vmatmul.mubr.bf16.gmra.mrb[0].mxu0 %v5170
      %v5286 = vpop.f32.mrb[0].mxu0
      %v5287 = vadd.f32 0.0, %v5286
      %v5288 = vpop.f32.mrb[0].mxu0
      %v5289 = vpop.f32.mrb[0].mxu0
      %v5290 = vadd.f32 0.0, %v5289
      %v5291 = vpop.f32.mrb[0].mxu0
      %5292 = vmatprep.mubr.bf16.mxu0 0
      %5293 = vmatmul.mubr.bf16.gmra.mrb[0].mxu0 %v5173
      %v5294 = vpop.f32.mrb[0].mxu0
      %v5295 = vadd.f32 0.0, %v5294
      %v5296 = vpop.f32.mrb[0].mxu0
      %v5297 = vpop.f32.mrb[0].mxu0
      %v5298 = vadd.f32 0.0, %v5297
      %v5299 = vpop.f32.mrb[0].mxu0
      %5300 = vmatprep.mubr.bf16.mxu0 0
      %5301 = vmatmul.mubr.bf16.gmra.mrb[0].mxu0 %v5176
      %v5302 = vpop.f32.mrb[0].mxu0
      %v5303 = vadd.f32 0.0, %v5302
      %v5304 = vpop.f32.mrb[0].mxu0
      %v5305 = vpop.f32.mrb[0].mxu0
      %v5306 = vadd.f32 0.0, %v5305
      %v5307 = vpop.f32.mrb[0].mxu0
      %5308 = vmatprep.mubr.bf16.mxu0 0
      %5309 = vmatmul.mubr.bf16.gmra.mrb[0].mxu0 %v5179
      %v5310 = vpop.f32.mrb[0].mxu0
      %v5311 = vadd.f32 0.0, %v5310
      %v5312 = vpop.f32.mrb[0].mxu0
      %v5313 = vpop.f32.mrb[0].mxu0
      %v5314 = vadd.f32 0.0, %v5313
      %v5315 = vpop.f32.mrb[0].mxu0
      %5316 = vmatprep.mubr.bf16.mxu0 0
      %5317 = vmatmul.mubr.bf16.gmra.mrb[0].mxu0 %v5182
      %v5318 = vpop.f32.mrb[0].mxu0
      %v5319 = vadd.f32 0.0, %v5318
      %v5320 = vpop.f32.mrb[0].mxu0
      %v5321 = vpop.f32.mrb[0].mxu0
      %v5322 = vadd.f32 0.0, %v5321
      %v5323 = vpop.f32.mrb[0].mxu0
      %5324 = vmatprep.mubr.bf16.mxu0 0
      %5325 = vmatmul.mubr.bf16.gmra.mrb[0].mxu0 %v5185
      %v5326 = vpop.f32.mrb[0].mxu0
      %v5327 = vadd.f32 0.0, %v5326
      %v5328 = vpop.f32.mrb[0].mxu0
      %v5329 = vpop.f32.mrb[0].mxu0
      %v5330 = vadd.f32 0.0, %v5329
      %v5331 = vpop.f32.mrb[0].mxu0
      %5332 = vmatprep.mubr.bf16.mxu0 0
      %5333 = vmatmul.mubr.bf16.gmra.mrb[0].mxu0 %v5188
      %v5334 = vpop.f32.mrb[0].mxu0
      %v5335 = vadd.f32 0.0, %v5334
      %v5336 = vpop.f32.mrb[0].mxu0
      %v5337 = vpop.f32.mrb[0].mxu0
      %v5338 = vadd.f32 0.0, %v5337
      %v5339 = vpop.f32.mrb[0].mxu0
      %5340 = vmatprep.mubr.bf16.mxu0 0
      %5341 = vmatmul.mubr.bf16.gmra.mrb[0].mxu0 %v5191
      %v5342 = vpop.f32.mrb[0].mxu0
      %v5343 = vadd.f32 0.0, %v5342
      %v5344 = vpop.f32.mrb[0].mxu0
      %v5345 = vpop.f32.mrb[0].mxu0
      %v5346 = vadd.f32 0.0, %v5345
      %v5347 = vpop.f32.mrb[0].mxu0
      %5348 = vmatprep.mubr.bf16.mxu0 0
      %5349 = vmatmul.mubr.bf16.gmra.mrb[0].mxu0 %v5194
      %v5350 = vpop.f32.mrb[0].mxu0
      %v5351 = vadd.f32 0.0, %v5350
      %v5352 = vpop.f32.mrb[0].mxu0
      %v5353 = vpop.f32.mrb[0].mxu0
      %v5354 = vadd.f32 0.0, %v5353
      %v5355 = vpop.f32.mrb[0].mxu0
      %5356 = vdwg.mxu0
      %v5357 = vadd.f32 %v5051, %v5231
      %v5358 = vadd.f32 %v5052, %v5234
      %v5359 = vadd.f32 %v5053, %v5239
      %v5360 = vadd.f32 %v5054, %v5242
      %v5361 = vadd.f32 %v5055, %v5247
      %v5362 = vadd.f32 %v5056, %v5250
      %v5363 = vadd.f32 %v5057, %v5255
      %v5364 = vadd.f32 %v5058, %v5258
      %v5365 = vadd.f32 %v5059, %v5263
      %v5366 = vadd.f32 %v5060, %v5266
      %v5367 = vadd.f32 %v5061, %v5271
      %v5368 = vadd.f32 %v5062, %v5274
      %v5369 = vadd.f32 %v5063, %v5279
      %v5370 = vadd.f32 %v5064, %v5282
      %v5371 = vadd.f32 %v5065, %v5287
      %v5372 = vadd.f32 %v5066, %v5290
      %v5373 = vadd.f32 %v5067, %v5295
      %v5374 = vadd.f32 %v5068, %v5298
      %v5375 = vadd.f32 %v5069, %v5303
      %v5376 = vadd.f32 %v5070, %v5306
      %v5377 = vadd.f32 %v5071, %v5311
      %v5378 = vadd.f32 %v5072, %v5314
      %v5379 = vadd.f32 %v5073, %v5319
      %v5380 = vadd.f32 %v5074, %v5322
      %v5381 = vadd.f32 %v5075, %v5327
      %v5382 = vadd.f32 %v5076, %v5330
      %v5383 = vadd.f32 %v5077, %v5335
      %v5384 = vadd.f32 %v5078, %v5338
      %v5385 = vadd.f32 %v5079, %v5343
      %v5386 = vadd.f32 %v5080, %v5346
      %v5387 = vadd.f32 %v5081, %v5351
      %v5388 = vadd.f32 %v5082, %v5354
      %s5389 = scalar_lea.vmem [#allocation3], 48
      %v5390 = vld [vmem:[%s5389] sm:$0xff]
      %v5391 = vld [vmem:[%s5389 + $0x8] sm:$0xff]
      %v5392 = vld [vmem:[%s5389 + $0x18] sm:$0xff]
      %v5393 = vld [vmem:[%s5389 + $0x20] sm:$0xff]
      %v5394 = vld [vmem:[%s5389 + $0x30] sm:$0xff]
      %v5395 = vld [vmem:[%s5389 + $0x38] sm:$0xff]
      %v5396 = vld [vmem:[%s5389 + $0x48] sm:$0xff]
      %v5397 = vld [vmem:[%s5389 + $0x50] sm:$0xff]
      %v5398 = vld [vmem:[%s5389 + $0x60] sm:$0xff]
      %v5399 = vld [vmem:[%s5389 + $0x68] sm:$0xff]
      %v5400 = vld [vmem:[%s5389 + $0x78] sm:$0xff]
      %v5401 = vld [vmem:[%s5389 + $0x80] sm:$0xff]
      %v5402 = vld [vmem:[%s5389 + $0x90] sm:$0xff]
      %v5403 = vld [vmem:[%s5389 + $0x98] sm:$0xff]
      %v5404 = vld [vmem:[%s5389 + $0xa8] sm:$0xff]
      %v5405 = vld [vmem:[%s5389 + $0xb0] sm:$0xff]
      %v5406 = vld [vmem:[%s5389 + $0xc0] sm:$0xff]
      %v5407 = vld [vmem:[%s5389 + $0xc8] sm:$0xff]
      %v5408 = vld [vmem:[%s5389 + $0xd8] sm:$0xff]
      %v5409 = vld [vmem:[%s5389 + $0xe0] sm:$0xff]
      %v5410 = vld [vmem:[%s5389 + $0xf0] sm:$0xff]
      %v5411 = vld [vmem:[%s5389 + $0xf8] sm:$0xff]
      %v5412 = vld [vmem:[%s5389 + $0x108] sm:$0xff]
      %v5413 = vld [vmem:[%s5389 + $0x110] sm:$0xff]
      %v5414 = vld [vmem:[%s5389 + $0x120] sm:$0xff]
      %v5415 = vld [vmem:[%s5389 + $0x128] sm:$0xff]
      %v5416 = vld [vmem:[%s5389 + $0x138] sm:$0xff]
      %v5417 = vld [vmem:[%s5389 + $0x140] sm:$0xff]
      %v5418 = vld [vmem:[%s5389 + $0x150] sm:$0xff]
      %v5419 = vld [vmem:[%s5389 + $0x158] sm:$0xff]
      %v5420 = vld [vmem:[%s5389 + $0x168] sm:$0xff]
      %v5421 = vld [vmem:[%s5389 + $0x170] sm:$0xff]
      %v5422 = vpack.c.bf16 %v5391, %v5390
      %v5423 = vpack.c.bf16 %v5393, %v5392
      %v5424 = vpack.c.bf16 %v5395, %v5394
      %v5425 = vpack.c.bf16 %v5397, %v5396
      %v5426 = vpack.c.bf16 %v5399, %v5398
      %v5427 = vpack.c.bf16 %v5401, %v5400
      %v5428 = vpack.c.bf16 %v5403, %v5402
      %v5429 = vpack.c.bf16 %v5405, %v5404
      %v5430 = vpack.c.bf16 %v5407, %v5406
      %v5431 = vpack.c.bf16 %v5409, %v5408
      %v5432 = vpack.c.bf16 %v5411, %v5410
      %v5433 = vpack.c.bf16 %v5413, %v5412
      %v5434 = vpack.c.bf16 %v5415, %v5414
      %v5435 = vpack.c.bf16 %v5417, %v5416
      %v5436 = vpack.c.bf16 %v5419, %v5418
      %v5437 = vpack.c.bf16 %v5421, %v5420
      %s5438 = scalar_lea.vmem %s8, 96
      %v5439 = vld [vmem:[%s5438] sm:$0xf]
      %v5440 = vld [vmem:[%s5438 + $0x4] sm:$0xf]
      %v5441 = vld [vmem:[%s5438 + $0x8] sm:$0xf]
      %v5442 = vld [vmem:[%s5438 + $0xc] sm:$0xf]
      %v5447 = vunpack.c.l.b16 %v5439
      %v5448 = vunpack.c.l.b16 %v5440
      %v5449 = vunpack.c.l.b16 %v5441
      %v5450 = vunpack.c.l.b16 %v5442
      %v5451 = vpack.c.b16 %v5448, %v5447
      %v5452 = vpack.c.b16 %v5450, %v5449
      %v5456 = vsel %vm448, %v5422, 0
      %v5459 = vsel %vm448, %v5423, 0
      %v5462 = vsel %vm448, %v5424, 0
      %v5465 = vsel %vm448, %v5425, 0
      %v5468 = vsel %vm448, %v5426, 0
      %v5471 = vsel %vm448, %v5427, 0
      %v5474 = vsel %vm448, %v5428, 0
      %v5477 = vsel %vm448, %v5429, 0
      %v5480 = vsel %vm448, %v5430, 0
      %v5483 = vsel %vm448, %v5431, 0
      %v5486 = vsel %vm448, %v5432, 0
      %v5489 = vsel %vm448, %v5433, 0
      %v5492 = vsel %vm448, %v5434, 0
      %v5495 = vsel %vm448, %v5435, 0
      %v5498 = vsel %vm448, %v5436, 0
      %v5501 = vsel %vm448, %v5437, 0
      %5503 = vmatprep.subr.bf16.mxu0 0
      %5504 = vmatpush1.bf16.msra.mxu0 %v5451
      %5505 = vmatprep.subr.bf16.mxu0 0
      %5506 = vmatpush1.bf16.msra.mxu0 %v5452
      %5507 = vmatprep.subr.bf16.mxu0 0
      %5508 = vmatpush1.bf16.msra.mxu0 0
      %5509 = vmatprep.subr.bf16.mxu0 0
      %5510 = vmatpush1.bf16.msra.mxu0 0
      %5511 = vmatprep.subr.bf16.mxu0 0
      %5512 = vmatpush1.bf16.msra.mxu0 0
      %5513 = vmatprep.subr.bf16.mxu0 0
      %5514 = vmatpush1.bf16.msra.mxu0 0
      %5515 = vmatprep.subr.bf16.mxu0 0
      %5516 = vmatpush1.bf16.msra.mxu0 0
      %5517 = vmatprep.subr.bf16.mxu0 0
      %5518 = vmatpush1.bf16.msra.mxu0 0
      %5519 = vmatprep.subr.bf16.mxu0 0
      %5520 = vmatpush1.bf16.msra.mxu0 0
      %5521 = vmatprep.subr.bf16.mxu0 0
      %5522 = vmatpush1.bf16.msra.mxu0 0
      %5523 = vmatprep.subr.bf16.mxu0 0
      %5524 = vmatpush1.bf16.msra.mxu0 0
      %5525 = vmatprep.subr.bf16.mxu0 0
      %5526 = vmatpush1.bf16.msra.mxu0 0
      %5527 = vmatprep.subr.bf16.mxu0 0
      %5528 = vmatpush1.bf16.msra.mxu0 0
      %5529 = vmatprep.subr.bf16.mxu0 0
      %5530 = vmatpush1.bf16.msra.mxu0 0
      %5531 = vmatprep.subr.bf16.mxu0 0
      %5532 = vmatpush1.bf16.msra.mxu0 0
      %5533 = vmatprep.subr.bf16.mxu0 0
      %5534 = vmatpush1.bf16.msra.mxu0 0
      %5535 = vmatprep.mubr.bf16.mxu0 0
      %5536 = vmatmul.mubr.bf16.gmra.mrb[0].mxu0 %v5456
      %v5537 = vpop.f32.mrb[0].mxu0
      %v5538 = vadd.f32 0.0, %v5537
      %v5539 = vpop.f32.mrb[0].mxu0
      %v5540 = vpop.f32.mrb[0].mxu0
      %v5541 = vadd.f32 0.0, %v5540
      %v5542 = vpop.f32.mrb[0].mxu0
      %5543 = vmatprep.mubr.bf16.mxu0 0
      %5544 = vmatmul.mubr.bf16.gmra.mrb[0].mxu0 %v5459
      %v5545 = vpop.f32.mrb[0].mxu0
      %v5546 = vadd.f32 0.0, %v5545
      %v5547 = vpop.f32.mrb[0].mxu0
      %v5548 = vpop.f32.mrb[0].mxu0
      %v5549 = vadd.f32 0.0, %v5548
      %v5550 = vpop.f32.mrb[0].mxu0
      %5551 = vmatprep.mubr.bf16.mxu0 0
      %5552 = vmatmul.mubr.bf16.gmra.mrb[0].mxu0 %v5462
      %v5553 = vpop.f32.mrb[0].mxu0
      %v5554 = vadd.f32 0.0, %v5553
      %v5555 = vpop.f32.mrb[0].mxu0
      %v5556 = vpop.f32.mrb[0].mxu0
      %v5557 = vadd.f32 0.0, %v5556
      %v5558 = vpop.f32.mrb[0].mxu0
      %5559 = vmatprep.mubr.bf16.mxu0 0
      %5560 = vmatmul.mubr.bf16.gmra.mrb[0].mxu0 %v5465
      %v5561 = vpop.f32.mrb[0].mxu0
      %v5562 = vadd.f32 0.0, %v5561
      %v5563 = vpop.f32.mrb[0].mxu0
      %v5564 = vpop.f32.mrb[0].mxu0
      %v5565 = vadd.f32 0.0, %v5564
      %v5566 = vpop.f32.mrb[0].mxu0
      %5567 = vmatprep.mubr.bf16.mxu0 0
      %5568 = vmatmul.mubr.bf16.gmra.mrb[0].mxu0 %v5468
      %v5569 = vpop.f32.mrb[0].mxu0
      %v5570 = vadd.f32 0.0, %v5569
      %v5571 = vpop.f32.mrb[0].mxu0
      %v5572 = vpop.f32.mrb[0].mxu0
      %v5573 = vadd.f32 0.0, %v5572
      %v5574 = vpop.f32.mrb[0].mxu0
      %5575 = vmatprep.mubr.bf16.mxu0 0
      %5576 = vmatmul.mubr.bf16.gmra.mrb[0].mxu0 %v5471
      %v5577 = vpop.f32.mrb[0].mxu0
      %v5578 = vadd.f32 0.0, %v5577
      %v5579 = vpop.f32.mrb[0].mxu0
      %v5580 = vpop.f32.mrb[0].mxu0
      %v5581 = vadd.f32 0.0, %v5580
      %v5582 = vpop.f32.mrb[0].mxu0
      %5583 = vmatprep.mubr.bf16.mxu0 0
      %5584 = vmatmul.mubr.bf16.gmra.mrb[0].mxu0 %v5474
      %v5585 = vpop.f32.mrb[0].mxu0
      %v5586 = vadd.f32 0.0, %v5585
      %v5587 = vpop.f32.mrb[0].mxu0
      %v5588 = vpop.f32.mrb[0].mxu0
      %v5589 = vadd.f32 0.0, %v5588
      %v5590 = vpop.f32.mrb[0].mxu0
      %5591 = vmatprep.mubr.bf16.mxu0 0
      %5592 = vmatmul.mubr.bf16.gmra.mrb[0].mxu0 %v5477
      %v5593 = vpop.f32.mrb[0].mxu0
      %v5594 = vadd.f32 0.0, %v5593
      %v5595 = vpop.f32.mrb[0].mxu0
      %v5596 = vpop.f32.mrb[0].mxu0
      %v5597 = vadd.f32 0.0, %v5596
      %v5598 = vpop.f32.mrb[0].mxu0
      %5599 = vmatprep.mubr.bf16.mxu0 0
      %5600 = vmatmul.mubr.bf16.gmra.mrb[0].mxu0 %v5480
      %v5601 = vpop.f32.mrb[0].mxu0
      %v5602 = vadd.f32 0.0, %v5601
      %v5603 = vpop.f32.mrb[0].mxu0
      %v5604 = vpop.f32.mrb[0].mxu0
      %v5605 = vadd.f32 0.0, %v5604
      %v5606 = vpop.f32.mrb[0].mxu0
      %5607 = vmatprep.mubr.bf16.mxu0 0
      %5608 = vmatmul.mubr.bf16.gmra.mrb[0].mxu0 %v5483
      %v5609 = vpop.f32.mrb[0].mxu0
      %v5610 = vadd.f32 0.0, %v5609
      %v5611 = vpop.f32.mrb[0].mxu0
      %v5612 = vpop.f32.mrb[0].mxu0
      %v5613 = vadd.f32 0.0, %v5612
      %v5614 = vpop.f32.mrb[0].mxu0
      %5615 = vmatprep.mubr.bf16.mxu0 0
      %5616 = vmatmul.mubr.bf16.gmra.mrb[0].mxu0 %v5486
      %v5617 = vpop.f32.mrb[0].mxu0
      %v5618 = vadd.f32 0.0, %v5617
      %v5619 = vpop.f32.mrb[0].mxu0
      %v5620 = vpop.f32.mrb[0].mxu0
      %v5621 = vadd.f32 0.0, %v5620
      %v5622 = vpop.f32.mrb[0].mxu0
      %5623 = vmatprep.mubr.bf16.mxu0 0
      %5624 = vmatmul.mubr.bf16.gmra.mrb[0].mxu0 %v5489
      %v5625 = vpop.f32.mrb[0].mxu0
      %v5626 = vadd.f32 0.0, %v5625
      %v5627 = vpop.f32.mrb[0].mxu0
      %v5628 = vpop.f32.mrb[0].mxu0
      %v5629 = vadd.f32 0.0, %v5628
      %v5630 = vpop.f32.mrb[0].mxu0
      %5631 = vmatprep.mubr.bf16.mxu0 0
      %5632 = vmatmul.mubr.bf16.gmra.mrb[0].mxu0 %v5492
      %v5633 = vpop.f32.mrb[0].mxu0
      %v5634 = vadd.f32 0.0, %v5633
      %v5635 = vpop.f32.mrb[0].mxu0
      %v5636 = vpop.f32.mrb[0].mxu0
      %v5637 = vadd.f32 0.0, %v5636
      %v5638 = vpop.f32.mrb[0].mxu0
      %5639 = vmatprep.mubr.bf16.mxu0 0
      %5640 = vmatmul.mubr.bf16.gmra.mrb[0].mxu0 %v5495
      %v5641 = vpop.f32.mrb[0].mxu0
      %v5642 = vadd.f32 0.0, %v5641
      %v5643 = vpop.f32.mrb[0].mxu0
      %v5644 = vpop.f32.mrb[0].mxu0
      %v5645 = vadd.f32 0.0, %v5644
      %v5646 = vpop.f32.mrb[0].mxu0
      %5647 = vmatprep.mubr.bf16.mxu0 0
      %5648 = vmatmul.mubr.bf16.gmra.mrb[0].mxu0 %v5498
      %v5649 = vpop.f32.mrb[0].mxu0
      %v5650 = vadd.f32 0.0, %v5649
      %v5651 = vpop.f32.mrb[0].mxu0
      %v5652 = vpop.f32.mrb[0].mxu0
      %v5653 = vadd.f32 0.0, %v5652
      %v5654 = vpop.f32.mrb[0].mxu0
      %5655 = vmatprep.mubr.bf16.mxu0 0
      %5656 = vmatmul.mubr.bf16.gmra.mrb[0].mxu0 %v5501
      %v5657 = vpop.f32.mrb[0].mxu0
      %v5658 = vadd.f32 0.0, %v5657
      %v5659 = vpop.f32.mrb[0].mxu0
      %v5660 = vpop.f32.mrb[0].mxu0
      %v5661 = vadd.f32 0.0, %v5660
      %v5662 = vpop.f32.mrb[0].mxu0
      %5663 = vdwg.mxu0
      %v5664 = vadd.f32 %v5357, %v5538
      %v5665 = vadd.f32 %v5358, %v5541
      %v5666 = vadd.f32 %v5359, %v5546
      %v5667 = vadd.f32 %v5360, %v5549
      %v5668 = vadd.f32 %v5361, %v5554
      %v5669 = vadd.f32 %v5362, %v5557
      %v5670 = vadd.f32 %v5363, %v5562
      %v5671 = vadd.f32 %v5364, %v5565
      %v5672 = vadd.f32 %v5365, %v5570
      %v5673 = vadd.f32 %v5366, %v5573
      %v5674 = vadd.f32 %v5367, %v5578
      %v5675 = vadd.f32 %v5368, %v5581
      %v5676 = vadd.f32 %v5369, %v5586
      %v5677 = vadd.f32 %v5370, %v5589
      %v5678 = vadd.f32 %v5371, %v5594
      %v5679 = vadd.f32 %v5372, %v5597
      %v5680 = vadd.f32 %v5373, %v5602
      %v5681 = vadd.f32 %v5374, %v5605
      %v5682 = vadd.f32 %v5375, %v5610
      %v5683 = vadd.f32 %v5376, %v5613
      %v5684 = vadd.f32 %v5377, %v5618
      %v5685 = vadd.f32 %v5378, %v5621
      %v5686 = vadd.f32 %v5379, %v5626
      %v5687 = vadd.f32 %v5380, %v5629
      %v5688 = vadd.f32 %v5381, %v5634
      %v5689 = vadd.f32 %v5382, %v5637
      %v5690 = vadd.f32 %v5383, %v5642
      %v5691 = vadd.f32 %v5384, %v5645
      %v5692 = vadd.f32 %v5385, %v5650
      %v5693 = vadd.f32 %v5386, %v5653
      %v5694 = vadd.f32 %v5387, %v5658
      %v5695 = vadd.f32 %v5388, %v5661
      %v5696 = vld [vmem:[%s5389 + $0x1] sm:$0xff]
      %v5697 = vld [vmem:[%s5389 + $0x9] sm:$0xff]
      %v5698 = vld [vmem:[%s5389 + $0x19] sm:$0xff]
      %v5699 = vld [vmem:[%s5389 + $0x21] sm:$0xff]
      %v5700 = vld [vmem:[%s5389 + $0x31] sm:$0xff]
      %v5701 = vld [vmem:[%s5389 + $0x39] sm:$0xff]
      %v5702 = vld [vmem:[%s5389 + $0x49] sm:$0xff]
      %v5703 = vld [vmem:[%s5389 + $0x51] sm:$0xff]
      %v5704 = vld [vmem:[%s5389 + $0x61] sm:$0xff]
      %v5705 = vld [vmem:[%s5389 + $0x69] sm:$0xff]
      %v5706 = vld [vmem:[%s5389 + $0x79] sm:$0xff]
      %v5707 = vld [vmem:[%s5389 + $0x81] sm:$0xff]
      %v5708 = vld [vmem:[%s5389 + $0x91] sm:$0xff]
      %v5709 = vld [vmem:[%s5389 + $0x99] sm:$0xff]
      %v5710 = vld [vmem:[%s5389 + $0xa9] sm:$0xff]
      %v5711 = vld [vmem:[%s5389 + $0xb1] sm:$0xff]
      %v5712 = vld [vmem:[%s5389 + $0xc1] sm:$0xff]
      %v5713 = vld [vmem:[%s5389 + $0xc9] sm:$0xff]
      %v5714 = vld [vmem:[%s5389 + $0xd9] sm:$0xff]
      %v5715 = vld [vmem:[%s5389 + $0xe1] sm:$0xff]
      %v5716 = vld [vmem:[%s5389 + $0xf1] sm:$0xff]
      %v5717 = vld [vmem:[%s5389 + $0xf9] sm:$0xff]
      %v5718 = vld [vmem:[%s5389 + $0x109] sm:$0xff]
      %v5719 = vld [vmem:[%s5389 + $0x111] sm:$0xff]
      %v5720 = vld [vmem:[%s5389 + $0x121] sm:$0xff]
      %v5721 = vld [vmem:[%s5389 + $0x129] sm:$0xff]
      %v5722 = vld [vmem:[%s5389 + $0x139] sm:$0xff]
      %v5723 = vld [vmem:[%s5389 + $0x141] sm:$0xff]
      %v5724 = vld [vmem:[%s5389 + $0x151] sm:$0xff]
      %v5725 = vld [vmem:[%s5389 + $0x159] sm:$0xff]
      %v5726 = vld [vmem:[%s5389 + $0x169] sm:$0xff]
      %v5727 = vld [vmem:[%s5389 + $0x171] sm:$0xff]
      %v5728 = vpack.c.bf16 %v5697, %v5696
      %v5729 = vpack.c.bf16 %v5699, %v5698
      %v5730 = vpack.c.bf16 %v5701, %v5700
      %v5731 = vpack.c.bf16 %v5703, %v5702
      %v5732 = vpack.c.bf16 %v5705, %v5704
      %v5733 = vpack.c.bf16 %v5707, %v5706
      %v5734 = vpack.c.bf16 %v5709, %v5708
      %v5735 = vpack.c.bf16 %v5711, %v5710
      %v5736 = vpack.c.bf16 %v5713, %v5712
      %v5737 = vpack.c.bf16 %v5715, %v5714
      %v5738 = vpack.c.bf16 %v5717, %v5716
      %v5739 = vpack.c.bf16 %v5719, %v5718
      %v5740 = vpack.c.bf16 %v5721, %v5720
      %v5741 = vpack.c.bf16 %v5723, %v5722
      %v5742 = vpack.c.bf16 %v5725, %v5724
      %v5743 = vpack.c.bf16 %v5727, %v5726
      %s5744 = scalar_lea.vmem %s8, 112
      %v5745 = vld [vmem:[%s5744] sm:$0xf]
      %v5746 = vld [vmem:[%s5744 + $0x4] sm:$0xf]
      %v5747 = vld [vmem:[%s5744 + $0x8] sm:$0xf]
      %v5748 = vld [vmem:[%s5744 + $0xc] sm:$0xf]
      %v5753 = vunpack.c.l.b16 %v5745
      %v5754 = vunpack.c.l.b16 %v5746
      %v5755 = vunpack.c.l.b16 %v5747
      %v5756 = vunpack.c.l.b16 %v5748
      %v5757 = vpack.c.b16 %v5754, %v5753
      %v5758 = vpack.c.b16 %v5756, %v5755
      %v5762 = vsel %vm448, %v5728, 0
      %v5765 = vsel %vm448, %v5729, 0
      %v5768 = vsel %vm448, %v5730, 0
      %v5771 = vsel %vm448, %v5731, 0
      %v5774 = vsel %vm448, %v5732, 0
      %v5777 = vsel %vm448, %v5733, 0
      %v5780 = vsel %vm448, %v5734, 0
      %v5783 = vsel %vm448, %v5735, 0
      %v5786 = vsel %vm448, %v5736, 0
      %v5789 = vsel %vm448, %v5737, 0
      %v5792 = vsel %vm448, %v5738, 0
      %v5795 = vsel %vm448, %v5739, 0
      %v5798 = vsel %vm448, %v5740, 0
      %v5801 = vsel %vm448, %v5741, 0
      %v5804 = vsel %vm448, %v5742, 0
      %v5807 = vsel %vm448, %v5743, 0
      %5809 = vmatprep.subr.bf16.mxu0 0
      %5810 = vmatpush1.bf16.msra.mxu0 %v5757
      %5811 = vmatprep.subr.bf16.mxu0 0
      %5812 = vmatpush1.bf16.msra.mxu0 %v5758
      %5813 = vmatprep.subr.bf16.mxu0 0
      %5814 = vmatpush1.bf16.msra.mxu0 0
      %5815 = vmatprep.subr.bf16.mxu0 0
      %5816 = vmatpush1.bf16.msra.mxu0 0
      %5817 = vmatprep.subr.bf16.mxu0 0
      %5818 = vmatpush1.bf16.msra.mxu0 0
      %5819 = vmatprep.subr.bf16.mxu0 0
      %5820 = vmatpush1.bf16.msra.mxu0 0
      %5821 = vmatprep.subr.bf16.mxu0 0
      %5822 = vmatpush1.bf16.msra.mxu0 0
      %5823 = vmatprep.subr.bf16.mxu0 0
      %5824 = vmatpush1.bf16.msra.mxu0 0
      %5825 = vmatprep.subr.bf16.mxu0 0
      %5826 = vmatpush1.bf16.msra.mxu0 0
      %5827 = vmatprep.subr.bf16.mxu0 0
      %5828 = vmatpush1.bf16.msra.mxu0 0
      %5829 = vmatprep.subr.bf16.mxu0 0
      %5830 = vmatpush1.bf16.msra.mxu0 0
      %5831 = vmatprep.subr.bf16.mxu0 0
      %5832 = vmatpush1.bf16.msra.mxu0 0
      %5833 = vmatprep.subr.bf16.mxu0 0
      %5834 = vmatpush1.bf16.msra.mxu0 0
      %5835 = vmatprep.subr.bf16.mxu0 0
      %5836 = vmatpush1.bf16.msra.mxu0 0
      %5837 = vmatprep.subr.bf16.mxu0 0
      %5838 = vmatpush1.bf16.msra.mxu0 0
      %5839 = vmatprep.subr.bf16.mxu0 0
      %5840 = vmatpush1.bf16.msra.mxu0 0
      %5841 = vmatprep.mubr.bf16.mxu0 0
      %5842 = vmatmul.mubr.bf16.gmra.mrb[0].mxu0 %v5762
      %v5843 = vpop.f32.mrb[0].mxu0
      %v5844 = vadd.f32 0.0, %v5843
      %v5845 = vpop.f32.mrb[0].mxu0
      %v5846 = vpop.f32.mrb[0].mxu0
      %v5847 = vadd.f32 0.0, %v5846
      %v5848 = vpop.f32.mrb[0].mxu0
      %5849 = vmatprep.mubr.bf16.mxu0 0
      %5850 = vmatmul.mubr.bf16.gmra.mrb[0].mxu0 %v5765
      %v5851 = vpop.f32.mrb[0].mxu0
      %v5852 = vadd.f32 0.0, %v5851
      %v5853 = vpop.f32.mrb[0].mxu0
      %v5854 = vpop.f32.mrb[0].mxu0
      %v5855 = vadd.f32 0.0, %v5854
      %v5856 = vpop.f32.mrb[0].mxu0
      %5857 = vmatprep.mubr.bf16.mxu0 0
      %5858 = vmatmul.mubr.bf16.gmra.mrb[0].mxu0 %v5768
      %v5859 = vpop.f32.mrb[0].mxu0
      %v5860 = vadd.f32 0.0, %v5859
      %v5861 = vpop.f32.mrb[0].mxu0
      %v5862 = vpop.f32.mrb[0].mxu0
      %v5863 = vadd.f32 0.0, %v5862
      %v5864 = vpop.f32.mrb[0].mxu0
      %5865 = vmatprep.mubr.bf16.mxu0 0
      %5866 = vmatmul.mubr.bf16.gmra.mrb[0].mxu0 %v5771
      %v5867 = vpop.f32.mrb[0].mxu0
      %v5868 = vadd.f32 0.0, %v5867
      %v5869 = vpop.f32.mrb[0].mxu0
      %v5870 = vpop.f32.mrb[0].mxu0
      %v5871 = vadd.f32 0.0, %v5870
      %v5872 = vpop.f32.mrb[0].mxu0
      %5873 = vmatprep.mubr.bf16.mxu0 0
      %5874 = vmatmul.mubr.bf16.gmra.mrb[0].mxu0 %v5774
      %v5875 = vpop.f32.mrb[0].mxu0
      %v5876 = vadd.f32 0.0, %v5875
      %v5877 = vpop.f32.mrb[0].mxu0
      %v5878 = vpop.f32.mrb[0].mxu0
      %v5879 = vadd.f32 0.0, %v5878
      %v5880 = vpop.f32.mrb[0].mxu0
      %5881 = vmatprep.mubr.bf16.mxu0 0
      %5882 = vmatmul.mubr.bf16.gmra.mrb[0].mxu0 %v5777
      %v5883 = vpop.f32.mrb[0].mxu0
      %v5884 = vadd.f32 0.0, %v5883
      %v5885 = vpop.f32.mrb[0].mxu0
      %v5886 = vpop.f32.mrb[0].mxu0
      %v5887 = vadd.f32 0.0, %v5886
      %v5888 = vpop.f32.mrb[0].mxu0
      %5889 = vmatprep.mubr.bf16.mxu0 0
      %5890 = vmatmul.mubr.bf16.gmra.mrb[0].mxu0 %v5780
      %v5891 = vpop.f32.mrb[0].mxu0
      %v5892 = vadd.f32 0.0, %v5891
      %v5893 = vpop.f32.mrb[0].mxu0
      %v5894 = vpop.f32.mrb[0].mxu0
      %v5895 = vadd.f32 0.0, %v5894
      %v5896 = vpop.f32.mrb[0].mxu0
      %5897 = vmatprep.mubr.bf16.mxu0 0
      %5898 = vmatmul.mubr.bf16.gmra.mrb[0].mxu0 %v5783
      %v5899 = vpop.f32.mrb[0].mxu0
      %v5900 = vadd.f32 0.0, %v5899
      %v5901 = vpop.f32.mrb[0].mxu0
      %v5902 = vpop.f32.mrb[0].mxu0
      %v5903 = vadd.f32 0.0, %v5902
      %v5904 = vpop.f32.mrb[0].mxu0
      %5905 = vmatprep.mubr.bf16.mxu0 0
      %5906 = vmatmul.mubr.bf16.gmra.mrb[0].mxu0 %v5786
      %v5907 = vpop.f32.mrb[0].mxu0
      %v5908 = vadd.f32 0.0, %v5907
      %v5909 = vpop.f32.mrb[0].mxu0
      %v5910 = vpop.f32.mrb[0].mxu0
      %v5911 = vadd.f32 0.0, %v5910
      %v5912 = vpop.f32.mrb[0].mxu0
      %5913 = vmatprep.mubr.bf16.mxu0 0
      %5914 = vmatmul.mubr.bf16.gmra.mrb[0].mxu0 %v5789
      %v5915 = vpop.f32.mrb[0].mxu0
      %v5916 = vadd.f32 0.0, %v5915
      %v5917 = vpop.f32.mrb[0].mxu0
      %v5918 = vpop.f32.mrb[0].mxu0
      %v5919 = vadd.f32 0.0, %v5918
      %v5920 = vpop.f32.mrb[0].mxu0
      %5921 = vmatprep.mubr.bf16.mxu0 0
      %5922 = vmatmul.mubr.bf16.gmra.mrb[0].mxu0 %v5792
      %v5923 = vpop.f32.mrb[0].mxu0
      %v5924 = vadd.f32 0.0, %v5923
      %v5925 = vpop.f32.mrb[0].mxu0
      %v5926 = vpop.f32.mrb[0].mxu0
      %v5927 = vadd.f32 0.0, %v5926
      %v5928 = vpop.f32.mrb[0].mxu0
      %5929 = vmatprep.mubr.bf16.mxu0 0
      %5930 = vmatmul.mubr.bf16.gmra.mrb[0].mxu0 %v5795
      %v5931 = vpop.f32.mrb[0].mxu0
      %v5932 = vadd.f32 0.0, %v5931
      %v5933 = vpop.f32.mrb[0].mxu0
      %v5934 = vpop.f32.mrb[0].mxu0
      %v5935 = vadd.f32 0.0, %v5934
      %v5936 = vpop.f32.mrb[0].mxu0
      %5937 = vmatprep.mubr.bf16.mxu0 0
      %5938 = vmatmul.mubr.bf16.gmra.mrb[0].mxu0 %v5798
      %v5939 = vpop.f32.mrb[0].mxu0
      %v5940 = vadd.f32 0.0, %v5939
      %v5941 = vpop.f32.mrb[0].mxu0
      %v5942 = vpop.f32.mrb[0].mxu0
      %v5943 = vadd.f32 0.0, %v5942
      %v5944 = vpop.f32.mrb[0].mxu0
      %5945 = vmatprep.mubr.bf16.mxu0 0
      %5946 = vmatmul.mubr.bf16.gmra.mrb[0].mxu0 %v5801
      %v5947 = vpop.f32.mrb[0].mxu0
      %v5948 = vadd.f32 0.0, %v5947
      %v5949 = vpop.f32.mrb[0].mxu0
      %v5950 = vpop.f32.mrb[0].mxu0
      %v5951 = vadd.f32 0.0, %v5950
      %v5952 = vpop.f32.mrb[0].mxu0
      %5953 = vmatprep.mubr.bf16.mxu0 0
      %5954 = vmatmul.mubr.bf16.gmra.mrb[0].mxu0 %v5804
      %v5955 = vpop.f32.mrb[0].mxu0
      %v5956 = vadd.f32 0.0, %v5955
      %v5957 = vpop.f32.mrb[0].mxu0
      %v5958 = vpop.f32.mrb[0].mxu0
      %v5959 = vadd.f32 0.0, %v5958
      %v5960 = vpop.f32.mrb[0].mxu0
      %5961 = vmatprep.mubr.bf16.mxu0 0
      %5962 = vmatmul.mubr.bf16.gmra.mrb[0].mxu0 %v5807
      %v5963 = vpop.f32.mrb[0].mxu0
      %v5964 = vadd.f32 0.0, %v5963
      %v5965 = vpop.f32.mrb[0].mxu0
      %v5966 = vpop.f32.mrb[0].mxu0
      %v5967 = vadd.f32 0.0, %v5966
      %v5968 = vpop.f32.mrb[0].mxu0
      %5969 = vdwg.mxu0
      %v5970 = vadd.f32 %v5664, %v5844
      %v5971 = vadd.f32 %v5665, %v5847
      %v5972 = vadd.f32 %v5666, %v5852
      %v5973 = vadd.f32 %v5667, %v5855
      %v5974 = vadd.f32 %v5668, %v5860
      %v5975 = vadd.f32 %v5669, %v5863
      %v5976 = vadd.f32 %v5670, %v5868
      %v5977 = vadd.f32 %v5671, %v5871
      %v5978 = vadd.f32 %v5672, %v5876
      %v5979 = vadd.f32 %v5673, %v5879
      %v5980 = vadd.f32 %v5674, %v5884
      %v5981 = vadd.f32 %v5675, %v5887
      %v5982 = vadd.f32 %v5676, %v5892
      %v5983 = vadd.f32 %v5677, %v5895
      %v5984 = vadd.f32 %v5678, %v5900
      %v5985 = vadd.f32 %v5679, %v5903
      %v5986 = vadd.f32 %v5680, %v5908
      %v5987 = vadd.f32 %v5681, %v5911
      %v5988 = vadd.f32 %v5682, %v5916
      %v5989 = vadd.f32 %v5683, %v5919
      %v5990 = vadd.f32 %v5684, %v5924
      %v5991 = vadd.f32 %v5685, %v5927
      %v5992 = vadd.f32 %v5686, %v5932
      %v5993 = vadd.f32 %v5687, %v5935
      %v5994 = vadd.f32 %v5688, %v5940
      %v5995 = vadd.f32 %v5689, %v5943
      %v5996 = vadd.f32 %v5690, %v5948
      %v5997 = vadd.f32 %v5691, %v5951
      %v5998 = vadd.f32 %v5692, %v5956
      %v5999 = vadd.f32 %v5693, %v5959
      %v6000 = vadd.f32 %v5694, %v5964
      %v6001 = vadd.f32 %v5695, %v5967
      %v6002 = vld [vmem:[%s5389 + $0x2] sm:$0xff]
      %v6003 = vld [vmem:[%s5389 + $0xa] sm:$0xff]
      %v6004 = vld [vmem:[%s5389 + $0x1a] sm:$0xff]
      %v6005 = vld [vmem:[%s5389 + $0x22] sm:$0xff]
      %v6006 = vld [vmem:[%s5389 + $0x32] sm:$0xff]
      %v6007 = vld [vmem:[%s5389 + $0x3a] sm:$0xff]
      %v6008 = vld [vmem:[%s5389 + $0x4a] sm:$0xff]
      %v6009 = vld [vmem:[%s5389 + $0x52] sm:$0xff]
      %v6010 = vld [vmem:[%s5389 + $0x62] sm:$0xff]
      %v6011 = vld [vmem:[%s5389 + $0x6a] sm:$0xff]
      %v6012 = vld [vmem:[%s5389 + $0x7a] sm:$0xff]
      %v6013 = vld [vmem:[%s5389 + $0x82] sm:$0xff]
      %v6014 = vld [vmem:[%s5389 + $0x92] sm:$0xff]
      %v6015 = vld [vmem:[%s5389 + $0x9a] sm:$0xff]
      %v6016 = vld [vmem:[%s5389 + $0xaa] sm:$0xff]
      %v6017 = vld [vmem:[%s5389 + $0xb2] sm:$0xff]
      %v6018 = vld [vmem:[%s5389 + $0xc2] sm:$0xff]
      %v6019 = vld [vmem:[%s5389 + $0xca] sm:$0xff]
      %v6020 = vld [vmem:[%s5389 + $0xda] sm:$0xff]
      %v6021 = vld [vmem:[%s5389 + $0xe2] sm:$0xff]
      %v6022 = vld [vmem:[%s5389 + $0xf2] sm:$0xff]
      %v6023 = vld [vmem:[%s5389 + $0xfa] sm:$0xff]
      %v6024 = vld [vmem:[%s5389 + $0x10a] sm:$0xff]
      %v6025 = vld [vmem:[%s5389 + $0x112] sm:$0xff]
      %v6026 = vld [vmem:[%s5389 + $0x122] sm:$0xff]
      %v6027 = vld [vmem:[%s5389 + $0x12a] sm:$0xff]
      %v6028 = vld [vmem:[%s5389 + $0x13a] sm:$0xff]
      %v6029 = vld [vmem:[%s5389 + $0x142] sm:$0xff]
      %v6030 = vld [vmem:[%s5389 + $0x152] sm:$0xff]
      %v6031 = vld [vmem:[%s5389 + $0x15a] sm:$0xff]
      %v6032 = vld [vmem:[%s5389 + $0x16a] sm:$0xff]
      %v6033 = vld [vmem:[%s5389 + $0x172] sm:$0xff]
      %v6034 = vpack.c.bf16 %v6003, %v6002
      %v6035 = vpack.c.bf16 %v6005, %v6004
      %v6036 = vpack.c.bf16 %v6007, %v6006
      %v6037 = vpack.c.bf16 %v6009, %v6008
      %v6038 = vpack.c.bf16 %v6011, %v6010
      %v6039 = vpack.c.bf16 %v6013, %v6012
      %v6040 = vpack.c.bf16 %v6015, %v6014
      %v6041 = vpack.c.bf16 %v6017, %v6016
      %v6042 = vpack.c.bf16 %v6019, %v6018
      %v6043 = vpack.c.bf16 %v6021, %v6020
      %v6044 = vpack.c.bf16 %v6023, %v6022
      %v6045 = vpack.c.bf16 %v6025, %v6024
      %v6046 = vpack.c.bf16 %v6027, %v6026
      %v6047 = vpack.c.bf16 %v6029, %v6028
      %v6048 = vpack.c.bf16 %v6031, %v6030
      %v6049 = vpack.c.bf16 %v6033, %v6032
      %s6050 = scalar_lea.vmem %s8, 128
      %v6051 = vld [vmem:[%s6050] sm:$0xf]
      %v6052 = vld [vmem:[%s6050 + $0x4] sm:$0xf]
      %v6053 = vld [vmem:[%s6050 + $0x8] sm:$0xf]
      %v6054 = vld [vmem:[%s6050 + $0xc] sm:$0xf]
      %v6059 = vunpack.c.l.b16 %v6051
      %v6060 = vunpack.c.l.b16 %v6052
      %v6061 = vunpack.c.l.b16 %v6053
      %v6062 = vunpack.c.l.b16 %v6054
      %v6063 = vpack.c.b16 %v6060, %v6059
      %v6064 = vpack.c.b16 %v6062, %v6061
      %v6068 = vsel %vm448, %v6034, 0
      %v6071 = vsel %vm448, %v6035, 0
      %v6074 = vsel %vm448, %v6036, 0
      %v6077 = vsel %vm448, %v6037, 0
      %v6080 = vsel %vm448, %v6038, 0
      %v6083 = vsel %vm448, %v6039, 0
      %v6086 = vsel %vm448, %v6040, 0
      %v6089 = vsel %vm448, %v6041, 0
      %v6092 = vsel %vm448, %v6042, 0
      %v6095 = vsel %vm448, %v6043, 0
      %v6098 = vsel %vm448, %v6044, 0
      %v6101 = vsel %vm448, %v6045, 0
      %v6104 = vsel %vm448, %v6046, 0
      %v6107 = vsel %vm448, %v6047, 0
      %v6110 = vsel %vm448, %v6048, 0
      %v6113 = vsel %vm448, %v6049, 0
      %6115 = vmatprep.subr.bf16.mxu0 0
      %6116 = vmatpush1.bf16.msra.mxu0 %v6063
      %6117 = vmatprep.subr.bf16.mxu0 0
      %6118 = vmatpush1.bf16.msra.mxu0 %v6064
      %6119 = vmatprep.subr.bf16.mxu0 0
      %6120 = vmatpush1.bf16.msra.mxu0 0
      %6121 = vmatprep.subr.bf16.mxu0 0
      %6122 = vmatpush1.bf16.msra.mxu0 0
      %6123 = vmatprep.subr.bf16.mxu0 0
      %6124 = vmatpush1.bf16.msra.mxu0 0
      %6125 = vmatprep.subr.bf16.mxu0 0
      %6126 = vmatpush1.bf16.msra.mxu0 0
      %6127 = vmatprep.subr.bf16.mxu0 0
      %6128 = vmatpush1.bf16.msra.mxu0 0
      %6129 = vmatprep.subr.bf16.mxu0 0
      %6130 = vmatpush1.bf16.msra.mxu0 0
      %6131 = vmatprep.subr.bf16.mxu0 0
      %6132 = vmatpush1.bf16.msra.mxu0 0
      %6133 = vmatprep.subr.bf16.mxu0 0
      %6134 = vmatpush1.bf16.msra.mxu0 0
      %6135 = vmatprep.subr.bf16.mxu0 0
      %6136 = vmatpush1.bf16.msra.mxu0 0
      %6137 = vmatprep.subr.bf16.mxu0 0
      %6138 = vmatpush1.bf16.msra.mxu0 0
      %6139 = vmatprep.subr.bf16.mxu0 0
      %6140 = vmatpush1.bf16.msra.mxu0 0
      %6141 = vmatprep.subr.bf16.mxu0 0
      %6142 = vmatpush1.bf16.msra.mxu0 0
      %6143 = vmatprep.subr.bf16.mxu0 0
      %6144 = vmatpush1.bf16.msra.mxu0 0
      %6145 = vmatprep.subr.bf16.mxu0 0
      %6146 = vmatpush1.bf16.msra.mxu0 0
      %6147 = vmatprep.mubr.bf16.mxu0 0
      %6148 = vmatmul.mubr.bf16.gmra.mrb[0].mxu0 %v6068
      %v6149 = vpop.f32.mrb[0].mxu0
      %v6150 = vadd.f32 0.0, %v6149
      %v6151 = vpop.f32.mrb[0].mxu0
      %v6152 = vpop.f32.mrb[0].mxu0
      %v6153 = vadd.f32 0.0, %v6152
      %v6154 = vpop.f32.mrb[0].mxu0
      %6155 = vmatprep.mubr.bf16.mxu0 0
      %6156 = vmatmul.mubr.bf16.gmra.mrb[0].mxu0 %v6071
      %v6157 = vpop.f32.mrb[0].mxu0
      %v6158 = vadd.f32 0.0, %v6157
      %v6159 = vpop.f32.mrb[0].mxu0
      %v6160 = vpop.f32.mrb[0].mxu0
      %v6161 = vadd.f32 0.0, %v6160
      %v6162 = vpop.f32.mrb[0].mxu0
      %6163 = vmatprep.mubr.bf16.mxu0 0
      %6164 = vmatmul.mubr.bf16.gmra.mrb[0].mxu0 %v6074
      %v6165 = vpop.f32.mrb[0].mxu0
      %v6166 = vadd.f32 0.0, %v6165
      %v6167 = vpop.f32.mrb[0].mxu0
      %v6168 = vpop.f32.mrb[0].mxu0
      %v6169 = vadd.f32 0.0, %v6168
      %v6170 = vpop.f32.mrb[0].mxu0
      %6171 = vmatprep.mubr.bf16.mxu0 0
      %6172 = vmatmul.mubr.bf16.gmra.mrb[0].mxu0 %v6077
      %v6173 = vpop.f32.mrb[0].mxu0
      %v6174 = vadd.f32 0.0, %v6173
      %v6175 = vpop.f32.mrb[0].mxu0
      %v6176 = vpop.f32.mrb[0].mxu0
      %v6177 = vadd.f32 0.0, %v6176
      %v6178 = vpop.f32.mrb[0].mxu0
      %6179 = vmatprep.mubr.bf16.mxu0 0
      %6180 = vmatmul.mubr.bf16.gmra.mrb[0].mxu0 %v6080
      %v6181 = vpop.f32.mrb[0].mxu0
      %v6182 = vadd.f32 0.0, %v6181
      %v6183 = vpop.f32.mrb[0].mxu0
      %v6184 = vpop.f32.mrb[0].mxu0
      %v6185 = vadd.f32 0.0, %v6184
      %v6186 = vpop.f32.mrb[0].mxu0
      %6187 = vmatprep.mubr.bf16.mxu0 0
      %6188 = vmatmul.mubr.bf16.gmra.mrb[0].mxu0 %v6083
      %v6189 = vpop.f32.mrb[0].mxu0
      %v6190 = vadd.f32 0.0, %v6189
      %v6191 = vpop.f32.mrb[0].mxu0
      %v6192 = vpop.f32.mrb[0].mxu0
      %v6193 = vadd.f32 0.0, %v6192
      %v6194 = vpop.f32.mrb[0].mxu0
      %6195 = vmatprep.mubr.bf16.mxu0 0
      %6196 = vmatmul.mubr.bf16.gmra.mrb[0].mxu0 %v6086
      %v6197 = vpop.f32.mrb[0].mxu0
      %v6198 = vadd.f32 0.0, %v6197
      %v6199 = vpop.f32.mrb[0].mxu0
      %v6200 = vpop.f32.mrb[0].mxu0
      %v6201 = vadd.f32 0.0, %v6200
      %v6202 = vpop.f32.mrb[0].mxu0
      %6203 = vmatprep.mubr.bf16.mxu0 0
      %6204 = vmatmul.mubr.bf16.gmra.mrb[0].mxu0 %v6089
      %v6205 = vpop.f32.mrb[0].mxu0
      %v6206 = vadd.f32 0.0, %v6205
      %v6207 = vpop.f32.mrb[0].mxu0
      %v6208 = vpop.f32.mrb[0].mxu0
      %v6209 = vadd.f32 0.0, %v6208
      %v6210 = vpop.f32.mrb[0].mxu0
      %6211 = vmatprep.mubr.bf16.mxu0 0
      %6212 = vmatmul.mubr.bf16.gmra.mrb[0].mxu0 %v6092
      %v6213 = vpop.f32.mrb[0].mxu0
      %v6214 = vadd.f32 0.0, %v6213
      %v6215 = vpop.f32.mrb[0].mxu0
      %v6216 = vpop.f32.mrb[0].mxu0
      %v6217 = vadd.f32 0.0, %v6216
      %v6218 = vpop.f32.mrb[0].mxu0
      %6219 = vmatprep.mubr.bf16.mxu0 0
      %6220 = vmatmul.mubr.bf16.gmra.mrb[0].mxu0 %v6095
      %v6221 = vpop.f32.mrb[0].mxu0
      %v6222 = vadd.f32 0.0, %v6221
      %v6223 = vpop.f32.mrb[0].mxu0
      %v6224 = vpop.f32.mrb[0].mxu0
      %v6225 = vadd.f32 0.0, %v6224
      %v6226 = vpop.f32.mrb[0].mxu0
      %6227 = vmatprep.mubr.bf16.mxu0 0
      %6228 = vmatmul.mubr.bf16.gmra.mrb[0].mxu0 %v6098
      %v6229 = vpop.f32.mrb[0].mxu0
      %v6230 = vadd.f32 0.0, %v6229
      %v6231 = vpop.f32.mrb[0].mxu0
      %v6232 = vpop.f32.mrb[0].mxu0
      %v6233 = vadd.f32 0.0, %v6232
      %v6234 = vpop.f32.mrb[0].mxu0
      %6235 = vmatprep.mubr.bf16.mxu0 0
      %6236 = vmatmul.mubr.bf16.gmra.mrb[0].mxu0 %v6101
      %v6237 = vpop.f32.mrb[0].mxu0
      %v6238 = vadd.f32 0.0, %v6237
      %v6239 = vpop.f32.mrb[0].mxu0
      %v6240 = vpop.f32.mrb[0].mxu0
      %v6241 = vadd.f32 0.0, %v6240
      %v6242 = vpop.f32.mrb[0].mxu0
      %6243 = vmatprep.mubr.bf16.mxu0 0
      %6244 = vmatmul.mubr.bf16.gmra.mrb[0].mxu0 %v6104
      %v6245 = vpop.f32.mrb[0].mxu0
      %v6246 = vadd.f32 0.0, %v6245
      %v6247 = vpop.f32.mrb[0].mxu0
      %v6248 = vpop.f32.mrb[0].mxu0
      %v6249 = vadd.f32 0.0, %v6248
      %v6250 = vpop.f32.mrb[0].mxu0
      %6251 = vmatprep.mubr.bf16.mxu0 0
      %6252 = vmatmul.mubr.bf16.gmra.mrb[0].mxu0 %v6107
      %v6253 = vpop.f32.mrb[0].mxu0
      %v6254 = vadd.f32 0.0, %v6253
      %v6255 = vpop.f32.mrb[0].mxu0
      %v6256 = vpop.f32.mrb[0].mxu0
      %v6257 = vadd.f32 0.0, %v6256
      %v6258 = vpop.f32.mrb[0].mxu0
      %6259 = vmatprep.mubr.bf16.mxu0 0
      %6260 = vmatmul.mubr.bf16.gmra.mrb[0].mxu0 %v6110
      %v6261 = vpop.f32.mrb[0].mxu0
      %v6262 = vadd.f32 0.0, %v6261
      %v6263 = vpop.f32.mrb[0].mxu0
      %v6264 = vpop.f32.mrb[0].mxu0
      %v6265 = vadd.f32 0.0, %v6264
      %v6266 = vpop.f32.mrb[0].mxu0
      %6267 = vmatprep.mubr.bf16.mxu0 0
      %6268 = vmatmul.mubr.bf16.gmra.mrb[0].mxu0 %v6113
      %v6269 = vpop.f32.mrb[0].mxu0
      %v6270 = vadd.f32 0.0, %v6269
      %v6271 = vpop.f32.mrb[0].mxu0
      %v6272 = vpop.f32.mrb[0].mxu0
      %v6273 = vadd.f32 0.0, %v6272
      %v6274 = vpop.f32.mrb[0].mxu0
      %6275 = vdwg.mxu0
      %v6276 = vadd.f32 %v5970, %v6150
      %v6277 = vadd.f32 %v5971, %v6153
      %v6278 = vadd.f32 %v5972, %v6158
      %v6279 = vadd.f32 %v5973, %v6161
      %v6280 = vadd.f32 %v5974, %v6166
      %v6281 = vadd.f32 %v5975, %v6169
      %v6282 = vadd.f32 %v5976, %v6174
      %v6283 = vadd.f32 %v5977, %v6177
      %v6284 = vadd.f32 %v5978, %v6182
      %v6285 = vadd.f32 %v5979, %v6185
      %v6286 = vadd.f32 %v5980, %v6190
      %v6287 = vadd.f32 %v5981, %v6193
      %v6288 = vadd.f32 %v5982, %v6198
      %v6289 = vadd.f32 %v5983, %v6201
      %v6290 = vadd.f32 %v5984, %v6206
      %v6291 = vadd.f32 %v5985, %v6209
      %v6292 = vadd.f32 %v5986, %v6214
      %v6293 = vadd.f32 %v5987, %v6217
      %v6294 = vadd.f32 %v5988, %v6222
      %v6295 = vadd.f32 %v5989, %v6225
      %v6296 = vadd.f32 %v5990, %v6230
      %v6297 = vadd.f32 %v5991, %v6233
      %v6298 = vadd.f32 %v5992, %v6238
      %v6299 = vadd.f32 %v5993, %v6241
      %v6300 = vadd.f32 %v5994, %v6246
      %v6301 = vadd.f32 %v5995, %v6249
      %v6302 = vadd.f32 %v5996, %v6254
      %v6303 = vadd.f32 %v5997, %v6257
      %v6304 = vadd.f32 %v5998, %v6262
      %v6305 = vadd.f32 %v5999, %v6265
      %v6306 = vadd.f32 %v6000, %v6270
      %v6307 = vadd.f32 %v6001, %v6273
      %v6308 = vld [vmem:[%s9] sm:$0x1]
      %v6310 = vlaneseq
      %v6311 = vshrl.u32 %v6310, 7
      %v6312 = vsub.s32 0, %v6311
      %v6313 = vrot.slane %v6308, %v6312
      %v6315 = vadd.f32 %v6276, %v6313
      %v6316 = vadd.f32 %v6277, %v6313
      %v6317 = vadd.f32 %v6278, %v6313
      %v6318 = vadd.f32 %v6279, %v6313
      %v6319 = vadd.f32 %v6280, %v6313
      %v6320 = vadd.f32 %v6281, %v6313
      %v6321 = vadd.f32 %v6282, %v6313
      %v6322 = vadd.f32 %v6283, %v6313
      %v6323 = vadd.f32 %v6284, %v6313
      %v6324 = vadd.f32 %v6285, %v6313
      %v6325 = vadd.f32 %v6286, %v6313
      %v6326 = vadd.f32 %v6287, %v6313
      %v6327 = vadd.f32 %v6288, %v6313
      %v6328 = vadd.f32 %v6289, %v6313
      %v6329 = vadd.f32 %v6290, %v6313
      %v6330 = vadd.f32 %v6291, %v6313
      %v6331 = vadd.f32 %v6292, %v6313
      %v6332 = vadd.f32 %v6293, %v6313
      %v6333 = vadd.f32 %v6294, %v6313
      %v6334 = vadd.f32 %v6295, %v6313
      %v6335 = vadd.f32 %v6296, %v6313
      %v6336 = vadd.f32 %v6297, %v6313
      %v6337 = vadd.f32 %v6298, %v6313
      %v6338 = vadd.f32 %v6299, %v6313
      %v6339 = vadd.f32 %v6300, %v6313
      %v6340 = vadd.f32 %v6301, %v6313
      %v6341 = vadd.f32 %v6302, %v6313
      %v6342 = vadd.f32 %v6303, %v6313
      %v6343 = vadd.f32 %v6304, %v6313
      %v6344 = vadd.f32 %v6305, %v6313
      %v6345 = vadd.f32 %v6306, %v6313
      %v6346 = vadd.f32 %v6307, %v6313
      %v6347 = vsub.f32 0.0, %v6315
      %v6348 = vsub.f32 0.0, %v6316
      %v6349 = vsub.f32 0.0, %v6317
      %v6350 = vsub.f32 0.0, %v6318
      %v6351 = vsub.f32 0.0, %v6319
      %v6352 = vsub.f32 0.0, %v6320
      %v6353 = vsub.f32 0.0, %v6321
      %v6354 = vsub.f32 0.0, %v6322
      %v6355 = vsub.f32 0.0, %v6323
      %v6356 = vsub.f32 0.0, %v6324
      %v6357 = vsub.f32 0.0, %v6325
      %v6358 = vsub.f32 0.0, %v6326
      %v6359 = vsub.f32 0.0, %v6327
      %v6360 = vsub.f32 0.0, %v6328
      %v6361 = vsub.f32 0.0, %v6329
      %v6362 = vsub.f32 0.0, %v6330
      %v6363 = vsub.f32 0.0, %v6331
      %v6364 = vsub.f32 0.0, %v6332
      %v6365 = vsub.f32 0.0, %v6333
      %v6366 = vsub.f32 0.0, %v6334
      %v6367 = vsub.f32 0.0, %v6335
      %v6368 = vsub.f32 0.0, %v6336
      %v6369 = vsub.f32 0.0, %v6337
      %v6370 = vsub.f32 0.0, %v6338
      %v6371 = vsub.f32 0.0, %v6339
      %v6372 = vsub.f32 0.0, %v6340
      %v6373 = vsub.f32 0.0, %v6341
      %v6374 = vsub.f32 0.0, %v6342
      %v6375 = vsub.f32 0.0, %v6343
      %v6376 = vsub.f32 0.0, %v6344
      %v6377 = vsub.f32 0.0, %v6345
      %v6378 = vsub.f32 0.0, %v6346
      %v6379 = vmul.f32 %v6347, 1.442695
      %v6380 = vpow.pop %v6379
      %v6381 = vmul.f32 %v6348, 1.442695
      %v6382 = vpow.pop %v6381
      %v6383 = vmul.f32 %v6349, 1.442695
      %v6384 = vpow.pop %v6383
      %v6385 = vmul.f32 %v6350, 1.442695
      %v6386 = vpow.pop %v6385
      %v6387 = vmul.f32 %v6351, 1.442695
      %v6388 = vpow.pop %v6387
      %v6389 = vmul.f32 %v6352, 1.442695
      %v6390 = vpow.pop %v6389
      %v6391 = vmul.f32 %v6353, 1.442695
      %v6392 = vpow.pop %v6391
      %v6393 = vmul.f32 %v6354, 1.442695
      %v6394 = vpow.pop %v6393
      %v6395 = vmul.f32 %v6355, 1.442695
      %v6396 = vpow.pop %v6395
      %v6397 = vmul.f32 %v6356, 1.442695
      %v6398 = vpow.pop %v6397
      %v6399 = vmul.f32 %v6357, 1.442695
      %v6400 = vpow.pop %v6399
      %v6401 = vmul.f32 %v6358, 1.442695
      %v6402 = vpow.pop %v6401
      %v6403 = vmul.f32 %v6359, 1.442695
      %v6404 = vpow.pop %v6403
      %v6405 = vmul.f32 %v6360, 1.442695
      %v6406 = vpow.pop %v6405
      %v6407 = vmul.f32 %v6361, 1.442695
      %v6408 = vpow.pop %v6407
      %v6409 = vmul.f32 %v6362, 1.442695
      %v6410 = vpow.pop %v6409
      %v6411 = vmul.f32 %v6363, 1.442695
      %v6412 = vpow.pop %v6411
      %v6413 = vmul.f32 %v6364, 1.442695
      %v6414 = vpow.pop %v6413
      %v6415 = vmul.f32 %v6365, 1.442695
      %v6416 = vpow.pop %v6415
      %v6417 = vmul.f32 %v6366, 1.442695
      %v6418 = vpow.pop %v6417
      %v6419 = vmul.f32 %v6367, 1.442695
      %v6420 = vpow.pop %v6419
      %v6421 = vmul.f32 %v6368, 1.442695
      %v6422 = vpow.pop %v6421
      %v6423 = vmul.f32 %v6369, 1.442695
      %v6424 = vpow.pop %v6423
      %v6425 = vmul.f32 %v6370, 1.442695
      %v6426 = vpow.pop %v6425
      %v6427 = vmul.f32 %v6371, 1.442695
      %v6428 = vpow.pop %v6427
      %v6429 = vmul.f32 %v6372, 1.442695
      %v6430 = vpow.pop %v6429
      %v6431 = vmul.f32 %v6373, 1.442695
      %v6432 = vpow.pop %v6431
      %v6433 = vmul.f32 %v6374, 1.442695
      %v6434 = vpow.pop %v6433
      %v6435 = vmul.f32 %v6375, 1.442695
      %v6436 = vpow.pop %v6435
      %v6437 = vmul.f32 %v6376, 1.442695
      %v6438 = vpow.pop %v6437
      %v6439 = vmul.f32 %v6377, 1.442695
      %v6440 = vpow.pop %v6439
      %v6441 = vmul.f32 %v6378, 1.442695
      %v6442 = vpow.pop %v6441
      %v6443 = vadd.f32 %v6380, 1.0
      %v6444 = vadd.f32 %v6382, 1.0
      %v6445 = vadd.f32 %v6384, 1.0
      %v6446 = vadd.f32 %v6386, 1.0
      %v6447 = vadd.f32 %v6388, 1.0
      %v6448 = vadd.f32 %v6390, 1.0
      %v6449 = vadd.f32 %v6392, 1.0
      %v6450 = vadd.f32 %v6394, 1.0
      %v6451 = vadd.f32 %v6396, 1.0
      %v6452 = vadd.f32 %v6398, 1.0
      %v6453 = vadd.f32 %v6400, 1.0
      %v6454 = vadd.f32 %v6402, 1.0
      %v6455 = vadd.f32 %v6404, 1.0
      %v6456 = vadd.f32 %v6406, 1.0
      %v6457 = vadd.f32 %v6408, 1.0
      %v6458 = vadd.f32 %v6410, 1.0
      %v6459 = vadd.f32 %v6412, 1.0
      %v6460 = vadd.f32 %v6414, 1.0
      %v6461 = vadd.f32 %v6416, 1.0
      %v6462 = vadd.f32 %v6418, 1.0
      %v6463 = vadd.f32 %v6420, 1.0
      %v6464 = vadd.f32 %v6422, 1.0
      %v6465 = vadd.f32 %v6424, 1.0
      %v6466 = vadd.f32 %v6426, 1.0
      %v6467 = vadd.f32 %v6428, 1.0
      %v6468 = vadd.f32 %v6430, 1.0
      %v6469 = vadd.f32 %v6432, 1.0
      %v6470 = vadd.f32 %v6434, 1.0
      %v6471 = vadd.f32 %v6436, 1.0
      %v6472 = vadd.f32 %v6438, 1.0
      %v6473 = vadd.f32 %v6440, 1.0
      %v6474 = vadd.f32 %v6442, 1.0
      %v6475 = vrcp.pop %v6443
      %v6476 = vrcp.pop %v6444
      %v6477 = vrcp.pop %v6445
      %v6478 = vrcp.pop %v6446
      %v6479 = vrcp.pop %v6447
      %v6480 = vrcp.pop %v6448
      %v6481 = vrcp.pop %v6449
      %v6482 = vrcp.pop %v6450
      %v6483 = vrcp.pop %v6451
      %v6484 = vrcp.pop %v6452
      %v6485 = vrcp.pop %v6453
      %v6486 = vrcp.pop %v6454
      %v6487 = vrcp.pop %v6455
      %v6488 = vrcp.pop %v6456
      %v6489 = vrcp.pop %v6457
      %v6490 = vrcp.pop %v6458
      %v6491 = vrcp.pop %v6459
      %v6492 = vrcp.pop %v6460
      %v6493 = vrcp.pop %v6461
      %v6494 = vrcp.pop %v6462
      %v6495 = vrcp.pop %v6463
      %v6496 = vrcp.pop %v6464
      %v6497 = vrcp.pop %v6465
      %v6498 = vrcp.pop %v6466
      %v6499 = vrcp.pop %v6467
      %v6500 = vrcp.pop %v6468
      %v6501 = vrcp.pop %v6469
      %v6502 = vrcp.pop %v6470
      %v6503 = vrcp.pop %v6471
      %v6504 = vrcp.pop %v6472
      %v6505 = vrcp.pop %v6473
      %v6506 = vrcp.pop %v6474
      %v6507 = vmul.f32 %v6315, %v6475
      %v6508 = vmul.f32 %v6316, %v6476
      %v6509 = vmul.f32 %v6317, %v6477
      %v6510 = vmul.f32 %v6318, %v6478
      %v6511 = vmul.f32 %v6319, %v6479
      %v6512 = vmul.f32 %v6320, %v6480
      %v6513 = vmul.f32 %v6321, %v6481
      %v6514 = vmul.f32 %v6322, %v6482
      %v6515 = vmul.f32 %v6323, %v6483
      %v6516 = vmul.f32 %v6324, %v6484
      %v6517 = vmul.f32 %v6325, %v6485
      %v6518 = vmul.f32 %v6326, %v6486
      %v6519 = vmul.f32 %v6327, %v6487
      %v6520 = vmul.f32 %v6328, %v6488
      %v6521 = vmul.f32 %v6329, %v6489
      %v6522 = vmul.f32 %v6330, %v6490
      %v6523 = vmul.f32 %v6331, %v6491
      %v6524 = vmul.f32 %v6332, %v6492
      %v6525 = vmul.f32 %v6333, %v6493
      %v6526 = vmul.f32 %v6334, %v6494
      %v6527 = vmul.f32 %v6335, %v6495
      %v6528 = vmul.f32 %v6336, %v6496
      %v6529 = vmul.f32 %v6337, %v6497
      %v6530 = vmul.f32 %v6338, %v6498
      %v6531 = vmul.f32 %v6339, %v6499
      %v6532 = vmul.f32 %v6340, %v6500
      %v6533 = vmul.f32 %v6341, %v6501
      %v6534 = vmul.f32 %v6342, %v6502
      %v6535 = vmul.f32 %v6343, %v6503
      %v6536 = vmul.f32 %v6344, %v6504
      %v6537 = vmul.f32 %v6345, %v6505
      %v6538 = vmul.f32 %v6346, %v6506
      %6539 = vst.msk [vmem:[#allocation4] sm:$0xff] %vm448, 0.0
      %6540 = vst.msk [vmem:[#allocation4 + $0x8] sm:$0xff] %vm448, 0.0
      %6541 = vst.msk [vmem:[#allocation4 + $0x10] sm:$0x3] %vm3532, 0.0
      %6542 = vst.msk [vmem:[#allocation4 + $0x18] sm:$0xff] %vm448, 0.0
      %6543 = vst.msk [vmem:[#allocation4 + $0x20] sm:$0xff] %vm448, 0.0
      %6544 = vst.msk [vmem:[#allocation4 + $0x28] sm:$0x3] %vm3532, 0.0
      %6545 = vst.msk [vmem:[#allocation4 + $0x30] sm:$0xff] %vm448, 0.0
      %6546 = vst.msk [vmem:[#allocation4 + $0x38] sm:$0xff] %vm448, 0.0
      %6547 = vst.msk [vmem:[#allocation4 + $0x40] sm:$0x3] %vm3532, 0.0
      %6548 = vst.msk [vmem:[#allocation4 + $0x48] sm:$0xff] %vm448, 0.0
      %6549 = vst.msk [vmem:[#allocation4 + $0x50] sm:$0xff] %vm448, 0.0
      %6550 = vst.msk [vmem:[#allocation4 + $0x58] sm:$0x3] %vm3532, 0.0
      %6551 = vst.msk [vmem:[#allocation4 + $0x60] sm:$0xff] %vm448, 0.0
      %6552 = vst.msk [vmem:[#allocation4 + $0x68] sm:$0xff] %vm448, 0.0
      %6553 = vst.msk [vmem:[#allocation4 + $0x70] sm:$0x3] %vm3532, 0.0
      %6554 = vst.msk [vmem:[#allocation4 + $0x78] sm:$0xff] %vm448, 0.0
      %6555 = vst.msk [vmem:[#allocation4 + $0x80] sm:$0xff] %vm448, 0.0
      %6556 = vst.msk [vmem:[#allocation4 + $0x88] sm:$0x3] %vm3532, 0.0
      %6557 = vst.msk [vmem:[#allocation4 + $0x90] sm:$0xff] %vm448, 0.0
      %6558 = vst.msk [vmem:[#allocation4 + $0x98] sm:$0xff] %vm448, 0.0
      %6559 = vst.msk [vmem:[#allocation4 + $0xa0] sm:$0x3] %vm3532, 0.0
      %6560 = vst.msk [vmem:[#allocation4 + $0xa8] sm:$0xff] %vm448, 0.0
      %6561 = vst.msk [vmem:[#allocation4 + $0xb0] sm:$0xff] %vm448, 0.0
      %6562 = vst.msk [vmem:[#allocation4 + $0xb8] sm:$0x3] %vm3532, 0.0
      %6563 = vst.msk [vmem:[#allocation4 + $0xc0] sm:$0xff] %vm448, 0.0
      %6564 = vst.msk [vmem:[#allocation4 + $0xc8] sm:$0xff] %vm448, 0.0
      %6565 = vst.msk [vmem:[#allocation4 + $0xd0] sm:$0x3] %vm3532, 0.0
      %6566 = vst.msk [vmem:[#allocation4 + $0xd8] sm:$0xff] %vm448, 0.0
      %6567 = vst.msk [vmem:[#allocation4 + $0xe0] sm:$0xff] %vm448, 0.0
      %6568 = vst.msk [vmem:[#allocation4 + $0xe8] sm:$0x3] %vm3532, 0.0
      %6569 = vst.msk [vmem:[#allocation4 + $0xf0] sm:$0xff] %vm448, 0.0
      %6570 = vst.msk [vmem:[#allocation4 + $0xf8] sm:$0xff] %vm448, 0.0
      %6571 = vst.msk [vmem:[#allocation4 + $0x100] sm:$0x3] %vm3532, 0.0
      %6572 = vst.msk [vmem:[#allocation4 + $0x108] sm:$0xff] %vm448, 0.0
      %6573 = vst.msk [vmem:[#allocation4 + $0x110] sm:$0xff] %vm448, 0.0
      %6574 = vst.msk [vmem:[#allocation4 + $0x118] sm:$0x3] %vm3532, 0.0
      %6575 = vst.msk [vmem:[#allocation4 + $0x120] sm:$0xff] %vm448, 0.0
      %6576 = vst.msk [vmem:[#allocation4 + $0x128] sm:$0xff] %vm448, 0.0
      %6577 = vst.msk [vmem:[#allocation4 + $0x130] sm:$0x3] %vm3532, 0.0
      %6578 = vst.msk [vmem:[#allocation4 + $0x138] sm:$0xff] %vm448, 0.0
      %6579 = vst.msk [vmem:[#allocation4 + $0x140] sm:$0xff] %vm448, 0.0
      %6580 = vst.msk [vmem:[#allocation4 + $0x148] sm:$0x3] %vm3532, 0.0
      %6581 = vst.msk [vmem:[#allocation4 + $0x150] sm:$0xff] %vm448, 0.0
      %6582 = vst.msk [vmem:[#allocation4 + $0x158] sm:$0xff] %vm448, 0.0
      %6583 = vst.msk [vmem:[#allocation4 + $0x160] sm:$0x3] %vm3532, 0.0
      %6584 = vst.msk [vmem:[#allocation4 + $0x168] sm:$0xff] %vm448, 0.0
      %6585 = vst.msk [vmem:[#allocation4 + $0x170] sm:$0xff] %vm448, 0.0
      %6586 = vst.msk [vmem:[#allocation4 + $0x178] sm:$0x3] %vm3532, 0.0
      %6587 = vst.msk [vmem:[#allocation4 + $0x180] sm:$0xff] %vm448, 0.0
      %6588 = vst.msk [vmem:[#allocation4 + $0x188] sm:$0xff] %vm448, 0.0
      %6589 = vst.msk [vmem:[#allocation4 + $0x190] sm:$0x3] %vm3532, 0.0
      %6590 = vst.msk [vmem:[#allocation4 + $0x198] sm:$0xff] %vm448, 0.0
      %6591 = vst.msk [vmem:[#allocation4 + $0x1a0] sm:$0xff] %vm448, 0.0
      %6592 = vst.msk [vmem:[#allocation4 + $0x1a8] sm:$0x3] %vm3532, 0.0
      %s6593 = scalar_lea.vmem [#allocation4], 24
      %6594 = vst.msk [vmem:[%s6593 + $0x1] sm:$0xff] %vm448, %v6507
      %6595 = vst.msk [vmem:[%s6593 + $0x9] sm:$0xff] %vm448, %v6508
      %6596 = vst.msk [vmem:[%s6593 + $0x19] sm:$0xff] %vm448, %v6509
      %6597 = vst.msk [vmem:[%s6593 + $0x21] sm:$0xff] %vm448, %v6510
      %6598 = vst.msk [vmem:[%s6593 + $0x31] sm:$0xff] %vm448, %v6511
      %6599 = vst.msk [vmem:[%s6593 + $0x39] sm:$0xff] %vm448, %v6512
      %6600 = vst.msk [vmem:[%s6593 + $0x49] sm:$0xff] %vm448, %v6513
      %6601 = vst.msk [vmem:[%s6593 + $0x51] sm:$0xff] %vm448, %v6514
      %6602 = vst.msk [vmem:[%s6593 + $0x61] sm:$0xff] %vm448, %v6515
      %6603 = vst.msk [vmem:[%s6593 + $0x69] sm:$0xff] %vm448, %v6516
      %6604 = vst.msk [vmem:[%s6593 + $0x79] sm:$0xff] %vm448, %v6517
      %6605 = vst.msk [vmem:[%s6593 + $0x81] sm:$0xff] %vm448, %v6518
      %6606 = vst.msk [vmem:[%s6593 + $0x91] sm:$0xff] %vm448, %v6519
      %6607 = vst.msk [vmem:[%s6593 + $0x99] sm:$0xff] %vm448, %v6520
      %6608 = vst.msk [vmem:[%s6593 + $0xa9] sm:$0xff] %vm448, %v6521
      %6609 = vst.msk [vmem:[%s6593 + $0xb1] sm:$0xff] %vm448, %v6522
      %6610 = vst.msk [vmem:[%s6593 + $0xc1] sm:$0xff] %vm448, %v6523
      %6611 = vst.msk [vmem:[%s6593 + $0xc9] sm:$0xff] %vm448, %v6524
      %6612 = vst.msk [vmem:[%s6593 + $0xd9] sm:$0xff] %vm448, %v6525
      %6613 = vst.msk [vmem:[%s6593 + $0xe1] sm:$0xff] %vm448, %v6526
      %6614 = vst.msk [vmem:[%s6593 + $0xf1] sm:$0xff] %vm448, %v6527
      %6615 = vst.msk [vmem:[%s6593 + $0xf9] sm:$0xff] %vm448, %v6528
      %6616 = vst.msk [vmem:[%s6593 + $0x109] sm:$0xff] %vm448, %v6529
      %6617 = vst.msk [vmem:[%s6593 + $0x111] sm:$0xff] %vm448, %v6530
      %6618 = vst.msk [vmem:[%s6593 + $0x121] sm:$0xff] %vm448, %v6531
      %6619 = vst.msk [vmem:[%s6593 + $0x129] sm:$0xff] %vm448, %v6532
      %6620 = vst.msk [vmem:[%s6593 + $0x139] sm:$0xff] %vm448, %v6533
      %6621 = vst.msk [vmem:[%s6593 + $0x141] sm:$0xff] %vm448, %v6534
      %6622 = vst.msk [vmem:[%s6593 + $0x151] sm:$0xff] %vm448, %v6535
      %6623 = vst.msk [vmem:[%s6593 + $0x159] sm:$0xff] %vm448, %v6536
      %6624 = vst.msk [vmem:[%s6593 + $0x169] sm:$0xff] %vm448, %v6537
      %6625 = vst.msk [vmem:[%s6593 + $0x171] sm:$0xff] %vm448, %v6538
      %v6626 = vld [vmem:[#allocation4] sm:$0xff]
      %v6627 = vld [vmem:[#allocation4 + $0x8] sm:$0xff]
      %v6628 = vld [vmem:[#allocation4 + $0x18] sm:$0xff]
      %v6629 = vld [vmem:[#allocation4 + $0x20] sm:$0xff]
      %v6630 = vld [vmem:[#allocation4 + $0x30] sm:$0xff]
      %v6631 = vld [vmem:[#allocation4 + $0x38] sm:$0xff]
      %v6632 = vld [vmem:[#allocation4 + $0x48] sm:$0xff]
      %v6633 = vld [vmem:[#allocation4 + $0x50] sm:$0xff]
      %v6634 = vld [vmem:[#allocation4 + $0x60] sm:$0xff]
      %v6635 = vld [vmem:[#allocation4 + $0x68] sm:$0xff]
      %v6636 = vld [vmem:[#allocation4 + $0x78] sm:$0xff]
      %v6637 = vld [vmem:[#allocation4 + $0x80] sm:$0xff]
      %v6638 = vld [vmem:[#allocation4 + $0x90] sm:$0xff]
      %v6639 = vld [vmem:[#allocation4 + $0x98] sm:$0xff]
      %v6640 = vld [vmem:[#allocation4 + $0xa8] sm:$0xff]
      %v6641 = vld [vmem:[#allocation4 + $0xb0] sm:$0xff]
      %v6642 = vld [vmem:[#allocation4 + $0xc0] sm:$0xff]
      %v6643 = vld [vmem:[#allocation4 + $0xc8] sm:$0xff]
      %v6644 = vld [vmem:[#allocation4 + $0xd8] sm:$0xff]
      %v6645 = vld [vmem:[#allocation4 + $0xe0] sm:$0xff]
      %v6646 = vld [vmem:[#allocation4 + $0xf0] sm:$0xff]
      %v6647 = vld [vmem:[#allocation4 + $0xf8] sm:$0xff]
      %v6648 = vld [vmem:[#allocation4 + $0x108] sm:$0xff]
      %v6649 = vld [vmem:[#allocation4 + $0x110] sm:$0xff]
      %v6650 = vld [vmem:[#allocation4 + $0x120] sm:$0xff]
      %v6651 = vld [vmem:[#allocation4 + $0x128] sm:$0xff]
      %v6652 = vld [vmem:[#allocation4 + $0x138] sm:$0xff]
      %v6653 = vld [vmem:[#allocation4 + $0x140] sm:$0xff]
      %v6654 = vld [vmem:[#allocation4 + $0x150] sm:$0xff]
      %v6655 = vld [vmem:[#allocation4 + $0x158] sm:$0xff]
      %v6656 = vld [vmem:[#allocation4 + $0x168] sm:$0xff]
      %v6657 = vld [vmem:[#allocation4 + $0x170] sm:$0xff]
      %v6658 = vpack.c.bf16 %v6627, %v6626
      %v6659 = vpack.c.bf16 %v6629, %v6628
      %v6660 = vpack.c.bf16 %v6631, %v6630
      %v6661 = vpack.c.bf16 %v6633, %v6632
      %v6662 = vpack.c.bf16 %v6635, %v6634
      %v6663 = vpack.c.bf16 %v6637, %v6636
      %v6664 = vpack.c.bf16 %v6639, %v6638
      %v6665 = vpack.c.bf16 %v6641, %v6640
      %v6666 = vpack.c.bf16 %v6643, %v6642
      %v6667 = vpack.c.bf16 %v6645, %v6644
      %v6668 = vpack.c.bf16 %v6647, %v6646
      %v6669 = vpack.c.bf16 %v6649, %v6648
      %v6670 = vpack.c.bf16 %v6651, %v6650
      %v6671 = vpack.c.bf16 %v6653, %v6652
      %v6672 = vpack.c.bf16 %v6655, %v6654
      %v6673 = vpack.c.bf16 %v6657, %v6656
      %v6674 = vld [vmem:[%s10] sm:$0xf]
      %v6675 = vld [vmem:[%s10 + $0x4] sm:$0xf]
      %v6676 = vld [vmem:[%s10 + $0x8] sm:$0xf]
      %v6677 = vld [vmem:[%s10 + $0xc] sm:$0xf]
      %v6678 = vld [vmem:[#allocation4 + $0x1] sm:$0xff]
      %v6679 = vld [vmem:[#allocation4 + $0x9] sm:$0xff]
      %v6680 = vld [vmem:[#allocation4 + $0x19] sm:$0xff]
      %v6681 = vld [vmem:[#allocation4 + $0x21] sm:$0xff]
      %v6682 = vld [vmem:[#allocation4 + $0x31] sm:$0xff]
      %v6683 = vld [vmem:[#allocation4 + $0x39] sm:$0xff]
      %v6684 = vld [vmem:[#allocation4 + $0x49] sm:$0xff]
      %v6685 = vld [vmem:[#allocation4 + $0x51] sm:$0xff]
      %v6686 = vld [vmem:[#allocation4 + $0x61] sm:$0xff]
      %v6687 = vld [vmem:[#allocation4 + $0x69] sm:$0xff]
      %v6688 = vld [vmem:[#allocation4 + $0x79] sm:$0xff]
      %v6689 = vld [vmem:[#allocation4 + $0x81] sm:$0xff]
      %v6690 = vld [vmem:[#allocation4 + $0x91] sm:$0xff]
      %v6691 = vld [vmem:[#allocation4 + $0x99] sm:$0xff]
      %v6692 = vld [vmem:[#allocation4 + $0xa9] sm:$0xff]
      %v6693 = vld [vmem:[#allocation4 + $0xb1] sm:$0xff]
      %v6694 = vld [vmem:[#allocation4 + $0xc1] sm:$0xff]
      %v6695 = vld [vmem:[#allocation4 + $0xc9] sm:$0xff]
      %v6696 = vld [vmem:[#allocation4 + $0xd9] sm:$0xff]
      %v6697 = vld [vmem:[#allocation4 + $0xe1] sm:$0xff]
      %v6698 = vld [vmem:[#allocation4 + $0xf1] sm:$0xff]
      %v6699 = vld [vmem:[#allocation4 + $0xf9] sm:$0xff]
      %v6700 = vld [vmem:[#allocation4 + $0x109] sm:$0xff]
      %v6701 = vld [vmem:[#allocation4 + $0x111] sm:$0xff]
      %v6702 = vld [vmem:[#allocation4 + $0x121] sm:$0xff]
      %v6703 = vld [vmem:[#allocation4 + $0x129] sm:$0xff]
      %v6704 = vld [vmem:[#allocation4 + $0x139] sm:$0xff]
      %v6705 = vld [vmem:[#allocation4 + $0x141] sm:$0xff]
      %v6706 = vld [vmem:[#allocation4 + $0x151] sm:$0xff]
      %v6707 = vld [vmem:[#allocation4 + $0x159] sm:$0xff]
      %v6708 = vld [vmem:[#allocation4 + $0x169] sm:$0xff]
      %v6709 = vld [vmem:[#allocation4 + $0x171] sm:$0xff]
      %v6710 = vpack.c.bf16 %v6679, %v6678
      %v6711 = vpack.c.bf16 %v6681, %v6680
      %v6712 = vpack.c.bf16 %v6683, %v6682
      %v6713 = vpack.c.bf16 %v6685, %v6684
      %v6714 = vpack.c.bf16 %v6687, %v6686
      %v6715 = vpack.c.bf16 %v6689, %v6688
      %v6716 = vpack.c.bf16 %v6691, %v6690
      %v6717 = vpack.c.bf16 %v6693, %v6692
      %v6718 = vpack.c.bf16 %v6695, %v6694
      %v6719 = vpack.c.bf16 %v6697, %v6696
      %v6720 = vpack.c.bf16 %v6699, %v6698
      %v6721 = vpack.c.bf16 %v6701, %v6700
      %v6722 = vpack.c.bf16 %v6703, %v6702
      %v6723 = vpack.c.bf16 %v6705, %v6704
      %v6724 = vpack.c.bf16 %v6707, %v6706
      %v6725 = vpack.c.bf16 %v6709, %v6708
      %s6726 = scalar_lea.vmem %s10, 16
      %v6727 = vld [vmem:[%s6726] sm:$0xf]
      %v6728 = vld [vmem:[%s6726 + $0x4] sm:$0xf]
      %v6729 = vld [vmem:[%s6726 + $0x8] sm:$0xf]
      %v6730 = vld [vmem:[%s6726 + $0xc] sm:$0xf]
      %v6735 = vunpack.c.l.b16 %v6727
      %v6736 = vunpack.c.l.b16 %v6728
      %v6737 = vunpack.c.l.b16 %v6729
      %v6738 = vunpack.c.l.b16 %v6730
      %v6739 = vpack.c.b16 %v6736, %v6735
      %v6740 = vpack.c.b16 %v6738, %v6737
      %v6744 = vsel %vm448, %v6710, 0
      %v6747 = vsel %vm448, %v6711, 0
      %v6750 = vsel %vm448, %v6712, 0
      %v6753 = vsel %vm448, %v6713, 0
      %v6756 = vsel %vm448, %v6714, 0
      %v6759 = vsel %vm448, %v6715, 0
      %v6762 = vsel %vm448, %v6716, 0
      %v6765 = vsel %vm448, %v6717, 0
      %v6768 = vsel %vm448, %v6718, 0
      %v6771 = vsel %vm448, %v6719, 0
      %v6774 = vsel %vm448, %v6720, 0
      %v6777 = vsel %vm448, %v6721, 0
      %v6780 = vsel %vm448, %v6722, 0
      %v6783 = vsel %vm448, %v6723, 0
      %v6786 = vsel %vm448, %v6724, 0
      %v6789 = vsel %vm448, %v6725, 0
      %6791 = vmatprep.subr.bf16.mxu0 0
      %6792 = vmatpush1.bf16.msra.mxu0 %v6739
      %6793 = vmatprep.subr.bf16.mxu0 0
      %6794 = vmatpush1.bf16.msra.mxu0 %v6740
      %6795 = vmatprep.subr.bf16.mxu0 0
      %6796 = vmatpush1.bf16.msra.mxu0 0
      %6797 = vmatprep.subr.bf16.mxu0 0
      %6798 = vmatpush1.bf16.msra.mxu0 0
      %6799 = vmatprep.subr.bf16.mxu0 0
      %6800 = vmatpush1.bf16.msra.mxu0 0
      %6801 = vmatprep.subr.bf16.mxu0 0
      %6802 = vmatpush1.bf16.msra.mxu0 0
      %6803 = vmatprep.subr.bf16.mxu0 0
      %6804 = vmatpush1.bf16.msra.mxu0 0
      %6805 = vmatprep.subr.bf16.mxu0 0
      %6806 = vmatpush1.bf16.msra.mxu0 0
      %6807 = vmatprep.subr.bf16.mxu0 0
      %6808 = vmatpush1.bf16.msra.mxu0 0
      %6809 = vmatprep.subr.bf16.mxu0 0
      %6810 = vmatpush1.bf16.msra.mxu0 0
      %6811 = vmatprep.subr.bf16.mxu0 0
      %6812 = vmatpush1.bf16.msra.mxu0 0
      %6813 = vmatprep.subr.bf16.mxu0 0
      %6814 = vmatpush1.bf16.msra.mxu0 0
      %6815 = vmatprep.subr.bf16.mxu0 0
      %6816 = vmatpush1.bf16.msra.mxu0 0
      %6817 = vmatprep.subr.bf16.mxu0 0
      %6818 = vmatpush1.bf16.msra.mxu0 0
      %6819 = vmatprep.subr.bf16.mxu0 0
      %6820 = vmatpush1.bf16.msra.mxu0 0
      %6821 = vmatprep.subr.bf16.mxu0 0
      %6822 = vmatpush1.bf16.msra.mxu0 0
      %6823 = vmatprep.mubr.bf16.mxu0 0
      %6824 = vmatmul.mubr.bf16.gmra.mrb[0].mxu0 %v6744
      %v6825 = vpop.f32.mrb[0].mxu0
      %v6826 = vadd.f32 0.0, %v6825
      %v6827 = vpop.f32.mrb[0].mxu0
      %v6828 = vpop.f32.mrb[0].mxu0
      %v6829 = vadd.f32 0.0, %v6828
      %v6830 = vpop.f32.mrb[0].mxu0
      %6831 = vmatprep.mubr.bf16.mxu0 0
      %6832 = vmatmul.mubr.bf16.gmra.mrb[0].mxu0 %v6747
      %v6833 = vpop.f32.mrb[0].mxu0
      %v6834 = vadd.f32 0.0, %v6833
      %v6835 = vpop.f32.mrb[0].mxu0
      %v6836 = vpop.f32.mrb[0].mxu0
      %v6837 = vadd.f32 0.0, %v6836
      %v6838 = vpop.f32.mrb[0].mxu0
      %6839 = vmatprep.mubr.bf16.mxu0 0
      %6840 = vmatmul.mubr.bf16.gmra.mrb[0].mxu0 %v6750
      %v6841 = vpop.f32.mrb[0].mxu0
      %v6842 = vadd.f32 0.0, %v6841
      %v6843 = vpop.f32.mrb[0].mxu0
      %v6844 = vpop.f32.mrb[0].mxu0
      %v6845 = vadd.f32 0.0, %v6844
      %v6846 = vpop.f32.mrb[0].mxu0
      %6847 = vmatprep.mubr.bf16.mxu0 0
      %6848 = vmatmul.mubr.bf16.gmra.mrb[0].mxu0 %v6753
      %v6849 = vpop.f32.mrb[0].mxu0
      %v6850 = vadd.f32 0.0, %v6849
      %v6851 = vpop.f32.mrb[0].mxu0
      %v6852 = vpop.f32.mrb[0].mxu0
      %v6853 = vadd.f32 0.0, %v6852
      %v6854 = vpop.f32.mrb[0].mxu0
      %6855 = vmatprep.mubr.bf16.mxu0 0
      %6856 = vmatmul.mubr.bf16.gmra.mrb[0].mxu0 %v6756
      %v6857 = vpop.f32.mrb[0].mxu0
      %v6858 = vadd.f32 0.0, %v6857
      %v6859 = vpop.f32.mrb[0].mxu0
      %v6860 = vpop.f32.mrb[0].mxu0
      %v6861 = vadd.f32 0.0, %v6860
      %v6862 = vpop.f32.mrb[0].mxu0
      %6863 = vmatprep.mubr.bf16.mxu0 0
      %6864 = vmatmul.mubr.bf16.gmra.mrb[0].mxu0 %v6759
      %v6865 = vpop.f32.mrb[0].mxu0
      %v6866 = vadd.f32 0.0, %v6865
      %v6867 = vpop.f32.mrb[0].mxu0
      %v6868 = vpop.f32.mrb[0].mxu0
      %v6869 = vadd.f32 0.0, %v6868
      %v6870 = vpop.f32.mrb[0].mxu0
      %6871 = vmatprep.mubr.bf16.mxu0 0
      %6872 = vmatmul.mubr.bf16.gmra.mrb[0].mxu0 %v6762
      %v6873 = vpop.f32.mrb[0].mxu0
      %v6874 = vadd.f32 0.0, %v6873
      %v6875 = vpop.f32.mrb[0].mxu0
      %v6876 = vpop.f32.mrb[0].mxu0
      %v6877 = vadd.f32 0.0, %v6876
      %v6878 = vpop.f32.mrb[0].mxu0
      %6879 = vmatprep.mubr.bf16.mxu0 0
      %6880 = vmatmul.mubr.bf16.gmra.mrb[0].mxu0 %v6765
      %v6881 = vpop.f32.mrb[0].mxu0
      %v6882 = vadd.f32 0.0, %v6881
      %v6883 = vpop.f32.mrb[0].mxu0
      %v6884 = vpop.f32.mrb[0].mxu0
      %v6885 = vadd.f32 0.0, %v6884
      %v6886 = vpop.f32.mrb[0].mxu0
      %6887 = vmatprep.mubr.bf16.mxu0 0
      %6888 = vmatmul.mubr.bf16.gmra.mrb[0].mxu0 %v6768
      %v6889 = vpop.f32.mrb[0].mxu0
      %v6890 = vadd.f32 0.0, %v6889
      %v6891 = vpop.f32.mrb[0].mxu0
      %v6892 = vpop.f32.mrb[0].mxu0
      %v6893 = vadd.f32 0.0, %v6892
      %v6894 = vpop.f32.mrb[0].mxu0
      %6895 = vmatprep.mubr.bf16.mxu0 0
      %6896 = vmatmul.mubr.bf16.gmra.mrb[0].mxu0 %v6771
      %v6897 = vpop.f32.mrb[0].mxu0
      %v6898 = vadd.f32 0.0, %v6897
      %v6899 = vpop.f32.mrb[0].mxu0
      %v6900 = vpop.f32.mrb[0].mxu0
      %v6901 = vadd.f32 0.0, %v6900
      %v6902 = vpop.f32.mrb[0].mxu0
      %6903 = vmatprep.mubr.bf16.mxu0 0
      %6904 = vmatmul.mubr.bf16.gmra.mrb[0].mxu0 %v6774
      %v6905 = vpop.f32.mrb[0].mxu0
      %v6906 = vadd.f32 0.0, %v6905
      %v6907 = vpop.f32.mrb[0].mxu0
      %v6908 = vpop.f32.mrb[0].mxu0
      %v6909 = vadd.f32 0.0, %v6908
      %v6910 = vpop.f32.mrb[0].mxu0
      %6911 = vmatprep.mubr.bf16.mxu0 0
      %6912 = vmatmul.mubr.bf16.gmra.mrb[0].mxu0 %v6777
      %v6913 = vpop.f32.mrb[0].mxu0
      %v6914 = vadd.f32 0.0, %v6913
      %v6915 = vpop.f32.mrb[0].mxu0
      %v6916 = vpop.f32.mrb[0].mxu0
      %v6917 = vadd.f32 0.0, %v6916
      %v6918 = vpop.f32.mrb[0].mxu0
      %6919 = vmatprep.mubr.bf16.mxu0 0
      %6920 = vmatmul.mubr.bf16.gmra.mrb[0].mxu0 %v6780
      %v6921 = vpop.f32.mrb[0].mxu0
      %v6922 = vadd.f32 0.0, %v6921
      %v6923 = vpop.f32.mrb[0].mxu0
      %v6924 = vpop.f32.mrb[0].mxu0
      %v6925 = vadd.f32 0.0, %v6924
      %v6926 = vpop.f32.mrb[0].mxu0
      %6927 = vmatprep.mubr.bf16.mxu0 0
      %6928 = vmatmul.mubr.bf16.gmra.mrb[0].mxu0 %v6783
      %v6929 = vpop.f32.mrb[0].mxu0
      %v6930 = vadd.f32 0.0, %v6929
      %v6931 = vpop.f32.mrb[0].mxu0
      %v6932 = vpop.f32.mrb[0].mxu0
      %v6933 = vadd.f32 0.0, %v6932
      %v6934 = vpop.f32.mrb[0].mxu0
      %6935 = vmatprep.mubr.bf16.mxu0 0
      %6936 = vmatmul.mubr.bf16.gmra.mrb[0].mxu0 %v6786
      %v6937 = vpop.f32.mrb[0].mxu0
      %v6938 = vadd.f32 0.0, %v6937
      %v6939 = vpop.f32.mrb[0].mxu0
      %v6940 = vpop.f32.mrb[0].mxu0
      %v6941 = vadd.f32 0.0, %v6940
      %v6942 = vpop.f32.mrb[0].mxu0
      %6943 = vmatprep.mubr.bf16.mxu0 0
      %6944 = vmatmul.mubr.bf16.gmra.mrb[0].mxu0 %v6789
      %v6945 = vpop.f32.mrb[0].mxu0
      %v6946 = vadd.f32 0.0, %v6945
      %v6947 = vpop.f32.mrb[0].mxu0
      %v6948 = vpop.f32.mrb[0].mxu0
      %v6949 = vadd.f32 0.0, %v6948
      %v6950 = vpop.f32.mrb[0].mxu0
      %6951 = vdwg.mxu0
      %v6956 = vunpack.c.l.b16 %v6674
      %v6957 = vunpack.c.l.b16 %v6675
      %v6958 = vunpack.c.l.b16 %v6676
      %v6959 = vunpack.c.l.b16 %v6677
      %v6960 = vpack.c.b16 %v6957, %v6956
      %v6961 = vpack.c.b16 %v6959, %v6958
      %v6965 = vsel %vm448, %v6658, 0
      %v6968 = vsel %vm448, %v6659, 0
      %v6971 = vsel %vm448, %v6660, 0
      %v6974 = vsel %vm448, %v6661, 0
      %v6977 = vsel %vm448, %v6662, 0
      %v6980 = vsel %vm448, %v6663, 0
      %v6983 = vsel %vm448, %v6664, 0
      %v6986 = vsel %vm448, %v6665, 0
      %v6989 = vsel %vm448, %v6666, 0
      %v6992 = vsel %vm448, %v6667, 0
      %v6995 = vsel %vm448, %v6668, 0
      %v6998 = vsel %vm448, %v6669, 0
      %v7001 = vsel %vm448, %v6670, 0
      %v7004 = vsel %vm448, %v6671, 0
      %v7007 = vsel %vm448, %v6672, 0
      %v7010 = vsel %vm448, %v6673, 0
      %7012 = vmatprep.subr.bf16.mxu0 0
      %7013 = vmatpush1.bf16.msra.mxu0 %v6960
      %7014 = vmatprep.subr.bf16.mxu0 0
      %7015 = vmatpush1.bf16.msra.mxu0 %v6961
      %7016 = vmatprep.subr.bf16.mxu0 0
      %7017 = vmatpush1.bf16.msra.mxu0 0
      %7018 = vmatprep.subr.bf16.mxu0 0
      %7019 = vmatpush1.bf16.msra.mxu0 0
      %7020 = vmatprep.subr.bf16.mxu0 0
      %7021 = vmatpush1.bf16.msra.mxu0 0
      %7022 = vmatprep.subr.bf16.mxu0 0
      %7023 = vmatpush1.bf16.msra.mxu0 0
      %7024 = vmatprep.subr.bf16.mxu0 0
      %7025 = vmatpush1.bf16.msra.mxu0 0
      %7026 = vmatprep.subr.bf16.mxu0 0
      %7027 = vmatpush1.bf16.msra.mxu0 0
      %7028 = vmatprep.subr.bf16.mxu0 0
      %7029 = vmatpush1.bf16.msra.mxu0 0
      %7030 = vmatprep.subr.bf16.mxu0 0
      %7031 = vmatpush1.bf16.msra.mxu0 0
      %7032 = vmatprep.subr.bf16.mxu0 0
      %7033 = vmatpush1.bf16.msra.mxu0 0
      %7034 = vmatprep.subr.bf16.mxu0 0
      %7035 = vmatpush1.bf16.msra.mxu0 0
      %7036 = vmatprep.subr.bf16.mxu0 0
      %7037 = vmatpush1.bf16.msra.mxu0 0
      %7038 = vmatprep.subr.bf16.mxu0 0
      %7039 = vmatpush1.bf16.msra.mxu0 0
      %7040 = vmatprep.subr.bf16.mxu0 0
      %7041 = vmatpush1.bf16.msra.mxu0 0
      %7042 = vmatprep.subr.bf16.mxu0 0
      %7043 = vmatpush1.bf16.msra.mxu0 0
      %7044 = vmatprep.mubr.bf16.mxu0 0
      %7045 = vmatmul.mubr.bf16.gmra.mrb[0].mxu0 %v6965
      %v7046 = vpop.f32.mrb[0].mxu0
      %v7047 = vadd.f32 %v6826, %v7046
      %v7048 = vpop.f32.mrb[0].mxu0
      %v7049 = vpop.f32.mrb[0].mxu0
      %v7050 = vadd.f32 %v6829, %v7049
      %v7051 = vpop.f32.mrb[0].mxu0
      %7052 = vmatprep.mubr.bf16.mxu0 0
      %7053 = vmatmul.mubr.bf16.gmra.mrb[0].mxu0 %v6968
      %v7054 = vpop.f32.mrb[0].mxu0
      %v7055 = vadd.f32 %v6834, %v7054
      %v7056 = vpop.f32.mrb[0].mxu0
      %v7057 = vpop.f32.mrb[0].mxu0
      %v7058 = vadd.f32 %v6837, %v7057
      %v7059 = vpop.f32.mrb[0].mxu0
      %7060 = vmatprep.mubr.bf16.mxu0 0
      %7061 = vmatmul.mubr.bf16.gmra.mrb[0].mxu0 %v6971
      %v7062 = vpop.f32.mrb[0].mxu0
      %v7063 = vadd.f32 %v6842, %v7062
      %v7064 = vpop.f32.mrb[0].mxu0
      %v7065 = vpop.f32.mrb[0].mxu0
      %v7066 = vadd.f32 %v6845, %v7065
      %v7067 = vpop.f32.mrb[0].mxu0
      %7068 = vmatprep.mubr.bf16.mxu0 0
      %7069 = vmatmul.mubr.bf16.gmra.mrb[0].mxu0 %v6974
      %v7070 = vpop.f32.mrb[0].mxu0
      %v7071 = vadd.f32 %v6850, %v7070
      %v7072 = vpop.f32.mrb[0].mxu0
      %v7073 = vpop.f32.mrb[0].mxu0
      %v7074 = vadd.f32 %v6853, %v7073
      %v7075 = vpop.f32.mrb[0].mxu0
      %7076 = vmatprep.mubr.bf16.mxu0 0
      %7077 = vmatmul.mubr.bf16.gmra.mrb[0].mxu0 %v6977
      %v7078 = vpop.f32.mrb[0].mxu0
      %v7079 = vadd.f32 %v6858, %v7078
      %v7080 = vpop.f32.mrb[0].mxu0
      %v7081 = vpop.f32.mrb[0].mxu0
      %v7082 = vadd.f32 %v6861, %v7081
      %v7083 = vpop.f32.mrb[0].mxu0
      %7084 = vmatprep.mubr.bf16.mxu0 0
      %7085 = vmatmul.mubr.bf16.gmra.mrb[0].mxu0 %v6980
      %v7086 = vpop.f32.mrb[0].mxu0
      %v7087 = vadd.f32 %v6866, %v7086
      %v7088 = vpop.f32.mrb[0].mxu0
      %v7089 = vpop.f32.mrb[0].mxu0
      %v7090 = vadd.f32 %v6869, %v7089
      %v7091 = vpop.f32.mrb[0].mxu0
      %7092 = vmatprep.mubr.bf16.mxu0 0
      %7093 = vmatmul.mubr.bf16.gmra.mrb[0].mxu0 %v6983
      %v7094 = vpop.f32.mrb[0].mxu0
      %v7095 = vadd.f32 %v6874, %v7094
      %v7096 = vpop.f32.mrb[0].mxu0
      %v7097 = vpop.f32.mrb[0].mxu0
      %v7098 = vadd.f32 %v6877, %v7097
      %v7099 = vpop.f32.mrb[0].mxu0
      %7100 = vmatprep.mubr.bf16.mxu0 0
      %7101 = vmatmul.mubr.bf16.gmra.mrb[0].mxu0 %v6986
      %v7102 = vpop.f32.mrb[0].mxu0
      %v7103 = vadd.f32 %v6882, %v7102
      %v7104 = vpop.f32.mrb[0].mxu0
      %v7105 = vpop.f32.mrb[0].mxu0
      %v7106 = vadd.f32 %v6885, %v7105
      %v7107 = vpop.f32.mrb[0].mxu0
      %7108 = vmatprep.mubr.bf16.mxu0 0
      %7109 = vmatmul.mubr.bf16.gmra.mrb[0].mxu0 %v6989
      %v7110 = vpop.f32.mrb[0].mxu0
      %v7111 = vadd.f32 %v6890, %v7110
      %v7112 = vpop.f32.mrb[0].mxu0
      %v7113 = vpop.f32.mrb[0].mxu0
      %v7114 = vadd.f32 %v6893, %v7113
      %v7115 = vpop.f32.mrb[0].mxu0
      %7116 = vmatprep.mubr.bf16.mxu0 0
      %7117 = vmatmul.mubr.bf16.gmra.mrb[0].mxu0 %v6992
      %v7118 = vpop.f32.mrb[0].mxu0
      %v7119 = vadd.f32 %v6898, %v7118
      %v7120 = vpop.f32.mrb[0].mxu0
      %v7121 = vpop.f32.mrb[0].mxu0
      %v7122 = vadd.f32 %v6901, %v7121
      %v7123 = vpop.f32.mrb[0].mxu0
      %7124 = vmatprep.mubr.bf16.mxu0 0
      %7125 = vmatmul.mubr.bf16.gmra.mrb[0].mxu0 %v6995
      %v7126 = vpop.f32.mrb[0].mxu0
      %v7127 = vadd.f32 %v6906, %v7126
      %v7128 = vpop.f32.mrb[0].mxu0
      %v7129 = vpop.f32.mrb[0].mxu0
      %v7130 = vadd.f32 %v6909, %v7129
      %v7131 = vpop.f32.mrb[0].mxu0
      %7132 = vmatprep.mubr.bf16.mxu0 0
      %7133 = vmatmul.mubr.bf16.gmra.mrb[0].mxu0 %v6998
      %v7134 = vpop.f32.mrb[0].mxu0
      %v7135 = vadd.f32 %v6914, %v7134
      %v7136 = vpop.f32.mrb[0].mxu0
      %v7137 = vpop.f32.mrb[0].mxu0
      %v7138 = vadd.f32 %v6917, %v7137
      %v7139 = vpop.f32.mrb[0].mxu0
      %7140 = vmatprep.mubr.bf16.mxu0 0
      %7141 = vmatmul.mubr.bf16.gmra.mrb[0].mxu0 %v7001
      %v7142 = vpop.f32.mrb[0].mxu0
      %v7143 = vadd.f32 %v6922, %v7142
      %v7144 = vpop.f32.mrb[0].mxu0
      %v7145 = vpop.f32.mrb[0].mxu0
      %v7146 = vadd.f32 %v6925, %v7145
      %v7147 = vpop.f32.mrb[0].mxu0
      %7148 = vmatprep.mubr.bf16.mxu0 0
      %7149 = vmatmul.mubr.bf16.gmra.mrb[0].mxu0 %v7004
      %v7150 = vpop.f32.mrb[0].mxu0
      %v7151 = vadd.f32 %v6930, %v7150
      %v7152 = vpop.f32.mrb[0].mxu0
      %v7153 = vpop.f32.mrb[0].mxu0
      %v7154 = vadd.f32 %v6933, %v7153
      %v7155 = vpop.f32.mrb[0].mxu0
      %7156 = vmatprep.mubr.bf16.mxu0 0
      %7157 = vmatmul.mubr.bf16.gmra.mrb[0].mxu0 %v7007
      %v7158 = vpop.f32.mrb[0].mxu0
      %v7159 = vadd.f32 %v6938, %v7158
      %v7160 = vpop.f32.mrb[0].mxu0
      %v7161 = vpop.f32.mrb[0].mxu0
      %v7162 = vadd.f32 %v6941, %v7161
      %v7163 = vpop.f32.mrb[0].mxu0
      %7164 = vmatprep.mubr.bf16.mxu0 0
      %7165 = vmatmul.mubr.bf16.gmra.mrb[0].mxu0 %v7010
      %v7166 = vpop.f32.mrb[0].mxu0
      %v7167 = vadd.f32 %v6946, %v7166
      %v7168 = vpop.f32.mrb[0].mxu0
      %v7169 = vpop.f32.mrb[0].mxu0
      %v7170 = vadd.f32 %v6949, %v7169
      %v7171 = vpop.f32.mrb[0].mxu0
      %7172 = vdwg.mxu0
      %v7173 = vld [vmem:[#allocation4 + $0x2] sm:$0xff]
      %v7174 = vld [vmem:[#allocation4 + $0xa] sm:$0xff]
      %v7175 = vld [vmem:[#allocation4 + $0x1a] sm:$0xff]
      %v7176 = vld [vmem:[#allocation4 + $0x22] sm:$0xff]
      %v7177 = vld [vmem:[#allocation4 + $0x32] sm:$0xff]
      %v7178 = vld [vmem:[#allocation4 + $0x3a] sm:$0xff]
      %v7179 = vld [vmem:[#allocation4 + $0x4a] sm:$0xff]
      %v7180 = vld [vmem:[#allocation4 + $0x52] sm:$0xff]
      %v7181 = vld [vmem:[#allocation4 + $0x62] sm:$0xff]
      %v7182 = vld [vmem:[#allocation4 + $0x6a] sm:$0xff]
      %v7183 = vld [vmem:[#allocation4 + $0x7a] sm:$0xff]
      %v7184 = vld [vmem:[#allocation4 + $0x82] sm:$0xff]
      %v7185 = vld [vmem:[#allocation4 + $0x92] sm:$0xff]
      %v7186 = vld [vmem:[#allocation4 + $0x9a] sm:$0xff]
      %v7187 = vld [vmem:[#allocation4 + $0xaa] sm:$0xff]
      %v7188 = vld [vmem:[#allocation4 + $0xb2] sm:$0xff]
      %v7189 = vld [vmem:[#allocation4 + $0xc2] sm:$0xff]
      %v7190 = vld [vmem:[#allocation4 + $0xca] sm:$0xff]
      %v7191 = vld [vmem:[#allocation4 + $0xda] sm:$0xff]
      %v7192 = vld [vmem:[#allocation4 + $0xe2] sm:$0xff]
      %v7193 = vld [vmem:[#allocation4 + $0xf2] sm:$0xff]
      %v7194 = vld [vmem:[#allocation4 + $0xfa] sm:$0xff]
      %v7195 = vld [vmem:[#allocation4 + $0x10a] sm:$0xff]
      %v7196 = vld [vmem:[#allocation4 + $0x112] sm:$0xff]
      %v7197 = vld [vmem:[#allocation4 + $0x122] sm:$0xff]
      %v7198 = vld [vmem:[#allocation4 + $0x12a] sm:$0xff]
      %v7199 = vld [vmem:[#allocation4 + $0x13a] sm:$0xff]
      %v7200 = vld [vmem:[#allocation4 + $0x142] sm:$0xff]
      %v7201 = vld [vmem:[#allocation4 + $0x152] sm:$0xff]
      %v7202 = vld [vmem:[#allocation4 + $0x15a] sm:$0xff]
      %v7203 = vld [vmem:[#allocation4 + $0x16a] sm:$0xff]
      %v7204 = vld [vmem:[#allocation4 + $0x172] sm:$0xff]
      %v7205 = vpack.c.bf16 %v7174, %v7173
      %v7206 = vpack.c.bf16 %v7176, %v7175
      %v7207 = vpack.c.bf16 %v7178, %v7177
      %v7208 = vpack.c.bf16 %v7180, %v7179
      %v7209 = vpack.c.bf16 %v7182, %v7181
      %v7210 = vpack.c.bf16 %v7184, %v7183
      %v7211 = vpack.c.bf16 %v7186, %v7185
      %v7212 = vpack.c.bf16 %v7188, %v7187
      %v7213 = vpack.c.bf16 %v7190, %v7189
      %v7214 = vpack.c.bf16 %v7192, %v7191
      %v7215 = vpack.c.bf16 %v7194, %v7193
      %v7216 = vpack.c.bf16 %v7196, %v7195
      %v7217 = vpack.c.bf16 %v7198, %v7197
      %v7218 = vpack.c.bf16 %v7200, %v7199
      %v7219 = vpack.c.bf16 %v7202, %v7201
      %v7220 = vpack.c.bf16 %v7204, %v7203
      %s7221 = scalar_lea.vmem %s10, 32
      %v7222 = vld [vmem:[%s7221] sm:$0xf]
      %v7223 = vld [vmem:[%s7221 + $0x4] sm:$0xf]
      %v7224 = vld [vmem:[%s7221 + $0x8] sm:$0xf]
      %v7225 = vld [vmem:[%s7221 + $0xc] sm:$0xf]
      %v7230 = vunpack.c.l.b16 %v7222
      %v7231 = vunpack.c.l.b16 %v7223
      %v7232 = vunpack.c.l.b16 %v7224
      %v7233 = vunpack.c.l.b16 %v7225
      %v7234 = vpack.c.b16 %v7231, %v7230
      %v7235 = vpack.c.b16 %v7233, %v7232
      %v7239 = vsel %vm448, %v7205, 0
      %v7242 = vsel %vm448, %v7206, 0
      %v7245 = vsel %vm448, %v7207, 0
      %v7248 = vsel %vm448, %v7208, 0
      %v7251 = vsel %vm448, %v7209, 0
      %v7254 = vsel %vm448, %v7210, 0
      %v7257 = vsel %vm448, %v7211, 0
      %v7260 = vsel %vm448, %v7212, 0
      %v7263 = vsel %vm448, %v7213, 0
      %v7266 = vsel %vm448, %v7214, 0
      %v7269 = vsel %vm448, %v7215, 0
      %v7272 = vsel %vm448, %v7216, 0
      %v7275 = vsel %vm448, %v7217, 0
      %v7278 = vsel %vm448, %v7218, 0
      %v7281 = vsel %vm448, %v7219, 0
      %v7284 = vsel %vm448, %v7220, 0
      %7286 = vmatprep.subr.bf16.mxu0 0
      %7287 = vmatpush1.bf16.msra.mxu0 %v7234
      %7288 = vmatprep.subr.bf16.mxu0 0
      %7289 = vmatpush1.bf16.msra.mxu0 %v7235
      %7290 = vmatprep.subr.bf16.mxu0 0
      %7291 = vmatpush1.bf16.msra.mxu0 0
      %7292 = vmatprep.subr.bf16.mxu0 0
      %7293 = vmatpush1.bf16.msra.mxu0 0
      %7294 = vmatprep.subr.bf16.mxu0 0
      %7295 = vmatpush1.bf16.msra.mxu0 0
      %7296 = vmatprep.subr.bf16.mxu0 0
      %7297 = vmatpush1.bf16.msra.mxu0 0
      %7298 = vmatprep.subr.bf16.mxu0 0
      %7299 = vmatpush1.bf16.msra.mxu0 0
      %7300 = vmatprep.subr.bf16.mxu0 0
      %7301 = vmatpush1.bf16.msra.mxu0 0
      %7302 = vmatprep.subr.bf16.mxu0 0
      %7303 = vmatpush1.bf16.msra.mxu0 0
      %7304 = vmatprep.subr.bf16.mxu0 0
      %7305 = vmatpush1.bf16.msra.mxu0 0
      %7306 = vmatprep.subr.bf16.mxu0 0
      %7307 = vmatpush1.bf16.msra.mxu0 0
      %7308 = vmatprep.subr.bf16.mxu0 0
      %7309 = vmatpush1.bf16.msra.mxu0 0
      %7310 = vmatprep.subr.bf16.mxu0 0
      %7311 = vmatpush1.bf16.msra.mxu0 0
      %7312 = vmatprep.subr.bf16.mxu0 0
      %7313 = vmatpush1.bf16.msra.mxu0 0
      %7314 = vmatprep.subr.bf16.mxu0 0
      %7315 = vmatpush1.bf16.msra.mxu0 0
      %7316 = vmatprep.subr.bf16.mxu0 0
      %7317 = vmatpush1.bf16.msra.mxu0 0
      %7318 = vmatprep.mubr.bf16.mxu0 0
      %7319 = vmatmul.mubr.bf16.gmra.mrb[0].mxu0 %v7239
      %v7320 = vpop.f32.mrb[0].mxu0
      %v7321 = vadd.f32 0.0, %v7320
      %v7322 = vpop.f32.mrb[0].mxu0
      %v7323 = vpop.f32.mrb[0].mxu0
      %v7324 = vadd.f32 0.0, %v7323
      %v7325 = vpop.f32.mrb[0].mxu0
      %7326 = vmatprep.mubr.bf16.mxu0 0
      %7327 = vmatmul.mubr.bf16.gmra.mrb[0].mxu0 %v7242
      %v7328 = vpop.f32.mrb[0].mxu0
      %v7329 = vadd.f32 0.0, %v7328
      %v7330 = vpop.f32.mrb[0].mxu0
      %v7331 = vpop.f32.mrb[0].mxu0
      %v7332 = vadd.f32 0.0, %v7331
      %v7333 = vpop.f32.mrb[0].mxu0
      %7334 = vmatprep.mubr.bf16.mxu0 0
      %7335 = vmatmul.mubr.bf16.gmra.mrb[0].mxu0 %v7245
      %v7336 = vpop.f32.mrb[0].mxu0
      %v7337 = vadd.f32 0.0, %v7336
      %v7338 = vpop.f32.mrb[0].mxu0
      %v7339 = vpop.f32.mrb[0].mxu0
      %v7340 = vadd.f32 0.0, %v7339
      %v7341 = vpop.f32.mrb[0].mxu0
      %7342 = vmatprep.mubr.bf16.mxu0 0
      %7343 = vmatmul.mubr.bf16.gmra.mrb[0].mxu0 %v7248
      %v7344 = vpop.f32.mrb[0].mxu0
      %v7345 = vadd.f32 0.0, %v7344
      %v7346 = vpop.f32.mrb[0].mxu0
      %v7347 = vpop.f32.mrb[0].mxu0
      %v7348 = vadd.f32 0.0, %v7347
      %v7349 = vpop.f32.mrb[0].mxu0
      %7350 = vmatprep.mubr.bf16.mxu0 0
      %7351 = vmatmul.mubr.bf16.gmra.mrb[0].mxu0 %v7251
      %v7352 = vpop.f32.mrb[0].mxu0
      %v7353 = vadd.f32 0.0, %v7352
      %v7354 = vpop.f32.mrb[0].mxu0
      %v7355 = vpop.f32.mrb[0].mxu0
      %v7356 = vadd.f32 0.0, %v7355
      %v7357 = vpop.f32.mrb[0].mxu0
      %7358 = vmatprep.mubr.bf16.mxu0 0
      %7359 = vmatmul.mubr.bf16.gmra.mrb[0].mxu0 %v7254
      %v7360 = vpop.f32.mrb[0].mxu0
      %v7361 = vadd.f32 0.0, %v7360
      %v7362 = vpop.f32.mrb[0].mxu0
      %v7363 = vpop.f32.mrb[0].mxu0
      %v7364 = vadd.f32 0.0, %v7363
      %v7365 = vpop.f32.mrb[0].mxu0
      %7366 = vmatprep.mubr.bf16.mxu0 0
      %7367 = vmatmul.mubr.bf16.gmra.mrb[0].mxu0 %v7257
      %v7368 = vpop.f32.mrb[0].mxu0
      %v7369 = vadd.f32 0.0, %v7368
      %v7370 = vpop.f32.mrb[0].mxu0
      %v7371 = vpop.f32.mrb[0].mxu0
      %v7372 = vadd.f32 0.0, %v7371
      %v7373 = vpop.f32.mrb[0].mxu0
      %7374 = vmatprep.mubr.bf16.mxu0 0
      %7375 = vmatmul.mubr.bf16.gmra.mrb[0].mxu0 %v7260
      %v7376 = vpop.f32.mrb[0].mxu0
      %v7377 = vadd.f32 0.0, %v7376
      %v7378 = vpop.f32.mrb[0].mxu0
      %v7379 = vpop.f32.mrb[0].mxu0
      %v7380 = vadd.f32 0.0, %v7379
      %v7381 = vpop.f32.mrb[0].mxu0
      %7382 = vmatprep.mubr.bf16.mxu0 0
      %7383 = vmatmul.mubr.bf16.gmra.mrb[0].mxu0 %v7263
      %v7384 = vpop.f32.mrb[0].mxu0
      %v7385 = vadd.f32 0.0, %v7384
      %v7386 = vpop.f32.mrb[0].mxu0
      %v7387 = vpop.f32.mrb[0].mxu0
      %v7388 = vadd.f32 0.0, %v7387
      %v7389 = vpop.f32.mrb[0].mxu0
      %7390 = vmatprep.mubr.bf16.mxu0 0
      %7391 = vmatmul.mubr.bf16.gmra.mrb[0].mxu0 %v7266
      %v7392 = vpop.f32.mrb[0].mxu0
      %v7393 = vadd.f32 0.0, %v7392
      %v7394 = vpop.f32.mrb[0].mxu0
      %v7395 = vpop.f32.mrb[0].mxu0
      %v7396 = vadd.f32 0.0, %v7395
      %v7397 = vpop.f32.mrb[0].mxu0
      %7398 = vmatprep.mubr.bf16.mxu0 0
      %7399 = vmatmul.mubr.bf16.gmra.mrb[0].mxu0 %v7269
      %v7400 = vpop.f32.mrb[0].mxu0
      %v7401 = vadd.f32 0.0, %v7400
      %v7402 = vpop.f32.mrb[0].mxu0
      %v7403 = vpop.f32.mrb[0].mxu0
      %v7404 = vadd.f32 0.0, %v7403
      %v7405 = vpop.f32.mrb[0].mxu0
      %7406 = vmatprep.mubr.bf16.mxu0 0
      %7407 = vmatmul.mubr.bf16.gmra.mrb[0].mxu0 %v7272
      %v7408 = vpop.f32.mrb[0].mxu0
      %v7409 = vadd.f32 0.0, %v7408
      %v7410 = vpop.f32.mrb[0].mxu0
      %v7411 = vpop.f32.mrb[0].mxu0
      %v7412 = vadd.f32 0.0, %v7411
      %v7413 = vpop.f32.mrb[0].mxu0
      %7414 = vmatprep.mubr.bf16.mxu0 0
      %7415 = vmatmul.mubr.bf16.gmra.mrb[0].mxu0 %v7275
      %v7416 = vpop.f32.mrb[0].mxu0
      %v7417 = vadd.f32 0.0, %v7416
      %v7418 = vpop.f32.mrb[0].mxu0
      %v7419 = vpop.f32.mrb[0].mxu0
      %v7420 = vadd.f32 0.0, %v7419
      %v7421 = vpop.f32.mrb[0].mxu0
      %7422 = vmatprep.mubr.bf16.mxu0 0
      %7423 = vmatmul.mubr.bf16.gmra.mrb[0].mxu0 %v7278
      %v7424 = vpop.f32.mrb[0].mxu0
      %v7425 = vadd.f32 0.0, %v7424
      %v7426 = vpop.f32.mrb[0].mxu0
      %v7427 = vpop.f32.mrb[0].mxu0
      %v7428 = vadd.f32 0.0, %v7427
      %v7429 = vpop.f32.mrb[0].mxu0
      %7430 = vmatprep.mubr.bf16.mxu0 0
      %7431 = vmatmul.mubr.bf16.gmra.mrb[0].mxu0 %v7281
      %v7432 = vpop.f32.mrb[0].mxu0
      %v7433 = vadd.f32 0.0, %v7432
      %v7434 = vpop.f32.mrb[0].mxu0
      %v7435 = vpop.f32.mrb[0].mxu0
      %v7436 = vadd.f32 0.0, %v7435
      %v7437 = vpop.f32.mrb[0].mxu0
      %7438 = vmatprep.mubr.bf16.mxu0 0
      %7439 = vmatmul.mubr.bf16.gmra.mrb[0].mxu0 %v7284
      %v7440 = vpop.f32.mrb[0].mxu0
      %v7441 = vadd.f32 0.0, %v7440
      %v7442 = vpop.f32.mrb[0].mxu0
      %v7443 = vpop.f32.mrb[0].mxu0
      %v7444 = vadd.f32 0.0, %v7443
      %v7445 = vpop.f32.mrb[0].mxu0
      %7446 = vdwg.mxu0
      %v7447 = vadd.f32 %v7047, %v7321
      %v7448 = vadd.f32 %v7050, %v7324
      %v7449 = vadd.f32 %v7055, %v7329
      %v7450 = vadd.f32 %v7058, %v7332
      %v7451 = vadd.f32 %v7063, %v7337
      %v7452 = vadd.f32 %v7066, %v7340
      %v7453 = vadd.f32 %v7071, %v7345
      %v7454 = vadd.f32 %v7074, %v7348
      %v7455 = vadd.f32 %v7079, %v7353
      %v7456 = vadd.f32 %v7082, %v7356
      %v7457 = vadd.f32 %v7087, %v7361
      %v7458 = vadd.f32 %v7090, %v7364
      %v7459 = vadd.f32 %v7095, %v7369
      %v7460 = vadd.f32 %v7098, %v7372
      %v7461 = vadd.f32 %v7103, %v7377
      %v7462 = vadd.f32 %v7106, %v7380
      %v7463 = vadd.f32 %v7111, %v7385
      %v7464 = vadd.f32 %v7114, %v7388
      %v7465 = vadd.f32 %v7119, %v7393
      %v7466 = vadd.f32 %v7122, %v7396
      %v7467 = vadd.f32 %v7127, %v7401
      %v7468 = vadd.f32 %v7130, %v7404
      %v7469 = vadd.f32 %v7135, %v7409
      %v7470 = vadd.f32 %v7138, %v7412
      %v7471 = vadd.f32 %v7143, %v7417
      %v7472 = vadd.f32 %v7146, %v7420
      %v7473 = vadd.f32 %v7151, %v7425
      %v7474 = vadd.f32 %v7154, %v7428
      %v7475 = vadd.f32 %v7159, %v7433
      %v7476 = vadd.f32 %v7162, %v7436
      %v7477 = vadd.f32 %v7167, %v7441
      %v7478 = vadd.f32 %v7170, %v7444
      %v7479 = vld [vmem:[%s6593] sm:$0xff]
      %v7480 = vld [vmem:[%s6593 + $0x8] sm:$0xff]
      %v7481 = vld [vmem:[%s6593 + $0x18] sm:$0xff]
      %v7482 = vld [vmem:[%s6593 + $0x20] sm:$0xff]
      %v7483 = vld [vmem:[%s6593 + $0x30] sm:$0xff]
      %v7484 = vld [vmem:[%s6593 + $0x38] sm:$0xff]
      %v7485 = vld [vmem:[%s6593 + $0x48] sm:$0xff]
      %v7486 = vld [vmem:[%s6593 + $0x50] sm:$0xff]
      %v7487 = vld [vmem:[%s6593 + $0x60] sm:$0xff]
      %v7488 = vld [vmem:[%s6593 + $0x68] sm:$0xff]
      %v7489 = vld [vmem:[%s6593 + $0x78] sm:$0xff]
      %v7490 = vld [vmem:[%s6593 + $0x80] sm:$0xff]
      %v7491 = vld [vmem:[%s6593 + $0x90] sm:$0xff]
      %v7492 = vld [vmem:[%s6593 + $0x98] sm:$0xff]
      %v7493 = vld [vmem:[%s6593 + $0xa8] sm:$0xff]
      %v7494 = vld [vmem:[%s6593 + $0xb0] sm:$0xff]
      %v7495 = vld [vmem:[%s6593 + $0xc0] sm:$0xff]
      %v7496 = vld [vmem:[%s6593 + $0xc8] sm:$0xff]
      %v7497 = vld [vmem:[%s6593 + $0xd8] sm:$0xff]
      %v7498 = vld [vmem:[%s6593 + $0xe0] sm:$0xff]
      %v7499 = vld [vmem:[%s6593 + $0xf0] sm:$0xff]
      %v7500 = vld [vmem:[%s6593 + $0xf8] sm:$0xff]
      %v7501 = vld [vmem:[%s6593 + $0x108] sm:$0xff]
      %v7502 = vld [vmem:[%s6593 + $0x110] sm:$0xff]
      %v7503 = vld [vmem:[%s6593 + $0x120] sm:$0xff]
      %v7504 = vld [vmem:[%s6593 + $0x128] sm:$0xff]
      %v7505 = vld [vmem:[%s6593 + $0x138] sm:$0xff]
      %v7506 = vld [vmem:[%s6593 + $0x140] sm:$0xff]
      %v7507 = vld [vmem:[%s6593 + $0x150] sm:$0xff]
      %v7508 = vld [vmem:[%s6593 + $0x158] sm:$0xff]
      %v7509 = vld [vmem:[%s6593 + $0x168] sm:$0xff]
      %v7510 = vld [vmem:[%s6593 + $0x170] sm:$0xff]
      %v7511 = vpack.c.bf16 %v7480, %v7479
      %v7512 = vpack.c.bf16 %v7482, %v7481
      %v7513 = vpack.c.bf16 %v7484, %v7483
      %v7514 = vpack.c.bf16 %v7486, %v7485
      %v7515 = vpack.c.bf16 %v7488, %v7487
      %v7516 = vpack.c.bf16 %v7490, %v7489
      %v7517 = vpack.c.bf16 %v7492, %v7491
      %v7518 = vpack.c.bf16 %v7494, %v7493
      %v7519 = vpack.c.bf16 %v7496, %v7495
      %v7520 = vpack.c.bf16 %v7498, %v7497
      %v7521 = vpack.c.bf16 %v7500, %v7499
      %v7522 = vpack.c.bf16 %v7502, %v7501
      %v7523 = vpack.c.bf16 %v7504, %v7503
      %v7524 = vpack.c.bf16 %v7506, %v7505
      %v7525 = vpack.c.bf16 %v7508, %v7507
      %v7526 = vpack.c.bf16 %v7510, %v7509
      %s7527 = scalar_lea.vmem %s10, 48
      %v7528 = vld [vmem:[%s7527] sm:$0xf]
      %v7529 = vld [vmem:[%s7527 + $0x4] sm:$0xf]
      %v7530 = vld [vmem:[%s7527 + $0x8] sm:$0xf]
      %v7531 = vld [vmem:[%s7527 + $0xc] sm:$0xf]
      %v7536 = vunpack.c.l.b16 %v7528
      %v7537 = vunpack.c.l.b16 %v7529
      %v7538 = vunpack.c.l.b16 %v7530
      %v7539 = vunpack.c.l.b16 %v7531
      %v7540 = vpack.c.b16 %v7537, %v7536
      %v7541 = vpack.c.b16 %v7539, %v7538
      %v7545 = vsel %vm448, %v7511, 0
      %v7548 = vsel %vm448, %v7512, 0
      %v7551 = vsel %vm448, %v7513, 0
      %v7554 = vsel %vm448, %v7514, 0
      %v7557 = vsel %vm448, %v7515, 0
      %v7560 = vsel %vm448, %v7516, 0
      %v7563 = vsel %vm448, %v7517, 0
      %v7566 = vsel %vm448, %v7518, 0
      %v7569 = vsel %vm448, %v7519, 0
      %v7572 = vsel %vm448, %v7520, 0
      %v7575 = vsel %vm448, %v7521, 0
      %v7578 = vsel %vm448, %v7522, 0
      %v7581 = vsel %vm448, %v7523, 0
      %v7584 = vsel %vm448, %v7524, 0
      %v7587 = vsel %vm448, %v7525, 0
      %v7590 = vsel %vm448, %v7526, 0
      %7592 = vmatprep.subr.bf16.mxu0 0
      %7593 = vmatpush1.bf16.msra.mxu0 %v7540
      %7594 = vmatprep.subr.bf16.mxu0 0
      %7595 = vmatpush1.bf16.msra.mxu0 %v7541
      %7596 = vmatprep.subr.bf16.mxu0 0
      %7597 = vmatpush1.bf16.msra.mxu0 0
      %7598 = vmatprep.subr.bf16.mxu0 0
      %7599 = vmatpush1.bf16.msra.mxu0 0
      %7600 = vmatprep.subr.bf16.mxu0 0
      %7601 = vmatpush1.bf16.msra.mxu0 0
      %7602 = vmatprep.subr.bf16.mxu0 0
      %7603 = vmatpush1.bf16.msra.mxu0 0
      %7604 = vmatprep.subr.bf16.mxu0 0
      %7605 = vmatpush1.bf16.msra.mxu0 0
      %7606 = vmatprep.subr.bf16.mxu0 0
      %7607 = vmatpush1.bf16.msra.mxu0 0
      %7608 = vmatprep.subr.bf16.mxu0 0
      %7609 = vmatpush1.bf16.msra.mxu0 0
      %7610 = vmatprep.subr.bf16.mxu0 0
      %7611 = vmatpush1.bf16.msra.mxu0 0
      %7612 = vmatprep.subr.bf16.mxu0 0
      %7613 = vmatpush1.bf16.msra.mxu0 0
      %7614 = vmatprep.subr.bf16.mxu0 0
      %7615 = vmatpush1.bf16.msra.mxu0 0
      %7616 = vmatprep.subr.bf16.mxu0 0
      %7617 = vmatpush1.bf16.msra.mxu0 0
      %7618 = vmatprep.subr.bf16.mxu0 0
      %7619 = vmatpush1.bf16.msra.mxu0 0
      %7620 = vmatprep.subr.bf16.mxu0 0
      %7621 = vmatpush1.bf16.msra.mxu0 0
      %7622 = vmatprep.subr.bf16.mxu0 0
      %7623 = vmatpush1.bf16.msra.mxu0 0
      %7624 = vmatprep.mubr.bf16.mxu0 0
      %7625 = vmatmul.mubr.bf16.gmra.mrb[0].mxu0 %v7545
      %v7626 = vpop.f32.mrb[0].mxu0
      %v7627 = vadd.f32 0.0, %v7626
      %v7628 = vpop.f32.mrb[0].mxu0
      %v7629 = vpop.f32.mrb[0].mxu0
      %v7630 = vadd.f32 0.0, %v7629
      %v7631 = vpop.f32.mrb[0].mxu0
      %7632 = vmatprep.mubr.bf16.mxu0 0
      %7633 = vmatmul.mubr.bf16.gmra.mrb[0].mxu0 %v7548
      %v7634 = vpop.f32.mrb[0].mxu0
      %v7635 = vadd.f32 0.0, %v7634
      %v7636 = vpop.f32.mrb[0].mxu0
      %v7637 = vpop.f32.mrb[0].mxu0
      %v7638 = vadd.f32 0.0, %v7637
      %v7639 = vpop.f32.mrb[0].mxu0
      %7640 = vmatprep.mubr.bf16.mxu0 0
      %7641 = vmatmul.mubr.bf16.gmra.mrb[0].mxu0 %v7551
      %v7642 = vpop.f32.mrb[0].mxu0
      %v7643 = vadd.f32 0.0, %v7642
      %v7644 = vpop.f32.mrb[0].mxu0
      %v7645 = vpop.f32.mrb[0].mxu0
      %v7646 = vadd.f32 0.0, %v7645
      %v7647 = vpop.f32.mrb[0].mxu0
      %7648 = vmatprep.mubr.bf16.mxu0 0
      %7649 = vmatmul.mubr.bf16.gmra.mrb[0].mxu0 %v7554
      %v7650 = vpop.f32.mrb[0].mxu0
      %v7651 = vadd.f32 0.0, %v7650
      %v7652 = vpop.f32.mrb[0].mxu0
      %v7653 = vpop.f32.mrb[0].mxu0
      %v7654 = vadd.f32 0.0, %v7653
      %v7655 = vpop.f32.mrb[0].mxu0
      %7656 = vmatprep.mubr.bf16.mxu0 0
      %7657 = vmatmul.mubr.bf16.gmra.mrb[0].mxu0 %v7557
      %v7658 = vpop.f32.mrb[0].mxu0
      %v7659 = vadd.f32 0.0, %v7658
      %v7660 = vpop.f32.mrb[0].mxu0
      %v7661 = vpop.f32.mrb[0].mxu0
      %v7662 = vadd.f32 0.0, %v7661
      %v7663 = vpop.f32.mrb[0].mxu0
      %7664 = vmatprep.mubr.bf16.mxu0 0
      %7665 = vmatmul.mubr.bf16.gmra.mrb[0].mxu0 %v7560
      %v7666 = vpop.f32.mrb[0].mxu0
      %v7667 = vadd.f32 0.0, %v7666
      %v7668 = vpop.f32.mrb[0].mxu0
      %v7669 = vpop.f32.mrb[0].mxu0
      %v7670 = vadd.f32 0.0, %v7669
      %v7671 = vpop.f32.mrb[0].mxu0
      %7672 = vmatprep.mubr.bf16.mxu0 0
      %7673 = vmatmul.mubr.bf16.gmra.mrb[0].mxu0 %v7563
      %v7674 = vpop.f32.mrb[0].mxu0
      %v7675 = vadd.f32 0.0, %v7674
      %v7676 = vpop.f32.mrb[0].mxu0
      %v7677 = vpop.f32.mrb[0].mxu0
      %v7678 = vadd.f32 0.0, %v7677
      %v7679 = vpop.f32.mrb[0].mxu0
      %7680 = vmatprep.mubr.bf16.mxu0 0
      %7681 = vmatmul.mubr.bf16.gmra.mrb[0].mxu0 %v7566
      %v7682 = vpop.f32.mrb[0].mxu0
      %v7683 = vadd.f32 0.0, %v7682
      %v7684 = vpop.f32.mrb[0].mxu0
      %v7685 = vpop.f32.mrb[0].mxu0
      %v7686 = vadd.f32 0.0, %v7685
      %v7687 = vpop.f32.mrb[0].mxu0
      %7688 = vmatprep.mubr.bf16.mxu0 0
      %7689 = vmatmul.mubr.bf16.gmra.mrb[0].mxu0 %v7569
      %v7690 = vpop.f32.mrb[0].mxu0
      %v7691 = vadd.f32 0.0, %v7690
      %v7692 = vpop.f32.mrb[0].mxu0
      %v7693 = vpop.f32.mrb[0].mxu0
      %v7694 = vadd.f32 0.0, %v7693
      %v7695 = vpop.f32.mrb[0].mxu0
      %7696 = vmatprep.mubr.bf16.mxu0 0
      %7697 = vmatmul.mubr.bf16.gmra.mrb[0].mxu0 %v7572
      %v7698 = vpop.f32.mrb[0].mxu0
      %v7699 = vadd.f32 0.0, %v7698
      %v7700 = vpop.f32.mrb[0].mxu0
      %v7701 = vpop.f32.mrb[0].mxu0
      %v7702 = vadd.f32 0.0, %v7701
      %v7703 = vpop.f32.mrb[0].mxu0
      %7704 = vmatprep.mubr.bf16.mxu0 0
      %7705 = vmatmul.mubr.bf16.gmra.mrb[0].mxu0 %v7575
      %v7706 = vpop.f32.mrb[0].mxu0
      %v7707 = vadd.f32 0.0, %v7706
      %v7708 = vpop.f32.mrb[0].mxu0
      %v7709 = vpop.f32.mrb[0].mxu0
      %v7710 = vadd.f32 0.0, %v7709
      %v7711 = vpop.f32.mrb[0].mxu0
      %7712 = vmatprep.mubr.bf16.mxu0 0
      %7713 = vmatmul.mubr.bf16.gmra.mrb[0].mxu0 %v7578
      %v7714 = vpop.f32.mrb[0].mxu0
      %v7715 = vadd.f32 0.0, %v7714
      %v7716 = vpop.f32.mrb[0].mxu0
      %v7717 = vpop.f32.mrb[0].mxu0
      %v7718 = vadd.f32 0.0, %v7717
      %v7719 = vpop.f32.mrb[0].mxu0
      %7720 = vmatprep.mubr.bf16.mxu0 0
      %7721 = vmatmul.mubr.bf16.gmra.mrb[0].mxu0 %v7581
      %v7722 = vpop.f32.mrb[0].mxu0
      %v7723 = vadd.f32 0.0, %v7722
      %v7724 = vpop.f32.mrb[0].mxu0
      %v7725 = vpop.f32.mrb[0].mxu0
      %v7726 = vadd.f32 0.0, %v7725
      %v7727 = vpop.f32.mrb[0].mxu0
      %7728 = vmatprep.mubr.bf16.mxu0 0
      %7729 = vmatmul.mubr.bf16.gmra.mrb[0].mxu0 %v7584
      %v7730 = vpop.f32.mrb[0].mxu0
      %v7731 = vadd.f32 0.0, %v7730
      %v7732 = vpop.f32.mrb[0].mxu0
      %v7733 = vpop.f32.mrb[0].mxu0
      %v7734 = vadd.f32 0.0, %v7733
      %v7735 = vpop.f32.mrb[0].mxu0
      %7736 = vmatprep.mubr.bf16.mxu0 0
      %7737 = vmatmul.mubr.bf16.gmra.mrb[0].mxu0 %v7587
      %v7738 = vpop.f32.mrb[0].mxu0
      %v7739 = vadd.f32 0.0, %v7738
      %v7740 = vpop.f32.mrb[0].mxu0
      %v7741 = vpop.f32.mrb[0].mxu0
      %v7742 = vadd.f32 0.0, %v7741
      %v7743 = vpop.f32.mrb[0].mxu0
      %7744 = vmatprep.mubr.bf16.mxu0 0
      %7745 = vmatmul.mubr.bf16.gmra.mrb[0].mxu0 %v7590
      %v7746 = vpop.f32.mrb[0].mxu0
      %v7747 = vadd.f32 0.0, %v7746
      %v7748 = vpop.f32.mrb[0].mxu0
      %v7749 = vpop.f32.mrb[0].mxu0
      %v7750 = vadd.f32 0.0, %v7749
      %v7751 = vpop.f32.mrb[0].mxu0
      %7752 = vdwg.mxu0
      %v7753 = vadd.f32 %v7447, %v7627
      %v7754 = vadd.f32 %v7448, %v7630
      %v7755 = vadd.f32 %v7449, %v7635
      %v7756 = vadd.f32 %v7450, %v7638
      %v7757 = vadd.f32 %v7451, %v7643
      %v7758 = vadd.f32 %v7452, %v7646
      %v7759 = vadd.f32 %v7453, %v7651
      %v7760 = vadd.f32 %v7454, %v7654
      %v7761 = vadd.f32 %v7455, %v7659
      %v7762 = vadd.f32 %v7456, %v7662
      %v7763 = vadd.f32 %v7457, %v7667
      %v7764 = vadd.f32 %v7458, %v7670
      %v7765 = vadd.f32 %v7459, %v7675
      %v7766 = vadd.f32 %v7460, %v7678
      %v7767 = vadd.f32 %v7461, %v7683
      %v7768 = vadd.f32 %v7462, %v7686
      %v7769 = vadd.f32 %v7463, %v7691
      %v7770 = vadd.f32 %v7464, %v7694
      %v7771 = vadd.f32 %v7465, %v7699
      %v7772 = vadd.f32 %v7466, %v7702
      %v7773 = vadd.f32 %v7467, %v7707
      %v7774 = vadd.f32 %v7468, %v7710
      %v7775 = vadd.f32 %v7469, %v7715
      %v7776 = vadd.f32 %v7470, %v7718
      %v7777 = vadd.f32 %v7471, %v7723
      %v7778 = vadd.f32 %v7472, %v7726
      %v7779 = vadd.f32 %v7473, %v7731
      %v7780 = vadd.f32 %v7474, %v7734
      %v7781 = vadd.f32 %v7475, %v7739
      %v7782 = vadd.f32 %v7476, %v7742
      %v7783 = vadd.f32 %v7477, %v7747
      %v7784 = vadd.f32 %v7478, %v7750
      %v7785 = vld [vmem:[%s6593 + $0x1] sm:$0xff]
      %v7786 = vld [vmem:[%s6593 + $0x9] sm:$0xff]
      %v7787 = vld [vmem:[%s6593 + $0x19] sm:$0xff]
      %v7788 = vld [vmem:[%s6593 + $0x21] sm:$0xff]
      %v7789 = vld [vmem:[%s6593 + $0x31] sm:$0xff]
      %v7790 = vld [vmem:[%s6593 + $0x39] sm:$0xff]
      %v7791 = vld [vmem:[%s6593 + $0x49] sm:$0xff]
      %v7792 = vld [vmem:[%s6593 + $0x51] sm:$0xff]
      %v7793 = vld [vmem:[%s6593 + $0x61] sm:$0xff]
      %v7794 = vld [vmem:[%s6593 + $0x69] sm:$0xff]
      %v7795 = vld [vmem:[%s6593 + $0x79] sm:$0xff]
      %v7796 = vld [vmem:[%s6593 + $0x81] sm:$0xff]
      %v7797 = vld [vmem:[%s6593 + $0x91] sm:$0xff]
      %v7798 = vld [vmem:[%s6593 + $0x99] sm:$0xff]
      %v7799 = vld [vmem:[%s6593 + $0xa9] sm:$0xff]
      %v7800 = vld [vmem:[%s6593 + $0xb1] sm:$0xff]
      %v7801 = vld [vmem:[%s6593 + $0xc1] sm:$0xff]
      %v7802 = vld [vmem:[%s6593 + $0xc9] sm:$0xff]
      %v7803 = vld [vmem:[%s6593 + $0xd9] sm:$0xff]
      %v7804 = vld [vmem:[%s6593 + $0xe1] sm:$0xff]
      %v7805 = vld [vmem:[%s6593 + $0xf1] sm:$0xff]
      %v7806 = vld [vmem:[%s6593 + $0xf9] sm:$0xff]
      %v7807 = vld [vmem:[%s6593 + $0x109] sm:$0xff]
      %v7808 = vld [vmem:[%s6593 + $0x111] sm:$0xff]
      %v7809 = vld [vmem:[%s6593 + $0x121] sm:$0xff]
      %v7810 = vld [vmem:[%s6593 + $0x129] sm:$0xff]
      %v7811 = vld [vmem:[%s6593 + $0x139] sm:$0xff]
      %v7812 = vld [vmem:[%s6593 + $0x141] sm:$0xff]
      %v7813 = vld [vmem:[%s6593 + $0x151] sm:$0xff]
      %v7814 = vld [vmem:[%s6593 + $0x159] sm:$0xff]
      %v7815 = vld [vmem:[%s6593 + $0x169] sm:$0xff]
      %v7816 = vld [vmem:[%s6593 + $0x171] sm:$0xff]
      %v7817 = vpack.c.bf16 %v7786, %v7785
      %v7818 = vpack.c.bf16 %v7788, %v7787
      %v7819 = vpack.c.bf16 %v7790, %v7789
      %v7820 = vpack.c.bf16 %v7792, %v7791
      %v7821 = vpack.c.bf16 %v7794, %v7793
      %v7822 = vpack.c.bf16 %v7796, %v7795
      %v7823 = vpack.c.bf16 %v7798, %v7797
      %v7824 = vpack.c.bf16 %v7800, %v7799
      %v7825 = vpack.c.bf16 %v7802, %v7801
      %v7826 = vpack.c.bf16 %v7804, %v7803
      %v7827 = vpack.c.bf16 %v7806, %v7805
      %v7828 = vpack.c.bf16 %v7808, %v7807
      %v7829 = vpack.c.bf16 %v7810, %v7809
      %v7830 = vpack.c.bf16 %v7812, %v7811
      %v7831 = vpack.c.bf16 %v7814, %v7813
      %v7832 = vpack.c.bf16 %v7816, %v7815
      %s7833 = scalar_lea.vmem %s10, 64
      %v7834 = vld [vmem:[%s7833] sm:$0xf]
      %v7835 = vld [vmem:[%s7833 + $0x4] sm:$0xf]
      %v7836 = vld [vmem:[%s7833 + $0x8] sm:$0xf]
      %v7837 = vld [vmem:[%s7833 + $0xc] sm:$0xf]
      %v7842 = vunpack.c.l.b16 %v7834
      %v7843 = vunpack.c.l.b16 %v7835
      %v7844 = vunpack.c.l.b16 %v7836
      %v7845 = vunpack.c.l.b16 %v7837
      %v7846 = vpack.c.b16 %v7843, %v7842
      %v7847 = vpack.c.b16 %v7845, %v7844
      %v7851 = vsel %vm448, %v7817, 0
      %v7854 = vsel %vm448, %v7818, 0
      %v7857 = vsel %vm448, %v7819, 0
      %v7860 = vsel %vm448, %v7820, 0
      %v7863 = vsel %vm448, %v7821, 0
      %v7866 = vsel %vm448, %v7822, 0
      %v7869 = vsel %vm448, %v7823, 0
      %v7872 = vsel %vm448, %v7824, 0
      %v7875 = vsel %vm448, %v7825, 0
      %v7878 = vsel %vm448, %v7826, 0
      %v7881 = vsel %vm448, %v7827, 0
      %v7884 = vsel %vm448, %v7828, 0
      %v7887 = vsel %vm448, %v7829, 0
      %v7890 = vsel %vm448, %v7830, 0
      %v7893 = vsel %vm448, %v7831, 0
      %v7896 = vsel %vm448, %v7832, 0
      %7898 = vmatprep.subr.bf16.mxu0 0
      %7899 = vmatpush1.bf16.msra.mxu0 %v7846
      %7900 = vmatprep.subr.bf16.mxu0 0
      %7901 = vmatpush1.bf16.msra.mxu0 %v7847
      %7902 = vmatprep.subr.bf16.mxu0 0
      %7903 = vmatpush1.bf16.msra.mxu0 0
      %7904 = vmatprep.subr.bf16.mxu0 0
      %7905 = vmatpush1.bf16.msra.mxu0 0
      %7906 = vmatprep.subr.bf16.mxu0 0
      %7907 = vmatpush1.bf16.msra.mxu0 0
      %7908 = vmatprep.subr.bf16.mxu0 0
      %7909 = vmatpush1.bf16.msra.mxu0 0
      %7910 = vmatprep.subr.bf16.mxu0 0
      %7911 = vmatpush1.bf16.msra.mxu0 0
      %7912 = vmatprep.subr.bf16.mxu0 0
      %7913 = vmatpush1.bf16.msra.mxu0 0
      %7914 = vmatprep.subr.bf16.mxu0 0
      %7915 = vmatpush1.bf16.msra.mxu0 0
      %7916 = vmatprep.subr.bf16.mxu0 0
      %7917 = vmatpush1.bf16.msra.mxu0 0
      %7918 = vmatprep.subr.bf16.mxu0 0
      %7919 = vmatpush1.bf16.msra.mxu0 0
      %7920 = vmatprep.subr.bf16.mxu0 0
      %7921 = vmatpush1.bf16.msra.mxu0 0
      %7922 = vmatprep.subr.bf16.mxu0 0
      %7923 = vmatpush1.bf16.msra.mxu0 0
      %7924 = vmatprep.subr.bf16.mxu0 0
      %7925 = vmatpush1.bf16.msra.mxu0 0
      %7926 = vmatprep.subr.bf16.mxu0 0
      %7927 = vmatpush1.bf16.msra.mxu0 0
      %7928 = vmatprep.subr.bf16.mxu0 0
      %7929 = vmatpush1.bf16.msra.mxu0 0
      %7930 = vmatprep.mubr.bf16.mxu0 0
      %7931 = vmatmul.mubr.bf16.gmra.mrb[0].mxu0 %v7851
      %v7932 = vpop.f32.mrb[0].mxu0
      %v7933 = vadd.f32 0.0, %v7932
      %v7934 = vpop.f32.mrb[0].mxu0
      %v7935 = vpop.f32.mrb[0].mxu0
      %v7936 = vadd.f32 0.0, %v7935
      %v7937 = vpop.f32.mrb[0].mxu0
      %7938 = vmatprep.mubr.bf16.mxu0 0
      %7939 = vmatmul.mubr.bf16.gmra.mrb[0].mxu0 %v7854
      %v7940 = vpop.f32.mrb[0].mxu0
      %v7941 = vadd.f32 0.0, %v7940
      %v7942 = vpop.f32.mrb[0].mxu0
      %v7943 = vpop.f32.mrb[0].mxu0
      %v7944 = vadd.f32 0.0, %v7943
      %v7945 = vpop.f32.mrb[0].mxu0
      %7946 = vmatprep.mubr.bf16.mxu0 0
      %7947 = vmatmul.mubr.bf16.gmra.mrb[0].mxu0 %v7857
      %v7948 = vpop.f32.mrb[0].mxu0
      %v7949 = vadd.f32 0.0, %v7948
      %v7950 = vpop.f32.mrb[0].mxu0
      %v7951 = vpop.f32.mrb[0].mxu0
      %v7952 = vadd.f32 0.0, %v7951
      %v7953 = vpop.f32.mrb[0].mxu0
      %7954 = vmatprep.mubr.bf16.mxu0 0
      %7955 = vmatmul.mubr.bf16.gmra.mrb[0].mxu0 %v7860
      %v7956 = vpop.f32.mrb[0].mxu0
      %v7957 = vadd.f32 0.0, %v7956
      %v7958 = vpop.f32.mrb[0].mxu0
      %v7959 = vpop.f32.mrb[0].mxu0
      %v7960 = vadd.f32 0.0, %v7959
      %v7961 = vpop.f32.mrb[0].mxu0
      %7962 = vmatprep.mubr.bf16.mxu0 0
      %7963 = vmatmul.mubr.bf16.gmra.mrb[0].mxu0 %v7863
      %v7964 = vpop.f32.mrb[0].mxu0
      %v7965 = vadd.f32 0.0, %v7964
      %v7966 = vpop.f32.mrb[0].mxu0
      %v7967 = vpop.f32.mrb[0].mxu0
      %v7968 = vadd.f32 0.0, %v7967
      %v7969 = vpop.f32.mrb[0].mxu0
      %7970 = vmatprep.mubr.bf16.mxu0 0
      %7971 = vmatmul.mubr.bf16.gmra.mrb[0].mxu0 %v7866
      %v7972 = vpop.f32.mrb[0].mxu0
      %v7973 = vadd.f32 0.0, %v7972
      %v7974 = vpop.f32.mrb[0].mxu0
      %v7975 = vpop.f32.mrb[0].mxu0
      %v7976 = vadd.f32 0.0, %v7975
      %v7977 = vpop.f32.mrb[0].mxu0
      %7978 = vmatprep.mubr.bf16.mxu0 0
      %7979 = vmatmul.mubr.bf16.gmra.mrb[0].mxu0 %v7869
      %v7980 = vpop.f32.mrb[0].mxu0
      %v7981 = vadd.f32 0.0, %v7980
      %v7982 = vpop.f32.mrb[0].mxu0
      %v7983 = vpop.f32.mrb[0].mxu0
      %v7984 = vadd.f32 0.0, %v7983
      %v7985 = vpop.f32.mrb[0].mxu0
      %7986 = vmatprep.mubr.bf16.mxu0 0
      %7987 = vmatmul.mubr.bf16.gmra.mrb[0].mxu0 %v7872
      %v7988 = vpop.f32.mrb[0].mxu0
      %v7989 = vadd.f32 0.0, %v7988
      %v7990 = vpop.f32.mrb[0].mxu0
      %v7991 = vpop.f32.mrb[0].mxu0
      %v7992 = vadd.f32 0.0, %v7991
      %v7993 = vpop.f32.mrb[0].mxu0
      %7994 = vmatprep.mubr.bf16.mxu0 0
      %7995 = vmatmul.mubr.bf16.gmra.mrb[0].mxu0 %v7875
      %v7996 = vpop.f32.mrb[0].mxu0
      %v7997 = vadd.f32 0.0, %v7996
      %v7998 = vpop.f32.mrb[0].mxu0
      %v7999 = vpop.f32.mrb[0].mxu0
      %v8000 = vadd.f32 0.0, %v7999
      %v8001 = vpop.f32.mrb[0].mxu0
      %8002 = vmatprep.mubr.bf16.mxu0 0
      %8003 = vmatmul.mubr.bf16.gmra.mrb[0].mxu0 %v7878
      %v8004 = vpop.f32.mrb[0].mxu0
      %v8005 = vadd.f32 0.0, %v8004
      %v8006 = vpop.f32.mrb[0].mxu0
      %v8007 = vpop.f32.mrb[0].mxu0
      %v8008 = vadd.f32 0.0, %v8007
      %v8009 = vpop.f32.mrb[0].mxu0
      %8010 = vmatprep.mubr.bf16.mxu0 0
      %8011 = vmatmul.mubr.bf16.gmra.mrb[0].mxu0 %v7881
      %v8012 = vpop.f32.mrb[0].mxu0
      %v8013 = vadd.f32 0.0, %v8012
      %v8014 = vpop.f32.mrb[0].mxu0
      %v8015 = vpop.f32.mrb[0].mxu0
      %v8016 = vadd.f32 0.0, %v8015
      %v8017 = vpop.f32.mrb[0].mxu0
      %8018 = vmatprep.mubr.bf16.mxu0 0
      %8019 = vmatmul.mubr.bf16.gmra.mrb[0].mxu0 %v7884
      %v8020 = vpop.f32.mrb[0].mxu0
      %v8021 = vadd.f32 0.0, %v8020
      %v8022 = vpop.f32.mrb[0].mxu0
      %v8023 = vpop.f32.mrb[0].mxu0
      %v8024 = vadd.f32 0.0, %v8023
      %v8025 = vpop.f32.mrb[0].mxu0
      %8026 = vmatprep.mubr.bf16.mxu0 0
      %8027 = vmatmul.mubr.bf16.gmra.mrb[0].mxu0 %v7887
      %v8028 = vpop.f32.mrb[0].mxu0
      %v8029 = vadd.f32 0.0, %v8028
      %v8030 = vpop.f32.mrb[0].mxu0
      %v8031 = vpop.f32.mrb[0].mxu0
      %v8032 = vadd.f32 0.0, %v8031
      %v8033 = vpop.f32.mrb[0].mxu0
      %8034 = vmatprep.mubr.bf16.mxu0 0
      %8035 = vmatmul.mubr.bf16.gmra.mrb[0].mxu0 %v7890
      %v8036 = vpop.f32.mrb[0].mxu0
      %v8037 = vadd.f32 0.0, %v8036
      %v8038 = vpop.f32.mrb[0].mxu0
      %v8039 = vpop.f32.mrb[0].mxu0
      %v8040 = vadd.f32 0.0, %v8039
      %v8041 = vpop.f32.mrb[0].mxu0
      %8042 = vmatprep.mubr.bf16.mxu0 0
      %8043 = vmatmul.mubr.bf16.gmra.mrb[0].mxu0 %v7893
      %v8044 = vpop.f32.mrb[0].mxu0
      %v8045 = vadd.f32 0.0, %v8044
      %v8046 = vpop.f32.mrb[0].mxu0
      %v8047 = vpop.f32.mrb[0].mxu0
      %v8048 = vadd.f32 0.0, %v8047
      %v8049 = vpop.f32.mrb[0].mxu0
      %8050 = vmatprep.mubr.bf16.mxu0 0
      %8051 = vmatmul.mubr.bf16.gmra.mrb[0].mxu0 %v7896
      %v8052 = vpop.f32.mrb[0].mxu0
      %v8053 = vadd.f32 0.0, %v8052
      %v8054 = vpop.f32.mrb[0].mxu0
      %v8055 = vpop.f32.mrb[0].mxu0
      %v8056 = vadd.f32 0.0, %v8055
      %v8057 = vpop.f32.mrb[0].mxu0
      %8058 = vdwg.mxu0
      %v8059 = vadd.f32 %v7753, %v7933
      %v8060 = vadd.f32 %v7754, %v7936
      %v8061 = vadd.f32 %v7755, %v7941
      %v8062 = vadd.f32 %v7756, %v7944
      %v8063 = vadd.f32 %v7757, %v7949
      %v8064 = vadd.f32 %v7758, %v7952
      %v8065 = vadd.f32 %v7759, %v7957
      %v8066 = vadd.f32 %v7760, %v7960
      %v8067 = vadd.f32 %v7761, %v7965
      %v8068 = vadd.f32 %v7762, %v7968
      %v8069 = vadd.f32 %v7763, %v7973
      %v8070 = vadd.f32 %v7764, %v7976
      %v8071 = vadd.f32 %v7765, %v7981
      %v8072 = vadd.f32 %v7766, %v7984
      %v8073 = vadd.f32 %v7767, %v7989
      %v8074 = vadd.f32 %v7768, %v7992
      %v8075 = vadd.f32 %v7769, %v7997
      %v8076 = vadd.f32 %v7770, %v8000
      %v8077 = vadd.f32 %v7771, %v8005
      %v8078 = vadd.f32 %v7772, %v8008
      %v8079 = vadd.f32 %v7773, %v8013
      %v8080 = vadd.f32 %v7774, %v8016
      %v8081 = vadd.f32 %v7775, %v8021
      %v8082 = vadd.f32 %v7776, %v8024
      %v8083 = vadd.f32 %v7777, %v8029
      %v8084 = vadd.f32 %v7778, %v8032
      %v8085 = vadd.f32 %v7779, %v8037
      %v8086 = vadd.f32 %v7780, %v8040
      %v8087 = vadd.f32 %v7781, %v8045
      %v8088 = vadd.f32 %v7782, %v8048
      %v8089 = vadd.f32 %v7783, %v8053
      %v8090 = vadd.f32 %v7784, %v8056
      %v8091 = vld [vmem:[%s6593 + $0x2] sm:$0xff]
      %v8092 = vld [vmem:[%s6593 + $0xa] sm:$0xff]
      %v8093 = vld [vmem:[%s6593 + $0x1a] sm:$0xff]
      %v8094 = vld [vmem:[%s6593 + $0x22] sm:$0xff]
      %v8095 = vld [vmem:[%s6593 + $0x32] sm:$0xff]
      %v8096 = vld [vmem:[%s6593 + $0x3a] sm:$0xff]
      %v8097 = vld [vmem:[%s6593 + $0x4a] sm:$0xff]
      %v8098 = vld [vmem:[%s6593 + $0x52] sm:$0xff]
      %v8099 = vld [vmem:[%s6593 + $0x62] sm:$0xff]
      %v8100 = vld [vmem:[%s6593 + $0x6a] sm:$0xff]
      %v8101 = vld [vmem:[%s6593 + $0x7a] sm:$0xff]
      %v8102 = vld [vmem:[%s6593 + $0x82] sm:$0xff]
      %v8103 = vld [vmem:[%s6593 + $0x92] sm:$0xff]
      %v8104 = vld [vmem:[%s6593 + $0x9a] sm:$0xff]
      %v8105 = vld [vmem:[%s6593 + $0xaa] sm:$0xff]
      %v8106 = vld [vmem:[%s6593 + $0xb2] sm:$0xff]
      %v8107 = vld [vmem:[%s6593 + $0xc2] sm:$0xff]
      %v8108 = vld [vmem:[%s6593 + $0xca] sm:$0xff]
      %v8109 = vld [vmem:[%s6593 + $0xda] sm:$0xff]
      %v8110 = vld [vmem:[%s6593 + $0xe2] sm:$0xff]
      %v8111 = vld [vmem:[%s6593 + $0xf2] sm:$0xff]
      %v8112 = vld [vmem:[%s6593 + $0xfa] sm:$0xff]
      %v8113 = vld [vmem:[%s6593 + $0x10a] sm:$0xff]
      %v8114 = vld [vmem:[%s6593 + $0x112] sm:$0xff]
      %v8115 = vld [vmem:[%s6593 + $0x122] sm:$0xff]
      %v8116 = vld [vmem:[%s6593 + $0x12a] sm:$0xff]
      %v8117 = vld [vmem:[%s6593 + $0x13a] sm:$0xff]
      %v8118 = vld [vmem:[%s6593 + $0x142] sm:$0xff]
      %v8119 = vld [vmem:[%s6593 + $0x152] sm:$0xff]
      %v8120 = vld [vmem:[%s6593 + $0x15a] sm:$0xff]
      %v8121 = vld [vmem:[%s6593 + $0x16a] sm:$0xff]
      %v8122 = vld [vmem:[%s6593 + $0x172] sm:$0xff]
      %v8123 = vpack.c.bf16 %v8092, %v8091
      %v8124 = vpack.c.bf16 %v8094, %v8093
      %v8125 = vpack.c.bf16 %v8096, %v8095
      %v8126 = vpack.c.bf16 %v8098, %v8097
      %v8127 = vpack.c.bf16 %v8100, %v8099
      %v8128 = vpack.c.bf16 %v8102, %v8101
      %v8129 = vpack.c.bf16 %v8104, %v8103
      %v8130 = vpack.c.bf16 %v8106, %v8105
      %v8131 = vpack.c.bf16 %v8108, %v8107
      %v8132 = vpack.c.bf16 %v8110, %v8109
      %v8133 = vpack.c.bf16 %v8112, %v8111
      %v8134 = vpack.c.bf16 %v8114, %v8113
      %v8135 = vpack.c.bf16 %v8116, %v8115
      %v8136 = vpack.c.bf16 %v8118, %v8117
      %v8137 = vpack.c.bf16 %v8120, %v8119
      %v8138 = vpack.c.bf16 %v8122, %v8121
      %s8139 = scalar_lea.vmem %s10, 80
      %v8140 = vld [vmem:[%s8139] sm:$0xf]
      %v8141 = vld [vmem:[%s8139 + $0x4] sm:$0xf]
      %v8142 = vld [vmem:[%s8139 + $0x8] sm:$0xf]
      %v8143 = vld [vmem:[%s8139 + $0xc] sm:$0xf]
      %v8148 = vunpack.c.l.b16 %v8140
      %v8149 = vunpack.c.l.b16 %v8141
      %v8150 = vunpack.c.l.b16 %v8142
      %v8151 = vunpack.c.l.b16 %v8143
      %v8152 = vpack.c.b16 %v8149, %v8148
      %v8153 = vpack.c.b16 %v8151, %v8150
      %v8157 = vsel %vm448, %v8123, 0
      %v8160 = vsel %vm448, %v8124, 0
      %v8163 = vsel %vm448, %v8125, 0
      %v8166 = vsel %vm448, %v8126, 0
      %v8169 = vsel %vm448, %v8127, 0
      %v8172 = vsel %vm448, %v8128, 0
      %v8175 = vsel %vm448, %v8129, 0
      %v8178 = vsel %vm448, %v8130, 0
      %v8181 = vsel %vm448, %v8131, 0
      %v8184 = vsel %vm448, %v8132, 0
      %v8187 = vsel %vm448, %v8133, 0
      %v8190 = vsel %vm448, %v8134, 0
      %v8193 = vsel %vm448, %v8135, 0
      %v8196 = vsel %vm448, %v8136, 0
      %v8199 = vsel %vm448, %v8137, 0
      %v8202 = vsel %vm448, %v8138, 0
      %8204 = vmatprep.subr.bf16.mxu0 0
      %8205 = vmatpush1.bf16.msra.mxu0 %v8152
      %8206 = vmatprep.subr.bf16.mxu0 0
      %8207 = vmatpush1.bf16.msra.mxu0 %v8153
      %8208 = vmatprep.subr.bf16.mxu0 0
      %8209 = vmatpush1.bf16.msra.mxu0 0
      %8210 = vmatprep.subr.bf16.mxu0 0
      %8211 = vmatpush1.bf16.msra.mxu0 0
      %8212 = vmatprep.subr.bf16.mxu0 0
      %8213 = vmatpush1.bf16.msra.mxu0 0
      %8214 = vmatprep.subr.bf16.mxu0 0
      %8215 = vmatpush1.bf16.msra.mxu0 0
      %8216 = vmatprep.subr.bf16.mxu0 0
      %8217 = vmatpush1.bf16.msra.mxu0 0
      %8218 = vmatprep.subr.bf16.mxu0 0
      %8219 = vmatpush1.bf16.msra.mxu0 0
      %8220 = vmatprep.subr.bf16.mxu0 0
      %8221 = vmatpush1.bf16.msra.mxu0 0
      %8222 = vmatprep.subr.bf16.mxu0 0
      %8223 = vmatpush1.bf16.msra.mxu0 0
      %8224 = vmatprep.subr.bf16.mxu0 0
      %8225 = vmatpush1.bf16.msra.mxu0 0
      %8226 = vmatprep.subr.bf16.mxu0 0
      %8227 = vmatpush1.bf16.msra.mxu0 0
      %8228 = vmatprep.subr.bf16.mxu0 0
      %8229 = vmatpush1.bf16.msra.mxu0 0
      %8230 = vmatprep.subr.bf16.mxu0 0
      %8231 = vmatpush1.bf16.msra.mxu0 0
      %8232 = vmatprep.subr.bf16.mxu0 0
      %8233 = vmatpush1.bf16.msra.mxu0 0
      %8234 = vmatprep.subr.bf16.mxu0 0
      %8235 = vmatpush1.bf16.msra.mxu0 0
      %8236 = vmatprep.mubr.bf16.mxu0 0
      %8237 = vmatmul.mubr.bf16.gmra.mrb[0].mxu0 %v8157
      %v8238 = vpop.f32.mrb[0].mxu0
      %v8239 = vadd.f32 0.0, %v8238
      %v8240 = vpop.f32.mrb[0].mxu0
      %v8241 = vpop.f32.mrb[0].mxu0
      %v8242 = vadd.f32 0.0, %v8241
      %v8243 = vpop.f32.mrb[0].mxu0
      %8244 = vmatprep.mubr.bf16.mxu0 0
      %8245 = vmatmul.mubr.bf16.gmra.mrb[0].mxu0 %v8160
      %v8246 = vpop.f32.mrb[0].mxu0
      %v8247 = vadd.f32 0.0, %v8246
      %v8248 = vpop.f32.mrb[0].mxu0
      %v8249 = vpop.f32.mrb[0].mxu0
      %v8250 = vadd.f32 0.0, %v8249
      %v8251 = vpop.f32.mrb[0].mxu0
      %8252 = vmatprep.mubr.bf16.mxu0 0
      %8253 = vmatmul.mubr.bf16.gmra.mrb[0].mxu0 %v8163
      %v8254 = vpop.f32.mrb[0].mxu0
      %v8255 = vadd.f32 0.0, %v8254
      %v8256 = vpop.f32.mrb[0].mxu0
      %v8257 = vpop.f32.mrb[0].mxu0
      %v8258 = vadd.f32 0.0, %v8257
      %v8259 = vpop.f32.mrb[0].mxu0
      %8260 = vmatprep.mubr.bf16.mxu0 0
      %8261 = vmatmul.mubr.bf16.gmra.mrb[0].mxu0 %v8166
      %v8262 = vpop.f32.mrb[0].mxu0
      %v8263 = vadd.f32 0.0, %v8262
      %v8264 = vpop.f32.mrb[0].mxu0
      %v8265 = vpop.f32.mrb[0].mxu0
      %v8266 = vadd.f32 0.0, %v8265
      %v8267 = vpop.f32.mrb[0].mxu0
      %8268 = vmatprep.mubr.bf16.mxu0 0
      %8269 = vmatmul.mubr.bf16.gmra.mrb[0].mxu0 %v8169
      %v8270 = vpop.f32.mrb[0].mxu0
      %v8271 = vadd.f32 0.0, %v8270
      %v8272 = vpop.f32.mrb[0].mxu0
      %v8273 = vpop.f32.mrb[0].mxu0
      %v8274 = vadd.f32 0.0, %v8273
      %v8275 = vpop.f32.mrb[0].mxu0
      %8276 = vmatprep.mubr.bf16.mxu0 0
      %8277 = vmatmul.mubr.bf16.gmra.mrb[0].mxu0 %v8172
      %v8278 = vpop.f32.mrb[0].mxu0
      %v8279 = vadd.f32 0.0, %v8278
      %v8280 = vpop.f32.mrb[0].mxu0
      %v8281 = vpop.f32.mrb[0].mxu0
      %v8282 = vadd.f32 0.0, %v8281
      %v8283 = vpop.f32.mrb[0].mxu0
      %8284 = vmatprep.mubr.bf16.mxu0 0
      %8285 = vmatmul.mubr.bf16.gmra.mrb[0].mxu0 %v8175
      %v8286 = vpop.f32.mrb[0].mxu0
      %v8287 = vadd.f32 0.0, %v8286
      %v8288 = vpop.f32.mrb[0].mxu0
      %v8289 = vpop.f32.mrb[0].mxu0
      %v8290 = vadd.f32 0.0, %v8289
      %v8291 = vpop.f32.mrb[0].mxu0
      %8292 = vmatprep.mubr.bf16.mxu0 0
      %8293 = vmatmul.mubr.bf16.gmra.mrb[0].mxu0 %v8178
      %v8294 = vpop.f32.mrb[0].mxu0
      %v8295 = vadd.f32 0.0, %v8294
      %v8296 = vpop.f32.mrb[0].mxu0
      %v8297 = vpop.f32.mrb[0].mxu0
      %v8298 = vadd.f32 0.0, %v8297
      %v8299 = vpop.f32.mrb[0].mxu0
      %8300 = vmatprep.mubr.bf16.mxu0 0
      %8301 = vmatmul.mubr.bf16.gmra.mrb[0].mxu0 %v8181
      %v8302 = vpop.f32.mrb[0].mxu0
      %v8303 = vadd.f32 0.0, %v8302
      %v8304 = vpop.f32.mrb[0].mxu0
      %v8305 = vpop.f32.mrb[0].mxu0
      %v8306 = vadd.f32 0.0, %v8305
      %v8307 = vpop.f32.mrb[0].mxu0
      %8308 = vmatprep.mubr.bf16.mxu0 0
      %8309 = vmatmul.mubr.bf16.gmra.mrb[0].mxu0 %v8184
      %v8310 = vpop.f32.mrb[0].mxu0
      %v8311 = vadd.f32 0.0, %v8310
      %v8312 = vpop.f32.mrb[0].mxu0
      %v8313 = vpop.f32.mrb[0].mxu0
      %v8314 = vadd.f32 0.0, %v8313
      %v8315 = vpop.f32.mrb[0].mxu0
      %8316 = vmatprep.mubr.bf16.mxu0 0
      %8317 = vmatmul.mubr.bf16.gmra.mrb[0].mxu0 %v8187
      %v8318 = vpop.f32.mrb[0].mxu0
      %v8319 = vadd.f32 0.0, %v8318
      %v8320 = vpop.f32.mrb[0].mxu0
      %v8321 = vpop.f32.mrb[0].mxu0
      %v8322 = vadd.f32 0.0, %v8321
      %v8323 = vpop.f32.mrb[0].mxu0
      %8324 = vmatprep.mubr.bf16.mxu0 0
      %8325 = vmatmul.mubr.bf16.gmra.mrb[0].mxu0 %v8190
      %v8326 = vpop.f32.mrb[0].mxu0
      %v8327 = vadd.f32 0.0, %v8326
      %v8328 = vpop.f32.mrb[0].mxu0
      %v8329 = vpop.f32.mrb[0].mxu0
      %v8330 = vadd.f32 0.0, %v8329
      %v8331 = vpop.f32.mrb[0].mxu0
      %8332 = vmatprep.mubr.bf16.mxu0 0
      %8333 = vmatmul.mubr.bf16.gmra.mrb[0].mxu0 %v8193
      %v8334 = vpop.f32.mrb[0].mxu0
      %v8335 = vadd.f32 0.0, %v8334
      %v8336 = vpop.f32.mrb[0].mxu0
      %v8337 = vpop.f32.mrb[0].mxu0
      %v8338 = vadd.f32 0.0, %v8337
      %v8339 = vpop.f32.mrb[0].mxu0
      %8340 = vmatprep.mubr.bf16.mxu0 0
      %8341 = vmatmul.mubr.bf16.gmra.mrb[0].mxu0 %v8196
      %v8342 = vpop.f32.mrb[0].mxu0
      %v8343 = vadd.f32 0.0, %v8342
      %v8344 = vpop.f32.mrb[0].mxu0
      %v8345 = vpop.f32.mrb[0].mxu0
      %v8346 = vadd.f32 0.0, %v8345
      %v8347 = vpop.f32.mrb[0].mxu0
      %8348 = vmatprep.mubr.bf16.mxu0 0
      %8349 = vmatmul.mubr.bf16.gmra.mrb[0].mxu0 %v8199
      %v8350 = vpop.f32.mrb[0].mxu0
      %v8351 = vadd.f32 0.0, %v8350
      %v8352 = vpop.f32.mrb[0].mxu0
      %v8353 = vpop.f32.mrb[0].mxu0
      %v8354 = vadd.f32 0.0, %v8353
      %v8355 = vpop.f32.mrb[0].mxu0
      %8356 = vmatprep.mubr.bf16.mxu0 0
      %8357 = vmatmul.mubr.bf16.gmra.mrb[0].mxu0 %v8202
      %v8358 = vpop.f32.mrb[0].mxu0
      %v8359 = vadd.f32 0.0, %v8358
      %v8360 = vpop.f32.mrb[0].mxu0
      %v8361 = vpop.f32.mrb[0].mxu0
      %v8362 = vadd.f32 0.0, %v8361
      %v8363 = vpop.f32.mrb[0].mxu0
      %8364 = vdwg.mxu0
      %v8365 = vadd.f32 %v8059, %v8239
      %v8366 = vadd.f32 %v8060, %v8242
      %v8367 = vadd.f32 %v8061, %v8247
      %v8368 = vadd.f32 %v8062, %v8250
      %v8369 = vadd.f32 %v8063, %v8255
      %v8370 = vadd.f32 %v8064, %v8258
      %v8371 = vadd.f32 %v8065, %v8263
      %v8372 = vadd.f32 %v8066, %v8266
      %v8373 = vadd.f32 %v8067, %v8271
      %v8374 = vadd.f32 %v8068, %v8274
      %v8375 = vadd.f32 %v8069, %v8279
      %v8376 = vadd.f32 %v8070, %v8282
      %v8377 = vadd.f32 %v8071, %v8287
      %v8378 = vadd.f32 %v8072, %v8290
      %v8379 = vadd.f32 %v8073, %v8295
      %v8380 = vadd.f32 %v8074, %v8298
      %v8381 = vadd.f32 %v8075, %v8303
      %v8382 = vadd.f32 %v8076, %v8306
      %v8383 = vadd.f32 %v8077, %v8311
      %v8384 = vadd.f32 %v8078, %v8314
      %v8385 = vadd.f32 %v8079, %v8319
      %v8386 = vadd.f32 %v8080, %v8322
      %v8387 = vadd.f32 %v8081, %v8327
      %v8388 = vadd.f32 %v8082, %v8330
      %v8389 = vadd.f32 %v8083, %v8335
      %v8390 = vadd.f32 %v8084, %v8338
      %v8391 = vadd.f32 %v8085, %v8343
      %v8392 = vadd.f32 %v8086, %v8346
      %v8393 = vadd.f32 %v8087, %v8351
      %v8394 = vadd.f32 %v8088, %v8354
      %v8395 = vadd.f32 %v8089, %v8359
      %v8396 = vadd.f32 %v8090, %v8362
      %s8397 = scalar_lea.vmem [#allocation4], 48
      %v8398 = vld [vmem:[%s8397] sm:$0xff]
      %v8399 = vld [vmem:[%s8397 + $0x8] sm:$0xff]
      %v8400 = vld [vmem:[%s8397 + $0x18] sm:$0xff]
      %v8401 = vld [vmem:[%s8397 + $0x20] sm:$0xff]
      %v8402 = vld [vmem:[%s8397 + $0x30] sm:$0xff]
      %v8403 = vld [vmem:[%s8397 + $0x38] sm:$0xff]
      %v8404 = vld [vmem:[%s8397 + $0x48] sm:$0xff]
      %v8405 = vld [vmem:[%s8397 + $0x50] sm:$0xff]
      %v8406 = vld [vmem:[%s8397 + $0x60] sm:$0xff]
      %v8407 = vld [vmem:[%s8397 + $0x68] sm:$0xff]
      %v8408 = vld [vmem:[%s8397 + $0x78] sm:$0xff]
      %v8409 = vld [vmem:[%s8397 + $0x80] sm:$0xff]
      %v8410 = vld [vmem:[%s8397 + $0x90] sm:$0xff]
      %v8411 = vld [vmem:[%s8397 + $0x98] sm:$0xff]
      %v8412 = vld [vmem:[%s8397 + $0xa8] sm:$0xff]
      %v8413 = vld [vmem:[%s8397 + $0xb0] sm:$0xff]
      %v8414 = vld [vmem:[%s8397 + $0xc0] sm:$0xff]
      %v8415 = vld [vmem:[%s8397 + $0xc8] sm:$0xff]
      %v8416 = vld [vmem:[%s8397 + $0xd8] sm:$0xff]
      %v8417 = vld [vmem:[%s8397 + $0xe0] sm:$0xff]
      %v8418 = vld [vmem:[%s8397 + $0xf0] sm:$0xff]
      %v8419 = vld [vmem:[%s8397 + $0xf8] sm:$0xff]
      %v8420 = vld [vmem:[%s8397 + $0x108] sm:$0xff]
      %v8421 = vld [vmem:[%s8397 + $0x110] sm:$0xff]
      %v8422 = vld [vmem:[%s8397 + $0x120] sm:$0xff]
      %v8423 = vld [vmem:[%s8397 + $0x128] sm:$0xff]
      %v8424 = vld [vmem:[%s8397 + $0x138] sm:$0xff]
      %v8425 = vld [vmem:[%s8397 + $0x140] sm:$0xff]
      %v8426 = vld [vmem:[%s8397 + $0x150] sm:$0xff]
      %v8427 = vld [vmem:[%s8397 + $0x158] sm:$0xff]
      %v8428 = vld [vmem:[%s8397 + $0x168] sm:$0xff]
      %v8429 = vld [vmem:[%s8397 + $0x170] sm:$0xff]
      %v8430 = vpack.c.bf16 %v8399, %v8398
      %v8431 = vpack.c.bf16 %v8401, %v8400
      %v8432 = vpack.c.bf16 %v8403, %v8402
      %v8433 = vpack.c.bf16 %v8405, %v8404
      %v8434 = vpack.c.bf16 %v8407, %v8406
      %v8435 = vpack.c.bf16 %v8409, %v8408
      %v8436 = vpack.c.bf16 %v8411, %v8410
      %v8437 = vpack.c.bf16 %v8413, %v8412
      %v8438 = vpack.c.bf16 %v8415, %v8414
      %v8439 = vpack.c.bf16 %v8417, %v8416
      %v8440 = vpack.c.bf16 %v8419, %v8418
      %v8441 = vpack.c.bf16 %v8421, %v8420
      %v8442 = vpack.c.bf16 %v8423, %v8422
      %v8443 = vpack.c.bf16 %v8425, %v8424
      %v8444 = vpack.c.bf16 %v8427, %v8426
      %v8445 = vpack.c.bf16 %v8429, %v8428
      %s8446 = scalar_lea.vmem %s10, 96
      %v8447 = vld [vmem:[%s8446] sm:$0xf]
      %v8448 = vld [vmem:[%s8446 + $0x4] sm:$0xf]
      %v8449 = vld [vmem:[%s8446 + $0x8] sm:$0xf]
      %v8450 = vld [vmem:[%s8446 + $0xc] sm:$0xf]
      %v8455 = vunpack.c.l.b16 %v8447
      %v8456 = vunpack.c.l.b16 %v8448
      %v8457 = vunpack.c.l.b16 %v8449
      %v8458 = vunpack.c.l.b16 %v8450
      %v8459 = vpack.c.b16 %v8456, %v8455
      %v8460 = vpack.c.b16 %v8458, %v8457
      %v8464 = vsel %vm448, %v8430, 0
      %v8467 = vsel %vm448, %v8431, 0
      %v8470 = vsel %vm448, %v8432, 0
      %v8473 = vsel %vm448, %v8433, 0
      %v8476 = vsel %vm448, %v8434, 0
      %v8479 = vsel %vm448, %v8435, 0
      %v8482 = vsel %vm448, %v8436, 0
      %v8485 = vsel %vm448, %v8437, 0
      %v8488 = vsel %vm448, %v8438, 0
      %v8491 = vsel %vm448, %v8439, 0
      %v8494 = vsel %vm448, %v8440, 0
      %v8497 = vsel %vm448, %v8441, 0
      %v8500 = vsel %vm448, %v8442, 0
      %v8503 = vsel %vm448, %v8443, 0
      %v8506 = vsel %vm448, %v8444, 0
      %v8509 = vsel %vm448, %v8445, 0
      %8511 = vmatprep.subr.bf16.mxu0 0
      %8512 = vmatpush1.bf16.msra.mxu0 %v8459
      %8513 = vmatprep.subr.bf16.mxu0 0
      %8514 = vmatpush1.bf16.msra.mxu0 %v8460
      %8515 = vmatprep.subr.bf16.mxu0 0
      %8516 = vmatpush1.bf16.msra.mxu0 0
      %8517 = vmatprep.subr.bf16.mxu0 0
      %8518 = vmatpush1.bf16.msra.mxu0 0
      %8519 = vmatprep.subr.bf16.mxu0 0
      %8520 = vmatpush1.bf16.msra.mxu0 0
      %8521 = vmatprep.subr.bf16.mxu0 0
      %8522 = vmatpush1.bf16.msra.mxu0 0
      %8523 = vmatprep.subr.bf16.mxu0 0
      %8524 = vmatpush1.bf16.msra.mxu0 0
      %8525 = vmatprep.subr.bf16.mxu0 0
      %8526 = vmatpush1.bf16.msra.mxu0 0
      %8527 = vmatprep.subr.bf16.mxu0 0
      %8528 = vmatpush1.bf16.msra.mxu0 0
      %8529 = vmatprep.subr.bf16.mxu0 0
      %8530 = vmatpush1.bf16.msra.mxu0 0
      %8531 = vmatprep.subr.bf16.mxu0 0
      %8532 = vmatpush1.bf16.msra.mxu0 0
      %8533 = vmatprep.subr.bf16.mxu0 0
      %8534 = vmatpush1.bf16.msra.mxu0 0
      %8535 = vmatprep.subr.bf16.mxu0 0
      %8536 = vmatpush1.bf16.msra.mxu0 0
      %8537 = vmatprep.subr.bf16.mxu0 0
      %8538 = vmatpush1.bf16.msra.mxu0 0
      %8539 = vmatprep.subr.bf16.mxu0 0
      %8540 = vmatpush1.bf16.msra.mxu0 0
      %8541 = vmatprep.subr.bf16.mxu0 0
      %8542 = vmatpush1.bf16.msra.mxu0 0
      %8543 = vmatprep.mubr.bf16.mxu0 0
      %8544 = vmatmul.mubr.bf16.gmra.mrb[0].mxu0 %v8464
      %v8545 = vpop.f32.mrb[0].mxu0
      %v8546 = vadd.f32 0.0, %v8545
      %v8547 = vpop.f32.mrb[0].mxu0
      %v8548 = vpop.f32.mrb[0].mxu0
      %v8549 = vadd.f32 0.0, %v8548
      %v8550 = vpop.f32.mrb[0].mxu0
      %8551 = vmatprep.mubr.bf16.mxu0 0
      %8552 = vmatmul.mubr.bf16.gmra.mrb[0].mxu0 %v8467
      %v8553 = vpop.f32.mrb[0].mxu0
      %v8554 = vadd.f32 0.0, %v8553
      %v8555 = vpop.f32.mrb[0].mxu0
      %v8556 = vpop.f32.mrb[0].mxu0
      %v8557 = vadd.f32 0.0, %v8556
      %v8558 = vpop.f32.mrb[0].mxu0
      %8559 = vmatprep.mubr.bf16.mxu0 0
      %8560 = vmatmul.mubr.bf16.gmra.mrb[0].mxu0 %v8470
      %v8561 = vpop.f32.mrb[0].mxu0
      %v8562 = vadd.f32 0.0, %v8561
      %v8563 = vpop.f32.mrb[0].mxu0
      %v8564 = vpop.f32.mrb[0].mxu0
      %v8565 = vadd.f32 0.0, %v8564
      %v8566 = vpop.f32.mrb[0].mxu0
      %8567 = vmatprep.mubr.bf16.mxu0 0
      %8568 = vmatmul.mubr.bf16.gmra.mrb[0].mxu0 %v8473
      %v8569 = vpop.f32.mrb[0].mxu0
      %v8570 = vadd.f32 0.0, %v8569
      %v8571 = vpop.f32.mrb[0].mxu0
      %v8572 = vpop.f32.mrb[0].mxu0
      %v8573 = vadd.f32 0.0, %v8572
      %v8574 = vpop.f32.mrb[0].mxu0
      %8575 = vmatprep.mubr.bf16.mxu0 0
      %8576 = vmatmul.mubr.bf16.gmra.mrb[0].mxu0 %v8476
      %v8577 = vpop.f32.mrb[0].mxu0
      %v8578 = vadd.f32 0.0, %v8577
      %v8579 = vpop.f32.mrb[0].mxu0
      %v8580 = vpop.f32.mrb[0].mxu0
      %v8581 = vadd.f32 0.0, %v8580
      %v8582 = vpop.f32.mrb[0].mxu0
      %8583 = vmatprep.mubr.bf16.mxu0 0
      %8584 = vmatmul.mubr.bf16.gmra.mrb[0].mxu0 %v8479
      %v8585 = vpop.f32.mrb[0].mxu0
      %v8586 = vadd.f32 0.0, %v8585
      %v8587 = vpop.f32.mrb[0].mxu0
      %v8588 = vpop.f32.mrb[0].mxu0
      %v8589 = vadd.f32 0.0, %v8588
      %v8590 = vpop.f32.mrb[0].mxu0
      %8591 = vmatprep.mubr.bf16.mxu0 0
      %8592 = vmatmul.mubr.bf16.gmra.mrb[0].mxu0 %v8482
      %v8593 = vpop.f32.mrb[0].mxu0
      %v8594 = vadd.f32 0.0, %v8593
      %v8595 = vpop.f32.mrb[0].mxu0
      %v8596 = vpop.f32.mrb[0].mxu0
      %v8597 = vadd.f32 0.0, %v8596
      %v8598 = vpop.f32.mrb[0].mxu0
      %8599 = vmatprep.mubr.bf16.mxu0 0
      %8600 = vmatmul.mubr.bf16.gmra.mrb[0].mxu0 %v8485
      %v8601 = vpop.f32.mrb[0].mxu0
      %v8602 = vadd.f32 0.0, %v8601
      %v8603 = vpop.f32.mrb[0].mxu0
      %v8604 = vpop.f32.mrb[0].mxu0
      %v8605 = vadd.f32 0.0, %v8604
      %v8606 = vpop.f32.mrb[0].mxu0
      %8607 = vmatprep.mubr.bf16.mxu0 0
      %8608 = vmatmul.mubr.bf16.gmra.mrb[0].mxu0 %v8488
      %v8609 = vpop.f32.mrb[0].mxu0
      %v8610 = vadd.f32 0.0, %v8609
      %v8611 = vpop.f32.mrb[0].mxu0
      %v8612 = vpop.f32.mrb[0].mxu0
      %v8613 = vadd.f32 0.0, %v8612
      %v8614 = vpop.f32.mrb[0].mxu0
      %8615 = vmatprep.mubr.bf16.mxu0 0
      %8616 = vmatmul.mubr.bf16.gmra.mrb[0].mxu0 %v8491
      %v8617 = vpop.f32.mrb[0].mxu0
      %v8618 = vadd.f32 0.0, %v8617
      %v8619 = vpop.f32.mrb[0].mxu0
      %v8620 = vpop.f32.mrb[0].mxu0
      %v8621 = vadd.f32 0.0, %v8620
      %v8622 = vpop.f32.mrb[0].mxu0
      %8623 = vmatprep.mubr.bf16.mxu0 0
      %8624 = vmatmul.mubr.bf16.gmra.mrb[0].mxu0 %v8494
      %v8625 = vpop.f32.mrb[0].mxu0
      %v8626 = vadd.f32 0.0, %v8625
      %v8627 = vpop.f32.mrb[0].mxu0
      %v8628 = vpop.f32.mrb[0].mxu0
      %v8629 = vadd.f32 0.0, %v8628
      %v8630 = vpop.f32.mrb[0].mxu0
      %8631 = vmatprep.mubr.bf16.mxu0 0
      %8632 = vmatmul.mubr.bf16.gmra.mrb[0].mxu0 %v8497
      %v8633 = vpop.f32.mrb[0].mxu0
      %v8634 = vadd.f32 0.0, %v8633
      %v8635 = vpop.f32.mrb[0].mxu0
      %v8636 = vpop.f32.mrb[0].mxu0
      %v8637 = vadd.f32 0.0, %v8636
      %v8638 = vpop.f32.mrb[0].mxu0
      %8639 = vmatprep.mubr.bf16.mxu0 0
      %8640 = vmatmul.mubr.bf16.gmra.mrb[0].mxu0 %v8500
      %v8641 = vpop.f32.mrb[0].mxu0
      %v8642 = vadd.f32 0.0, %v8641
      %v8643 = vpop.f32.mrb[0].mxu0
      %v8644 = vpop.f32.mrb[0].mxu0
      %v8645 = vadd.f32 0.0, %v8644
      %v8646 = vpop.f32.mrb[0].mxu0
      %8647 = vmatprep.mubr.bf16.mxu0 0
      %8648 = vmatmul.mubr.bf16.gmra.mrb[0].mxu0 %v8503
      %v8649 = vpop.f32.mrb[0].mxu0
      %v8650 = vadd.f32 0.0, %v8649
      %v8651 = vpop.f32.mrb[0].mxu0
      %v8652 = vpop.f32.mrb[0].mxu0
      %v8653 = vadd.f32 0.0, %v8652
      %v8654 = vpop.f32.mrb[0].mxu0
      %8655 = vmatprep.mubr.bf16.mxu0 0
      %8656 = vmatmul.mubr.bf16.gmra.mrb[0].mxu0 %v8506
      %v8657 = vpop.f32.mrb[0].mxu0
      %v8658 = vadd.f32 0.0, %v8657
      %v8659 = vpop.f32.mrb[0].mxu0
      %v8660 = vpop.f32.mrb[0].mxu0
      %v8661 = vadd.f32 0.0, %v8660
      %v8662 = vpop.f32.mrb[0].mxu0
      %8663 = vmatprep.mubr.bf16.mxu0 0
      %8664 = vmatmul.mubr.bf16.gmra.mrb[0].mxu0 %v8509
      %v8665 = vpop.f32.mrb[0].mxu0
      %v8666 = vadd.f32 0.0, %v8665
      %v8667 = vpop.f32.mrb[0].mxu0
      %v8668 = vpop.f32.mrb[0].mxu0
      %v8669 = vadd.f32 0.0, %v8668
      %v8670 = vpop.f32.mrb[0].mxu0
      %8671 = vdwg.mxu0
      %v8672 = vadd.f32 %v8365, %v8546
      %v8673 = vadd.f32 %v8366, %v8549
      %v8674 = vadd.f32 %v8367, %v8554
      %v8675 = vadd.f32 %v8368, %v8557
      %v8676 = vadd.f32 %v8369, %v8562
      %v8677 = vadd.f32 %v8370, %v8565
      %v8678 = vadd.f32 %v8371, %v8570
      %v8679 = vadd.f32 %v8372, %v8573
      %v8680 = vadd.f32 %v8373, %v8578
      %v8681 = vadd.f32 %v8374, %v8581
      %v8682 = vadd.f32 %v8375, %v8586
      %v8683 = vadd.f32 %v8376, %v8589
      %v8684 = vadd.f32 %v8377, %v8594
      %v8685 = vadd.f32 %v8378, %v8597
      %v8686 = vadd.f32 %v8379, %v8602
      %v8687 = vadd.f32 %v8380, %v8605
      %v8688 = vadd.f32 %v8381, %v8610
      %v8689 = vadd.f32 %v8382, %v8613
      %v8690 = vadd.f32 %v8383, %v8618
      %v8691 = vadd.f32 %v8384, %v8621
      %v8692 = vadd.f32 %v8385, %v8626
      %v8693 = vadd.f32 %v8386, %v8629
      %v8694 = vadd.f32 %v8387, %v8634
      %v8695 = vadd.f32 %v8388, %v8637
      %v8696 = vadd.f32 %v8389, %v8642
      %v8697 = vadd.f32 %v8390, %v8645
      %v8698 = vadd.f32 %v8391, %v8650
      %v8699 = vadd.f32 %v8392, %v8653
      %v8700 = vadd.f32 %v8393, %v8658
      %v8701 = vadd.f32 %v8394, %v8661
      %v8702 = vadd.f32 %v8395, %v8666
      %v8703 = vadd.f32 %v8396, %v8669
      %v8704 = vld [vmem:[%s8397 + $0x1] sm:$0xff]
      %v8705 = vld [vmem:[%s8397 + $0x9] sm:$0xff]
      %v8706 = vld [vmem:[%s8397 + $0x19] sm:$0xff]
      %v8707 = vld [vmem:[%s8397 + $0x21] sm:$0xff]
      %v8708 = vld [vmem:[%s8397 + $0x31] sm:$0xff]
      %v8709 = vld [vmem:[%s8397 + $0x39] sm:$0xff]
      %v8710 = vld [vmem:[%s8397 + $0x49] sm:$0xff]
      %v8711 = vld [vmem:[%s8397 + $0x51] sm:$0xff]
      %v8712 = vld [vmem:[%s8397 + $0x61] sm:$0xff]
      %v8713 = vld [vmem:[%s8397 + $0x69] sm:$0xff]
      %v8714 = vld [vmem:[%s8397 + $0x79] sm:$0xff]
      %v8715 = vld [vmem:[%s8397 + $0x81] sm:$0xff]
      %v8716 = vld [vmem:[%s8397 + $0x91] sm:$0xff]
      %v8717 = vld [vmem:[%s8397 + $0x99] sm:$0xff]
      %v8718 = vld [vmem:[%s8397 + $0xa9] sm:$0xff]
      %v8719 = vld [vmem:[%s8397 + $0xb1] sm:$0xff]
      %v8720 = vld [vmem:[%s8397 + $0xc1] sm:$0xff]
      %v8721 = vld [vmem:[%s8397 + $0xc9] sm:$0xff]
      %v8722 = vld [vmem:[%s8397 + $0xd9] sm:$0xff]
      %v8723 = vld [vmem:[%s8397 + $0xe1] sm:$0xff]
      %v8724 = vld [vmem:[%s8397 + $0xf1] sm:$0xff]
      %v8725 = vld [vmem:[%s8397 + $0xf9] sm:$0xff]
      %v8726 = vld [vmem:[%s8397 + $0x109] sm:$0xff]
      %v8727 = vld [vmem:[%s8397 + $0x111] sm:$0xff]
      %v8728 = vld [vmem:[%s8397 + $0x121] sm:$0xff]
      %v8729 = vld [vmem:[%s8397 + $0x129] sm:$0xff]
      %v8730 = vld [vmem:[%s8397 + $0x139] sm:$0xff]
      %v8731 = vld [vmem:[%s8397 + $0x141] sm:$0xff]
      %v8732 = vld [vmem:[%s8397 + $0x151] sm:$0xff]
      %v8733 = vld [vmem:[%s8397 + $0x159] sm:$0xff]
      %v8734 = vld [vmem:[%s8397 + $0x169] sm:$0xff]
      %v8735 = vld [vmem:[%s8397 + $0x171] sm:$0xff]
      %v8736 = vpack.c.bf16 %v8705, %v8704
      %v8737 = vpack.c.bf16 %v8707, %v8706
      %v8738 = vpack.c.bf16 %v8709, %v8708
      %v8739 = vpack.c.bf16 %v8711, %v8710
      %v8740 = vpack.c.bf16 %v8713, %v8712
      %v8741 = vpack.c.bf16 %v8715, %v8714
      %v8742 = vpack.c.bf16 %v8717, %v8716
      %v8743 = vpack.c.bf16 %v8719, %v8718
      %v8744 = vpack.c.bf16 %v8721, %v8720
      %v8745 = vpack.c.bf16 %v8723, %v8722
      %v8746 = vpack.c.bf16 %v8725, %v8724
      %v8747 = vpack.c.bf16 %v8727, %v8726
      %v8748 = vpack.c.bf16 %v8729, %v8728
      %v8749 = vpack.c.bf16 %v8731, %v8730
      %v8750 = vpack.c.bf16 %v8733, %v8732
      %v8751 = vpack.c.bf16 %v8735, %v8734
      %s8752 = scalar_lea.vmem %s10, 112
      %v8753 = vld [vmem:[%s8752] sm:$0xf]
      %v8754 = vld [vmem:[%s8752 + $0x4] sm:$0xf]
      %v8755 = vld [vmem:[%s8752 + $0x8] sm:$0xf]
      %v8756 = vld [vmem:[%s8752 + $0xc] sm:$0xf]
      %v8761 = vunpack.c.l.b16 %v8753
      %v8762 = vunpack.c.l.b16 %v8754
      %v8763 = vunpack.c.l.b16 %v8755
      %v8764 = vunpack.c.l.b16 %v8756
      %v8765 = vpack.c.b16 %v8762, %v8761
      %v8766 = vpack.c.b16 %v8764, %v8763
      %v8770 = vsel %vm448, %v8736, 0
      %v8773 = vsel %vm448, %v8737, 0
      %v8776 = vsel %vm448, %v8738, 0
      %v8779 = vsel %vm448, %v8739, 0
      %v8782 = vsel %vm448, %v8740, 0
      %v8785 = vsel %vm448, %v8741, 0
      %v8788 = vsel %vm448, %v8742, 0
      %v8791 = vsel %vm448, %v8743, 0
      %v8794 = vsel %vm448, %v8744, 0
      %v8797 = vsel %vm448, %v8745, 0
      %v8800 = vsel %vm448, %v8746, 0
      %v8803 = vsel %vm448, %v8747, 0
      %v8806 = vsel %vm448, %v8748, 0
      %v8809 = vsel %vm448, %v8749, 0
      %v8812 = vsel %vm448, %v8750, 0
      %v8815 = vsel %vm448, %v8751, 0
      %8817 = vmatprep.subr.bf16.mxu0 0
      %8818 = vmatpush1.bf16.msra.mxu0 %v8765
      %8819 = vmatprep.subr.bf16.mxu0 0
      %8820 = vmatpush1.bf16.msra.mxu0 %v8766
      %8821 = vmatprep.subr.bf16.mxu0 0
      %8822 = vmatpush1.bf16.msra.mxu0 0
      %8823 = vmatprep.subr.bf16.mxu0 0
      %8824 = vmatpush1.bf16.msra.mxu0 0
      %8825 = vmatprep.subr.bf16.mxu0 0
      %8826 = vmatpush1.bf16.msra.mxu0 0
      %8827 = vmatprep.subr.bf16.mxu0 0
      %8828 = vmatpush1.bf16.msra.mxu0 0
      %8829 = vmatprep.subr.bf16.mxu0 0
      %8830 = vmatpush1.bf16.msra.mxu0 0
      %8831 = vmatprep.subr.bf16.mxu0 0
      %8832 = vmatpush1.bf16.msra.mxu0 0
      %8833 = vmatprep.subr.bf16.mxu0 0
      %8834 = vmatpush1.bf16.msra.mxu0 0
      %8835 = vmatprep.subr.bf16.mxu0 0
      %8836 = vmatpush1.bf16.msra.mxu0 0
      %8837 = vmatprep.subr.bf16.mxu0 0
      %8838 = vmatpush1.bf16.msra.mxu0 0
      %8839 = vmatprep.subr.bf16.mxu0 0
      %8840 = vmatpush1.bf16.msra.mxu0 0
      %8841 = vmatprep.subr.bf16.mxu0 0
      %8842 = vmatpush1.bf16.msra.mxu0 0
      %8843 = vmatprep.subr.bf16.mxu0 0
      %8844 = vmatpush1.bf16.msra.mxu0 0
      %8845 = vmatprep.subr.bf16.mxu0 0
      %8846 = vmatpush1.bf16.msra.mxu0 0
      %8847 = vmatprep.subr.bf16.mxu0 0
      %8848 = vmatpush1.bf16.msra.mxu0 0
      %8849 = vmatprep.mubr.bf16.mxu0 0
      %8850 = vmatmul.mubr.bf16.gmra.mrb[0].mxu0 %v8770
      %v8851 = vpop.f32.mrb[0].mxu0
      %v8852 = vadd.f32 0.0, %v8851
      %v8853 = vpop.f32.mrb[0].mxu0
      %v8854 = vpop.f32.mrb[0].mxu0
      %v8855 = vadd.f32 0.0, %v8854
      %v8856 = vpop.f32.mrb[0].mxu0
      %8857 = vmatprep.mubr.bf16.mxu0 0
      %8858 = vmatmul.mubr.bf16.gmra.mrb[0].mxu0 %v8773
      %v8859 = vpop.f32.mrb[0].mxu0
      %v8860 = vadd.f32 0.0, %v8859
      %v8861 = vpop.f32.mrb[0].mxu0
      %v8862 = vpop.f32.mrb[0].mxu0
      %v8863 = vadd.f32 0.0, %v8862
      %v8864 = vpop.f32.mrb[0].mxu0
      %8865 = vmatprep.mubr.bf16.mxu0 0
      %8866 = vmatmul.mubr.bf16.gmra.mrb[0].mxu0 %v8776
      %v8867 = vpop.f32.mrb[0].mxu0
      %v8868 = vadd.f32 0.0, %v8867
      %v8869 = vpop.f32.mrb[0].mxu0
      %v8870 = vpop.f32.mrb[0].mxu0
      %v8871 = vadd.f32 0.0, %v8870
      %v8872 = vpop.f32.mrb[0].mxu0
      %8873 = vmatprep.mubr.bf16.mxu0 0
      %8874 = vmatmul.mubr.bf16.gmra.mrb[0].mxu0 %v8779
      %v8875 = vpop.f32.mrb[0].mxu0
      %v8876 = vadd.f32 0.0, %v8875
      %v8877 = vpop.f32.mrb[0].mxu0
      %v8878 = vpop.f32.mrb[0].mxu0
      %v8879 = vadd.f32 0.0, %v8878
      %v8880 = vpop.f32.mrb[0].mxu0
      %8881 = vmatprep.mubr.bf16.mxu0 0
      %8882 = vmatmul.mubr.bf16.gmra.mrb[0].mxu0 %v8782
      %v8883 = vpop.f32.mrb[0].mxu0
      %v8884 = vadd.f32 0.0, %v8883
      %v8885 = vpop.f32.mrb[0].mxu0
      %v8886 = vpop.f32.mrb[0].mxu0
      %v8887 = vadd.f32 0.0, %v8886
      %v8888 = vpop.f32.mrb[0].mxu0
      %8889 = vmatprep.mubr.bf16.mxu0 0
      %8890 = vmatmul.mubr.bf16.gmra.mrb[0].mxu0 %v8785
      %v8891 = vpop.f32.mrb[0].mxu0
      %v8892 = vadd.f32 0.0, %v8891
      %v8893 = vpop.f32.mrb[0].mxu0
      %v8894 = vpop.f32.mrb[0].mxu0
      %v8895 = vadd.f32 0.0, %v8894
      %v8896 = vpop.f32.mrb[0].mxu0
      %8897 = vmatprep.mubr.bf16.mxu0 0
      %8898 = vmatmul.mubr.bf16.gmra.mrb[0].mxu0 %v8788
      %v8899 = vpop.f32.mrb[0].mxu0
      %v8900 = vadd.f32 0.0, %v8899
      %v8901 = vpop.f32.mrb[0].mxu0
      %v8902 = vpop.f32.mrb[0].mxu0
      %v8903 = vadd.f32 0.0, %v8902
      %v8904 = vpop.f32.mrb[0].mxu0
      %8905 = vmatprep.mubr.bf16.mxu0 0
      %8906 = vmatmul.mubr.bf16.gmra.mrb[0].mxu0 %v8791
      %v8907 = vpop.f32.mrb[0].mxu0
      %v8908 = vadd.f32 0.0, %v8907
      %v8909 = vpop.f32.mrb[0].mxu0
      %v8910 = vpop.f32.mrb[0].mxu0
      %v8911 = vadd.f32 0.0, %v8910
      %v8912 = vpop.f32.mrb[0].mxu0
      %8913 = vmatprep.mubr.bf16.mxu0 0
      %8914 = vmatmul.mubr.bf16.gmra.mrb[0].mxu0 %v8794
      %v8915 = vpop.f32.mrb[0].mxu0
      %v8916 = vadd.f32 0.0, %v8915
      %v8917 = vpop.f32.mrb[0].mxu0
      %v8918 = vpop.f32.mrb[0].mxu0
      %v8919 = vadd.f32 0.0, %v8918
      %v8920 = vpop.f32.mrb[0].mxu0
      %8921 = vmatprep.mubr.bf16.mxu0 0
      %8922 = vmatmul.mubr.bf16.gmra.mrb[0].mxu0 %v8797
      %v8923 = vpop.f32.mrb[0].mxu0
      %v8924 = vadd.f32 0.0, %v8923
      %v8925 = vpop.f32.mrb[0].mxu0
      %v8926 = vpop.f32.mrb[0].mxu0
      %v8927 = vadd.f32 0.0, %v8926
      %v8928 = vpop.f32.mrb[0].mxu0
      %8929 = vmatprep.mubr.bf16.mxu0 0
      %8930 = vmatmul.mubr.bf16.gmra.mrb[0].mxu0 %v8800
      %v8931 = vpop.f32.mrb[0].mxu0
      %v8932 = vadd.f32 0.0, %v8931
      %v8933 = vpop.f32.mrb[0].mxu0
      %v8934 = vpop.f32.mrb[0].mxu0
      %v8935 = vadd.f32 0.0, %v8934
      %v8936 = vpop.f32.mrb[0].mxu0
      %8937 = vmatprep.mubr.bf16.mxu0 0
      %8938 = vmatmul.mubr.bf16.gmra.mrb[0].mxu0 %v8803
      %v8939 = vpop.f32.mrb[0].mxu0
      %v8940 = vadd.f32 0.0, %v8939
      %v8941 = vpop.f32.mrb[0].mxu0
      %v8942 = vpop.f32.mrb[0].mxu0
      %v8943 = vadd.f32 0.0, %v8942
      %v8944 = vpop.f32.mrb[0].mxu0
      %8945 = vmatprep.mubr.bf16.mxu0 0
      %8946 = vmatmul.mubr.bf16.gmra.mrb[0].mxu0 %v8806
      %v8947 = vpop.f32.mrb[0].mxu0
      %v8948 = vadd.f32 0.0, %v8947
      %v8949 = vpop.f32.mrb[0].mxu0
      %v8950 = vpop.f32.mrb[0].mxu0
      %v8951 = vadd.f32 0.0, %v8950
      %v8952 = vpop.f32.mrb[0].mxu0
      %8953 = vmatprep.mubr.bf16.mxu0 0
      %8954 = vmatmul.mubr.bf16.gmra.mrb[0].mxu0 %v8809
      %v8955 = vpop.f32.mrb[0].mxu0
      %v8956 = vadd.f32 0.0, %v8955
      %v8957 = vpop.f32.mrb[0].mxu0
      %v8958 = vpop.f32.mrb[0].mxu0
      %v8959 = vadd.f32 0.0, %v8958
      %v8960 = vpop.f32.mrb[0].mxu0
      %8961 = vmatprep.mubr.bf16.mxu0 0
      %8962 = vmatmul.mubr.bf16.gmra.mrb[0].mxu0 %v8812
      %v8963 = vpop.f32.mrb[0].mxu0
      %v8964 = vadd.f32 0.0, %v8963
      %v8965 = vpop.f32.mrb[0].mxu0
      %v8966 = vpop.f32.mrb[0].mxu0
      %v8967 = vadd.f32 0.0, %v8966
      %v8968 = vpop.f32.mrb[0].mxu0
      %8969 = vmatprep.mubr.bf16.mxu0 0
      %8970 = vmatmul.mubr.bf16.gmra.mrb[0].mxu0 %v8815
      %v8971 = vpop.f32.mrb[0].mxu0
      %v8972 = vadd.f32 0.0, %v8971
      %v8973 = vpop.f32.mrb[0].mxu0
      %v8974 = vpop.f32.mrb[0].mxu0
      %v8975 = vadd.f32 0.0, %v8974
      %v8976 = vpop.f32.mrb[0].mxu0
      %8977 = vdwg.mxu0
      %v8978 = vadd.f32 %v8672, %v8852
      %v8979 = vadd.f32 %v8673, %v8855
      %v8980 = vadd.f32 %v8674, %v8860
      %v8981 = vadd.f32 %v8675, %v8863
      %v8982 = vadd.f32 %v8676, %v8868
      %v8983 = vadd.f32 %v8677, %v8871
      %v8984 = vadd.f32 %v8678, %v8876
      %v8985 = vadd.f32 %v8679, %v8879
      %v8986 = vadd.f32 %v8680, %v8884
      %v8987 = vadd.f32 %v8681, %v8887
      %v8988 = vadd.f32 %v8682, %v8892
      %v8989 = vadd.f32 %v8683, %v8895
      %v8990 = vadd.f32 %v8684, %v8900
      %v8991 = vadd.f32 %v8685, %v8903
      %v8992 = vadd.f32 %v8686, %v8908
      %v8993 = vadd.f32 %v8687, %v8911
      %v8994 = vadd.f32 %v8688, %v8916
      %v8995 = vadd.f32 %v8689, %v8919
      %v8996 = vadd.f32 %v8690, %v8924
      %v8997 = vadd.f32 %v8691, %v8927
      %v8998 = vadd.f32 %v8692, %v8932
      %v8999 = vadd.f32 %v8693, %v8935
      %v9000 = vadd.f32 %v8694, %v8940
      %v9001 = vadd.f32 %v8695, %v8943
      %v9002 = vadd.f32 %v8696, %v8948
      %v9003 = vadd.f32 %v8697, %v8951
      %v9004 = vadd.f32 %v8698, %v8956
      %v9005 = vadd.f32 %v8699, %v8959
      %v9006 = vadd.f32 %v8700, %v8964
      %v9007 = vadd.f32 %v8701, %v8967
      %v9008 = vadd.f32 %v8702, %v8972
      %v9009 = vadd.f32 %v8703, %v8975
      %v9010 = vld [vmem:[%s8397 + $0x2] sm:$0xff]
      %v9011 = vld [vmem:[%s8397 + $0xa] sm:$0xff]
      %v9012 = vld [vmem:[%s8397 + $0x1a] sm:$0xff]
      %v9013 = vld [vmem:[%s8397 + $0x22] sm:$0xff]
      %v9014 = vld [vmem:[%s8397 + $0x32] sm:$0xff]
      %v9015 = vld [vmem:[%s8397 + $0x3a] sm:$0xff]
      %v9016 = vld [vmem:[%s8397 + $0x4a] sm:$0xff]
      %v9017 = vld [vmem:[%s8397 + $0x52] sm:$0xff]
      %v9018 = vld [vmem:[%s8397 + $0x62] sm:$0xff]
      %v9019 = vld [vmem:[%s8397 + $0x6a] sm:$0xff]
      %v9020 = vld [vmem:[%s8397 + $0x7a] sm:$0xff]
      %v9021 = vld [vmem:[%s8397 + $0x82] sm:$0xff]
      %v9022 = vld [vmem:[%s8397 + $0x92] sm:$0xff]
      %v9023 = vld [vmem:[%s8397 + $0x9a] sm:$0xff]
      %v9024 = vld [vmem:[%s8397 + $0xaa] sm:$0xff]
      %v9025 = vld [vmem:[%s8397 + $0xb2] sm:$0xff]
      %v9026 = vld [vmem:[%s8397 + $0xc2] sm:$0xff]
      %v9027 = vld [vmem:[%s8397 + $0xca] sm:$0xff]
      %v9028 = vld [vmem:[%s8397 + $0xda] sm:$0xff]
      %v9029 = vld [vmem:[%s8397 + $0xe2] sm:$0xff]
      %v9030 = vld [vmem:[%s8397 + $0xf2] sm:$0xff]
      %v9031 = vld [vmem:[%s8397 + $0xfa] sm:$0xff]
      %v9032 = vld [vmem:[%s8397 + $0x10a] sm:$0xff]
      %v9033 = vld [vmem:[%s8397 + $0x112] sm:$0xff]
      %v9034 = vld [vmem:[%s8397 + $0x122] sm:$0xff]
      %v9035 = vld [vmem:[%s8397 + $0x12a] sm:$0xff]
      %v9036 = vld [vmem:[%s8397 + $0x13a] sm:$0xff]
      %v9037 = vld [vmem:[%s8397 + $0x142] sm:$0xff]
      %v9038 = vld [vmem:[%s8397 + $0x152] sm:$0xff]
      %v9039 = vld [vmem:[%s8397 + $0x15a] sm:$0xff]
      %v9040 = vld [vmem:[%s8397 + $0x16a] sm:$0xff]
      %v9041 = vld [vmem:[%s8397 + $0x172] sm:$0xff]
      %v9042 = vpack.c.bf16 %v9011, %v9010
      %v9043 = vpack.c.bf16 %v9013, %v9012
      %v9044 = vpack.c.bf16 %v9015, %v9014
      %v9045 = vpack.c.bf16 %v9017, %v9016
      %v9046 = vpack.c.bf16 %v9019, %v9018
      %v9047 = vpack.c.bf16 %v9021, %v9020
      %v9048 = vpack.c.bf16 %v9023, %v9022
      %v9049 = vpack.c.bf16 %v9025, %v9024
      %v9050 = vpack.c.bf16 %v9027, %v9026
      %v9051 = vpack.c.bf16 %v9029, %v9028
      %v9052 = vpack.c.bf16 %v9031, %v9030
      %v9053 = vpack.c.bf16 %v9033, %v9032
      %v9054 = vpack.c.bf16 %v9035, %v9034
      %v9055 = vpack.c.bf16 %v9037, %v9036
      %v9056 = vpack.c.bf16 %v9039, %v9038
      %v9057 = vpack.c.bf16 %v9041, %v9040
      %s9058 = scalar_lea.vmem %s10, 128
      %v9059 = vld [vmem:[%s9058] sm:$0xf]
      %v9060 = vld [vmem:[%s9058 + $0x4] sm:$0xf]
      %v9061 = vld [vmem:[%s9058 + $0x8] sm:$0xf]
      %v9062 = vld [vmem:[%s9058 + $0xc] sm:$0xf]
      %v9067 = vunpack.c.l.b16 %v9059
      %v9068 = vunpack.c.l.b16 %v9060
      %v9069 = vunpack.c.l.b16 %v9061
      %v9070 = vunpack.c.l.b16 %v9062
      %v9071 = vpack.c.b16 %v9068, %v9067
      %v9072 = vpack.c.b16 %v9070, %v9069
      %v9076 = vsel %vm448, %v9042, 0
      %v9079 = vsel %vm448, %v9043, 0
      %v9082 = vsel %vm448, %v9044, 0
      %v9085 = vsel %vm448, %v9045, 0
      %v9088 = vsel %vm448, %v9046, 0
      %v9091 = vsel %vm448, %v9047, 0
      %v9094 = vsel %vm448, %v9048, 0
      %v9097 = vsel %vm448, %v9049, 0
      %v9100 = vsel %vm448, %v9050, 0
      %v9103 = vsel %vm448, %v9051, 0
      %v9106 = vsel %vm448, %v9052, 0
      %v9109 = vsel %vm448, %v9053, 0
      %v9112 = vsel %vm448, %v9054, 0
      %v9115 = vsel %vm448, %v9055, 0
      %v9118 = vsel %vm448, %v9056, 0
      %v9121 = vsel %vm448, %v9057, 0
      %9123 = vmatprep.subr.bf16.mxu0 0
      %9124 = vmatpush1.bf16.msra.mxu0 %v9071
      %9125 = vmatprep.subr.bf16.mxu0 0
      %9126 = vmatpush1.bf16.msra.mxu0 %v9072
      %9127 = vmatprep.subr.bf16.mxu0 0
      %9128 = vmatpush1.bf16.msra.mxu0 0
      %9129 = vmatprep.subr.bf16.mxu0 0
      %9130 = vmatpush1.bf16.msra.mxu0 0
      %9131 = vmatprep.subr.bf16.mxu0 0
      %9132 = vmatpush1.bf16.msra.mxu0 0
      %9133 = vmatprep.subr.bf16.mxu0 0
      %9134 = vmatpush1.bf16.msra.mxu0 0
      %9135 = vmatprep.subr.bf16.mxu0 0
      %9136 = vmatpush1.bf16.msra.mxu0 0
      %9137 = vmatprep.subr.bf16.mxu0 0
      %9138 = vmatpush1.bf16.msra.mxu0 0
      %9139 = vmatprep.subr.bf16.mxu0 0
      %9140 = vmatpush1.bf16.msra.mxu0 0
      %9141 = vmatprep.subr.bf16.mxu0 0
      %9142 = vmatpush1.bf16.msra.mxu0 0
      %9143 = vmatprep.subr.bf16.mxu0 0
      %9144 = vmatpush1.bf16.msra.mxu0 0
      %9145 = vmatprep.subr.bf16.mxu0 0
      %9146 = vmatpush1.bf16.msra.mxu0 0
      %9147 = vmatprep.subr.bf16.mxu0 0
      %9148 = vmatpush1.bf16.msra.mxu0 0
      %9149 = vmatprep.subr.bf16.mxu0 0
      %9150 = vmatpush1.bf16.msra.mxu0 0
      %9151 = vmatprep.subr.bf16.mxu0 0
      %9152 = vmatpush1.bf16.msra.mxu0 0
      %9153 = vmatprep.subr.bf16.mxu0 0
      %9154 = vmatpush1.bf16.msra.mxu0 0
      %9155 = vmatprep.mubr.bf16.mxu0 0
      %9156 = vmatmul.mubr.bf16.gmra.mrb[0].mxu0 %v9076
      %v9157 = vpop.f32.mrb[0].mxu0
      %v9158 = vadd.f32 0.0, %v9157
      %v9159 = vpop.f32.mrb[0].mxu0
      %v9160 = vpop.f32.mrb[0].mxu0
      %v9161 = vadd.f32 0.0, %v9160
      %v9162 = vpop.f32.mrb[0].mxu0
      %9163 = vmatprep.mubr.bf16.mxu0 0
      %9164 = vmatmul.mubr.bf16.gmra.mrb[0].mxu0 %v9079
      %v9165 = vpop.f32.mrb[0].mxu0
      %v9166 = vadd.f32 0.0, %v9165
      %v9167 = vpop.f32.mrb[0].mxu0
      %v9168 = vpop.f32.mrb[0].mxu0
      %v9169 = vadd.f32 0.0, %v9168
      %v9170 = vpop.f32.mrb[0].mxu0
      %9171 = vmatprep.mubr.bf16.mxu0 0
      %9172 = vmatmul.mubr.bf16.gmra.mrb[0].mxu0 %v9082
      %v9173 = vpop.f32.mrb[0].mxu0
      %v9174 = vadd.f32 0.0, %v9173
      %v9175 = vpop.f32.mrb[0].mxu0
      %v9176 = vpop.f32.mrb[0].mxu0
      %v9177 = vadd.f32 0.0, %v9176
      %v9178 = vpop.f32.mrb[0].mxu0
      %9179 = vmatprep.mubr.bf16.mxu0 0
      %9180 = vmatmul.mubr.bf16.gmra.mrb[0].mxu0 %v9085
      %v9181 = vpop.f32.mrb[0].mxu0
      %v9182 = vadd.f32 0.0, %v9181
      %v9183 = vpop.f32.mrb[0].mxu0
      %v9184 = vpop.f32.mrb[0].mxu0
      %v9185 = vadd.f32 0.0, %v9184
      %v9186 = vpop.f32.mrb[0].mxu0
      %9187 = vmatprep.mubr.bf16.mxu0 0
      %9188 = vmatmul.mubr.bf16.gmra.mrb[0].mxu0 %v9088
      %v9189 = vpop.f32.mrb[0].mxu0
      %v9190 = vadd.f32 0.0, %v9189
      %v9191 = vpop.f32.mrb[0].mxu0
      %v9192 = vpop.f32.mrb[0].mxu0
      %v9193 = vadd.f32 0.0, %v9192
      %v9194 = vpop.f32.mrb[0].mxu0
      %9195 = vmatprep.mubr.bf16.mxu0 0
      %9196 = vmatmul.mubr.bf16.gmra.mrb[0].mxu0 %v9091
      %v9197 = vpop.f32.mrb[0].mxu0
      %v9198 = vadd.f32 0.0, %v9197
      %v9199 = vpop.f32.mrb[0].mxu0
      %v9200 = vpop.f32.mrb[0].mxu0
      %v9201 = vadd.f32 0.0, %v9200
      %v9202 = vpop.f32.mrb[0].mxu0
      %9203 = vmatprep.mubr.bf16.mxu0 0
      %9204 = vmatmul.mubr.bf16.gmra.mrb[0].mxu0 %v9094
      %v9205 = vpop.f32.mrb[0].mxu0
      %v9206 = vadd.f32 0.0, %v9205
      %v9207 = vpop.f32.mrb[0].mxu0
      %v9208 = vpop.f32.mrb[0].mxu0
      %v9209 = vadd.f32 0.0, %v9208
      %v9210 = vpop.f32.mrb[0].mxu0
      %9211 = vmatprep.mubr.bf16.mxu0 0
      %9212 = vmatmul.mubr.bf16.gmra.mrb[0].mxu0 %v9097
      %v9213 = vpop.f32.mrb[0].mxu0
      %v9214 = vadd.f32 0.0, %v9213
      %v9215 = vpop.f32.mrb[0].mxu0
      %v9216 = vpop.f32.mrb[0].mxu0
      %v9217 = vadd.f32 0.0, %v9216
      %v9218 = vpop.f32.mrb[0].mxu0
      %9219 = vmatprep.mubr.bf16.mxu0 0
      %9220 = vmatmul.mubr.bf16.gmra.mrb[0].mxu0 %v9100
      %v9221 = vpop.f32.mrb[0].mxu0
      %v9222 = vadd.f32 0.0, %v9221
      %v9223 = vpop.f32.mrb[0].mxu0
      %v9224 = vpop.f32.mrb[0].mxu0
      %v9225 = vadd.f32 0.0, %v9224
      %v9226 = vpop.f32.mrb[0].mxu0
      %9227 = vmatprep.mubr.bf16.mxu0 0
      %9228 = vmatmul.mubr.bf16.gmra.mrb[0].mxu0 %v9103
      %v9229 = vpop.f32.mrb[0].mxu0
      %v9230 = vadd.f32 0.0, %v9229
      %v9231 = vpop.f32.mrb[0].mxu0
      %v9232 = vpop.f32.mrb[0].mxu0
      %v9233 = vadd.f32 0.0, %v9232
      %v9234 = vpop.f32.mrb[0].mxu0
      %9235 = vmatprep.mubr.bf16.mxu0 0
      %9236 = vmatmul.mubr.bf16.gmra.mrb[0].mxu0 %v9106
      %v9237 = vpop.f32.mrb[0].mxu0
      %v9238 = vadd.f32 0.0, %v9237
      %v9239 = vpop.f32.mrb[0].mxu0
      %v9240 = vpop.f32.mrb[0].mxu0
      %v9241 = vadd.f32 0.0, %v9240
      %v9242 = vpop.f32.mrb[0].mxu0
      %9243 = vmatprep.mubr.bf16.mxu0 0
      %9244 = vmatmul.mubr.bf16.gmra.mrb[0].mxu0 %v9109
      %v9245 = vpop.f32.mrb[0].mxu0
      %v9246 = vadd.f32 0.0, %v9245
      %v9247 = vpop.f32.mrb[0].mxu0
      %v9248 = vpop.f32.mrb[0].mxu0
      %v9249 = vadd.f32 0.0, %v9248
      %v9250 = vpop.f32.mrb[0].mxu0
      %9251 = vmatprep.mubr.bf16.mxu0 0
      %9252 = vmatmul.mubr.bf16.gmra.mrb[0].mxu0 %v9112
      %v9253 = vpop.f32.mrb[0].mxu0
      %v9254 = vadd.f32 0.0, %v9253
      %v9255 = vpop.f32.mrb[0].mxu0
      %v9256 = vpop.f32.mrb[0].mxu0
      %v9257 = vadd.f32 0.0, %v9256
      %v9258 = vpop.f32.mrb[0].mxu0
      %9259 = vmatprep.mubr.bf16.mxu0 0
      %9260 = vmatmul.mubr.bf16.gmra.mrb[0].mxu0 %v9115
      %v9261 = vpop.f32.mrb[0].mxu0
      %v9262 = vadd.f32 0.0, %v9261
      %v9263 = vpop.f32.mrb[0].mxu0
      %v9264 = vpop.f32.mrb[0].mxu0
      %v9265 = vadd.f32 0.0, %v9264
      %v9266 = vpop.f32.mrb[0].mxu0
      %9267 = vmatprep.mubr.bf16.mxu0 0
      %9268 = vmatmul.mubr.bf16.gmra.mrb[0].mxu0 %v9118
      %v9269 = vpop.f32.mrb[0].mxu0
      %v9270 = vadd.f32 0.0, %v9269
      %v9271 = vpop.f32.mrb[0].mxu0
      %v9272 = vpop.f32.mrb[0].mxu0
      %v9273 = vadd.f32 0.0, %v9272
      %v9274 = vpop.f32.mrb[0].mxu0
      %9275 = vmatprep.mubr.bf16.mxu0 0
      %9276 = vmatmul.mubr.bf16.gmra.mrb[0].mxu0 %v9121
      %v9277 = vpop.f32.mrb[0].mxu0
      %v9278 = vadd.f32 0.0, %v9277
      %v9279 = vpop.f32.mrb[0].mxu0
      %v9280 = vpop.f32.mrb[0].mxu0
      %v9281 = vadd.f32 0.0, %v9280
      %v9282 = vpop.f32.mrb[0].mxu0
      %9283 = vdwg.mxu0
      %v9284 = vadd.f32 %v8978, %v9158
      %v9285 = vadd.f32 %v8979, %v9161
      %v9286 = vadd.f32 %v8980, %v9166
      %v9287 = vadd.f32 %v8981, %v9169
      %v9288 = vadd.f32 %v8982, %v9174
      %v9289 = vadd.f32 %v8983, %v9177
      %v9290 = vadd.f32 %v8984, %v9182
      %v9291 = vadd.f32 %v8985, %v9185
      %v9292 = vadd.f32 %v8986, %v9190
      %v9293 = vadd.f32 %v8987, %v9193
      %v9294 = vadd.f32 %v8988, %v9198
      %v9295 = vadd.f32 %v8989, %v9201
      %v9296 = vadd.f32 %v8990, %v9206
      %v9297 = vadd.f32 %v8991, %v9209
      %v9298 = vadd.f32 %v8992, %v9214
      %v9299 = vadd.f32 %v8993, %v9217
      %v9300 = vadd.f32 %v8994, %v9222
      %v9301 = vadd.f32 %v8995, %v9225
      %v9302 = vadd.f32 %v8996, %v9230
      %v9303 = vadd.f32 %v8997, %v9233
      %v9304 = vadd.f32 %v8998, %v9238
      %v9305 = vadd.f32 %v8999, %v9241
      %v9306 = vadd.f32 %v9000, %v9246
      %v9307 = vadd.f32 %v9001, %v9249
      %v9308 = vadd.f32 %v9002, %v9254
      %v9309 = vadd.f32 %v9003, %v9257
      %v9310 = vadd.f32 %v9004, %v9262
      %v9311 = vadd.f32 %v9005, %v9265
      %v9312 = vadd.f32 %v9006, %v9270
      %v9313 = vadd.f32 %v9007, %v9273
      %v9314 = vadd.f32 %v9008, %v9278
      %v9315 = vadd.f32 %v9009, %v9281
      %v9316 = vld [vmem:[%s11] sm:$0x1]
      %v9318 = vlaneseq
      %v9319 = vshrl.u32 %v9318, 7
      %v9320 = vsub.s32 0, %v9319
      %v9321 = vrot.slane %v9316, %v9320
      %v9323 = vadd.f32 %v9284, %v9321
      %v9324 = vadd.f32 %v9285, %v9321
      %v9325 = vadd.f32 %v9286, %v9321
      %v9326 = vadd.f32 %v9287, %v9321
      %v9327 = vadd.f32 %v9288, %v9321
      %v9328 = vadd.f32 %v9289, %v9321
      %v9329 = vadd.f32 %v9290, %v9321
      %v9330 = vadd.f32 %v9291, %v9321
      %v9331 = vadd.f32 %v9292, %v9321
      %v9332 = vadd.f32 %v9293, %v9321
      %v9333 = vadd.f32 %v9294, %v9321
      %v9334 = vadd.f32 %v9295, %v9321
      %v9335 = vadd.f32 %v9296, %v9321
      %v9336 = vadd.f32 %v9297, %v9321
      %v9337 = vadd.f32 %v9298, %v9321
      %v9338 = vadd.f32 %v9299, %v9321
      %v9339 = vadd.f32 %v9300, %v9321
      %v9340 = vadd.f32 %v9301, %v9321
      %v9341 = vadd.f32 %v9302, %v9321
      %v9342 = vadd.f32 %v9303, %v9321
      %v9343 = vadd.f32 %v9304, %v9321
      %v9344 = vadd.f32 %v9305, %v9321
      %v9345 = vadd.f32 %v9306, %v9321
      %v9346 = vadd.f32 %v9307, %v9321
      %v9347 = vadd.f32 %v9308, %v9321
      %v9348 = vadd.f32 %v9309, %v9321
      %v9349 = vadd.f32 %v9310, %v9321
      %v9350 = vadd.f32 %v9311, %v9321
      %v9351 = vadd.f32 %v9312, %v9321
      %v9352 = vadd.f32 %v9313, %v9321
      %v9353 = vadd.f32 %v9314, %v9321
      %v9354 = vadd.f32 %v9315, %v9321
      %9355 = vst [vmem:[%s427] sm:$0xff] %v9323
      %9356 = vst [vmem:[%s427 + $0x8] sm:$0xff] %v9324
      %9357 = vst [vmem:[%s427 + $0x10] sm:$0xff] %v9325
      %9358 = vst [vmem:[%s427 + $0x18] sm:$0xff] %v9326
      %9359 = vst [vmem:[%s427 + $0x20] sm:$0xff] %v9327
      %9360 = vst [vmem:[%s427 + $0x28] sm:$0xff] %v9328
      %9361 = vst [vmem:[%s427 + $0x30] sm:$0xff] %v9329
      %9362 = vst [vmem:[%s427 + $0x38] sm:$0xff] %v9330
      %9363 = vst [vmem:[%s427 + $0x40] sm:$0xff] %v9331
      %9364 = vst [vmem:[%s427 + $0x48] sm:$0xff] %v9332
      %9365 = vst [vmem:[%s427 + $0x50] sm:$0xff] %v9333
      %9366 = vst [vmem:[%s427 + $0x58] sm:$0xff] %v9334
      %9367 = vst [vmem:[%s427 + $0x60] sm:$0xff] %v9335
      %9368 = vst [vmem:[%s427 + $0x68] sm:$0xff] %v9336
      %9369 = vst [vmem:[%s427 + $0x70] sm:$0xff] %v9337
      %9370 = vst [vmem:[%s427 + $0x78] sm:$0xff] %v9338
      %9371 = vst [vmem:[%s427 + $0x80] sm:$0xff] %v9339
      %9372 = vst [vmem:[%s427 + $0x88] sm:$0xff] %v9340
      %9373 = vst [vmem:[%s427 + $0x90] sm:$0xff] %v9341
      %9374 = vst [vmem:[%s427 + $0x98] sm:$0xff] %v9342
      %9375 = vst [vmem:[%s427 + $0xa0] sm:$0xff] %v9343
      %9376 = vst [vmem:[%s427 + $0xa8] sm:$0xff] %v9344
      %9377 = vst [vmem:[%s427 + $0xb0] sm:$0xff] %v9345
      %9378 = vst [vmem:[%s427 + $0xb8] sm:$0xff] %v9346
      %9379 = vst [vmem:[%s427 + $0xc0] sm:$0xff] %v9347
      %9380 = vst [vmem:[%s427 + $0xc8] sm:$0xff] %v9348
      %9381 = vst [vmem:[%s427 + $0xd0] sm:$0xff] %v9349
      %9382 = vst [vmem:[%s427 + $0xd8] sm:$0xff] %v9350
      %9383 = vst [vmem:[%s427 + $0xe0] sm:$0xff] %v9351
      %9384 = vst [vmem:[%s427 + $0xe8] sm:$0xff] %v9352
      %9385 = vst [vmem:[%s427 + $0xf0] sm:$0xff] %v9353
      %9386 = vst [vmem:[%s427 + $0xf8] sm:$0xff] %v9354
      %p9387 = scmp.lt.s32.totalorder %s23, 1
      %s9388 = scalar_select %p9387, %s23, 1
      %s9389 = smul.addr %s9388, 32
      %s9390 = smul.addr %s9389, 8
      %s9391 = scalar_lea.vmem %s12, %s9390
      // Predicated region
      $region69: #{forward.1} parent=67 // pred_check
        %p9392 = pneg %p303
      $region70: #{forward.1} parent=67 // pred_check_branch
        %9394 = sbr.rel (%p9392) target = $region72
      $region71: #{forward.1} parent=67 // pred_region
        _
      $region72: #{forward.1} parent=67 // pred_fallthru
        _
    $region68: #{forward.1} parent=5 // pred_fallthru
      _
    %p9395 = scmp.le.s32.totalorder 2, %s18
    // Predicated region
    $region73: #{forward.1} parent=5 // pred_check
      %p9396 = pneg %p9395
    $region74: #{forward.1} parent=5 // pred_check_branch
      %9398 = sbr.rel (%p9396) target = $region76
    $region75: #{forward.1} parent=5 // pred_region
      %s9399 = ssub.s32 %s18, 2
      // Predicated region
      $region77: #{forward.1} parent=75 // pred_check
        %p9400 = pneg %p309
      $region78: #{forward.1} parent=75 // pred_check_branch
        %9402 = sbr.rel (%p9400) target = $region80
      $region79: #{forward.1} parent=75 // pred_region
        %p9403 = scmp.lt.s32.totalorder %s24, 1
        %s9404 = scalar_select %p9403, %s24, 1
        %s9405 = smul.addr %s9404, 32
        %s9406 = smul.addr %s9405, 8
        %s9407 = scalar_lea.vmem %s12, %s9406
      $region80: #{forward.1} parent=75 // pred_fallthru
        _
    $region76: #{forward.1} parent=5 // pred_fallthru
      _
  $region6: #{forward.1} parent=0 // loop_footer
    %s22 = sadd.s32 1, %s18
  $region7: #{forward.1} parent=0 // loop_footer_branch
    %17 = sbr.rel target = $region3
  $region8: #{forward.1} parent=0 // loop_exit
    _

</llo_original>
